<compile_context>
chip_gen: v6e
topology: v6e:2x2x1
jax: 0.10.0
libtpu: 0.0.40
codegen_flags: <defaults>
</compile_context>

<pallas_src>
import functools
import math

import jax
import jax.numpy as jnp
from jax import lax
from jax.experimental import pallas as pl
from jax.experimental.pallas import tpu as pltpu


# ---------------------------------------------------------------------------
# Fixed architecture sizes (hard-coded by the PyTorch module).
# ---------------------------------------------------------------------------
N_CHAN = 63                            # EEG channels == Conv2d kernel height
SEQ_LEN = 250                          # time samples
N_FILT = 40                            # conv filters
K_T = 25                               # temporal kernel width
T_CONV = SEQ_LEN - K_T + 1             # 226
POOL_K, POOL_S = 51, 5
T_POOL = (T_CONV - POOL_K) // POOL_S + 1   # 36
EMBED_DIM = T_POOL * N_FILT            # 1440 == 36 * 40
PROJ_DIM = 1024
BN_EPS = 1e-5
LN_EPS = 1e-5
MAX_TB = 64                            # samples per grid step


def _elu(v):
    # ELU(alpha=1): x if x>0 else exp(x)-1  (min() keeps exp() safe for x>0)
    return jnp.where(v > 0, v, jnp.exp(jnp.minimum(v, 0.0)) - 1.0)


def _gelu_tanh(x):
    c = math.sqrt(2.0 / math.pi)
    return 0.5 * x * (1.0 + jnp.tanh(c * (x + 0.044715 * (x * x * x))))


def _pool_matrix():
    """(226, 36) matrix P with P[t,p] = 1/51 if 5p <= t < 5p+51 (exact AvgPool)."""
    t = jnp.arange(T_CONV)[:, None]
    p = jnp.arange(T_POOL)[None, :]
    m = (t >= POOL_S * p) & (t < POOL_S * p + POOL_K)
    return m.astype(jnp.float32) / float(POOL_K)


# ---------------------------------------------------------------------------
# Fused MUSE_EEG kernel (encoder + projection head per batch tile).
# ---------------------------------------------------------------------------
def _fused_kernel(total_b,
                  x_ref, w1_ref, s1_ref, t1_ref, w2r_ref, poolT_ref,
                  s2_ref, t2_ref, wl1_ref, bl1_ref, wl2_ref, bl2_ref,
                  lng_ref, lnb_ref, o_ref, u_sc):
    tb = o_ref.shape[0]
    # Number of real samples in this tile (skip padded rows of a partial tile).
    n_valid = jnp.minimum(tb, total_b - pl.program_id(0) * tb)

    def encode_one(b, carry):
        xb = x_ref[b]                                           # (63, 250)
        # spatial conv (63x1) + folded BN1(eval) + ELU       -> (40, 250)
        y = jnp.dot(w1_ref[...], xb, preferred_element_type=jnp.float32)
        y = _elu(y * s1_ref[...] + t1_ref[...])
        # temporal conv (1x25) as one im2col MXU matmul      -> (40, 226)
        ystack = jnp.concatenate(
            [y[:, k:k + T_CONV] for k in range(K_T)], axis=0)   # (1000, 226)
        z = jnp.dot(w2r_ref[...], ystack, preferred_element_type=jnp.float32)
        # avg-pool (1x51 stride 5) as matmul, produced already time-major:
        # (36,226) x (40,226)^T -> (36, 40)
        pooledT = lax.dot_general(
            poolT_ref[...], z, (((1,), (1,)), ((), ())),
            preferred_element_type=jnp.float32)
        uT = _elu(pooledT * s2_ref[...] + t2_ref[...])          # (36, 40)
        u_sc[b] = uT.astype(u_sc.dtype)
        return carry

    lax.fori_loop(0, n_valid, encode_one, 0)

    # Flatten (p, e) time-major into a lane-dense (tb, 1440) bf16 feature slab
    # (stays in VMEM; the 1x1 conv w3/b3 is already folded into wl1/bl1).
    feat = jnp.concatenate(
        [u_sc[:, p, :] for p in range(T_POOL)], axis=-1)        # (tb, 1440)

    # Projection head: Linear -> GELU -> Linear -> +residual -> LayerNorm.
    h1 = jnp.dot(feat, wl1_ref[...],
                 preferred_element_type=jnp.float32) + bl1_ref[...]
    g = _gelu_tanh(h1)
    h2 = jnp.dot(g.astype(wl2_ref.dtype), wl2_ref[...],
                 preferred_element_type=jnp.float32)
    h2 = h2 + bl2_ref[...] + h1        # residual add (Dropout = identity, eval)
    mean = jnp.mean(h2, axis=-1, keepdims=True)
    var = jnp.mean(h2 * h2, axis=-1, keepdims=True) - mean * mean   # one pass
    nrm = (h2 - mean) * lax.rsqrt(var + LN_EPS)
    o_ref[...] = (nrm * lng_ref[...] + lnb_ref[...]).astype(o_ref.dtype)


def muse_eeg_forward(x, params):
    B = x.shape[0]
    tb = min(B, MAX_TB)

    # Fold conv biases + eval-mode BatchNorm into per-channel scale / shift.
    s1 = params["bn1_gamma"] * lax.rsqrt(params["bn1_var"] + BN_EPS)
    t1 = params["bn1_beta"] + (params["b1"] - params["bn1_mean"]) * s1
    s2 = params["bn2_gamma"] * lax.rsqrt(params["bn2_var"] + BN_EPS)
    t2 = params["bn2_beta"] + (params["b2"] - params["bn2_mean"]) * s2

    # im2col weight: W2r[f, k*40 + c] = w2[f, c, k]         -> (40, 1000)
    w2r = jnp.transpose(params["w2"], (0, 2, 1)).reshape(N_FILT, K_T * N_FILT)
    poolT = _pool_matrix().T                                 # (36, 226)

    # Fold the 1x1 projection conv (w3, b3) into the first Linear (bf16 weight).
    wl1r = params["wl1"].reshape(T_POOL, N_FILT, PROJ_DIM)   # [p, e', j]
    wl1e = jnp.einsum("fe,pfj->pej", params["w3"], wl1r)
    wl1e = wl1e.reshape(EMBED_DIM, PROJ_DIM).astype(jnp.bfloat16)
    bl1e = params["bl1"] + jnp.einsum("f,pfj->j", params["b3"], wl1r)
    wl2b = params["wl2"].astype(jnp.bfloat16)

    col = lambda v: v.reshape(N_FILT, 1)
    row40 = lambda v: v.reshape(1, N_FILT)
    row = lambda v: v.reshape(1, PROJ_DIM)
    const2 = lambda i: (0, 0)

    kernel = functools.partial(_fused_kernel, B)

    return pl.pallas_call(
        kernel,
        out_shape=jax.ShapeDtypeStruct((B, PROJ_DIM), x.dtype),
        grid=(pl.cdiv(B, tb),),
        in_specs=[
            pl.BlockSpec((tb, N_CHAN, SEQ_LEN), lambda i: (i, 0, 0)),  # x
            pl.BlockSpec((N_FILT, N_CHAN), const2),          # w1
            pl.BlockSpec((N_FILT, 1), const2),               # s1 (col)
            pl.BlockSpec((N_FILT, 1), const2),               # t1 (col)
            pl.BlockSpec((N_FILT, K_T * N_FILT), const2),    # w2 im2col
            pl.BlockSpec((T_POOL, T_CONV), const2),          # pool^T
            pl.BlockSpec((1, N_FILT), const2),               # s2 (row)
            pl.BlockSpec((1, N_FILT), const2),               # t2 (row)
            pl.BlockSpec((EMBED_DIM, PROJ_DIM), const2),     # wl1 folded, bf16
            pl.BlockSpec((1, PROJ_DIM), const2),             # bl1 folded
            pl.BlockSpec((PROJ_DIM, PROJ_DIM), const2),      # wl2, bf16
            pl.BlockSpec((1, PROJ_DIM), const2),             # bl2
            pl.BlockSpec((1, PROJ_DIM), const2),             # ln gamma
            pl.BlockSpec((1, PROJ_DIM), const2),             # ln beta
        ],
        out_specs=pl.BlockSpec((tb, PROJ_DIM), lambda i: (i, 0)),
        scratch_shapes=[pltpu.VMEM((tb, T_POOL, N_FILT), jnp.bfloat16)],
        compiler_params=pltpu.CompilerParams(
            dimension_semantics=("parallel",),
            vmem_limit_bytes=40 * 1024 * 1024),
    )(x, params["w1"], col(s1), col(t1), w2r, poolT, row40(s2), row40(t2),
      wl1e, row(bl1e), wl2b, row(params["bl2"]),
      row(params["ln_gamma"]), row(params["ln_beta"]))


# ---------------------------------------------------------------------------
# Deterministic parameter construction + pure-JAX reference.
# ---------------------------------------------------------------------------
def init_params(key):
    ks = jax.random.split(key, 20)
    n = lambda k, s, sc: sc * jax.random.normal(k, s, dtype=jnp.float32)
    return {
        "w1": n(ks[0], (N_FILT, N_CHAN), 1.0 / math.sqrt(N_CHAN)),
        "b1": n(ks[1], (N_FILT,), 0.05),
        "bn1_gamma": 1.0 + n(ks[2], (N_FILT,), 0.1),
        "bn1_beta": n(ks[3], (N_FILT,), 0.1),
        "bn1_mean": n(ks[4], (N_FILT,), 0.1),
        "bn1_var": 1.0 + 0.1 * jnp.abs(n(ks[5], (N_FILT,), 1.0)),
        "w2": n(ks[6], (N_FILT, N_FILT, K_T), 1.0 / math.sqrt(N_FILT * K_T)),
        "b2": n(ks[7], (N_FILT,), 0.05),
        "bn2_gamma": 1.0 + n(ks[8], (N_FILT,), 0.1),
        "bn2_beta": n(ks[9], (N_FILT,), 0.1),
        "bn2_mean": n(ks[10], (N_FILT,), 0.1),
        "bn2_var": 1.0 + 0.1 * jnp.abs(n(ks[11], (N_FILT,), 1.0)),
        "w3": n(ks[12], (N_FILT, N_FILT), 1.0 / math.sqrt(N_FILT)),
        "b3": n(ks[13], (N_FILT,), 0.05),
        "wl1": n(ks[14], (EMBED_DIM, PROJ_DIM), 1.0 / math.sqrt(EMBED_DIM)),
        "bl1": n(ks[15], (PROJ_DIM,), 0.02),
        "wl2": n(ks[16], (PROJ_DIM, PROJ_DIM), 1.0 / math.sqrt(PROJ_DIM)),
        "bl2": n(ks[17], (PROJ_DIM,), 0.02),
        "ln_gamma": 1.0 + n(ks[18], (PROJ_DIM,), 0.1),
        "ln_beta": n(ks[19], (PROJ_DIM,), 0.1),
    }


def reference_forward(x, p):
    hp = lax.Precision.HIGHEST
    B = x.shape[0]

    def bn(v, g, b, m, var):
        inv = lax.rsqrt(var + BN_EPS)
        return (v - m[None, :, None]) * inv[None, :, None] * g[None, :, None] \
            + b[None, :, None]

    y = jnp.einsum("oh,bht->bot", p["w1"], x, precision=hp) \
        + p["b1"][None, :, None]
    y = _elu(bn(y, p["bn1_gamma"], p["bn1_beta"], p["bn1_mean"], p["bn1_var"]))
    z = jnp.zeros((B, N_FILT, T_CONV), jnp.float32)
    for k in range(K_T):
        z = z + jnp.einsum("oi,bit->bot", p["w2"][:, :, k],
                           y[:, :, k:k + T_CONV], precision=hp)
    z = z + p["b2"][None, :, None]
    pooled = jnp.einsum("bct,tp->bcp", z, _pool_matrix(), precision=hp)
    u = _elu(bn(pooled, p["bn2_gamma"], p["bn2_beta"],
                p["bn2_mean"], p["bn2_var"]))
    proj = jnp.einsum("oi,bip->bop", p["w3"], u, precision=hp) \
        + p["b3"][None, :, None]
    feat = jnp.transpose(proj, (0, 2, 1)).reshape(B, EMBED_DIM)
    h1 = jnp.dot(feat, p["wl1"], precision=hp) + p["bl1"][None, :]
    g = _gelu_tanh(h1)
    h2 = jnp.dot(g, p["wl2"], precision=hp) + p["bl2"][None, :] + h1
    mean = jnp.mean(h2, axis=-1, keepdims=True)
    var = jnp.mean(jnp.square(h2 - mean), axis=-1, keepdims=True)
    nrm = (h2 - mean) * lax.rsqrt(var + LN_EPS)
    return nrm * p["ln_gamma"][None, :] + p["ln_beta"][None, :]


# ---------------------------------------------------------------------------
# Demo / self-test
# ---------------------------------------------------------------------------
if __name__ == "__main__":
    key = jax.random.PRNGKey(0)
    kx, kp = jax.random.split(key)

    B = 2
    x = jax.random.normal(kx, (B, N_CHAN, SEQ_LEN), dtype=jnp.float32)
    params = init_params(kp)

    out = jax.jit(muse_eeg_forward)(x, params)
    out = jax.block_until_ready(out)
    assert out.shape == (B, PROJ_DIM)

    ref = jax.block_until_ready(reference_forward(x, params))
    max_err = float(jnp.max(jnp.abs(out - ref)))
    # Tolerance covers the bf16 projection-head matmuls (f32 accumulation) and
    # default MXU precision vs the HIGHEST-precision f32 reference.
    assert jnp.allclose(out, ref, atol=5e-2, rtol=5e-2), \
        f"mismatch vs reference (max abs err {max_err})"

    print("KERNEL_OK")
</pallas_src>

<mosaic_0001>
module attributes {stable_mosaic.version = 11 : i64} {
  func.func @_fused_kernel(%arg0: i32, %arg1: memref<2x63x250xf32, #tpu.memory_space<vmem>>, %arg2: memref<40x63xf32, #tpu.memory_space<vmem>>, %arg3: memref<40x1xf32, #tpu.memory_space<vmem>>, %arg4: memref<40x1xf32, #tpu.memory_space<vmem>>, %arg5: memref<40x1000xf32, #tpu.memory_space<vmem>>, %arg6: memref<36x226xf32, #tpu.memory_space<vmem>>, %arg7: memref<1x40xf32, #tpu.memory_space<vmem>>, %arg8: memref<1x40xf32, #tpu.memory_space<vmem>>, %arg9: memref<1440x1024xbf16, #tpu.memory_space<vmem>>, %arg10: memref<1x1024xf32, #tpu.memory_space<vmem>>, %arg11: memref<1024x1024xbf16, #tpu.memory_space<vmem>>, %arg12: memref<1x1024xf32, #tpu.memory_space<vmem>>, %arg13: memref<1x1024xf32, #tpu.memory_space<vmem>>, %arg14: memref<1x1024xf32, #tpu.memory_space<vmem>>, %arg15: memref<2x1024xf32, #tpu.memory_space<vmem>>, %arg16: memref<2x36x40xbf16, #tpu.memory_space<vmem>>) attributes {dimension_semantics = [#tpu.dimension_semantics<parallel>], iteration_bounds = array<i64: 1>, scalar_prefetch = 0 : i64, scratch_operands = 1 : i64, tpu.core_type = #tpu.core_type<tc>, window_params = [{transform_indices = @transform_0, window_bounds = array<i64: 2, 63, 250>}, {pipeline_mode = #tpu.pipeline_mode<synchronous>, transform_indices = @transform_1, window_bounds = array<i64: 40, 63>}, {pipeline_mode = #tpu.pipeline_mode<synchronous>, transform_indices = @transform_2, window_bounds = array<i64: 40, 1>}, {pipeline_mode = #tpu.pipeline_mode<synchronous>, transform_indices = @transform_3, window_bounds = array<i64: 40, 1>}, {pipeline_mode = #tpu.pipeline_mode<synchronous>, transform_indices = @transform_4, window_bounds = array<i64: 40, 1000>}, {pipeline_mode = #tpu.pipeline_mode<synchronous>, transform_indices = @transform_5, window_bounds = array<i64: 36, 226>}, {pipeline_mode = #tpu.pipeline_mode<synchronous>, transform_indices = @transform_6, window_bounds = array<i64: 1, 40>}, {pipeline_mode = #tpu.pipeline_mode<synchronous>, transform_indices = @transform_7, window_bounds = array<i64: 1, 40>}, {pipeline_mode = #tpu.pipeline_mode<synchronous>, transform_indices = @transform_8, window_bounds = array<i64: 1440, 1024>}, {pipeline_mode = #tpu.pipeline_mode<synchronous>, transform_indices = @transform_9, window_bounds = array<i64: 1, 1024>}, {pipeline_mode = #tpu.pipeline_mode<synchronous>, transform_indices = @transform_10, window_bounds = array<i64: 1024, 1024>}, {pipeline_mode = #tpu.pipeline_mode<synchronous>, transform_indices = @transform_11, window_bounds = array<i64: 1, 1024>}, {pipeline_mode = #tpu.pipeline_mode<synchronous>, transform_indices = @transform_12, window_bounds = array<i64: 1, 1024>}, {pipeline_mode = #tpu.pipeline_mode<synchronous>, transform_indices = @transform_13, window_bounds = array<i64: 1, 1024>}, {transform_indices = @transform_14, window_bounds = array<i64: 2, 1024>}]} {
    %c2_i32 = arith.constant 2 : i32
    %0 = arith.muli %arg0, %c2_i32 : i32
    %c2_i32_0 = arith.constant 2 : i32
    %1 = arith.subi %c2_i32_0, %0 : i32
    %c2_i32_1 = arith.constant 2 : i32
    %2 = arith.minsi %c2_i32_1, %1 : i32
    %c0_i32 = arith.constant 0 : i32
    %c0_i32_2 = arith.constant 0 : i32
    %3 = arith.subi %2, %c0_i32_2 : i32
    %4 = arith.addi %c0_i32_2, %3 : i32
    %c1_i32 = arith.constant 1 : i32
    scf.for %arg17 = %c0_i32_2 to %4 step %c1_i32  : i32 {
      %131 = arith.index_cast %arg17 : i32 to index
      %c0_99 = arith.constant 0 : index
      %c0_100 = arith.constant 0 : index
      %132 = vector.load %arg1[%131, %c0_99, %c0_100] : memref<2x63x250xf32, #tpu.memory_space<vmem>>, vector<1x63x250xf32>
      %133 = vector.shape_cast %132 : vector<1x63x250xf32> to vector<63x250xf32>
      %c0_101 = arith.constant 0 : index
      %c0_102 = arith.constant 0 : index
      %134 = vector.load %arg2[%c0_101, %c0_102] : memref<40x63xf32, #tpu.memory_space<vmem>>, vector<40x63xf32>
      %cst_103 = arith.constant dense<0.000000e+00> : vector<40x250xf32>
      %135 = tpu.matmul %134, %133, %cst_103 {dimension_numbers = #tpu.dot_dimension_numbers<[1], [0], [0], [1], [0, 0, 1, 1], [], []>} : vector<40x63xf32>, vector<63x250xf32>, vector<40x250xf32> -> vector<40x250xf32>
      %c0_104 = arith.constant 0 : index
      %c0_105 = arith.constant 0 : index
      %136 = vector.load %arg3[%c0_104, %c0_105] : memref<40x1xf32, #tpu.memory_space<vmem>>, vector<40x1xf32>
      %137 = vector.broadcast %136 : vector<40x1xf32> to vector<40x250xf32>
      %138 = arith.mulf %135, %137 : vector<40x250xf32>
      %c0_106 = arith.constant 0 : index
      %c0_107 = arith.constant 0 : index
      %139 = vector.load %arg4[%c0_106, %c0_107] : memref<40x1xf32, #tpu.memory_space<vmem>>, vector<40x1xf32>
      %140 = vector.broadcast %139 : vector<40x1xf32> to vector<40x250xf32>
      %141 = arith.addf %138, %140 : vector<40x250xf32>
      %cst_108 = arith.constant 0.000000e+00 : f32
      %142 = vector.broadcast %cst_108 : f32 to vector<40x250xf32>
      %143 = arith.cmpf ogt, %141, %142 : vector<40x250xf32>
      %cst_109 = arith.constant 0.000000e+00 : f32
      %144 = vector.broadcast %cst_109 : f32 to vector<40x250xf32>
      %145 = arith.minimumf %141, %144 : vector<40x250xf32>
      %146 = math.exp %145 : vector<40x250xf32>
      %cst_110 = arith.constant 1.000000e+00 : f32
      %147 = vector.broadcast %cst_110 : f32 to vector<40x250xf32>
      %148 = arith.subf %146, %147 : vector<40x250xf32>
      %149 = arith.select %143, %141, %148 : vector<40x250xi1>, vector<40x250xf32>
      %150 = vector.extract_strided_slice %149 {offsets = [0, 0], sizes = [40, 226], strides = [1, 1]} : vector<40x250xf32> to vector<40x226xf32>
      %151 = vector.extract_strided_slice %149 {offsets = [0, 1], sizes = [40, 226], strides = [1, 1]} : vector<40x250xf32> to vector<40x226xf32>
      %152 = vector.extract_strided_slice %149 {offsets = [0, 2], sizes = [40, 226], strides = [1, 1]} : vector<40x250xf32> to vector<40x226xf32>
      %153 = vector.extract_strided_slice %149 {offsets = [0, 3], sizes = [40, 226], strides = [1, 1]} : vector<40x250xf32> to vector<40x226xf32>
      %154 = vector.extract_strided_slice %149 {offsets = [0, 4], sizes = [40, 226], strides = [1, 1]} : vector<40x250xf32> to vector<40x226xf32>
      %155 = vector.extract_strided_slice %149 {offsets = [0, 5], sizes = [40, 226], strides = [1, 1]} : vector<40x250xf32> to vector<40x226xf32>
      %156 = vector.extract_strided_slice %149 {offsets = [0, 6], sizes = [40, 226], strides = [1, 1]} : vector<40x250xf32> to vector<40x226xf32>
      %157 = vector.extract_strided_slice %149 {offsets = [0, 7], sizes = [40, 226], strides = [1, 1]} : vector<40x250xf32> to vector<40x226xf32>
      %158 = vector.extract_strided_slice %149 {offsets = [0, 8], sizes = [40, 226], strides = [1, 1]} : vector<40x250xf32> to vector<40x226xf32>
      %159 = vector.extract_strided_slice %149 {offsets = [0, 9], sizes = [40, 226], strides = [1, 1]} : vector<40x250xf32> to vector<40x226xf32>
      %160 = vector.extract_strided_slice %149 {offsets = [0, 10], sizes = [40, 226], strides = [1, 1]} : vector<40x250xf32> to vector<40x226xf32>
      %161 = vector.extract_strided_slice %149 {offsets = [0, 11], sizes = [40, 226], strides = [1, 1]} : vector<40x250xf32> to vector<40x226xf32>
      %162 = vector.extract_strided_slice %149 {offsets = [0, 12], sizes = [40, 226], strides = [1, 1]} : vector<40x250xf32> to vector<40x226xf32>
      %163 = vector.extract_strided_slice %149 {offsets = [0, 13], sizes = [40, 226], strides = [1, 1]} : vector<40x250xf32> to vector<40x226xf32>
      %164 = vector.extract_strided_slice %149 {offsets = [0, 14], sizes = [40, 226], strides = [1, 1]} : vector<40x250xf32> to vector<40x226xf32>
      %165 = vector.extract_strided_slice %149 {offsets = [0, 15], sizes = [40, 226], strides = [1, 1]} : vector<40x250xf32> to vector<40x226xf32>
      %166 = vector.extract_strided_slice %149 {offsets = [0, 16], sizes = [40, 226], strides = [1, 1]} : vector<40x250xf32> to vector<40x226xf32>
      %167 = vector.extract_strided_slice %149 {offsets = [0, 17], sizes = [40, 226], strides = [1, 1]} : vector<40x250xf32> to vector<40x226xf32>
      %168 = vector.extract_strided_slice %149 {offsets = [0, 18], sizes = [40, 226], strides = [1, 1]} : vector<40x250xf32> to vector<40x226xf32>
      %169 = vector.extract_strided_slice %149 {offsets = [0, 19], sizes = [40, 226], strides = [1, 1]} : vector<40x250xf32> to vector<40x226xf32>
      %170 = vector.extract_strided_slice %149 {offsets = [0, 20], sizes = [40, 226], strides = [1, 1]} : vector<40x250xf32> to vector<40x226xf32>
      %171 = vector.extract_strided_slice %149 {offsets = [0, 21], sizes = [40, 226], strides = [1, 1]} : vector<40x250xf32> to vector<40x226xf32>
      %172 = vector.extract_strided_slice %149 {offsets = [0, 22], sizes = [40, 226], strides = [1, 1]} : vector<40x250xf32> to vector<40x226xf32>
      %173 = vector.extract_strided_slice %149 {offsets = [0, 23], sizes = [40, 226], strides = [1, 1]} : vector<40x250xf32> to vector<40x226xf32>
      %174 = vector.extract_strided_slice %149 {offsets = [0, 24], sizes = [40, 226], strides = [1, 1]} : vector<40x250xf32> to vector<40x226xf32>
      %175 = tpu.concatenate %150, %151, %152, %153, %154, %155, %156, %157, %158, %159, %160, %161, %162, %163, %164, %165 in 0 : vector<40x226xf32>, vector<40x226xf32>, vector<40x226xf32>, vector<40x226xf32>, vector<40x226xf32>, vector<40x226xf32>, vector<40x226xf32>, vector<40x226xf32>, vector<40x226xf32>, vector<40x226xf32>, vector<40x226xf32>, vector<40x226xf32>, vector<40x226xf32>, vector<40x226xf32>, vector<40x226xf32>, vector<40x226xf32> -> vector<640x226xf32>
      %176 = tpu.concatenate %166, %167, %168, %169, %170, %171, %172, %173, %174 in 0 : vector<40x226xf32>, vector<40x226xf32>, vector<40x226xf32>, vector<40x226xf32>, vector<40x226xf32>, vector<40x226xf32>, vector<40x226xf32>, vector<40x226xf32>, vector<40x226xf32> -> vector<360x226xf32>
      %177 = tpu.concatenate %175, %176 in 0 : vector<640x226xf32>, vector<360x226xf32> -> vector<1000x226xf32>
      %c0_111 = arith.constant 0 : index
      %c0_112 = arith.constant 0 : index
      %178 = vector.load %arg5[%c0_111, %c0_112] : memref<40x1000xf32, #tpu.memory_space<vmem>>, vector<40x1000xf32>
      %cst_113 = arith.constant dense<0.000000e+00> : vector<40x226xf32>
      %179 = tpu.matmul %178, %177, %cst_113 {dimension_numbers = #tpu.dot_dimension_numbers<[1], [0], [0], [1], [0, 0, 1, 1], [], []>} : vector<40x1000xf32>, vector<1000x226xf32>, vector<40x226xf32> -> vector<40x226xf32>
      %c0_114 = arith.constant 0 : index
      %c0_115 = arith.constant 0 : index
      %180 = vector.load %arg6[%c0_114, %c0_115] : memref<36x226xf32, #tpu.memory_space<vmem>>, vector<36x226xf32>
      %cst_116 = arith.constant dense<0.000000e+00> : vector<36x40xf32>
      %181 = tpu.matmul %180, %179, %cst_116 {dimension_numbers = #tpu.dot_dimension_numbers<[1], [1], [0], [0], [0, 0, 1, 0], [], []>} : vector<36x226xf32>, vector<40x226xf32>, vector<36x40xf32> -> vector<36x40xf32>
      %c0_117 = arith.constant 0 : index
      %c0_118 = arith.constant 0 : index
      %182 = vector.load %arg7[%c0_117, %c0_118] : memref<1x40xf32, #tpu.memory_space<vmem>>, vector<1x40xf32>
      %183 = vector.broadcast %182 : vector<1x40xf32> to vector<36x40xf32>
      %184 = arith.mulf %181, %183 : vector<36x40xf32>
      %c0_119 = arith.constant 0 : index
      %c0_120 = arith.constant 0 : index
      %185 = vector.load %arg8[%c0_119, %c0_120] : memref<1x40xf32, #tpu.memory_space<vmem>>, vector<1x40xf32>
      %186 = vector.broadcast %185 : vector<1x40xf32> to vector<36x40xf32>
      %187 = arith.addf %184, %186 : vector<36x40xf32>
      %cst_121 = arith.constant 0.000000e+00 : f32
      %188 = vector.broadcast %cst_121 : f32 to vector<36x40xf32>
      %189 = arith.cmpf ogt, %187, %188 : vector<36x40xf32>
      %cst_122 = arith.constant 0.000000e+00 : f32
      %190 = vector.broadcast %cst_122 : f32 to vector<36x40xf32>
      %191 = arith.minimumf %187, %190 : vector<36x40xf32>
      %192 = math.exp %191 : vector<36x40xf32>
      %cst_123 = arith.constant 1.000000e+00 : f32
      %193 = vector.broadcast %cst_123 : f32 to vector<36x40xf32>
      %194 = arith.subf %192, %193 : vector<36x40xf32>
      %195 = arith.select %189, %187, %194 : vector<36x40xi1>, vector<36x40xf32>
      %196 = arith.truncf %195 : vector<36x40xf32> to vector<36x40xbf16>
      %197 = arith.index_cast %arg17 : i32 to index
      %c0_124 = arith.constant 0 : index
      %c0_125 = arith.constant 0 : index
      %198 = vector.load %arg16[%197, %c0_124, %c0_125] : memref<2x36x40xbf16, #tpu.memory_space<vmem>>, vector<1x36x40xbf16>
      %199 = vector.shape_cast %198 : vector<1x36x40xbf16> to vector<36x40xbf16>
      %200 = vector.shape_cast %196 : vector<36x40xbf16> to vector<1x36x40xbf16>
      tpu.vector_store %arg16[%197, %c0_124, %c0_125], %200 {strides = array<i32>} : memref<2x36x40xbf16, #tpu.memory_space<vmem>>, vector<1x36x40xbf16>,
    }
    %c0 = arith.constant 0 : index
    %c0_3 = arith.constant 0 : index
    %c0_4 = arith.constant 0 : index
    %5 = vector.load %arg16[%c0, %c0_3, %c0_4] : memref<2x36x40xbf16, #tpu.memory_space<vmem>>, vector<2x1x40xbf16>
    %6 = vector.shape_cast %5 : vector<2x1x40xbf16> to vector<2x40xbf16>
    %c0_5 = arith.constant 0 : index
    %c1 = arith.constant 1 : index
    %c0_6 = arith.constant 0 : index
    %7 = vector.load %arg16[%c0_5, %c1, %c0_6] : memref<2x36x40xbf16, #tpu.memory_space<vmem>>, vector<2x1x40xbf16>
    %8 = vector.shape_cast %7 : vector<2x1x40xbf16> to vector<2x40xbf16>
    %c0_7 = arith.constant 0 : index
    %c2 = arith.constant 2 : index
    %c0_8 = arith.constant 0 : index
    %9 = vector.load %arg16[%c0_7, %c2, %c0_8] : memref<2x36x40xbf16, #tpu.memory_space<vmem>>, vector<2x1x40xbf16>
    %10 = vector.shape_cast %9 : vector<2x1x40xbf16> to vector<2x40xbf16>
    %c0_9 = arith.constant 0 : index
    %c3 = arith.constant 3 : index
    %c0_10 = arith.constant 0 : index
    %11 = vector.load %arg16[%c0_9, %c3, %c0_10] : memref<2x36x40xbf16, #tpu.memory_space<vmem>>, vector<2x1x40xbf16>
    %12 = vector.shape_cast %11 : vector<2x1x40xbf16> to vector<2x40xbf16>
    %c0_11 = arith.constant 0 : index
    %c4 = arith.constant 4 : index
    %c0_12 = arith.constant 0 : index
    %13 = vector.load %arg16[%c0_11, %c4, %c0_12] : memref<2x36x40xbf16, #tpu.memory_space<vmem>>, vector<2x1x40xbf16>
    %14 = vector.shape_cast %13 : vector<2x1x40xbf16> to vector<2x40xbf16>
    %c0_13 = arith.constant 0 : index
    %c5 = arith.constant 5 : index
    %c0_14 = arith.constant 0 : index
    %15 = vector.load %arg16[%c0_13, %c5, %c0_14] : memref<2x36x40xbf16, #tpu.memory_space<vmem>>, vector<2x1x40xbf16>
    %16 = vector.shape_cast %15 : vector<2x1x40xbf16> to vector<2x40xbf16>
    %c0_15 = arith.constant 0 : index
    %c6 = arith.constant 6 : index
    %c0_16 = arith.constant 0 : index
    %17 = vector.load %arg16[%c0_15, %c6, %c0_16] : memref<2x36x40xbf16, #tpu.memory_space<vmem>>, vector<2x1x40xbf16>
    %18 = vector.shape_cast %17 : vector<2x1x40xbf16> to vector<2x40xbf16>
    %c0_17 = arith.constant 0 : index
    %c7 = arith.constant 7 : index
    %c0_18 = arith.constant 0 : index
    %19 = vector.load %arg16[%c0_17, %c7, %c0_18] : memref<2x36x40xbf16, #tpu.memory_space<vmem>>, vector<2x1x40xbf16>
    %20 = vector.shape_cast %19 : vector<2x1x40xbf16> to vector<2x40xbf16>
    %c0_19 = arith.constant 0 : index
    %c8 = arith.constant 8 : index
    %c0_20 = arith.constant 0 : index
    %21 = vector.load %arg16[%c0_19, %c8, %c0_20] : memref<2x36x40xbf16, #tpu.memory_space<vmem>>, vector<2x1x40xbf16>
    %22 = vector.shape_cast %21 : vector<2x1x40xbf16> to vector<2x40xbf16>
    %c0_21 = arith.constant 0 : index
    %c9 = arith.constant 9 : index
    %c0_22 = arith.constant 0 : index
    %23 = vector.load %arg16[%c0_21, %c9, %c0_22] : memref<2x36x40xbf16, #tpu.memory_space<vmem>>, vector<2x1x40xbf16>
    %24 = vector.shape_cast %23 : vector<2x1x40xbf16> to vector<2x40xbf16>
    %c0_23 = arith.constant 0 : index
    %c10 = arith.constant 10 : index
    %c0_24 = arith.constant 0 : index
    %25 = vector.load %arg16[%c0_23, %c10, %c0_24] : memref<2x36x40xbf16, #tpu.memory_space<vmem>>, vector<2x1x40xbf16>
    %26 = vector.shape_cast %25 : vector<2x1x40xbf16> to vector<2x40xbf16>
    %c0_25 = arith.constant 0 : index
    %c11 = arith.constant 11 : index
    %c0_26 = arith.constant 0 : index
    %27 = vector.load %arg16[%c0_25, %c11, %c0_26] : memref<2x36x40xbf16, #tpu.memory_space<vmem>>, vector<2x1x40xbf16>
    %28 = vector.shape_cast %27 : vector<2x1x40xbf16> to vector<2x40xbf16>
    %c0_27 = arith.constant 0 : index
    %c12 = arith.constant 12 : index
    %c0_28 = arith.constant 0 : index
    %29 = vector.load %arg16[%c0_27, %c12, %c0_28] : memref<2x36x40xbf16, #tpu.memory_space<vmem>>, vector<2x1x40xbf16>
    %30 = vector.shape_cast %29 : vector<2x1x40xbf16> to vector<2x40xbf16>
    %c0_29 = arith.constant 0 : index
    %c13 = arith.constant 13 : index
    %c0_30 = arith.constant 0 : index
    %31 = vector.load %arg16[%c0_29, %c13, %c0_30] : memref<2x36x40xbf16, #tpu.memory_space<vmem>>, vector<2x1x40xbf16>
    %32 = vector.shape_cast %31 : vector<2x1x40xbf16> to vector<2x40xbf16>
    %c0_31 = arith.constant 0 : index
    %c14 = arith.constant 14 : index
    %c0_32 = arith.constant 0 : index
    %33 = vector.load %arg16[%c0_31, %c14, %c0_32] : memref<2x36x40xbf16, #tpu.memory_space<vmem>>, vector<2x1x40xbf16>
    %34 = vector.shape_cast %33 : vector<2x1x40xbf16> to vector<2x40xbf16>
    %c0_33 = arith.constant 0 : index
    %c15 = arith.constant 15 : index
    %c0_34 = arith.constant 0 : index
    %35 = vector.load %arg16[%c0_33, %c15, %c0_34] : memref<2x36x40xbf16, #tpu.memory_space<vmem>>, vector<2x1x40xbf16>
    %36 = vector.shape_cast %35 : vector<2x1x40xbf16> to vector<2x40xbf16>
    %c0_35 = arith.constant 0 : index
    %c16 = arith.constant 16 : index
    %c0_36 = arith.constant 0 : index
    %37 = vector.load %arg16[%c0_35, %c16, %c0_36] : memref<2x36x40xbf16, #tpu.memory_space<vmem>>, vector<2x1x40xbf16>
    %38 = vector.shape_cast %37 : vector<2x1x40xbf16> to vector<2x40xbf16>
    %c0_37 = arith.constant 0 : index
    %c17 = arith.constant 17 : index
    %c0_38 = arith.constant 0 : index
    %39 = vector.load %arg16[%c0_37, %c17, %c0_38] : memref<2x36x40xbf16, #tpu.memory_space<vmem>>, vector<2x1x40xbf16>
    %40 = vector.shape_cast %39 : vector<2x1x40xbf16> to vector<2x40xbf16>
    %c0_39 = arith.constant 0 : index
    %c18 = arith.constant 18 : index
    %c0_40 = arith.constant 0 : index
    %41 = vector.load %arg16[%c0_39, %c18, %c0_40] : memref<2x36x40xbf16, #tpu.memory_space<vmem>>, vector<2x1x40xbf16>
    %42 = vector.shape_cast %41 : vector<2x1x40xbf16> to vector<2x40xbf16>
    %c0_41 = arith.constant 0 : index
    %c19 = arith.constant 19 : index
    %c0_42 = arith.constant 0 : index
    %43 = vector.load %arg16[%c0_41, %c19, %c0_42] : memref<2x36x40xbf16, #tpu.memory_space<vmem>>, vector<2x1x40xbf16>
    %44 = vector.shape_cast %43 : vector<2x1x40xbf16> to vector<2x40xbf16>
    %c0_43 = arith.constant 0 : index
    %c20 = arith.constant 20 : index
    %c0_44 = arith.constant 0 : index
    %45 = vector.load %arg16[%c0_43, %c20, %c0_44] : memref<2x36x40xbf16, #tpu.memory_space<vmem>>, vector<2x1x40xbf16>
    %46 = vector.shape_cast %45 : vector<2x1x40xbf16> to vector<2x40xbf16>
    %c0_45 = arith.constant 0 : index
    %c21 = arith.constant 21 : index
    %c0_46 = arith.constant 0 : index
    %47 = vector.load %arg16[%c0_45, %c21, %c0_46] : memref<2x36x40xbf16, #tpu.memory_space<vmem>>, vector<2x1x40xbf16>
    %48 = vector.shape_cast %47 : vector<2x1x40xbf16> to vector<2x40xbf16>
    %c0_47 = arith.constant 0 : index
    %c22 = arith.constant 22 : index
    %c0_48 = arith.constant 0 : index
    %49 = vector.load %arg16[%c0_47, %c22, %c0_48] : memref<2x36x40xbf16, #tpu.memory_space<vmem>>, vector<2x1x40xbf16>
    %50 = vector.shape_cast %49 : vector<2x1x40xbf16> to vector<2x40xbf16>
    %c0_49 = arith.constant 0 : index
    %c23 = arith.constant 23 : index
    %c0_50 = arith.constant 0 : index
    %51 = vector.load %arg16[%c0_49, %c23, %c0_50] : memref<2x36x40xbf16, #tpu.memory_space<vmem>>, vector<2x1x40xbf16>
    %52 = vector.shape_cast %51 : vector<2x1x40xbf16> to vector<2x40xbf16>
    %c0_51 = arith.constant 0 : index
    %c24 = arith.constant 24 : index
    %c0_52 = arith.constant 0 : index
    %53 = vector.load %arg16[%c0_51, %c24, %c0_52] : memref<2x36x40xbf16, #tpu.memory_space<vmem>>, vector<2x1x40xbf16>
    %54 = vector.shape_cast %53 : vector<2x1x40xbf16> to vector<2x40xbf16>
    %c0_53 = arith.constant 0 : index
    %c25 = arith.constant 25 : index
    %c0_54 = arith.constant 0 : index
    %55 = vector.load %arg16[%c0_53, %c25, %c0_54] : memref<2x36x40xbf16, #tpu.memory_space<vmem>>, vector<2x1x40xbf16>
    %56 = vector.shape_cast %55 : vector<2x1x40xbf16> to vector<2x40xbf16>
    %c0_55 = arith.constant 0 : index
    %c26 = arith.constant 26 : index
    %c0_56 = arith.constant 0 : index
    %57 = vector.load %arg16[%c0_55, %c26, %c0_56] : memref<2x36x40xbf16, #tpu.memory_space<vmem>>, vector<2x1x40xbf16>
    %58 = vector.shape_cast %57 : vector<2x1x40xbf16> to vector<2x40xbf16>
    %c0_57 = arith.constant 0 : index
    %c27 = arith.constant 27 : index
    %c0_58 = arith.constant 0 : index
    %59 = vector.load %arg16[%c0_57, %c27, %c0_58] : memref<2x36x40xbf16, #tpu.memory_space<vmem>>, vector<2x1x40xbf16>
    %60 = vector.shape_cast %59 : vector<2x1x40xbf16> to vector<2x40xbf16>
    %c0_59 = arith.constant 0 : index
    %c28 = arith.constant 28 : index
    %c0_60 = arith.constant 0 : index
    %61 = vector.load %arg16[%c0_59, %c28, %c0_60] : memref<2x36x40xbf16, #tpu.memory_space<vmem>>, vector<2x1x40xbf16>
    %62 = vector.shape_cast %61 : vector<2x1x40xbf16> to vector<2x40xbf16>
    %c0_61 = arith.constant 0 : index
    %c29 = arith.constant 29 : index
    %c0_62 = arith.constant 0 : index
    %63 = vector.load %arg16[%c0_61, %c29, %c0_62] : memref<2x36x40xbf16, #tpu.memory_space<vmem>>, vector<2x1x40xbf16>
    %64 = vector.shape_cast %63 : vector<2x1x40xbf16> to vector<2x40xbf16>
    %c0_63 = arith.constant 0 : index
    %c30 = arith.constant 30 : index
    %c0_64 = arith.constant 0 : index
    %65 = vector.load %arg16[%c0_63, %c30, %c0_64] : memref<2x36x40xbf16, #tpu.memory_space<vmem>>, vector<2x1x40xbf16>
    %66 = vector.shape_cast %65 : vector<2x1x40xbf16> to vector<2x40xbf16>
    %c0_65 = arith.constant 0 : index
    %c31 = arith.constant 31 : index
    %c0_66 = arith.constant 0 : index
    %67 = vector.load %arg16[%c0_65, %c31, %c0_66] : memref<2x36x40xbf16, #tpu.memory_space<vmem>>, vector<2x1x40xbf16>
    %68 = vector.shape_cast %67 : vector<2x1x40xbf16> to vector<2x40xbf16>
    %c0_67 = arith.constant 0 : index
    %c32 = arith.constant 32 : index
    %c0_68 = arith.constant 0 : index
    %69 = vector.load %arg16[%c0_67, %c32, %c0_68] : memref<2x36x40xbf16, #tpu.memory_space<vmem>>, vector<2x1x40xbf16>
    %70 = vector.shape_cast %69 : vector<2x1x40xbf16> to vector<2x40xbf16>
    %c0_69 = arith.constant 0 : index
    %c33 = arith.constant 33 : index
    %c0_70 = arith.constant 0 : index
    %71 = vector.load %arg16[%c0_69, %c33, %c0_70] : memref<2x36x40xbf16, #tpu.memory_space<vmem>>, vector<2x1x40xbf16>
    %72 = vector.shape_cast %71 : vector<2x1x40xbf16> to vector<2x40xbf16>
    %c0_71 = arith.constant 0 : index
    %c34 = arith.constant 34 : index
    %c0_72 = arith.constant 0 : index
    %73 = vector.load %arg16[%c0_71, %c34, %c0_72] : memref<2x36x40xbf16, #tpu.memory_space<vmem>>, vector<2x1x40xbf16>
    %74 = vector.shape_cast %73 : vector<2x1x40xbf16> to vector<2x40xbf16>
    %c0_73 = arith.constant 0 : index
    %c35 = arith.constant 35 : index
    %c0_74 = arith.constant 0 : index
    %75 = vector.load %arg16[%c0_73, %c35, %c0_74] : memref<2x36x40xbf16, #tpu.memory_space<vmem>>, vector<2x1x40xbf16>
    %76 = vector.shape_cast %75 : vector<2x1x40xbf16> to vector<2x40xbf16>
    %77 = tpu.concatenate %6, %8, %10, %12, %14, %16, %18, %20, %22, %24, %26, %28, %30, %32, %34, %36 in 1 : vector<2x40xbf16>, vector<2x40xbf16>, vector<2x40xbf16>, vector<2x40xbf16>, vector<2x40xbf16>, vector<2x40xbf16>, vector<2x40xbf16>, vector<2x40xbf16>, vector<2x40xbf16>, vector<2x40xbf16>, vector<2x40xbf16>, vector<2x40xbf16>, vector<2x40xbf16>, vector<2x40xbf16>, vector<2x40xbf16>, vector<2x40xbf16> -> vector<2x640xbf16>
    %78 = tpu.concatenate %38, %40, %42, %44, %46, %48, %50, %52, %54, %56, %58, %60, %62, %64, %66, %68 in 1 : vector<2x40xbf16>, vector<2x40xbf16>, vector<2x40xbf16>, vector<2x40xbf16>, vector<2x40xbf16>, vector<2x40xbf16>, vector<2x40xbf16>, vector<2x40xbf16>, vector<2x40xbf16>, vector<2x40xbf16>, vector<2x40xbf16>, vector<2x40xbf16>, vector<2x40xbf16>, vector<2x40xbf16>, vector<2x40xbf16>, vector<2x40xbf16> -> vector<2x640xbf16>
    %79 = tpu.concatenate %70, %72, %74, %76 in 1 : vector<2x40xbf16>, vector<2x40xbf16>, vector<2x40xbf16>, vector<2x40xbf16> -> vector<2x160xbf16>
    %80 = tpu.concatenate %77, %78, %79 in 1 : vector<2x640xbf16>, vector<2x640xbf16>, vector<2x160xbf16> -> vector<2x1440xbf16>
    %c0_75 = arith.constant 0 : index
    %c0_76 = arith.constant 0 : index
    %81 = vector.load %arg9[%c0_75, %c0_76] : memref<1440x1024xbf16, #tpu.memory_space<vmem>>, vector<1440x1024xbf16>
    %cst = arith.constant dense<0.000000e+00> : vector<2x1024xf32>
    %82 = tpu.matmul %80, %81, %cst {dimension_numbers = #tpu.dot_dimension_numbers<[1], [0], [0], [1], [0, 0, 1, 1], [], []>} : vector<2x1440xbf16>, vector<1440x1024xbf16>, vector<2x1024xf32> -> vector<2x1024xf32>
    %c0_77 = arith.constant 0 : index
    %c0_78 = arith.constant 0 : index
    %83 = vector.load %arg10[%c0_77, %c0_78] : memref<1x1024xf32, #tpu.memory_space<vmem>>, vector<1x1024xf32>
    %84 = vector.broadcast %83 : vector<1x1024xf32> to vector<2x1024xf32>
    %85 = arith.addf %82, %84 : vector<2x1024xf32>
    %cst_79 = arith.constant 5.000000e-01 : f32
    %86 = vector.broadcast %cst_79 : f32 to vector<2x1024xf32>
    %87 = arith.mulf %86, %85 : vector<2x1024xf32>
    %88 = arith.mulf %85, %85 : vector<2x1024xf32>
    %89 = arith.mulf %88, %85 : vector<2x1024xf32>
    %cst_80 = arith.constant 4.471500e-02 : f32
    %90 = vector.broadcast %cst_80 : f32 to vector<2x1024xf32>
    %91 = arith.mulf %90, %89 : vector<2x1024xf32>
    %92 = arith.addf %85, %91 : vector<2x1024xf32>
    %cst_81 = arith.constant 0.797884583 : f32
    %93 = vector.broadcast %cst_81 : f32 to vector<2x1024xf32>
    %94 = arith.mulf %93, %92 : vector<2x1024xf32>
    %95 = math.tanh %94 : vector<2x1024xf32>
    %cst_82 = arith.constant 1.000000e+00 : f32
    %96 = vector.broadcast %cst_82 : f32 to vector<2x1024xf32>
    %97 = arith.addf %96, %95 : vector<2x1024xf32>
    %98 = arith.mulf %87, %97 : vector<2x1024xf32>
    %99 = arith.truncf %98 : vector<2x1024xf32> to vector<2x1024xbf16>
    %c0_83 = arith.constant 0 : index
    %c0_84 = arith.constant 0 : index
    %100 = vector.load %arg11[%c0_83, %c0_84] : memref<1024x1024xbf16, #tpu.memory_space<vmem>>, vector<1024x1024xbf16>
    %cst_85 = arith.constant dense<0.000000e+00> : vector<2x1024xf32>
    %101 = tpu.matmul %99, %100, %cst_85 {dimension_numbers = #tpu.dot_dimension_numbers<[1], [0], [0], [1], [0, 0, 1, 1], [], []>} : vector<2x1024xbf16>, vector<1024x1024xbf16>, vector<2x1024xf32> -> vector<2x1024xf32>
    %c0_86 = arith.constant 0 : index
    %c0_87 = arith.constant 0 : index
    %102 = vector.load %arg12[%c0_86, %c0_87] : memref<1x1024xf32, #tpu.memory_space<vmem>>, vector<1x1024xf32>
    %103 = vector.broadcast %102 : vector<1x1024xf32> to vector<2x1024xf32>
    %104 = arith.addf %101, %103 : vector<2x1024xf32>
    %105 = arith.addf %104, %85 : vector<2x1024xf32>
    %cst_88 = arith.constant dense<0.000000e+00> : vector<2xf32>
    %106 = vector.multi_reduction <add>, %105, %cst_88 [1] : vector<2x1024xf32> to vector<2xf32>
    %107 = vector.shape_cast %106 : vector<2xf32> to vector<2x1xf32>
    %cst_89 = arith.constant 1.024000e+03 : f32
    %108 = vector.broadcast %cst_89 : f32 to vector<2x1xf32>
    %109 = arith.divf %107, %108 : vector<2x1xf32>
    %110 = arith.mulf %105, %105 : vector<2x1024xf32>
    %cst_90 = arith.constant dense<0.000000e+00> : vector<2xf32>
    %111 = vector.multi_reduction <add>, %110, %cst_90 [1] : vector<2x1024xf32> to vector<2xf32>
    %112 = vector.shape_cast %111 : vector<2xf32> to vector<2x1xf32>
    %cst_91 = arith.constant 1.024000e+03 : f32
    %113 = vector.broadcast %cst_91 : f32 to vector<2x1xf32>
    %114 = arith.divf %112, %113 : vector<2x1xf32>
    %115 = arith.mulf %109, %109 : vector<2x1xf32>
    %116 = arith.subf %114, %115 : vector<2x1xf32>
    %117 = vector.broadcast %109 : vector<2x1xf32> to vector<2x1024xf32>
    %118 = arith.subf %105, %117 : vector<2x1024xf32>
    %cst_92 = arith.constant 9.99999974E-6 : f32
    %119 = vector.broadcast %cst_92 : f32 to vector<2x1xf32>
    %120 = arith.addf %116, %119 : vector<2x1xf32>
    %121 = math.rsqrt %120 : vector<2x1xf32>
    %122 = vector.broadcast %121 : vector<2x1xf32> to vector<2x1024xf32>
    %123 = arith.mulf %118, %122 : vector<2x1024xf32>
    %c0_93 = arith.constant 0 : index
    %c0_94 = arith.constant 0 : index
    %124 = vector.load %arg13[%c0_93, %c0_94] : memref<1x1024xf32, #tpu.memory_space<vmem>>, vector<1x1024xf32>
    %125 = vector.broadcast %124 : vector<1x1024xf32> to vector<2x1024xf32>
    %126 = arith.mulf %123, %125 : vector<2x1024xf32>
    %c0_95 = arith.constant 0 : index
    %c0_96 = arith.constant 0 : index
    %127 = vector.load %arg14[%c0_95, %c0_96] : memref<1x1024xf32, #tpu.memory_space<vmem>>, vector<1x1024xf32>
    %128 = vector.broadcast %127 : vector<1x1024xf32> to vector<2x1024xf32>
    %129 = arith.addf %126, %128 : vector<2x1024xf32>
    %c0_97 = arith.constant 0 : index
    %c0_98 = arith.constant 0 : index
    %130 = vector.load %arg15[%c0_97, %c0_98] : memref<2x1024xf32, #tpu.memory_space<vmem>>, vector<2x1024xf32>
    tpu.vector_store %arg15[%c0_97, %c0_98], %129 {strides = array<i32>} : memref<2x1024xf32, #tpu.memory_space<vmem>>, vector<2x1024xf32>,
    return
  }
  func.func @transform_0(%arg0: i32) -> (i32, i32, i32) {
    %c0_i32 = arith.constant 0 : i32
    %c0_i32_0 = arith.constant 0 : i32
    %c0_i32_1 = arith.constant 0 : i32
    return %arg0, %c0_i32, %c0_i32_0 : i32, i32, i32
  }
  func.func @transform_1(%arg0: i32) -> (i32, i32) {
    %c0_i32 = arith.constant 0 : i32
    %c0_i32_0 = arith.constant 0 : i32
    %c0_i32_1 = arith.constant 0 : i32
    return %c0_i32, %c0_i32_0 : i32, i32
  }
  func.func @transform_2(%arg0: i32) -> (i32, i32) {
    %c0_i32 = arith.constant 0 : i32
    %c0_i32_0 = arith.constant 0 : i32
    %c0_i32_1 = arith.constant 0 : i32
    return %c0_i32, %c0_i32_0 : i32, i32
  }
  func.func @transform_3(%arg0: i32) -> (i32, i32) {
    %c0_i32 = arith.constant 0 : i32
    %c0_i32_0 = arith.constant 0 : i32
    %c0_i32_1 = arith.constant 0 : i32
    return %c0_i32, %c0_i32_0 : i32, i32
  }
  func.func @transform_4(%arg0: i32) -> (i32, i32) {
    %c0_i32 = arith.constant 0 : i32
    %c0_i32_0 = arith.constant 0 : i32
    %c0_i32_1 = arith.constant 0 : i32
    return %c0_i32, %c0_i32_0 : i32, i32
  }
  func.func @transform_5(%arg0: i32) -> (i32, i32) {
    %c0_i32 = arith.constant 0 : i32
    %c0_i32_0 = arith.constant 0 : i32
    %c0_i32_1 = arith.constant 0 : i32
    return %c0_i32, %c0_i32_0 : i32, i32
  }
  func.func @transform_6(%arg0: i32) -> (i32, i32) {
    %c0_i32 = arith.constant 0 : i32
    %c0_i32_0 = arith.constant 0 : i32
    %c0_i32_1 = arith.constant 0 : i32
    return %c0_i32, %c0_i32_0 : i32, i32
  }
  func.func @transform_7(%arg0: i32) -> (i32, i32) {
    %c0_i32 = arith.constant 0 : i32
    %c0_i32_0 = arith.constant 0 : i32
    %c0_i32_1 = arith.constant 0 : i32
    return %c0_i32, %c0_i32_0 : i32, i32
  }
  func.func @transform_8(%arg0: i32) -> (i32, i32) {
    %c0_i32 = arith.constant 0 : i32
    %c0_i32_0 = arith.constant 0 : i32
    %c0_i32_1 = arith.constant 0 : i32
    return %c0_i32, %c0_i32_0 : i32, i32
  }
  func.func @transform_9(%arg0: i32) -> (i32, i32) {
    %c0_i32 = arith.constant 0 : i32
    %c0_i32_0 = arith.constant 0 : i32
    %c0_i32_1 = arith.constant 0 : i32
    return %c0_i32, %c0_i32_0 : i32, i32
  }
  func.func @transform_10(%arg0: i32) -> (i32, i32) {
    %c0_i32 = arith.constant 0 : i32
    %c0_i32_0 = arith.constant 0 : i32
    %c0_i32_1 = arith.constant 0 : i32
    return %c0_i32, %c0_i32_0 : i32, i32
  }
  func.func @transform_11(%arg0: i32) -> (i32, i32) {
    %c0_i32 = arith.constant 0 : i32
    %c0_i32_0 = arith.constant 0 : i32
    %c0_i32_1 = arith.constant 0 : i32
    return %c0_i32, %c0_i32_0 : i32, i32
  }
  func.func @transform_12(%arg0: i32) -> (i32, i32) {
    %c0_i32 = arith.constant 0 : i32
    %c0_i32_0 = arith.constant 0 : i32
    %c0_i32_1 = arith.constant 0 : i32
    return %c0_i32, %c0_i32_0 : i32, i32
  }
  func.func @transform_13(%arg0: i32) -> (i32, i32) {
    %c0_i32 = arith.constant 0 : i32
    %c0_i32_0 = arith.constant 0 : i32
    %c0_i32_1 = arith.constant 0 : i32
    return %c0_i32, %c0_i32_0 : i32, i32
  }
  func.func @transform_14(%arg0: i32) -> (i32, i32) {
    %c0_i32 = arith.constant 0 : i32
    %c0_i32_0 = arith.constant 0 : i32
    return %arg0, %c0_i32 : i32, i32
  }
}

</mosaic_0001>

<llo_original>
// kernel: muse_eeg_forward.1
$region0: #{muse_eeg_forward.1}
  #allocation0 [shape = 'u32[]', space=smem, size = 0x4, offset = 0x4, fixed_abs, tag = 'smem constant byte address 0x4 - core index']
  #allocation1 [shape = 'u32[144,128]{1,0:T(1,128)}', space=vmem, size = 0x12000, scoped, tag = 'internal scratch']
  #allocation2 [shape = 'bf16[2,36,40]{2,1,0:T(8,128)(2,1)}', space=vmem, size = 0x5000, scoped, tag = 'scratch operand']
  %s0 = inlined_call_operand.vmem [shape: f32[2,63,250], index: 0, kind: input, shape index: {}]
  %s1 = inlined_call_operand.vmem [shape: f32[40,63], index: 1, kind: input, shape index: {}]
  %s2 = inlined_call_operand.vmem [shape: f32[40,1], index: 2, kind: input, shape index: {}]
  %s3 = inlined_call_operand.vmem [shape: f32[40,1], index: 3, kind: input, shape index: {}]
  %s4 = inlined_call_operand.vmem [shape: f32[40,1000], index: 4, kind: input, shape index: {}]
  %s5 = inlined_call_operand.vmem [shape: f32[36,226], index: 5, kind: input, shape index: {}]
  %s6 = inlined_call_operand.vmem [shape: f32[1,40], index: 6, kind: input, shape index: {}]
  %s7 = inlined_call_operand.vmem [shape: f32[1,40], index: 7, kind: input, shape index: {}]
  %s8 = inlined_call_operand.vmem [shape: bf16[1440,1024], index: 8, kind: input, shape index: {}]
  %s9 = inlined_call_operand.vmem [shape: f32[1,1024], index: 9, kind: input, shape index: {}]
  %s10 = inlined_call_operand.vmem [shape: bf16[1024,1024], index: 10, kind: input, shape index: {}]
  %s11 = inlined_call_operand.vmem [shape: f32[1,1024], index: 11, kind: input, shape index: {}]
  %s12 = inlined_call_operand.vmem [shape: f32[1,1024], index: 12, kind: input, shape index: {}]
  %s13 = inlined_call_operand.vmem [shape: f32[1,1024], index: 13, kind: input, shape index: {}]
  %s14 = inlined_call_operand.hbm [shape: f32[2,1024], index: 14, kind: output, shape index: {}]
  %s15 = sld [smem:[#allocation0]]
  $region73: #{muse_eeg_forward.1} parent=0
    _
  %s17 = ssub.s32 1, %s15
  %s18 = scalar_select 0, %s17, %s15
  $region1: #{muse_eeg_forward.1} parent=0
    #allocation3 [shape = 'u8[8192]{0}', space=vmem, size = 0x2000, scoped, tag = 'output window, operand 0, single buffered']
    #allocation4 [shape = 's32[1]{0}', space=sflag, size = 0x4, scoped, tag = 'scoped memory for muse_eeg_forward.1']
    %19 = vsyncpa [#allocation4], 0
    // Predicated region
    $region2: #{muse_eeg_forward.1} parent=1 // pred_check
      _
    $region3: #{muse_eeg_forward.1} parent=1 // pred_check_branch
      %21 = sbr.rel (0) target = $region5
    $region4: #{muse_eeg_forward.1} parent=1 // pred_region
      _
    $region5: #{muse_eeg_forward.1} parent=1 // pred_fallthru
      _
    // Predicated region
    $region6: #{muse_eeg_forward.1} parent=1 // pred_check
      _
    $region7: #{muse_eeg_forward.1} parent=1 // pred_check_branch
      %23 = sbr.rel (0) target = $region9
    $region8: #{muse_eeg_forward.1} parent=1 // pred_region
      _
    $region9: #{muse_eeg_forward.1} parent=1 // pred_fallthru
      _
    // Predicated region
    $region10: #{muse_eeg_forward.1} parent=1 // pred_check
      _
    $region11: #{muse_eeg_forward.1} parent=1 // pred_check_branch
      %25 = sbr.rel (0) target = $region13
    $region12: #{muse_eeg_forward.1} parent=1 // pred_region
      _
    $region13: #{muse_eeg_forward.1} parent=1 // pred_fallthru
      _
    // Predicated region
    $region14: #{muse_eeg_forward.1} parent=1 // pred_check
      _
    $region15: #{muse_eeg_forward.1} parent=1 // pred_check_branch
      %27 = sbr.rel (0) target = $region17
    $region16: #{muse_eeg_forward.1} parent=1 // pred_region
      _
    $region17: #{muse_eeg_forward.1} parent=1 // pred_fallthru
      _
    // Predicated region
    $region18: #{muse_eeg_forward.1} parent=1 // pred_check
      _
    $region19: #{muse_eeg_forward.1} parent=1 // pred_check_branch
      %29 = sbr.rel (0) target = $region21
    $region20: #{muse_eeg_forward.1} parent=1 // pred_region
      _
    $region21: #{muse_eeg_forward.1} parent=1 // pred_fallthru
      _
    // Predicated region
    $region22: #{muse_eeg_forward.1} parent=1 // pred_check
      _
    $region23: #{muse_eeg_forward.1} parent=1 // pred_check_branch
      %31 = sbr.rel (0) target = $region25
    $region24: #{muse_eeg_forward.1} parent=1 // pred_region
      _
    $region25: #{muse_eeg_forward.1} parent=1 // pred_fallthru
      _
    // Predicated region
    $region26: #{muse_eeg_forward.1} parent=1 // pred_check
      _
    $region27: #{muse_eeg_forward.1} parent=1 // pred_check_branch
      %33 = sbr.rel (0) target = $region29
    $region28: #{muse_eeg_forward.1} parent=1 // pred_region
      _
    $region29: #{muse_eeg_forward.1} parent=1 // pred_fallthru
      _
    // Predicated region
    $region30: #{muse_eeg_forward.1} parent=1 // pred_check
      _
    $region31: #{muse_eeg_forward.1} parent=1 // pred_check_branch
      %35 = sbr.rel (0) target = $region33
    $region32: #{muse_eeg_forward.1} parent=1 // pred_region
      _
    $region33: #{muse_eeg_forward.1} parent=1 // pred_fallthru
      _
    // Predicated region
    $region34: #{muse_eeg_forward.1} parent=1 // pred_check
      _
    $region35: #{muse_eeg_forward.1} parent=1 // pred_check_branch
      %37 = sbr.rel (0) target = $region37
    $region36: #{muse_eeg_forward.1} parent=1 // pred_region
      _
    $region37: #{muse_eeg_forward.1} parent=1 // pred_fallthru
      _
    // Predicated region
    $region38: #{muse_eeg_forward.1} parent=1 // pred_check
      _
    $region39: #{muse_eeg_forward.1} parent=1 // pred_check_branch
      %39 = sbr.rel (0) target = $region41
    $region40: #{muse_eeg_forward.1} parent=1 // pred_region
      _
    $region41: #{muse_eeg_forward.1} parent=1 // pred_fallthru
      _
    // Predicated region
    $region42: #{muse_eeg_forward.1} parent=1 // pred_check
      _
    $region43: #{muse_eeg_forward.1} parent=1 // pred_check_branch
      %41 = sbr.rel (0) target = $region45
    $region44: #{muse_eeg_forward.1} parent=1 // pred_region
      _
    $region45: #{muse_eeg_forward.1} parent=1 // pred_fallthru
      _
    // Predicated region
    $region46: #{muse_eeg_forward.1} parent=1 // pred_check
      _
    $region47: #{muse_eeg_forward.1} parent=1 // pred_check_branch
      %43 = sbr.rel (0) target = $region49
    $region48: #{muse_eeg_forward.1} parent=1 // pred_region
      _
    $region49: #{muse_eeg_forward.1} parent=1 // pred_fallthru
      _
    // Predicated region
    $region50: #{muse_eeg_forward.1} parent=1 // pred_check
      _
    $region51: #{muse_eeg_forward.1} parent=1 // pred_check_branch
      %45 = sbr.rel (0) target = $region53
    $region52: #{muse_eeg_forward.1} parent=1 // pred_region
      _
    $region53: #{muse_eeg_forward.1} parent=1 // pred_fallthru
      _
    // Predicated region
    $region54: #{muse_eeg_forward.1} parent=1 // pred_check
      _
    $region55: #{muse_eeg_forward.1} parent=1 // pred_check_branch
      %47 = sbr.rel (0) target = $region57
    $region56: #{muse_eeg_forward.1} parent=1 // pred_region
      _
    $region57: #{muse_eeg_forward.1} parent=1 // pred_fallthru
      _
    %s49 = smul.u32 0, 2
    %s50 = ssub.s32 2, %s49
    %p51 = scmp.lt.s32.totalorder %s50, 2
    %s52 = scalar_select %p51, %s50, 2
    // While loop
    $region58: #{muse_eeg_forward.1} parent=1 // loop_pre_header
      _
    $region59: #{muse_eeg_forward.1} parent=1 // loop_header
      %s54 = sphi 0, %s56
      %p55 = scmp.ge.s32.totalorder %s54, %s52
    $region60: #{muse_eeg_forward.1} parent=1 // loop_header_branch
      %58 = sbr.rel (%p55) target = $region64
    $region61: #{muse_eeg_forward.1} parent=1 // loop_body
      %s59 = smul.u32 %s54, 16
      %s60 = smul.addr %s59, 8
      %s61 = scalar_lea.vmem %s0, %s60
      %v62 = vld [vmem:[%s61] sm:$0xff]
      %v63 = vld [vmem:[%s61 + $0x8] sm:$0xff]
      %v64 = vld [vmem:[%s61 + $0x10] sm:$0xff]
      %v65 = vld [vmem:[%s61 + $0x18] sm:$0xff]
      %v66 = vld [vmem:[%s61 + $0x20] sm:$0xff]
      %v67 = vld [vmem:[%s61 + $0x28] sm:$0xff]
      %v68 = vld [vmem:[%s61 + $0x30] sm:$0xff]
      %v69 = vld [vmem:[%s61 + $0x38] sm:$0xff]
      %v70 = vld [vmem:[%s61 + $0x40] sm:$0xff]
      %v71 = vld [vmem:[%s61 + $0x48] sm:$0xff]
      %v72 = vld [vmem:[%s61 + $0x50] sm:$0xff]
      %v73 = vld [vmem:[%s61 + $0x58] sm:$0xff]
      %v74 = vld [vmem:[%s61 + $0x60] sm:$0xff]
      %v75 = vld [vmem:[%s61 + $0x68] sm:$0xff]
      %v76 = vld [vmem:[%s61 + $0x70] sm:$0x7f]
      %v77 = vld [vmem:[%s61 + $0x78] sm:$0x7f]
      %v78 = vld [vmem:[%s1] sm:$0xff]
      %v79 = vld [vmem:[%s1 + $0x8] sm:$0xff]
      %v80 = vld [vmem:[%s1 + $0x10] sm:$0xff]
      %v81 = vld [vmem:[%s1 + $0x18] sm:$0xff]
      %v82 = vld [vmem:[%s1 + $0x20] sm:$0xff]
      %vm83 = vcmask 515072
      %v85 = vsel %vm83, %v78, 0
      %v88 = vsel %vm83, %v79, 0
      %v91 = vsel %vm83, %v80, 0
      %v94 = vsel %vm83, %v81, 0
      %v97 = vsel %vm83, %v82, 0
      %vm99 = vcmask 1046528
      %v101 = vsel %vm99, %v76, 0
      %v104 = vsel %vm99, %v77, 0
      %106 = vmatprep.subr.mxu0 0.0
      %107 = vmatpush1.msra.mxu0 0.0
      %108 = vmatprep.subr.mxu0 0.0
      %109 = vmatpush1.msra.mxu0 0.0
      %110 = vmatprep.subr.mxu0 0.0
      %111 = vmatpush1.msra.mxu0 0.0
      %112 = vmatprep.subr.mxu0 0.0
      %113 = vmatpush1.msra.mxu0 0.0
      %114 = vmatprep.subr.mxu0 0.0
      %115 = vmatpush1.msra.mxu0 0.0
      %116 = vmatprep.subr.mxu0 0.0
      %117 = vmatpush1.msra.mxu0 0.0
      %118 = vmatprep.subr.mxu0 0.0
      %119 = vmatpush1.msra.mxu0 0.0
      %120 = vmatprep.subr.mxu0 0.0
      %121 = vmatpush1.msra.mxu0 0.0
      %122 = vmatprep.subr.mxu0 %v104
      %123 = vmatpush1.msra.mxu0 %v101
      %124 = vmatprep.subr.mxu0 %v75
      %125 = vmatpush1.msra.mxu0 %v74
      %126 = vmatprep.subr.mxu0 %v73
      %127 = vmatpush1.msra.mxu0 %v72
      %128 = vmatprep.subr.mxu0 %v71
      %129 = vmatpush1.msra.mxu0 %v70
      %130 = vmatprep.subr.mxu0 %v69
      %131 = vmatpush1.msra.mxu0 %v68
      %132 = vmatprep.subr.mxu0 %v67
      %133 = vmatpush1.msra.mxu0 %v66
      %134 = vmatprep.subr.mxu0 %v65
      %135 = vmatpush1.msra.mxu0 %v64
      %136 = vmatprep.subr.mxu0 %v63
      %137 = vmatpush1.msra.mxu0 %v62
      %138 = vmatprep.subr.mxu0 0.0
      %139 = vmatpush2.msra.mxu0 0.0
      %140 = vmatprep.subr.mxu0 0.0
      %141 = vmatpush2.msra.mxu0 0.0
      %142 = vmatprep.subr.mxu0 0.0
      %143 = vmatpush2.msra.mxu0 0.0
      %144 = vmatprep.subr.mxu0 0.0
      %145 = vmatpush2.msra.mxu0 0.0
      %146 = vmatprep.subr.mxu0 0.0
      %147 = vmatpush2.msra.mxu0 0.0
      %148 = vmatprep.subr.mxu0 0.0
      %149 = vmatpush2.msra.mxu0 0.0
      %150 = vmatprep.subr.mxu0 0.0
      %151 = vmatpush2.msra.mxu0 0.0
      %152 = vmatprep.subr.mxu0 0.0
      %153 = vmatpush2.msra.mxu0 0.0
      %154 = vmatprep.subr.mxu0 0.0
      %155 = vmatpush2.msra.mxu0 0.0
      %156 = vmatprep.subr.mxu0 0.0
      %157 = vmatpush2.msra.mxu0 0.0
      %158 = vmatprep.subr.mxu0 0.0
      %159 = vmatpush2.msra.mxu0 0.0
      %160 = vmatprep.subr.mxu0 0.0
      %161 = vmatpush2.msra.mxu0 0.0
      %162 = vmatprep.subr.mxu0 0.0
      %163 = vmatpush2.msra.mxu0 0.0
      %164 = vmatprep.subr.mxu0 0.0
      %165 = vmatpush2.msra.mxu0 0.0
      %166 = vmatprep.subr.mxu0 0.0
      %167 = vmatpush2.msra.mxu0 0.0
      %168 = vmatprep.subr.mxu0 0.0
      %169 = vmatpush2.msra.mxu0 0.0
      %170 = vmatprep.mubr.f32.mxu0 0.0
      %171 = vmatmul.mubr.f32.gmra.mxu0 %v85
      %v172 = vpop.f32.mrf.mxu0
      %v173 = vadd.f32 0.0, %v172
      %v174 = vpop.f32.mrf.mxu0
      %v175 = vadd.f32 0.0, %v174
      %176 = vmatprep.mubr.f32.mxu0 0.0
      %177 = vmatmul.mubr.f32.gmra.mxu0 %v88
      %v178 = vpop.f32.mrf.mxu0
      %v179 = vadd.f32 0.0, %v178
      %v180 = vpop.f32.mrf.mxu0
      %v181 = vadd.f32 0.0, %v180
      %182 = vmatprep.mubr.f32.mxu0 0.0
      %183 = vmatmul.mubr.f32.gmra.mxu0 %v91
      %v184 = vpop.f32.mrf.mxu0
      %v185 = vadd.f32 0.0, %v184
      %v186 = vpop.f32.mrf.mxu0
      %v187 = vadd.f32 0.0, %v186
      %188 = vmatprep.mubr.f32.mxu0 0.0
      %189 = vmatmul.mubr.f32.gmra.mxu0 %v94
      %v190 = vpop.f32.mrf.mxu0
      %v191 = vadd.f32 0.0, %v190
      %v192 = vpop.f32.mrf.mxu0
      %v193 = vadd.f32 0.0, %v192
      %194 = vmatprep.mubr.f32.mxu0 0.0
      %195 = vmatmul.mubr.f32.gmra.mxu0 %v97
      %v196 = vpop.f32.mrf.mxu0
      %v197 = vadd.f32 0.0, %v196
      %v198 = vpop.f32.mrf.mxu0
      %v199 = vadd.f32 0.0, %v198
      %200 = vdwg.mxu0
      %v201 = vld [vmem:[%s2] sm:$0xff]
      %v202 = vld [vmem:[%s2 + $0x8] sm:$0xff]
      %v203 = vld [vmem:[%s2 + $0x10] sm:$0xff]
      %v204 = vld [vmem:[%s2 + $0x18] sm:$0xff]
      %v205 = vld [vmem:[%s2 + $0x20] sm:$0xff]
      %207 = vset.pattern.permute.xlu0 0
      %208 = vperm.xlu0 %207, %v201
      %v209 = vpop.permute.xlu0 %208
      %212 = vset.pattern.permute.xlu0 0
      %213 = vperm.xlu0 %212, %v202
      %v214 = vpop.permute.xlu0 %213
      %217 = vset.pattern.permute.xlu0 0
      %218 = vperm.xlu0 %217, %v203
      %v219 = vpop.permute.xlu0 %218
      %222 = vset.pattern.permute.xlu0 0
      %223 = vperm.xlu0 %222, %v204
      %v224 = vpop.permute.xlu0 %223
      %227 = vset.pattern.permute.xlu0 0
      %228 = vperm.xlu0 %227, %v205
      %v229 = vpop.permute.xlu0 %228
      %v231 = vmul.f32 %v173, %v209
      %v232 = vmul.f32 %v175, %v209
      %v233 = vmul.f32 %v179, %v214
      %v234 = vmul.f32 %v181, %v214
      %v235 = vmul.f32 %v185, %v219
      %v236 = vmul.f32 %v187, %v219
      %v237 = vmul.f32 %v191, %v224
      %v238 = vmul.f32 %v193, %v224
      %v239 = vmul.f32 %v197, %v229
      %v240 = vmul.f32 %v199, %v229
      %v241 = vld [vmem:[%s3] sm:$0xff]
      %v242 = vld [vmem:[%s3 + $0x8] sm:$0xff]
      %v243 = vld [vmem:[%s3 + $0x10] sm:$0xff]
      %v244 = vld [vmem:[%s3 + $0x18] sm:$0xff]
      %v245 = vld [vmem:[%s3 + $0x20] sm:$0xff]
      %247 = vset.pattern.permute.xlu0 0
      %248 = vperm.xlu0 %247, %v241
      %v249 = vpop.permute.xlu0 %248
      %252 = vset.pattern.permute.xlu0 0
      %253 = vperm.xlu0 %252, %v242
      %v254 = vpop.permute.xlu0 %253
      %257 = vset.pattern.permute.xlu0 0
      %258 = vperm.xlu0 %257, %v243
      %v259 = vpop.permute.xlu0 %258
      %262 = vset.pattern.permute.xlu0 0
      %263 = vperm.xlu0 %262, %v244
      %v264 = vpop.permute.xlu0 %263
      %267 = vset.pattern.permute.xlu0 0
      %268 = vperm.xlu0 %267, %v245
      %v269 = vpop.permute.xlu0 %268
      %v271 = vadd.f32 %v231, %v249
      %v272 = vadd.f32 %v232, %v249
      %v273 = vadd.f32 %v233, %v254
      %v274 = vadd.f32 %v234, %v254
      %v275 = vadd.f32 %v235, %v259
      %v276 = vadd.f32 %v236, %v259
      %v277 = vadd.f32 %v237, %v264
      %v278 = vadd.f32 %v238, %v264
      %v279 = vadd.f32 %v239, %v269
      %v280 = vadd.f32 %v240, %v269
      %vm281 = vcmp.gt.f32.partialorder %v271, 0.0
      %vm282 = vcmp.gt.f32.partialorder %v272, 0.0
      %vm283 = vcmp.gt.f32.partialorder %v273, 0.0
      %vm284 = vcmp.gt.f32.partialorder %v274, 0.0
      %vm285 = vcmp.gt.f32.partialorder %v275, 0.0
      %vm286 = vcmp.gt.f32.partialorder %v276, 0.0
      %vm287 = vcmp.gt.f32.partialorder %v277, 0.0
      %vm288 = vcmp.gt.f32.partialorder %v278, 0.0
      %vm289 = vcmp.gt.f32.partialorder %v279, 0.0
      %vm290 = vcmp.gt.f32.partialorder %v280, 0.0
      %v291 = vmin.f32 %v271, 0.0
      %v292 = vmin.f32 %v272, 0.0
      %v293 = vmin.f32 %v273, 0.0
      %v294 = vmin.f32 %v274, 0.0
      %v295 = vmin.f32 %v275, 0.0
      %v296 = vmin.f32 %v276, 0.0
      %v297 = vmin.f32 %v277, 0.0
      %v298 = vmin.f32 %v278, 0.0
      %v299 = vmin.f32 %v279, 0.0
      %v300 = vmin.f32 %v280, 0.0
      %v301 = vmul.f32 %v291, 1.442695
      %v302 = vpow.pop %v301
      %v303 = vmul.f32 %v292, 1.442695
      %v304 = vpow.pop %v303
      %v305 = vmul.f32 %v293, 1.442695
      %v306 = vpow.pop %v305
      %v307 = vmul.f32 %v294, 1.442695
      %v308 = vpow.pop %v307
      %v309 = vmul.f32 %v295, 1.442695
      %v310 = vpow.pop %v309
      %v311 = vmul.f32 %v296, 1.442695
      %v312 = vpow.pop %v311
      %v313 = vmul.f32 %v297, 1.442695
      %v314 = vpow.pop %v313
      %v315 = vmul.f32 %v298, 1.442695
      %v316 = vpow.pop %v315
      %v317 = vmul.f32 %v299, 1.442695
      %v318 = vpow.pop %v317
      %v319 = vmul.f32 %v300, 1.442695
      %v320 = vpow.pop %v319
      %v321 = vsub.f32 %v302, 1.0
      %v322 = vsub.f32 %v304, 1.0
      %v323 = vsub.f32 %v306, 1.0
      %v324 = vsub.f32 %v308, 1.0
      %v325 = vsub.f32 %v310, 1.0
      %v326 = vsub.f32 %v312, 1.0
      %v327 = vsub.f32 %v314, 1.0
      %v328 = vsub.f32 %v316, 1.0
      %v329 = vsub.f32 %v318, 1.0
      %v330 = vsub.f32 %v320, 1.0
      %v331 = vsel %vm281, %v271, %v321
      %v332 = vsel %vm282, %v272, %v322
      %v333 = vsel %vm283, %v273, %v323
      %v334 = vsel %vm284, %v274, %v324
      %v335 = vsel %vm285, %v275, %v325
      %v336 = vsel %vm286, %v276, %v326
      %v337 = vsel %vm287, %v277, %v327
      %v338 = vsel %vm288, %v278, %v328
      %v339 = vsel %vm289, %v279, %v329
      %v340 = vsel %vm290, %v280, %v330
      %351 = vrot.lane.b32.xlu0 %v331, 127
      %v352 = vpop.permute.xlu0 %351
      %353 = vrot.lane.b32.xlu0 %v332, 127
      %v354 = vpop.permute.xlu0 %353
      %355 = vrot.lane.b32.xlu0 %v333, 127
      %v356 = vpop.permute.xlu0 %355
      %357 = vrot.lane.b32.xlu0 %v334, 127
      %v358 = vpop.permute.xlu0 %357
      %359 = vrot.lane.b32.xlu0 %v335, 127
      %v360 = vpop.permute.xlu0 %359
      %361 = vrot.lane.b32.xlu0 %v336, 127
      %v362 = vpop.permute.xlu0 %361
      %363 = vrot.lane.b32.xlu0 %v337, 127
      %v364 = vpop.permute.xlu0 %363
      %365 = vrot.lane.b32.xlu0 %v338, 127
      %v366 = vpop.permute.xlu0 %365
      %367 = vrot.lane.b32.xlu0 %v339, 127
      %v368 = vpop.permute.xlu0 %367
      %369 = vrot.lane.b32.xlu0 %v340, 127
      %v370 = vpop.permute.xlu0 %369
      %vm371 = vcmask 1039360
      %v372 = vsel %vm371, %v352, %v354
      %v373 = vsel %vm371, %v356, %v358
      %v374 = vsel %vm371, %v360, %v362
      %v375 = vsel %vm371, %v364, %v366
      %v376 = vsel %vm371, %v368, %v370
      %387 = vrot.lane.b32.xlu0 %v331, 126
      %v388 = vpop.permute.xlu0 %387
      %389 = vrot.lane.b32.xlu0 %v332, 126
      %v390 = vpop.permute.xlu0 %389
      %391 = vrot.lane.b32.xlu0 %v333, 126
      %v392 = vpop.permute.xlu0 %391
      %393 = vrot.lane.b32.xlu0 %v334, 126
      %v394 = vpop.permute.xlu0 %393
      %395 = vrot.lane.b32.xlu0 %v335, 126
      %v396 = vpop.permute.xlu0 %395
      %397 = vrot.lane.b32.xlu0 %v336, 126
      %v398 = vpop.permute.xlu0 %397
      %399 = vrot.lane.b32.xlu0 %v337, 126
      %v400 = vpop.permute.xlu0 %399
      %401 = vrot.lane.b32.xlu0 %v338, 126
      %v402 = vpop.permute.xlu0 %401
      %403 = vrot.lane.b32.xlu0 %v339, 126
      %v404 = vpop.permute.xlu0 %403
      %405 = vrot.lane.b32.xlu0 %v340, 126
      %v406 = vpop.permute.xlu0 %405
      %vm407 = vcmask 1031168
      %v408 = vsel %vm407, %v388, %v390
      %v409 = vsel %vm407, %v392, %v394
      %v410 = vsel %vm407, %v396, %v398
      %v411 = vsel %vm407, %v400, %v402
      %v412 = vsel %vm407, %v404, %v406
      %423 = vrot.lane.b32.xlu0 %v331, 125
      %v424 = vpop.permute.xlu0 %423
      %425 = vrot.lane.b32.xlu0 %v332, 125
      %v426 = vpop.permute.xlu0 %425
      %427 = vrot.lane.b32.xlu0 %v333, 125
      %v428 = vpop.permute.xlu0 %427
      %429 = vrot.lane.b32.xlu0 %v334, 125
      %v430 = vpop.permute.xlu0 %429
      %431 = vrot.lane.b32.xlu0 %v335, 125
      %v432 = vpop.permute.xlu0 %431
      %433 = vrot.lane.b32.xlu0 %v336, 125
      %v434 = vpop.permute.xlu0 %433
      %435 = vrot.lane.b32.xlu0 %v337, 125
      %v436 = vpop.permute.xlu0 %435
      %437 = vrot.lane.b32.xlu0 %v338, 125
      %v438 = vpop.permute.xlu0 %437
      %439 = vrot.lane.b32.xlu0 %v339, 125
      %v440 = vpop.permute.xlu0 %439
      %441 = vrot.lane.b32.xlu0 %v340, 125
      %v442 = vpop.permute.xlu0 %441
      %vm443 = vcmask 1022976
      %v444 = vsel %vm443, %v424, %v426
      %v445 = vsel %vm443, %v428, %v430
      %v446 = vsel %vm443, %v432, %v434
      %v447 = vsel %vm443, %v436, %v438
      %v448 = vsel %vm443, %v440, %v442
      %459 = vrot.lane.b32.xlu0 %v331, 124
      %v460 = vpop.permute.xlu0 %459
      %461 = vrot.lane.b32.xlu0 %v332, 124
      %v462 = vpop.permute.xlu0 %461
      %463 = vrot.lane.b32.xlu0 %v333, 124
      %v464 = vpop.permute.xlu0 %463
      %465 = vrot.lane.b32.xlu0 %v334, 124
      %v466 = vpop.permute.xlu0 %465
      %467 = vrot.lane.b32.xlu0 %v335, 124
      %v468 = vpop.permute.xlu0 %467
      %469 = vrot.lane.b32.xlu0 %v336, 124
      %v470 = vpop.permute.xlu0 %469
      %471 = vrot.lane.b32.xlu0 %v337, 124
      %v472 = vpop.permute.xlu0 %471
      %473 = vrot.lane.b32.xlu0 %v338, 124
      %v474 = vpop.permute.xlu0 %473
      %475 = vrot.lane.b32.xlu0 %v339, 124
      %v476 = vpop.permute.xlu0 %475
      %477 = vrot.lane.b32.xlu0 %v340, 124
      %v478 = vpop.permute.xlu0 %477
      %vm479 = vcmask 1014784
      %v480 = vsel %vm479, %v460, %v462
      %v481 = vsel %vm479, %v464, %v466
      %v482 = vsel %vm479, %v468, %v470
      %v483 = vsel %vm479, %v472, %v474
      %v484 = vsel %vm479, %v476, %v478
      %495 = vrot.lane.b32.xlu0 %v331, 123
      %v496 = vpop.permute.xlu0 %495
      %497 = vrot.lane.b32.xlu0 %v332, 123
      %v498 = vpop.permute.xlu0 %497
      %499 = vrot.lane.b32.xlu0 %v333, 123
      %v500 = vpop.permute.xlu0 %499
      %501 = vrot.lane.b32.xlu0 %v334, 123
      %v502 = vpop.permute.xlu0 %501
      %503 = vrot.lane.b32.xlu0 %v335, 123
      %v504 = vpop.permute.xlu0 %503
      %505 = vrot.lane.b32.xlu0 %v336, 123
      %v506 = vpop.permute.xlu0 %505
      %507 = vrot.lane.b32.xlu0 %v337, 123
      %v508 = vpop.permute.xlu0 %507
      %509 = vrot.lane.b32.xlu0 %v338, 123
      %v510 = vpop.permute.xlu0 %509
      %511 = vrot.lane.b32.xlu0 %v339, 123
      %v512 = vpop.permute.xlu0 %511
      %513 = vrot.lane.b32.xlu0 %v340, 123
      %v514 = vpop.permute.xlu0 %513
      %vm515 = vcmask 1006592
      %v516 = vsel %vm515, %v496, %v498
      %v517 = vsel %vm515, %v500, %v502
      %v518 = vsel %vm515, %v504, %v506
      %v519 = vsel %vm515, %v508, %v510
      %v520 = vsel %vm515, %v512, %v514
      %531 = vrot.lane.b32.xlu0 %v331, 122
      %v532 = vpop.permute.xlu0 %531
      %533 = vrot.lane.b32.xlu0 %v332, 122
      %v534 = vpop.permute.xlu0 %533
      %535 = vrot.lane.b32.xlu0 %v333, 122
      %v536 = vpop.permute.xlu0 %535
      %537 = vrot.lane.b32.xlu0 %v334, 122
      %v538 = vpop.permute.xlu0 %537
      %539 = vrot.lane.b32.xlu0 %v335, 122
      %v540 = vpop.permute.xlu0 %539
      %541 = vrot.lane.b32.xlu0 %v336, 122
      %v542 = vpop.permute.xlu0 %541
      %543 = vrot.lane.b32.xlu0 %v337, 122
      %v544 = vpop.permute.xlu0 %543
      %545 = vrot.lane.b32.xlu0 %v338, 122
      %v546 = vpop.permute.xlu0 %545
      %547 = vrot.lane.b32.xlu0 %v339, 122
      %v548 = vpop.permute.xlu0 %547
      %549 = vrot.lane.b32.xlu0 %v340, 122
      %v550 = vpop.permute.xlu0 %549
      %vm551 = vcmask 998400
      %v552 = vsel %vm551, %v532, %v534
      %v553 = vsel %vm551, %v536, %v538
      %v554 = vsel %vm551, %v540, %v542
      %v555 = vsel %vm551, %v544, %v546
      %v556 = vsel %vm551, %v548, %v550
      %567 = vrot.lane.b32.xlu0 %v331, 121
      %v568 = vpop.permute.xlu0 %567
      %569 = vrot.lane.b32.xlu0 %v332, 121
      %v570 = vpop.permute.xlu0 %569
      %571 = vrot.lane.b32.xlu0 %v333, 121
      %v572 = vpop.permute.xlu0 %571
      %573 = vrot.lane.b32.xlu0 %v334, 121
      %v574 = vpop.permute.xlu0 %573
      %575 = vrot.lane.b32.xlu0 %v335, 121
      %v576 = vpop.permute.xlu0 %575
      %577 = vrot.lane.b32.xlu0 %v336, 121
      %v578 = vpop.permute.xlu0 %577
      %579 = vrot.lane.b32.xlu0 %v337, 121
      %v580 = vpop.permute.xlu0 %579
      %581 = vrot.lane.b32.xlu0 %v338, 121
      %v582 = vpop.permute.xlu0 %581
      %583 = vrot.lane.b32.xlu0 %v339, 121
      %v584 = vpop.permute.xlu0 %583
      %585 = vrot.lane.b32.xlu0 %v340, 121
      %v586 = vpop.permute.xlu0 %585
      %vm587 = vcmask 990208
      %v588 = vsel %vm587, %v568, %v570
      %v589 = vsel %vm587, %v572, %v574
      %v590 = vsel %vm587, %v576, %v578
      %v591 = vsel %vm587, %v580, %v582
      %v592 = vsel %vm587, %v584, %v586
      %603 = vrot.lane.b32.xlu0 %v331, 120
      %v604 = vpop.permute.xlu0 %603
      %605 = vrot.lane.b32.xlu0 %v332, 120
      %v606 = vpop.permute.xlu0 %605
      %607 = vrot.lane.b32.xlu0 %v333, 120
      %v608 = vpop.permute.xlu0 %607
      %609 = vrot.lane.b32.xlu0 %v334, 120
      %v610 = vpop.permute.xlu0 %609
      %611 = vrot.lane.b32.xlu0 %v335, 120
      %v612 = vpop.permute.xlu0 %611
      %613 = vrot.lane.b32.xlu0 %v336, 120
      %v614 = vpop.permute.xlu0 %613
      %615 = vrot.lane.b32.xlu0 %v337, 120
      %v616 = vpop.permute.xlu0 %615
      %617 = vrot.lane.b32.xlu0 %v338, 120
      %v618 = vpop.permute.xlu0 %617
      %619 = vrot.lane.b32.xlu0 %v339, 120
      %v620 = vpop.permute.xlu0 %619
      %621 = vrot.lane.b32.xlu0 %v340, 120
      %v622 = vpop.permute.xlu0 %621
      %vm623 = vcmask 982016
      %v624 = vsel %vm623, %v604, %v606
      %v625 = vsel %vm623, %v608, %v610
      %v626 = vsel %vm623, %v612, %v614
      %v627 = vsel %vm623, %v616, %v618
      %v628 = vsel %vm623, %v620, %v622
      %639 = vrot.lane.b32.xlu0 %v331, 119
      %v640 = vpop.permute.xlu0 %639
      %641 = vrot.lane.b32.xlu0 %v332, 119
      %v642 = vpop.permute.xlu0 %641
      %643 = vrot.lane.b32.xlu0 %v333, 119
      %v644 = vpop.permute.xlu0 %643
      %645 = vrot.lane.b32.xlu0 %v334, 119
      %v646 = vpop.permute.xlu0 %645
      %647 = vrot.lane.b32.xlu0 %v335, 119
      %v648 = vpop.permute.xlu0 %647
      %649 = vrot.lane.b32.xlu0 %v336, 119
      %v650 = vpop.permute.xlu0 %649
      %651 = vrot.lane.b32.xlu0 %v337, 119
      %v652 = vpop.permute.xlu0 %651
      %653 = vrot.lane.b32.xlu0 %v338, 119
      %v654 = vpop.permute.xlu0 %653
      %655 = vrot.lane.b32.xlu0 %v339, 119
      %v656 = vpop.permute.xlu0 %655
      %657 = vrot.lane.b32.xlu0 %v340, 119
      %v658 = vpop.permute.xlu0 %657
      %vm659 = vcmask 973824
      %v660 = vsel %vm659, %v640, %v642
      %v661 = vsel %vm659, %v644, %v646
      %v662 = vsel %vm659, %v648, %v650
      %v663 = vsel %vm659, %v652, %v654
      %v664 = vsel %vm659, %v656, %v658
      %675 = vrot.lane.b32.xlu0 %v331, 118
      %v676 = vpop.permute.xlu0 %675
      %677 = vrot.lane.b32.xlu0 %v332, 118
      %v678 = vpop.permute.xlu0 %677
      %679 = vrot.lane.b32.xlu0 %v333, 118
      %v680 = vpop.permute.xlu0 %679
      %681 = vrot.lane.b32.xlu0 %v334, 118
      %v682 = vpop.permute.xlu0 %681
      %683 = vrot.lane.b32.xlu0 %v335, 118
      %v684 = vpop.permute.xlu0 %683
      %685 = vrot.lane.b32.xlu0 %v336, 118
      %v686 = vpop.permute.xlu0 %685
      %687 = vrot.lane.b32.xlu0 %v337, 118
      %v688 = vpop.permute.xlu0 %687
      %689 = vrot.lane.b32.xlu0 %v338, 118
      %v690 = vpop.permute.xlu0 %689
      %691 = vrot.lane.b32.xlu0 %v339, 118
      %v692 = vpop.permute.xlu0 %691
      %693 = vrot.lane.b32.xlu0 %v340, 118
      %v694 = vpop.permute.xlu0 %693
      %vm695 = vcmask 965632
      %v696 = vsel %vm695, %v676, %v678
      %v697 = vsel %vm695, %v680, %v682
      %v698 = vsel %vm695, %v684, %v686
      %v699 = vsel %vm695, %v688, %v690
      %v700 = vsel %vm695, %v692, %v694
      %711 = vrot.lane.b32.xlu0 %v331, 117
      %v712 = vpop.permute.xlu0 %711
      %713 = vrot.lane.b32.xlu0 %v332, 117
      %v714 = vpop.permute.xlu0 %713
      %715 = vrot.lane.b32.xlu0 %v333, 117
      %v716 = vpop.permute.xlu0 %715
      %717 = vrot.lane.b32.xlu0 %v334, 117
      %v718 = vpop.permute.xlu0 %717
      %719 = vrot.lane.b32.xlu0 %v335, 117
      %v720 = vpop.permute.xlu0 %719
      %721 = vrot.lane.b32.xlu0 %v336, 117
      %v722 = vpop.permute.xlu0 %721
      %723 = vrot.lane.b32.xlu0 %v337, 117
      %v724 = vpop.permute.xlu0 %723
      %725 = vrot.lane.b32.xlu0 %v338, 117
      %v726 = vpop.permute.xlu0 %725
      %727 = vrot.lane.b32.xlu0 %v339, 117
      %v728 = vpop.permute.xlu0 %727
      %729 = vrot.lane.b32.xlu0 %v340, 117
      %v730 = vpop.permute.xlu0 %729
      %vm731 = vcmask 957440
      %v732 = vsel %vm731, %v712, %v714
      %v733 = vsel %vm731, %v716, %v718
      %v734 = vsel %vm731, %v720, %v722
      %v735 = vsel %vm731, %v724, %v726
      %v736 = vsel %vm731, %v728, %v730
      %747 = vrot.lane.b32.xlu0 %v331, 116
      %v748 = vpop.permute.xlu0 %747
      %749 = vrot.lane.b32.xlu0 %v332, 116
      %v750 = vpop.permute.xlu0 %749
      %751 = vrot.lane.b32.xlu0 %v333, 116
      %v752 = vpop.permute.xlu0 %751
      %753 = vrot.lane.b32.xlu0 %v334, 116
      %v754 = vpop.permute.xlu0 %753
      %755 = vrot.lane.b32.xlu0 %v335, 116
      %v756 = vpop.permute.xlu0 %755
      %757 = vrot.lane.b32.xlu0 %v336, 116
      %v758 = vpop.permute.xlu0 %757
      %759 = vrot.lane.b32.xlu0 %v337, 116
      %v760 = vpop.permute.xlu0 %759
      %761 = vrot.lane.b32.xlu0 %v338, 116
      %v762 = vpop.permute.xlu0 %761
      %763 = vrot.lane.b32.xlu0 %v339, 116
      %v764 = vpop.permute.xlu0 %763
      %765 = vrot.lane.b32.xlu0 %v340, 116
      %v766 = vpop.permute.xlu0 %765
      %vm767 = vcmask 949248
      %v768 = vsel %vm767, %v748, %v750
      %v769 = vsel %vm767, %v752, %v754
      %v770 = vsel %vm767, %v756, %v758
      %v771 = vsel %vm767, %v760, %v762
      %v772 = vsel %vm767, %v764, %v766
      %783 = vrot.lane.b32.xlu0 %v331, 115
      %v784 = vpop.permute.xlu0 %783
      %785 = vrot.lane.b32.xlu0 %v332, 115
      %v786 = vpop.permute.xlu0 %785
      %787 = vrot.lane.b32.xlu0 %v333, 115
      %v788 = vpop.permute.xlu0 %787
      %789 = vrot.lane.b32.xlu0 %v334, 115
      %v790 = vpop.permute.xlu0 %789
      %791 = vrot.lane.b32.xlu0 %v335, 115
      %v792 = vpop.permute.xlu0 %791
      %793 = vrot.lane.b32.xlu0 %v336, 115
      %v794 = vpop.permute.xlu0 %793
      %795 = vrot.lane.b32.xlu0 %v337, 115
      %v796 = vpop.permute.xlu0 %795
      %797 = vrot.lane.b32.xlu0 %v338, 115
      %v798 = vpop.permute.xlu0 %797
      %799 = vrot.lane.b32.xlu0 %v339, 115
      %v800 = vpop.permute.xlu0 %799
      %801 = vrot.lane.b32.xlu0 %v340, 115
      %v802 = vpop.permute.xlu0 %801
      %vm803 = vcmask 941056
      %v804 = vsel %vm803, %v784, %v786
      %v805 = vsel %vm803, %v788, %v790
      %v806 = vsel %vm803, %v792, %v794
      %v807 = vsel %vm803, %v796, %v798
      %v808 = vsel %vm803, %v800, %v802
      %819 = vrot.lane.b32.xlu0 %v331, 114
      %v820 = vpop.permute.xlu0 %819
      %821 = vrot.lane.b32.xlu0 %v332, 114
      %v822 = vpop.permute.xlu0 %821
      %823 = vrot.lane.b32.xlu0 %v333, 114
      %v824 = vpop.permute.xlu0 %823
      %825 = vrot.lane.b32.xlu0 %v334, 114
      %v826 = vpop.permute.xlu0 %825
      %827 = vrot.lane.b32.xlu0 %v335, 114
      %v828 = vpop.permute.xlu0 %827
      %829 = vrot.lane.b32.xlu0 %v336, 114
      %v830 = vpop.permute.xlu0 %829
      %831 = vrot.lane.b32.xlu0 %v337, 114
      %v832 = vpop.permute.xlu0 %831
      %833 = vrot.lane.b32.xlu0 %v338, 114
      %v834 = vpop.permute.xlu0 %833
      %835 = vrot.lane.b32.xlu0 %v339, 114
      %v836 = vpop.permute.xlu0 %835
      %837 = vrot.lane.b32.xlu0 %v340, 114
      %v838 = vpop.permute.xlu0 %837
      %vm839 = vcmask 932864
      %v840 = vsel %vm839, %v820, %v822
      %v841 = vsel %vm839, %v824, %v826
      %v842 = vsel %vm839, %v828, %v830
      %v843 = vsel %vm839, %v832, %v834
      %v844 = vsel %vm839, %v836, %v838
      %855 = vrot.lane.b32.xlu0 %v331, 113
      %v856 = vpop.permute.xlu0 %855
      %857 = vrot.lane.b32.xlu0 %v332, 113
      %v858 = vpop.permute.xlu0 %857
      %859 = vrot.lane.b32.xlu0 %v333, 113
      %v860 = vpop.permute.xlu0 %859
      %861 = vrot.lane.b32.xlu0 %v334, 113
      %v862 = vpop.permute.xlu0 %861
      %863 = vrot.lane.b32.xlu0 %v335, 113
      %v864 = vpop.permute.xlu0 %863
      %865 = vrot.lane.b32.xlu0 %v336, 113
      %v866 = vpop.permute.xlu0 %865
      %867 = vrot.lane.b32.xlu0 %v337, 113
      %v868 = vpop.permute.xlu0 %867
      %869 = vrot.lane.b32.xlu0 %v338, 113
      %v870 = vpop.permute.xlu0 %869
      %871 = vrot.lane.b32.xlu0 %v339, 113
      %v872 = vpop.permute.xlu0 %871
      %873 = vrot.lane.b32.xlu0 %v340, 113
      %v874 = vpop.permute.xlu0 %873
      %vm875 = vcmask 924672
      %v876 = vsel %vm875, %v856, %v858
      %v877 = vsel %vm875, %v860, %v862
      %v878 = vsel %vm875, %v864, %v866
      %v879 = vsel %vm875, %v868, %v870
      %v880 = vsel %vm875, %v872, %v874
      %891 = vrot.lane.b32.xlu0 %v331, 112
      %v892 = vpop.permute.xlu0 %891
      %893 = vrot.lane.b32.xlu0 %v332, 112
      %v894 = vpop.permute.xlu0 %893
      %895 = vrot.lane.b32.xlu0 %v333, 112
      %v896 = vpop.permute.xlu0 %895
      %897 = vrot.lane.b32.xlu0 %v334, 112
      %v898 = vpop.permute.xlu0 %897
      %899 = vrot.lane.b32.xlu0 %v335, 112
      %v900 = vpop.permute.xlu0 %899
      %901 = vrot.lane.b32.xlu0 %v336, 112
      %v902 = vpop.permute.xlu0 %901
      %903 = vrot.lane.b32.xlu0 %v337, 112
      %v904 = vpop.permute.xlu0 %903
      %905 = vrot.lane.b32.xlu0 %v338, 112
      %v906 = vpop.permute.xlu0 %905
      %907 = vrot.lane.b32.xlu0 %v339, 112
      %v908 = vpop.permute.xlu0 %907
      %909 = vrot.lane.b32.xlu0 %v340, 112
      %v910 = vpop.permute.xlu0 %909
      %911 = vrot.lane.b32.xlu0 %v372, 112
      %v912 = vpop.permute.xlu0 %911
      %913 = vrot.lane.b32.xlu0 %v354, 112
      %v914 = vpop.permute.xlu0 %913
      %915 = vrot.lane.b32.xlu0 %v373, 112
      %v916 = vpop.permute.xlu0 %915
      %917 = vrot.lane.b32.xlu0 %v358, 112
      %v918 = vpop.permute.xlu0 %917
      %919 = vrot.lane.b32.xlu0 %v374, 112
      %v920 = vpop.permute.xlu0 %919
      %921 = vrot.lane.b32.xlu0 %v362, 112
      %v922 = vpop.permute.xlu0 %921
      %923 = vrot.lane.b32.xlu0 %v375, 112
      %v924 = vpop.permute.xlu0 %923
      %925 = vrot.lane.b32.xlu0 %v366, 112
      %v926 = vpop.permute.xlu0 %925
      %927 = vrot.lane.b32.xlu0 %v376, 112
      %v928 = vpop.permute.xlu0 %927
      %929 = vrot.lane.b32.xlu0 %v370, 112
      %v930 = vpop.permute.xlu0 %929
      %931 = vrot.lane.b32.xlu0 %v408, 112
      %v932 = vpop.permute.xlu0 %931
      %933 = vrot.lane.b32.xlu0 %v390, 112
      %v934 = vpop.permute.xlu0 %933
      %935 = vrot.lane.b32.xlu0 %v409, 112
      %v936 = vpop.permute.xlu0 %935
      %937 = vrot.lane.b32.xlu0 %v394, 112
      %v938 = vpop.permute.xlu0 %937
      %939 = vrot.lane.b32.xlu0 %v410, 112
      %v940 = vpop.permute.xlu0 %939
      %941 = vrot.lane.b32.xlu0 %v398, 112
      %v942 = vpop.permute.xlu0 %941
      %943 = vrot.lane.b32.xlu0 %v411, 112
      %v944 = vpop.permute.xlu0 %943
      %945 = vrot.lane.b32.xlu0 %v402, 112
      %v946 = vpop.permute.xlu0 %945
      %947 = vrot.lane.b32.xlu0 %v412, 112
      %v948 = vpop.permute.xlu0 %947
      %949 = vrot.lane.b32.xlu0 %v406, 112
      %v950 = vpop.permute.xlu0 %949
      %951 = vrot.lane.b32.xlu0 %v444, 112
      %v952 = vpop.permute.xlu0 %951
      %953 = vrot.lane.b32.xlu0 %v426, 112
      %v954 = vpop.permute.xlu0 %953
      %955 = vrot.lane.b32.xlu0 %v445, 112
      %v956 = vpop.permute.xlu0 %955
      %957 = vrot.lane.b32.xlu0 %v430, 112
      %v958 = vpop.permute.xlu0 %957
      %959 = vrot.lane.b32.xlu0 %v446, 112
      %v960 = vpop.permute.xlu0 %959
      %961 = vrot.lane.b32.xlu0 %v434, 112
      %v962 = vpop.permute.xlu0 %961
      %963 = vrot.lane.b32.xlu0 %v447, 112
      %v964 = vpop.permute.xlu0 %963
      %965 = vrot.lane.b32.xlu0 %v438, 112
      %v966 = vpop.permute.xlu0 %965
      %967 = vrot.lane.b32.xlu0 %v448, 112
      %v968 = vpop.permute.xlu0 %967
      %969 = vrot.lane.b32.xlu0 %v442, 112
      %v970 = vpop.permute.xlu0 %969
      %971 = vrot.lane.b32.xlu0 %v480, 112
      %v972 = vpop.permute.xlu0 %971
      %973 = vrot.lane.b32.xlu0 %v462, 112
      %v974 = vpop.permute.xlu0 %973
      %975 = vrot.lane.b32.xlu0 %v481, 112
      %v976 = vpop.permute.xlu0 %975
      %977 = vrot.lane.b32.xlu0 %v466, 112
      %v978 = vpop.permute.xlu0 %977
      %979 = vrot.lane.b32.xlu0 %v482, 112
      %v980 = vpop.permute.xlu0 %979
      %981 = vrot.lane.b32.xlu0 %v470, 112
      %v982 = vpop.permute.xlu0 %981
      %983 = vrot.lane.b32.xlu0 %v483, 112
      %v984 = vpop.permute.xlu0 %983
      %985 = vrot.lane.b32.xlu0 %v474, 112
      %v986 = vpop.permute.xlu0 %985
      %987 = vrot.lane.b32.xlu0 %v484, 112
      %v988 = vpop.permute.xlu0 %987
      %989 = vrot.lane.b32.xlu0 %v478, 112
      %v990 = vpop.permute.xlu0 %989
      %991 = vrot.lane.b32.xlu0 %v516, 112
      %v992 = vpop.permute.xlu0 %991
      %993 = vrot.lane.b32.xlu0 %v498, 112
      %v994 = vpop.permute.xlu0 %993
      %995 = vrot.lane.b32.xlu0 %v517, 112
      %v996 = vpop.permute.xlu0 %995
      %997 = vrot.lane.b32.xlu0 %v502, 112
      %v998 = vpop.permute.xlu0 %997
      %999 = vrot.lane.b32.xlu0 %v518, 112
      %v1000 = vpop.permute.xlu0 %999
      %1001 = vrot.lane.b32.xlu0 %v506, 112
      %v1002 = vpop.permute.xlu0 %1001
      %1003 = vrot.lane.b32.xlu0 %v519, 112
      %v1004 = vpop.permute.xlu0 %1003
      %1005 = vrot.lane.b32.xlu0 %v510, 112
      %v1006 = vpop.permute.xlu0 %1005
      %1007 = vrot.lane.b32.xlu0 %v520, 112
      %v1008 = vpop.permute.xlu0 %1007
      %1009 = vrot.lane.b32.xlu0 %v514, 112
      %v1010 = vpop.permute.xlu0 %1009
      %1011 = vrot.lane.b32.xlu0 %v552, 112
      %v1012 = vpop.permute.xlu0 %1011
      %1013 = vrot.lane.b32.xlu0 %v534, 112
      %v1014 = vpop.permute.xlu0 %1013
      %1015 = vrot.lane.b32.xlu0 %v553, 112
      %v1016 = vpop.permute.xlu0 %1015
      %1017 = vrot.lane.b32.xlu0 %v538, 112
      %v1018 = vpop.permute.xlu0 %1017
      %1019 = vrot.lane.b32.xlu0 %v554, 112
      %v1020 = vpop.permute.xlu0 %1019
      %1021 = vrot.lane.b32.xlu0 %v542, 112
      %v1022 = vpop.permute.xlu0 %1021
      %1023 = vrot.lane.b32.xlu0 %v555, 112
      %v1024 = vpop.permute.xlu0 %1023
      %1025 = vrot.lane.b32.xlu0 %v546, 112
      %v1026 = vpop.permute.xlu0 %1025
      %1027 = vrot.lane.b32.xlu0 %v556, 112
      %v1028 = vpop.permute.xlu0 %1027
      %1029 = vrot.lane.b32.xlu0 %v550, 112
      %v1030 = vpop.permute.xlu0 %1029
      %1031 = vrot.lane.b32.xlu0 %v588, 112
      %v1032 = vpop.permute.xlu0 %1031
      %1033 = vrot.lane.b32.xlu0 %v570, 112
      %v1034 = vpop.permute.xlu0 %1033
      %1035 = vrot.lane.b32.xlu0 %v589, 112
      %v1036 = vpop.permute.xlu0 %1035
      %1037 = vrot.lane.b32.xlu0 %v574, 112
      %v1038 = vpop.permute.xlu0 %1037
      %1039 = vrot.lane.b32.xlu0 %v590, 112
      %v1040 = vpop.permute.xlu0 %1039
      %1041 = vrot.lane.b32.xlu0 %v578, 112
      %v1042 = vpop.permute.xlu0 %1041
      %1043 = vrot.lane.b32.xlu0 %v591, 112
      %v1044 = vpop.permute.xlu0 %1043
      %1045 = vrot.lane.b32.xlu0 %v582, 112
      %v1046 = vpop.permute.xlu0 %1045
      %1047 = vrot.lane.b32.xlu0 %v592, 112
      %v1048 = vpop.permute.xlu0 %1047
      %1049 = vrot.lane.b32.xlu0 %v586, 112
      %v1050 = vpop.permute.xlu0 %1049
      %1051 = vrot.lane.b32.xlu0 %v624, 112
      %v1052 = vpop.permute.xlu0 %1051
      %1053 = vrot.lane.b32.xlu0 %v606, 112
      %v1054 = vpop.permute.xlu0 %1053
      %1055 = vrot.lane.b32.xlu0 %v625, 112
      %v1056 = vpop.permute.xlu0 %1055
      %1057 = vrot.lane.b32.xlu0 %v610, 112
      %v1058 = vpop.permute.xlu0 %1057
      %1059 = vrot.lane.b32.xlu0 %v626, 112
      %v1060 = vpop.permute.xlu0 %1059
      %1061 = vrot.lane.b32.xlu0 %v614, 112
      %v1062 = vpop.permute.xlu0 %1061
      %1063 = vrot.lane.b32.xlu0 %v627, 112
      %v1064 = vpop.permute.xlu0 %1063
      %1065 = vrot.lane.b32.xlu0 %v618, 112
      %v1066 = vpop.permute.xlu0 %1065
      %1067 = vrot.lane.b32.xlu0 %v628, 112
      %v1068 = vpop.permute.xlu0 %1067
      %1069 = vrot.lane.b32.xlu0 %v622, 112
      %v1070 = vpop.permute.xlu0 %1069
      %vm1071 = vcmask 916480
      %v1072 = vsel %vm1071, %v892, %v894
      %v1073 = vsel %vm1071, %v896, %v898
      %v1074 = vsel %vm1071, %v900, %v902
      %v1075 = vsel %vm1071, %v904, %v906
      %v1076 = vsel %vm1071, %v908, %v910
      %v1077 = vsel %vm1071, %v912, %v914
      %v1078 = vsel %vm1071, %v916, %v918
      %v1079 = vsel %vm1071, %v920, %v922
      %v1080 = vsel %vm1071, %v924, %v926
      %v1081 = vsel %vm1071, %v928, %v930
      %v1082 = vsel %vm1071, %v932, %v934
      %v1083 = vsel %vm1071, %v936, %v938
      %v1084 = vsel %vm1071, %v940, %v942
      %v1085 = vsel %vm1071, %v944, %v946
      %v1086 = vsel %vm1071, %v948, %v950
      %v1087 = vsel %vm1071, %v952, %v954
      %v1088 = vsel %vm1071, %v956, %v958
      %v1089 = vsel %vm1071, %v960, %v962
      %v1090 = vsel %vm1071, %v964, %v966
      %v1091 = vsel %vm1071, %v968, %v970
      %v1092 = vsel %vm1071, %v972, %v974
      %v1093 = vsel %vm1071, %v976, %v978
      %v1094 = vsel %vm1071, %v980, %v982
      %v1095 = vsel %vm1071, %v984, %v986
      %v1096 = vsel %vm1071, %v988, %v990
      %v1097 = vsel %vm1071, %v992, %v994
      %v1098 = vsel %vm1071, %v996, %v998
      %v1099 = vsel %vm1071, %v1000, %v1002
      %v1100 = vsel %vm1071, %v1004, %v1006
      %v1101 = vsel %vm1071, %v1008, %v1010
      %v1102 = vsel %vm1071, %v1012, %v1014
      %v1103 = vsel %vm1071, %v1016, %v1018
      %v1104 = vsel %vm1071, %v1020, %v1022
      %v1105 = vsel %vm1071, %v1024, %v1026
      %v1106 = vsel %vm1071, %v1028, %v1030
      %v1107 = vsel %vm1071, %v1032, %v1034
      %v1108 = vsel %vm1071, %v1036, %v1038
      %v1109 = vsel %vm1071, %v1040, %v1042
      %v1110 = vsel %vm1071, %v1044, %v1046
      %v1111 = vsel %vm1071, %v1048, %v1050
      %v1112 = vsel %vm1071, %v1052, %v1054
      %v1113 = vsel %vm1071, %v1056, %v1058
      %v1114 = vsel %vm1071, %v1060, %v1062
      %v1115 = vsel %vm1071, %v1064, %v1066
      %v1116 = vsel %vm1071, %v1068, %v1070
      %v1207 = vld [vmem:[%s4] sm:$0xff]
      %v1208 = vld [vmem:[%s4 + $0x8] sm:$0xff]
      %v1209 = vld [vmem:[%s4 + $0x10] sm:$0xff]
      %v1210 = vld [vmem:[%s4 + $0x18] sm:$0xff]
      %v1211 = vld [vmem:[%s4 + $0x20] sm:$0xff]
      %v1212 = vld [vmem:[%s4 + $0x28] sm:$0xff]
      %v1213 = vld [vmem:[%s4 + $0x30] sm:$0xff]
      %v1214 = vld [vmem:[%s4 + $0x38] sm:$0xff]
      %v1215 = vld [vmem:[%s4 + $0x40] sm:$0xff]
      %v1216 = vld [vmem:[%s4 + $0x48] sm:$0xff]
      %v1217 = vld [vmem:[%s4 + $0x50] sm:$0xff]
      %v1218 = vld [vmem:[%s4 + $0x58] sm:$0xff]
      %v1219 = vld [vmem:[%s4 + $0x60] sm:$0xff]
      %v1220 = vld [vmem:[%s4 + $0x68] sm:$0xff]
      %v1221 = vld [vmem:[%s4 + $0x70] sm:$0xff]
      %v1222 = vld [vmem:[%s4 + $0x78] sm:$0xff]
      %v1223 = vld [vmem:[%s4 + $0x80] sm:$0xff]
      %v1224 = vld [vmem:[%s4 + $0x88] sm:$0xff]
      %v1225 = vld [vmem:[%s4 + $0x90] sm:$0xff]
      %v1226 = vld [vmem:[%s4 + $0x98] sm:$0xff]
      %v1227 = vld [vmem:[%s4 + $0xa0] sm:$0xff]
      %v1228 = vld [vmem:[%s4 + $0xa8] sm:$0xff]
      %v1229 = vld [vmem:[%s4 + $0xb0] sm:$0xff]
      %v1230 = vld [vmem:[%s4 + $0xb8] sm:$0xff]
      %v1231 = vld [vmem:[%s4 + $0xc0] sm:$0xff]
      %v1232 = vld [vmem:[%s4 + $0xc8] sm:$0xff]
      %v1233 = vld [vmem:[%s4 + $0xd0] sm:$0xff]
      %v1234 = vld [vmem:[%s4 + $0xd8] sm:$0xff]
      %v1235 = vld [vmem:[%s4 + $0xe0] sm:$0xff]
      %v1236 = vld [vmem:[%s4 + $0xe8] sm:$0xff]
      %v1237 = vld [vmem:[%s4 + $0xf0] sm:$0xff]
      %v1238 = vld [vmem:[%s4 + $0xf8] sm:$0xff]
      %v1239 = vld [vmem:[%s4 + $0x100] sm:$0xff]
      %v1240 = vld [vmem:[%s4 + $0x108] sm:$0xff]
      %v1241 = vld [vmem:[%s4 + $0x110] sm:$0xff]
      %v1242 = vld [vmem:[%s4 + $0x118] sm:$0xff]
      %v1243 = vld [vmem:[%s4 + $0x120] sm:$0xff]
      %v1244 = vld [vmem:[%s4 + $0x128] sm:$0xff]
      %v1245 = vld [vmem:[%s4 + $0x130] sm:$0xff]
      %v1246 = vld [vmem:[%s4 + $0x138] sm:$0xff]
      %vm1247 = vcmask 850944
      %v1249 = vsel %vm1247, %v1214, 0
      %v1252 = vsel %vm1247, %v1222, 0
      %v1255 = vsel %vm1247, %v1230, 0
      %v1258 = vsel %vm1247, %v1238, 0
      %v1261 = vsel %vm1247, %v1246, 0
      %1263 = vmatprep.subr.mxu0 %v426
      %1264 = vmatpush1.msra.mxu0 %v444
      %1265 = vmatprep.subr.mxu0 %v406
      %1266 = vmatpush1.msra.mxu0 %v412
      %1267 = vmatprep.subr.mxu0 %v402
      %1268 = vmatpush1.msra.mxu0 %v411
      %1269 = vmatprep.subr.mxu0 %v398
      %1270 = vmatpush1.msra.mxu0 %v410
      %1271 = vmatprep.subr.mxu0 %v394
      %1272 = vmatpush1.msra.mxu0 %v409
      %1273 = vmatprep.subr.mxu0 %v390
      %1274 = vmatpush1.msra.mxu0 %v408
      %1275 = vmatprep.subr.mxu0 %v370
      %1276 = vmatpush1.msra.mxu0 %v376
      %1277 = vmatprep.subr.mxu0 %v366
      %1278 = vmatpush1.msra.mxu0 %v375
      %1279 = vmatprep.subr.mxu0 %v362
      %1280 = vmatpush1.msra.mxu0 %v374
      %1281 = vmatprep.subr.mxu0 %v358
      %1282 = vmatpush1.msra.mxu0 %v373
      %1283 = vmatprep.subr.mxu0 %v354
      %1284 = vmatpush1.msra.mxu0 %v372
      %1285 = vmatprep.subr.mxu0 %v340
      %1286 = vmatpush1.msra.mxu0 %v339
      %1287 = vmatprep.subr.mxu0 %v338
      %1288 = vmatpush1.msra.mxu0 %v337
      %1289 = vmatprep.subr.mxu0 %v336
      %1290 = vmatpush1.msra.mxu0 %v335
      %1291 = vmatprep.subr.mxu0 %v334
      %1292 = vmatpush1.msra.mxu0 %v333
      %1293 = vmatprep.subr.mxu0 %v332
      %1294 = vmatpush1.msra.mxu0 %v331
      %1295 = vmatprep.subr.mxu0 %v538
      %1296 = vmatpush2.msra.mxu0 %v553
      %1297 = vmatprep.subr.mxu0 %v534
      %1298 = vmatpush2.msra.mxu0 %v552
      %1299 = vmatprep.subr.mxu0 %v514
      %1300 = vmatpush2.msra.mxu0 %v520
      %1301 = vmatprep.subr.mxu0 %v510
      %1302 = vmatpush2.msra.mxu0 %v519
      %1303 = vmatprep.subr.mxu0 %v506
      %1304 = vmatpush2.msra.mxu0 %v518
      %1305 = vmatprep.subr.mxu0 %v502
      %1306 = vmatpush2.msra.mxu0 %v517
      %1307 = vmatprep.subr.mxu0 %v498
      %1308 = vmatpush2.msra.mxu0 %v516
      %1309 = vmatprep.subr.mxu0 %v478
      %1310 = vmatpush2.msra.mxu0 %v484
      %1311 = vmatprep.subr.mxu0 %v474
      %1312 = vmatpush2.msra.mxu0 %v483
      %1313 = vmatprep.subr.mxu0 %v470
      %1314 = vmatpush2.msra.mxu0 %v482
      %1315 = vmatprep.subr.mxu0 %v466
      %1316 = vmatpush2.msra.mxu0 %v481
      %1317 = vmatprep.subr.mxu0 %v462
      %1318 = vmatpush2.msra.mxu0 %v480
      %1319 = vmatprep.subr.mxu0 %v442
      %1320 = vmatpush2.msra.mxu0 %v448
      %1321 = vmatprep.subr.mxu0 %v438
      %1322 = vmatpush2.msra.mxu0 %v447
      %1323 = vmatprep.subr.mxu0 %v434
      %1324 = vmatpush2.msra.mxu0 %v446
      %1325 = vmatprep.subr.mxu0 %v430
      %1326 = vmatpush2.msra.mxu0 %v445
      %1327 = vmatprep.mubr.f32.mxu0 %v1208
      %1328 = vmatmul.mubr.f32.gmra.mxu0 %v1207
      %v1329 = vpop.f32.mrf.mxu0
      %v1330 = vadd.f32 0.0, %v1329
      %v1331 = vpop.f32.mrf.mxu0
      %v1332 = vadd.f32 0.0, %v1331
      %1333 = vmatprep.mubr.f32.mxu0 %v1216
      %1334 = vmatmul.mubr.f32.gmra.mxu0 %v1215
      %v1335 = vpop.f32.mrf.mxu0
      %v1336 = vadd.f32 0.0, %v1335
      %v1337 = vpop.f32.mrf.mxu0
      %v1338 = vadd.f32 0.0, %v1337
      %1339 = vmatprep.mubr.f32.mxu0 %v1224
      %1340 = vmatmul.mubr.f32.gmra.mxu0 %v1223
      %v1341 = vpop.f32.mrf.mxu0
      %v1342 = vadd.f32 0.0, %v1341
      %v1343 = vpop.f32.mrf.mxu0
      %v1344 = vadd.f32 0.0, %v1343
      %1345 = vmatprep.mubr.f32.mxu0 %v1232
      %1346 = vmatmul.mubr.f32.gmra.mxu0 %v1231
      %v1347 = vpop.f32.mrf.mxu0
      %v1348 = vadd.f32 0.0, %v1347
      %v1349 = vpop.f32.mrf.mxu0
      %v1350 = vadd.f32 0.0, %v1349
      %1351 = vmatprep.mubr.f32.mxu0 %v1240
      %1352 = vmatmul.mubr.f32.gmra.mxu0 %v1239
      %v1353 = vpop.f32.mrf.mxu0
      %v1354 = vadd.f32 0.0, %v1353
      %v1355 = vpop.f32.mrf.mxu0
      %v1356 = vadd.f32 0.0, %v1355
      %1357 = vdwg.mxu0
      %1358 = vmatprep.subr.mxu0 %v650
      %1359 = vmatpush1.msra.mxu0 %v662
      %1360 = vmatprep.subr.mxu0 %v646
      %1361 = vmatpush1.msra.mxu0 %v661
      %1362 = vmatprep.subr.mxu0 %v642
      %1363 = vmatpush1.msra.mxu0 %v660
      %1364 = vmatprep.subr.mxu0 %v622
      %1365 = vmatpush1.msra.mxu0 %v628
      %1366 = vmatprep.subr.mxu0 %v618
      %1367 = vmatpush1.msra.mxu0 %v627
      %1368 = vmatprep.subr.mxu0 %v614
      %1369 = vmatpush1.msra.mxu0 %v626
      %1370 = vmatprep.subr.mxu0 %v610
      %1371 = vmatpush1.msra.mxu0 %v625
      %1372 = vmatprep.subr.mxu0 %v606
      %1373 = vmatpush1.msra.mxu0 %v624
      %1374 = vmatprep.subr.mxu0 %v586
      %1375 = vmatpush1.msra.mxu0 %v592
      %1376 = vmatprep.subr.mxu0 %v582
      %1377 = vmatpush1.msra.mxu0 %v591
      %1378 = vmatprep.subr.mxu0 %v578
      %1379 = vmatpush1.msra.mxu0 %v590
      %1380 = vmatprep.subr.mxu0 %v574
      %1381 = vmatpush1.msra.mxu0 %v589
      %1382 = vmatprep.subr.mxu0 %v570
      %1383 = vmatpush1.msra.mxu0 %v588
      %1384 = vmatprep.subr.mxu0 %v550
      %1385 = vmatpush1.msra.mxu0 %v556
      %1386 = vmatprep.subr.mxu0 %v546
      %1387 = vmatpush1.msra.mxu0 %v555
      %1388 = vmatprep.subr.mxu0 %v542
      %1389 = vmatpush1.msra.mxu0 %v554
      %1390 = vmatprep.subr.mxu0 %v762
      %1391 = vmatpush2.msra.mxu0 %v771
      %1392 = vmatprep.subr.mxu0 %v758
      %1393 = vmatpush2.msra.mxu0 %v770
      %1394 = vmatprep.subr.mxu0 %v754
      %1395 = vmatpush2.msra.mxu0 %v769
      %1396 = vmatprep.subr.mxu0 %v750
      %1397 = vmatpush2.msra.mxu0 %v768
      %1398 = vmatprep.subr.mxu0 %v730
      %1399 = vmatpush2.msra.mxu0 %v736
      %1400 = vmatprep.subr.mxu0 %v726
      %1401 = vmatpush2.msra.mxu0 %v735
      %1402 = vmatprep.subr.mxu0 %v722
      %1403 = vmatpush2.msra.mxu0 %v734
      %1404 = vmatprep.subr.mxu0 %v718
      %1405 = vmatpush2.msra.mxu0 %v733
      %1406 = vmatprep.subr.mxu0 %v714
      %1407 = vmatpush2.msra.mxu0 %v732
      %1408 = vmatprep.subr.mxu0 %v694
      %1409 = vmatpush2.msra.mxu0 %v700
      %1410 = vmatprep.subr.mxu0 %v690
      %1411 = vmatpush2.msra.mxu0 %v699
      %1412 = vmatprep.subr.mxu0 %v686
      %1413 = vmatpush2.msra.mxu0 %v698
      %1414 = vmatprep.subr.mxu0 %v682
      %1415 = vmatpush2.msra.mxu0 %v697
      %1416 = vmatprep.subr.mxu0 %v678
      %1417 = vmatpush2.msra.mxu0 %v696
      %1418 = vmatprep.subr.mxu0 %v658
      %1419 = vmatpush2.msra.mxu0 %v664
      %1420 = vmatprep.subr.mxu0 %v654
      %1421 = vmatpush2.msra.mxu0 %v663
      %1422 = vmatprep.mubr.f32.mxu0 %v1210
      %1423 = vmatmul.mubr.f32.gmra.mxu0 %v1209
      %v1424 = vpop.f32.mrf.mxu0
      %v1425 = vadd.f32 %v1330, %v1424
      %v1426 = vpop.f32.mrf.mxu0
      %v1427 = vadd.f32 %v1332, %v1426
      %1428 = vmatprep.mubr.f32.mxu0 %v1218
      %1429 = vmatmul.mubr.f32.gmra.mxu0 %v1217
      %v1430 = vpop.f32.mrf.mxu0
      %v1431 = vadd.f32 %v1336, %v1430
      %v1432 = vpop.f32.mrf.mxu0
      %v1433 = vadd.f32 %v1338, %v1432
      %1434 = vmatprep.mubr.f32.mxu0 %v1226
      %1435 = vmatmul.mubr.f32.gmra.mxu0 %v1225
      %v1436 = vpop.f32.mrf.mxu0
      %v1437 = vadd.f32 %v1342, %v1436
      %v1438 = vpop.f32.mrf.mxu0
      %v1439 = vadd.f32 %v1344, %v1438
      %1440 = vmatprep.mubr.f32.mxu0 %v1234
      %1441 = vmatmul.mubr.f32.gmra.mxu0 %v1233
      %v1442 = vpop.f32.mrf.mxu0
      %v1443 = vadd.f32 %v1348, %v1442
      %v1444 = vpop.f32.mrf.mxu0
      %v1445 = vadd.f32 %v1350, %v1444
      %1446 = vmatprep.mubr.f32.mxu0 %v1242
      %1447 = vmatmul.mubr.f32.gmra.mxu0 %v1241
      %v1448 = vpop.f32.mrf.mxu0
      %v1449 = vadd.f32 %v1354, %v1448
      %v1450 = vpop.f32.mrf.mxu0
      %v1451 = vadd.f32 %v1356, %v1450
      %1452 = vdwg.mxu0
      %1453 = vmatprep.subr.mxu0 %v874
      %1454 = vmatpush1.msra.mxu0 %v880
      %1455 = vmatprep.subr.mxu0 %v870
      %1456 = vmatpush1.msra.mxu0 %v879
      %1457 = vmatprep.subr.mxu0 %v866
      %1458 = vmatpush1.msra.mxu0 %v878
      %1459 = vmatprep.subr.mxu0 %v862
      %1460 = vmatpush1.msra.mxu0 %v877
      %1461 = vmatprep.subr.mxu0 %v858
      %1462 = vmatpush1.msra.mxu0 %v876
      %1463 = vmatprep.subr.mxu0 %v838
      %1464 = vmatpush1.msra.mxu0 %v844
      %1465 = vmatprep.subr.mxu0 %v834
      %1466 = vmatpush1.msra.mxu0 %v843
      %1467 = vmatprep.subr.mxu0 %v830
      %1468 = vmatpush1.msra.mxu0 %v842
      %1469 = vmatprep.subr.mxu0 %v826
      %1470 = vmatpush1.msra.mxu0 %v841
      %1471 = vmatprep.subr.mxu0 %v822
      %1472 = vmatpush1.msra.mxu0 %v840
      %1473 = vmatprep.subr.mxu0 %v802
      %1474 = vmatpush1.msra.mxu0 %v808
      %1475 = vmatprep.subr.mxu0 %v798
      %1476 = vmatpush1.msra.mxu0 %v807
      %1477 = vmatprep.subr.mxu0 %v794
      %1478 = vmatpush1.msra.mxu0 %v806
      %1479 = vmatprep.subr.mxu0 %v790
      %1480 = vmatpush1.msra.mxu0 %v805
      %1481 = vmatprep.subr.mxu0 %v786
      %1482 = vmatpush1.msra.mxu0 %v804
      %1483 = vmatprep.subr.mxu0 %v766
      %1484 = vmatpush1.msra.mxu0 %v772
      %1485 = vmatprep.subr.mxu0 %v954
      %1486 = vmatpush2.msra.mxu0 %v1087
      %1487 = vmatprep.subr.mxu0 %v950
      %1488 = vmatpush2.msra.mxu0 %v1086
      %1489 = vmatprep.subr.mxu0 %v946
      %1490 = vmatpush2.msra.mxu0 %v1085
      %1491 = vmatprep.subr.mxu0 %v942
      %1492 = vmatpush2.msra.mxu0 %v1084
      %1493 = vmatprep.subr.mxu0 %v938
      %1494 = vmatpush2.msra.mxu0 %v1083
      %1495 = vmatprep.subr.mxu0 %v934
      %1496 = vmatpush2.msra.mxu0 %v1082
      %1497 = vmatprep.subr.mxu0 %v930
      %1498 = vmatpush2.msra.mxu0 %v1081
      %1499 = vmatprep.subr.mxu0 %v926
      %1500 = vmatpush2.msra.mxu0 %v1080
      %1501 = vmatprep.subr.mxu0 %v922
      %1502 = vmatpush2.msra.mxu0 %v1079
      %1503 = vmatprep.subr.mxu0 %v918
      %1504 = vmatpush2.msra.mxu0 %v1078
      %1505 = vmatprep.subr.mxu0 %v914
      %1506 = vmatpush2.msra.mxu0 %v1077
      %1507 = vmatprep.subr.mxu0 %v910
      %1508 = vmatpush2.msra.mxu0 %v1076
      %1509 = vmatprep.subr.mxu0 %v906
      %1510 = vmatpush2.msra.mxu0 %v1075
      %1511 = vmatprep.subr.mxu0 %v902
      %1512 = vmatpush2.msra.mxu0 %v1074
      %1513 = vmatprep.subr.mxu0 %v898
      %1514 = vmatpush2.msra.mxu0 %v1073
      %1515 = vmatprep.subr.mxu0 %v894
      %1516 = vmatpush2.msra.mxu0 %v1072
      %1517 = vmatprep.mubr.f32.mxu0 %v1212
      %1518 = vmatmul.mubr.f32.gmra.mxu0 %v1211
      %v1519 = vpop.f32.mrf.mxu0
      %v1520 = vadd.f32 %v1425, %v1519
      %v1521 = vpop.f32.mrf.mxu0
      %v1522 = vadd.f32 %v1427, %v1521
      %1523 = vmatprep.mubr.f32.mxu0 %v1220
      %1524 = vmatmul.mubr.f32.gmra.mxu0 %v1219
      %v1525 = vpop.f32.mrf.mxu0
      %v1526 = vadd.f32 %v1431, %v1525
      %v1527 = vpop.f32.mrf.mxu0
      %v1528 = vadd.f32 %v1433, %v1527
      %1529 = vmatprep.mubr.f32.mxu0 %v1228
      %1530 = vmatmul.mubr.f32.gmra.mxu0 %v1227
      %v1531 = vpop.f32.mrf.mxu0
      %v1532 = vadd.f32 %v1437, %v1531
      %v1533 = vpop.f32.mrf.mxu0
      %v1534 = vadd.f32 %v1439, %v1533
      %1535 = vmatprep.mubr.f32.mxu0 %v1236
      %1536 = vmatmul.mubr.f32.gmra.mxu0 %v1235
      %v1537 = vpop.f32.mrf.mxu0
      %v1538 = vadd.f32 %v1443, %v1537
      %v1539 = vpop.f32.mrf.mxu0
      %v1540 = vadd.f32 %v1445, %v1539
      %1541 = vmatprep.mubr.f32.mxu0 %v1244
      %1542 = vmatmul.mubr.f32.gmra.mxu0 %v1243
      %v1543 = vpop.f32.mrf.mxu0
      %v1544 = vadd.f32 %v1449, %v1543
      %v1545 = vpop.f32.mrf.mxu0
      %v1546 = vadd.f32 %v1451, %v1545
      %1547 = vdwg.mxu0
      %1548 = vmatprep.subr.mxu0 %v1018
      %1549 = vmatpush1.msra.mxu0 %v1103
      %1550 = vmatprep.subr.mxu0 %v1014
      %1551 = vmatpush1.msra.mxu0 %v1102
      %1552 = vmatprep.subr.mxu0 %v1010
      %1553 = vmatpush1.msra.mxu0 %v1101
      %1554 = vmatprep.subr.mxu0 %v1006
      %1555 = vmatpush1.msra.mxu0 %v1100
      %1556 = vmatprep.subr.mxu0 %v1002
      %1557 = vmatpush1.msra.mxu0 %v1099
      %1558 = vmatprep.subr.mxu0 %v998
      %1559 = vmatpush1.msra.mxu0 %v1098
      %1560 = vmatprep.subr.mxu0 %v994
      %1561 = vmatpush1.msra.mxu0 %v1097
      %1562 = vmatprep.subr.mxu0 %v990
      %1563 = vmatpush1.msra.mxu0 %v1096
      %1564 = vmatprep.subr.mxu0 %v986
      %1565 = vmatpush1.msra.mxu0 %v1095
      %1566 = vmatprep.subr.mxu0 %v982
      %1567 = vmatpush1.msra.mxu0 %v1094
      %1568 = vmatprep.subr.mxu0 %v978
      %1569 = vmatpush1.msra.mxu0 %v1093
      %1570 = vmatprep.subr.mxu0 %v974
      %1571 = vmatpush1.msra.mxu0 %v1092
      %1572 = vmatprep.subr.mxu0 %v970
      %1573 = vmatpush1.msra.mxu0 %v1091
      %1574 = vmatprep.subr.mxu0 %v966
      %1575 = vmatpush1.msra.mxu0 %v1090
      %1576 = vmatprep.subr.mxu0 %v962
      %1577 = vmatpush1.msra.mxu0 %v1089
      %1578 = vmatprep.subr.mxu0 %v958
      %1579 = vmatpush1.msra.mxu0 %v1088
      %1580 = vmatprep.subr.mxu0 0.0
      %1581 = vmatpush2.msra.mxu0 0.0
      %1582 = vmatprep.subr.mxu0 0.0
      %1583 = vmatpush2.msra.mxu0 0.0
      %1584 = vmatprep.subr.mxu0 0.0
      %1585 = vmatpush2.msra.mxu0 0.0
      %1586 = vmatprep.subr.mxu0 %v1070
      %1587 = vmatpush2.msra.mxu0 %v1116
      %1588 = vmatprep.subr.mxu0 %v1066
      %1589 = vmatpush2.msra.mxu0 %v1115
      %1590 = vmatprep.subr.mxu0 %v1062
      %1591 = vmatpush2.msra.mxu0 %v1114
      %1592 = vmatprep.subr.mxu0 %v1058
      %1593 = vmatpush2.msra.mxu0 %v1113
      %1594 = vmatprep.subr.mxu0 %v1054
      %1595 = vmatpush2.msra.mxu0 %v1112
      %1596 = vmatprep.subr.mxu0 %v1050
      %1597 = vmatpush2.msra.mxu0 %v1111
      %1598 = vmatprep.subr.mxu0 %v1046
      %1599 = vmatpush2.msra.mxu0 %v1110
      %1600 = vmatprep.subr.mxu0 %v1042
      %1601 = vmatpush2.msra.mxu0 %v1109
      %1602 = vmatprep.subr.mxu0 %v1038
      %1603 = vmatpush2.msra.mxu0 %v1108
      %1604 = vmatprep.subr.mxu0 %v1034
      %1605 = vmatpush2.msra.mxu0 %v1107
      %1606 = vmatprep.subr.mxu0 %v1030
      %1607 = vmatpush2.msra.mxu0 %v1106
      %1608 = vmatprep.subr.mxu0 %v1026
      %1609 = vmatpush2.msra.mxu0 %v1105
      %1610 = vmatprep.subr.mxu0 %v1022
      %1611 = vmatpush2.msra.mxu0 %v1104
      %1612 = vmatprep.mubr.f32.mxu0 %v1249
      %1613 = vmatmul.mubr.f32.gmra.mxu0 %v1213
      %v1614 = vpop.f32.mrf.mxu0
      %v1615 = vadd.f32 %v1520, %v1614
      %v1616 = vpop.f32.mrf.mxu0
      %v1617 = vadd.f32 %v1522, %v1616
      %1618 = vmatprep.mubr.f32.mxu0 %v1252
      %1619 = vmatmul.mubr.f32.gmra.mxu0 %v1221
      %v1620 = vpop.f32.mrf.mxu0
      %v1621 = vadd.f32 %v1526, %v1620
      %v1622 = vpop.f32.mrf.mxu0
      %v1623 = vadd.f32 %v1528, %v1622
      %1624 = vmatprep.mubr.f32.mxu0 %v1255
      %1625 = vmatmul.mubr.f32.gmra.mxu0 %v1229
      %v1626 = vpop.f32.mrf.mxu0
      %v1627 = vadd.f32 %v1532, %v1626
      %v1628 = vpop.f32.mrf.mxu0
      %v1629 = vadd.f32 %v1534, %v1628
      %1630 = vmatprep.mubr.f32.mxu0 %v1258
      %1631 = vmatmul.mubr.f32.gmra.mxu0 %v1237
      %v1632 = vpop.f32.mrf.mxu0
      %v1633 = vadd.f32 %v1538, %v1632
      %v1634 = vpop.f32.mrf.mxu0
      %v1635 = vadd.f32 %v1540, %v1634
      %1636 = vmatprep.mubr.f32.mxu0 %v1261
      %1637 = vmatmul.mubr.f32.gmra.mxu0 %v1245
      %v1638 = vpop.f32.mrf.mxu0
      %v1639 = vadd.f32 %v1544, %v1638
      %v1640 = vpop.f32.mrf.mxu0
      %v1641 = vadd.f32 %v1546, %v1640
      %1642 = vdwg.mxu0
      %v1643 = vld [vmem:[%s5] sm:$0xff]
      %v1644 = vld [vmem:[%s5 + $0x8] sm:$0xff]
      %v1645 = vld [vmem:[%s5 + $0x10] sm:$0xff]
      %v1646 = vld [vmem:[%s5 + $0x18] sm:$0xff]
      %v1647 = vld [vmem:[%s5 + $0x20] sm:$0xff]
      %v1648 = vld [vmem:[%s5 + $0x28] sm:$0xff]
      %v1649 = vld [vmem:[%s5 + $0x30] sm:$0xff]
      %v1650 = vld [vmem:[%s5 + $0x38] sm:$0xff]
      %v1651 = vld [vmem:[%s5 + $0x40] sm:$0xf]
      %v1652 = vld [vmem:[%s5 + $0x48] sm:$0xf]
      %vm1653 = vcmask 801792
      %v1655 = vsel %vm1653, %v1644, 0
      %v1658 = vsel %vm1653, %v1646, 0
      %v1661 = vsel %vm1653, %v1648, 0
      %v1664 = vsel %vm1653, %v1650, 0
      %v1667 = vsel %vm1653, %v1652, 0
      %v1670 = vsel %vm1653, %v1617, 0
      %v1673 = vsel %vm1653, %v1623, 0
      %v1676 = vsel %vm1653, %v1629, 0
      %v1679 = vsel %vm1653, %v1635, 0
      %v1682 = vsel %vm1653, %v1641, 0
      %1684 = vmatprep.subr.mxu0 0.0
      %1685 = vmatpush1.xpose.msra.mxu0 0.0
      %1686 = vmatprep.subr.mxu0 0.0
      %1687 = vmatpush1.xpose.msra.mxu0 0.0
      %1688 = vmatprep.subr.mxu0 0.0
      %1689 = vmatpush1.xpose.msra.mxu0 0.0
      %1690 = vmatprep.subr.mxu0 0.0
      %1691 = vmatpush1.xpose.msra.mxu0 0.0
      %1692 = vmatprep.subr.mxu0 0.0
      %1693 = vmatpush1.xpose.msra.mxu0 0.0
      %1694 = vmatprep.subr.mxu0 0.0
      %1695 = vmatpush1.xpose.msra.mxu0 0.0
      %1696 = vmatprep.subr.mxu0 0.0
      %1697 = vmatpush1.xpose.msra.mxu0 0.0
      %1698 = vmatprep.subr.mxu0 0.0
      %1699 = vmatpush1.xpose.msra.mxu0 0.0
      %1700 = vmatprep.subr.mxu0 0.0
      %1701 = vmatpush1.xpose.msra.mxu0 0.0
      %1702 = vmatprep.subr.mxu0 0.0
      %1703 = vmatpush1.xpose.msra.mxu0 0.0
      %1704 = vmatprep.subr.mxu0 0.0
      %1705 = vmatpush1.xpose.msra.mxu0 0.0
      %1706 = vmatprep.subr.mxu0 %v1682
      %1707 = vmatpush1.xpose.msra.mxu0 %v1639
      %1708 = vmatprep.subr.mxu0 %v1679
      %1709 = vmatpush1.xpose.msra.mxu0 %v1633
      %1710 = vmatprep.subr.mxu0 %v1676
      %1711 = vmatpush1.xpose.msra.mxu0 %v1627
      %1712 = vmatprep.subr.mxu0 %v1673
      %1713 = vmatpush1.xpose.msra.mxu0 %v1621
      %1714 = vmatprep.subr.mxu0 %v1670
      %1715 = vmatpush1.xpose.msra.mxu0 %v1615
      %1716 = vmatprep.subr.mxu0 0.0
      %1717 = vmatpush2.xpose.msra.mxu0 0.0
      %1718 = vmatprep.subr.mxu0 0.0
      %1719 = vmatpush2.xpose.msra.mxu0 0.0
      %1720 = vmatprep.subr.mxu0 0.0
      %1721 = vmatpush2.xpose.msra.mxu0 0.0
      %1722 = vmatprep.subr.mxu0 0.0
      %1723 = vmatpush2.xpose.msra.mxu0 0.0
      %1724 = vmatprep.subr.mxu0 0.0
      %1725 = vmatpush2.xpose.msra.mxu0 0.0
      %1726 = vmatprep.subr.mxu0 0.0
      %1727 = vmatpush2.xpose.msra.mxu0 0.0
      %1728 = vmatprep.subr.mxu0 0.0
      %1729 = vmatpush2.xpose.msra.mxu0 0.0
      %1730 = vmatprep.subr.mxu0 0.0
      %1731 = vmatpush2.xpose.msra.mxu0 0.0
      %1732 = vmatprep.subr.mxu0 0.0
      %1733 = vmatpush2.xpose.msra.mxu0 0.0
      %1734 = vmatprep.subr.mxu0 0.0
      %1735 = vmatpush2.xpose.msra.mxu0 0.0
      %1736 = vmatprep.subr.mxu0 0.0
      %1737 = vmatpush2.xpose.msra.mxu0 0.0
      %1738 = vmatprep.subr.mxu0 0.0
      %1739 = vmatpush2.xpose.msra.mxu0 0.0
      %1740 = vmatprep.subr.mxu0 0.0
      %1741 = vmatpush2.xpose.msra.mxu0 0.0
      %1742 = vmatprep.subr.mxu0 0.0
      %1743 = vmatpush2.xpose.msra.mxu0 0.0
      %1744 = vmatprep.subr.mxu0 0.0
      %1745 = vmatpush2.xpose.msra.mxu0 0.0
      %1746 = vmatprep.subr.mxu0 0.0
      %1747 = vmatpush2.xpose.msra.mxu0 0.0
      %1748 = vmatprep.mubr.f32.mxu0 %v1655
      %1749 = vmatmul.mubr.f32.gmra.mxu0 %v1643
      %v1750 = vpop.f32.mrf.mxu0
      %v1751 = vadd.f32 0.0, %v1750
      %v1752 = vpop.f32.mrf.mxu0
      %1753 = vmatprep.mubr.f32.mxu0 %v1658
      %1754 = vmatmul.mubr.f32.gmra.mxu0 %v1645
      %v1755 = vpop.f32.mrf.mxu0
      %v1756 = vadd.f32 0.0, %v1755
      %v1757 = vpop.f32.mrf.mxu0
      %1758 = vmatprep.mubr.f32.mxu0 %v1661
      %1759 = vmatmul.mubr.f32.gmra.mxu0 %v1647
      %v1760 = vpop.f32.mrf.mxu0
      %v1761 = vadd.f32 0.0, %v1760
      %v1762 = vpop.f32.mrf.mxu0
      %1763 = vmatprep.mubr.f32.mxu0 %v1664
      %1764 = vmatmul.mubr.f32.gmra.mxu0 %v1649
      %v1765 = vpop.f32.mrf.mxu0
      %v1766 = vadd.f32 0.0, %v1765
      %v1767 = vpop.f32.mrf.mxu0
      %1768 = vmatprep.mubr.f32.mxu0 %v1667
      %1769 = vmatmul.mubr.f32.gmra.mxu0 %v1651
      %v1770 = vpop.f32.mrf.mxu0
      %v1771 = vadd.f32 0.0, %v1770
      %v1772 = vpop.f32.mrf.mxu0
      %1773 = vdwg.mxu0
      %v1774 = vld [vmem:[%s6] sm:$0x1]
      %v1776 = vlaneseq
      %v1777 = vshrl.u32 %v1776, 7
      %v1778 = vsub.s32 0, %v1777
      %v1779 = vrot.slane %v1774, %v1778
      %v1781 = vmul.f32 %v1751, %v1779
      %v1782 = vmul.f32 %v1756, %v1779
      %v1783 = vmul.f32 %v1761, %v1779
      %v1784 = vmul.f32 %v1766, %v1779
      %v1785 = vmul.f32 %v1771, %v1779
      %v1786 = vld [vmem:[%s7] sm:$0x1]
      %v1788 = vlaneseq
      %v1789 = vshrl.u32 %v1788, 7
      %v1790 = vsub.s32 0, %v1789
      %v1791 = vrot.slane %v1786, %v1790
      %v1793 = vadd.f32 %v1781, %v1791
      %v1794 = vadd.f32 %v1782, %v1791
      %v1795 = vadd.f32 %v1783, %v1791
      %v1796 = vadd.f32 %v1784, %v1791
      %v1797 = vadd.f32 %v1785, %v1791
      %vm1798 = vcmp.gt.f32.partialorder %v1793, 0.0
      %vm1799 = vcmp.gt.f32.partialorder %v1794, 0.0
      %vm1800 = vcmp.gt.f32.partialorder %v1795, 0.0
      %vm1801 = vcmp.gt.f32.partialorder %v1796, 0.0
      %vm1802 = vcmp.gt.f32.partialorder %v1797, 0.0
      %v1803 = vmin.f32 %v1793, 0.0
      %v1804 = vmin.f32 %v1794, 0.0
      %v1805 = vmin.f32 %v1795, 0.0
      %v1806 = vmin.f32 %v1796, 0.0
      %v1807 = vmin.f32 %v1797, 0.0
      %v1808 = vmul.f32 %v1803, 1.442695
      %v1809 = vpow.pop %v1808
      %v1810 = vmul.f32 %v1804, 1.442695
      %v1811 = vpow.pop %v1810
      %v1812 = vmul.f32 %v1805, 1.442695
      %v1813 = vpow.pop %v1812
      %v1814 = vmul.f32 %v1806, 1.442695
      %v1815 = vpow.pop %v1814
      %v1816 = vmul.f32 %v1807, 1.442695
      %v1817 = vpow.pop %v1816
      %v1818 = vsub.f32 %v1809, 1.0
      %v1819 = vsub.f32 %v1811, 1.0
      %v1820 = vsub.f32 %v1813, 1.0
      %v1821 = vsub.f32 %v1815, 1.0
      %v1822 = vsub.f32 %v1817, 1.0
      %v1823 = vsel %vm1798, %v1793, %v1818
      %v1824 = vsel %vm1799, %v1794, %v1819
      %v1825 = vsel %vm1800, %v1795, %v1820
      %v1826 = vsel %vm1801, %v1796, %v1821
      %v1827 = vsel %vm1802, %v1797, %v1822
      %v1828 = vpack.c.bf16 %v1824, %v1823
      %v1829 = vpack.c.bf16 %v1826, %v1825
      %v1830 = vpack.c.bf16 %v1827, %v1827
      %v1834 = vunpack.c.l.b16 %v1828
      %v1835 = vunpack.c.h.b16 %v1828
      %v1836 = vunpack.c.l.b16 %v1829
      %v1837 = vunpack.c.h.b16 %v1829
      %v1838 = vunpack.c.l.b16 %v1830
      %v1839 = vpack.c.b16 %v1834, %v1834
      %v1840 = vpack.c.b16 %v1835, %v1835
      %v1841 = vpack.c.b16 %v1836, %v1836
      %v1842 = vpack.c.b16 %v1837, %v1837
      %v1843 = vpack.c.b16 %v1838, %v1838
      %s1849 = smul.u32 %s54, 5
      %s1850 = smul.addr %s1849, 4
      %s1851 = scalar_lea.vmem [#allocation2], %s1850
      %vm1852 = vcmask 322560
      %1853 = vst.msk [vmem:[%s1851] sm:$0xf] %vm1852, %v1839
      %1854 = vst.msk [vmem:[%s1851 + $0x4] sm:$0xf] %vm1852, %v1840
      %1855 = vst.msk [vmem:[%s1851 + $0x8] sm:$0xf] %vm1852, %v1841
      %1856 = vst.msk [vmem:[%s1851 + $0xc] sm:$0xf] %vm1852, %v1842
      %vm1857 = vcmask 320512
      %1858 = vst.msk [vmem:[%s1851 + $0x10] sm:$0x3] %vm1857, %v1843
    $region62: #{muse_eeg_forward.1} parent=1 // loop_footer
      %s56 = sadd.s32 %s54, 1
    $region63: #{muse_eeg_forward.1} parent=1 // loop_footer_branch
      %53 = sbr.rel target = $region59
    $region64: #{muse_eeg_forward.1} parent=1 // loop_exit
      _
    %v1859 = vld [vmem:[#allocation2] sm:$0x1]
    %v1860 = vld [vmem:[#allocation2 + $0x14] sm:$0x1]
    %v1861 = vld [vmem:[#allocation2] sm:$0x2]
    %v1862 = vld [vmem:[#allocation2 + $0x14] sm:$0x2]
    %v1863 = vld [vmem:[#allocation2] sm:$0x4]
    %v1864 = vld [vmem:[#allocation2 + $0x14] sm:$0x4]
    %v1865 = vld [vmem:[#allocation2] sm:$0x8]
    %v1866 = vld [vmem:[#allocation2 + $0x14] sm:$0x8]
    %v1867 = vld [vmem:[#allocation2 + $0x4] sm:$0x1]
    %v1868 = vld [vmem:[#allocation2 + $0x18] sm:$0x1]
    %v1869 = vld [vmem:[#allocation2 + $0x4] sm:$0x2]
    %v1870 = vld [vmem:[#allocation2 + $0x18] sm:$0x2]
    %v1871 = vld [vmem:[#allocation2 + $0x4] sm:$0x4]
    %v1872 = vld [vmem:[#allocation2 + $0x18] sm:$0x4]
    %v1873 = vld [vmem:[#allocation2 + $0x4] sm:$0x8]
    %v1874 = vld [vmem:[#allocation2 + $0x18] sm:$0x8]
    %v1875 = vld [vmem:[#allocation2 + $0x8] sm:$0x1]
    %v1876 = vld [vmem:[#allocation2 + $0x1c] sm:$0x1]
    %v1877 = vld [vmem:[#allocation2 + $0x8] sm:$0x2]
    %v1878 = vld [vmem:[#allocation2 + $0x1c] sm:$0x2]
    %v1879 = vld [vmem:[#allocation2 + $0x8] sm:$0x4]
    %v1880 = vld [vmem:[#allocation2 + $0x1c] sm:$0x4]
    %v1881 = vld [vmem:[#allocation2 + $0x8] sm:$0x8]
    %v1882 = vld [vmem:[#allocation2 + $0x1c] sm:$0x8]
    %v1883 = vld [vmem:[#allocation2 + $0xc] sm:$0x1]
    %v1884 = vld [vmem:[#allocation2 + $0x20] sm:$0x1]
    %v1885 = vld [vmem:[#allocation2 + $0xc] sm:$0x2]
    %v1886 = vld [vmem:[#allocation2 + $0x20] sm:$0x2]
    %v1887 = vld [vmem:[#allocation2 + $0xc] sm:$0x4]
    %v1888 = vld [vmem:[#allocation2 + $0x20] sm:$0x4]
    %v1889 = vld [vmem:[#allocation2 + $0xc] sm:$0x8]
    %v1890 = vld [vmem:[#allocation2 + $0x20] sm:$0x8]
    %v1891 = vld [vmem:[#allocation2 + $0x10] sm:$0x1]
    %v1892 = vld [vmem:[#allocation2 + $0x24] sm:$0x1]
    %v1893 = vld [vmem:[#allocation2 + $0x10] sm:$0x2]
    %v1894 = vld [vmem:[#allocation2 + $0x24] sm:$0x2]
    %v1897 = vunpack.c.l.b16 %v1859
    %v1898 = vunpack.c.l.b16 %v1860
    %v1899 = vpack.c.b16 %v1897, %v1897
    %v1900 = vpack.c.b16 %v1898, %v1898
    %v1901 = vunpack.c.l.b16 %v1899
    %v1902 = vunpack.c.l.b16 %v1900
    %v1903 = vrot.slane %v1902, 7
    %vm1904 = vcmask 1041409
    %v1905 = vsel %vm1904, %v1903, %v1901
    %v1906 = vpack.c.b16 %v1905, %v1905
    %v1907 = vrot.slane %v1901, 1
    %v1908 = vsel %vm1904, %v1902, %v1907
    %v1909 = vpack.c.b16 %v1908, %v1908
    %1910 = vrot.lane.b32.xlu0 %v1909, 40
    %v1911 = vpop.permute.xlu0 %1910
    %v1914 = vunpack.c.l.b16 %v1861
    %v1915 = vunpack.c.l.b16 %v1862
    %v1916 = vpack.c.b16 %v1914, %v1914
    %v1917 = vpack.c.b16 %v1915, %v1915
    %v1918 = vunpack.c.l.b16 %v1916
    %v1919 = vunpack.c.l.b16 %v1917
    %v1920 = vrot.slane %v1918, 2
    %v1921 = vrot.slane %v1919, 1
    %v1922 = vsel %vm1904, %v1921, %v1920
    %v1923 = vpack.c.b16 %v1922, %v1922
    %1924 = vrot.lane.b32.xlu0 %v1923, 80
    %v1925 = vpop.permute.xlu0 %1924
    %v1926 = vrot.slane %v1918, 3
    %v1927 = vrot.slane %v1919, 2
    %v1928 = vsel %vm1904, %v1927, %v1926
    %v1929 = vpack.c.b16 %v1928, %v1928
    %1930 = vrot.lane.b32.xlu0 %v1929, 120
    %v1931 = vpop.permute.xlu0 %1930
    %v1934 = vunpack.c.l.b16 %v1863
    %v1935 = vunpack.c.l.b16 %v1864
    %v1936 = vpack.c.b16 %v1934, %v1934
    %v1937 = vpack.c.b16 %v1935, %v1935
    %v1938 = vunpack.c.l.b16 %v1936
    %v1939 = vunpack.c.l.b16 %v1937
    %v1940 = vrot.slane %v1938, 4
    %v1941 = vrot.slane %v1939, 3
    %v1942 = vsel %vm1904, %v1941, %v1940
    %v1943 = vpack.c.b16 %v1942, %v1942
    %1944 = vrot.lane.b32.xlu0 %v1943, 32
    %v1945 = vpop.permute.xlu0 %1944
    %v1946 = vrot.slane %v1938, 5
    %v1947 = vrot.slane %v1939, 4
    %v1948 = vsel %vm1904, %v1947, %v1946
    %v1949 = vpack.c.b16 %v1948, %v1948
    %1950 = vrot.lane.b32.xlu0 %v1949, 72
    %v1951 = vpop.permute.xlu0 %1950
    %v1954 = vunpack.c.l.b16 %v1865
    %v1955 = vunpack.c.l.b16 %v1866
    %v1956 = vpack.c.b16 %v1954, %v1954
    %v1957 = vpack.c.b16 %v1955, %v1955
    %v1958 = vunpack.c.l.b16 %v1956
    %v1959 = vunpack.c.l.b16 %v1957
    %v1960 = vrot.slane %v1958, 6
    %v1961 = vrot.slane %v1959, 5
    %v1962 = vsel %vm1904, %v1961, %v1960
    %v1963 = vpack.c.b16 %v1962, %v1962
    %1964 = vrot.lane.b32.xlu0 %v1963, 112
    %v1965 = vpop.permute.xlu0 %1964
    %v1966 = vrot.slane %v1958, 7
    %v1967 = vrot.slane %v1959, 6
    %v1968 = vsel %vm1904, %v1967, %v1966
    %v1969 = vpack.c.b16 %v1968, %v1968
    %1970 = vrot.lane.b32.xlu0 %v1969, 24
    %v1971 = vpop.permute.xlu0 %1970
    %v1974 = vunpack.c.l.b16 %v1867
    %v1975 = vunpack.c.l.b16 %v1868
    %v1976 = vpack.c.b16 %v1974, %v1974
    %v1977 = vpack.c.b16 %v1975, %v1975
    %v1978 = vunpack.c.l.b16 %v1976
    %v1979 = vunpack.c.l.b16 %v1977
    %v1980 = vrot.slane %v1979, 7
    %v1981 = vsel %vm1904, %v1980, %v1978
    %v1982 = vpack.c.b16 %v1981, %v1981
    %1983 = vrot.lane.b32.xlu0 %v1982, 64
    %v1984 = vpop.permute.xlu0 %1983
    %v1985 = vrot.slane %v1978, 1
    %v1986 = vsel %vm1904, %v1979, %v1985
    %v1987 = vpack.c.b16 %v1986, %v1986
    %1988 = vrot.lane.b32.xlu0 %v1987, 104
    %v1989 = vpop.permute.xlu0 %1988
    %v1992 = vunpack.c.l.b16 %v1869
    %v1993 = vunpack.c.l.b16 %v1870
    %v1994 = vpack.c.b16 %v1992, %v1992
    %v1995 = vpack.c.b16 %v1993, %v1993
    %v1996 = vunpack.c.l.b16 %v1994
    %v1997 = vunpack.c.l.b16 %v1995
    %v1998 = vrot.slane %v1996, 2
    %v1999 = vrot.slane %v1997, 1
    %v2000 = vsel %vm1904, %v1999, %v1998
    %v2001 = vpack.c.b16 %v2000, %v2000
    %2002 = vrot.lane.b32.xlu0 %v2001, 16
    %v2003 = vpop.permute.xlu0 %2002
    %v2004 = vrot.slane %v1996, 3
    %v2005 = vrot.slane %v1997, 2
    %v2006 = vsel %vm1904, %v2005, %v2004
    %v2007 = vpack.c.b16 %v2006, %v2006
    %2008 = vrot.lane.b32.xlu0 %v2007, 56
    %v2009 = vpop.permute.xlu0 %2008
    %v2012 = vunpack.c.l.b16 %v1871
    %v2013 = vunpack.c.l.b16 %v1872
    %v2014 = vpack.c.b16 %v2012, %v2012
    %v2015 = vpack.c.b16 %v2013, %v2013
    %v2016 = vunpack.c.l.b16 %v2014
    %v2017 = vunpack.c.l.b16 %v2015
    %v2018 = vrot.slane %v2016, 4
    %v2019 = vrot.slane %v2017, 3
    %v2020 = vsel %vm1904, %v2019, %v2018
    %v2021 = vpack.c.b16 %v2020, %v2020
    %2022 = vrot.lane.b32.xlu0 %v2021, 96
    %v2023 = vpop.permute.xlu0 %2022
    %v2024 = vrot.slane %v2016, 5
    %v2025 = vrot.slane %v2017, 4
    %v2026 = vsel %vm1904, %v2025, %v2024
    %v2027 = vpack.c.b16 %v2026, %v2026
    %2028 = vrot.lane.b32.xlu0 %v2027, 8
    %v2029 = vpop.permute.xlu0 %2028
    %v2032 = vunpack.c.l.b16 %v1873
    %v2033 = vunpack.c.l.b16 %v1874
    %v2034 = vpack.c.b16 %v2032, %v2032
    %v2035 = vpack.c.b16 %v2033, %v2033
    %v2036 = vunpack.c.l.b16 %v2034
    %v2037 = vunpack.c.l.b16 %v2035
    %v2038 = vrot.slane %v2036, 6
    %v2039 = vrot.slane %v2037, 5
    %v2040 = vsel %vm1904, %v2039, %v2038
    %v2041 = vpack.c.b16 %v2040, %v2040
    %2042 = vrot.lane.b32.xlu0 %v2041, 48
    %v2043 = vpop.permute.xlu0 %2042
    %v2044 = vrot.slane %v2036, 7
    %v2045 = vrot.slane %v2037, 6
    %v2046 = vsel %vm1904, %v2045, %v2044
    %v2047 = vpack.c.b16 %v2046, %v2046
    %2048 = vrot.lane.b32.xlu0 %v2047, 88
    %v2049 = vpop.permute.xlu0 %2048
    %vm2050 = vcmask 326656
    %v2053 = vsel %vm2050, %v1906, %v1911
    %vm2054 = vcmask 654336
    %v2056 = vsel %vm2054, %v2053, %v1925
    %vm2057 = vcmask 982016
    %v2059 = vsel %vm2057, %v2056, %v1931
    %vm2061 = vcmask 261120
    %v2063 = vsel %vm2061, %v1931, %v1945
    %vm2064 = vcmask 588800
    %v2066 = vsel %vm2064, %v2063, %v1951
    %vm2067 = vcmask 916480
    %v2069 = vsel %vm2067, %v2066, %v1965
    %vm2071 = vcmask 195584
    %v2073 = vsel %vm2071, %v1965, %v1971
    %vm2074 = vcmask 523264
    %v2076 = vsel %vm2074, %v2073, %v1984
    %vm2077 = vcmask 850944
    %v2079 = vsel %vm2077, %v2076, %v1989
    %vm2081 = vcmask 130048
    %v2083 = vsel %vm2081, %v1989, %v2003
    %vm2084 = vcmask 457728
    %v2086 = vsel %vm2084, %v2083, %v2009
    %vm2087 = vcmask 785408
    %v2089 = vsel %vm2087, %v2086, %v2023
    %vm2091 = vcmask 64512
    %v2093 = vsel %vm2091, %v2023, %v2029
    %vm2094 = vcmask 392192
    %v2096 = vsel %vm2094, %v2093, %v2043
    %vm2097 = vcmask 719872
    %v2099 = vsel %vm2097, %v2096, %v2049
    %v2103 = vunpack.c.l.b16 %v1875
    %v2104 = vunpack.c.l.b16 %v1876
    %v2105 = vpack.c.b16 %v2103, %v2103
    %v2106 = vpack.c.b16 %v2104, %v2104
    %v2107 = vunpack.c.l.b16 %v2105
    %v2108 = vunpack.c.l.b16 %v2106
    %v2109 = vrot.slane %v2108, 7
    %v2110 = vsel %vm1904, %v2109, %v2107
    %v2111 = vpack.c.b16 %v2110, %v2110
    %v2112 = vrot.slane %v2107, 1
    %v2113 = vsel %vm1904, %v2108, %v2112
    %v2114 = vpack.c.b16 %v2113, %v2113
    %2115 = vrot.lane.b32.xlu0 %v2114, 40
    %v2116 = vpop.permute.xlu0 %2115
    %v2119 = vunpack.c.l.b16 %v1877
    %v2120 = vunpack.c.l.b16 %v1878
    %v2121 = vpack.c.b16 %v2119, %v2119
    %v2122 = vpack.c.b16 %v2120, %v2120
    %v2123 = vunpack.c.l.b16 %v2121
    %v2124 = vunpack.c.l.b16 %v2122
    %v2125 = vrot.slane %v2123, 2
    %v2126 = vrot.slane %v2124, 1
    %v2127 = vsel %vm1904, %v2126, %v2125
    %v2128 = vpack.c.b16 %v2127, %v2127
    %2129 = vrot.lane.b32.xlu0 %v2128, 80
    %v2130 = vpop.permute.xlu0 %2129
    %v2131 = vrot.slane %v2123, 3
    %v2132 = vrot.slane %v2124, 2
    %v2133 = vsel %vm1904, %v2132, %v2131
    %v2134 = vpack.c.b16 %v2133, %v2133
    %2135 = vrot.lane.b32.xlu0 %v2134, 120
    %v2136 = vpop.permute.xlu0 %2135
    %v2139 = vunpack.c.l.b16 %v1879
    %v2140 = vunpack.c.l.b16 %v1880
    %v2141 = vpack.c.b16 %v2139, %v2139
    %v2142 = vpack.c.b16 %v2140, %v2140
    %v2143 = vunpack.c.l.b16 %v2141
    %v2144 = vunpack.c.l.b16 %v2142
    %v2145 = vrot.slane %v2143, 4
    %v2146 = vrot.slane %v2144, 3
    %v2147 = vsel %vm1904, %v2146, %v2145
    %v2148 = vpack.c.b16 %v2147, %v2147
    %2149 = vrot.lane.b32.xlu0 %v2148, 32
    %v2150 = vpop.permute.xlu0 %2149
    %v2151 = vrot.slane %v2143, 5
    %v2152 = vrot.slane %v2144, 4
    %v2153 = vsel %vm1904, %v2152, %v2151
    %v2154 = vpack.c.b16 %v2153, %v2153
    %2155 = vrot.lane.b32.xlu0 %v2154, 72
    %v2156 = vpop.permute.xlu0 %2155
    %v2159 = vunpack.c.l.b16 %v1881
    %v2160 = vunpack.c.l.b16 %v1882
    %v2161 = vpack.c.b16 %v2159, %v2159
    %v2162 = vpack.c.b16 %v2160, %v2160
    %v2163 = vunpack.c.l.b16 %v2161
    %v2164 = vunpack.c.l.b16 %v2162
    %v2165 = vrot.slane %v2163, 6
    %v2166 = vrot.slane %v2164, 5
    %v2167 = vsel %vm1904, %v2166, %v2165
    %v2168 = vpack.c.b16 %v2167, %v2167
    %2169 = vrot.lane.b32.xlu0 %v2168, 112
    %v2170 = vpop.permute.xlu0 %2169
    %v2171 = vrot.slane %v2163, 7
    %v2172 = vrot.slane %v2164, 6
    %v2173 = vsel %vm1904, %v2172, %v2171
    %v2174 = vpack.c.b16 %v2173, %v2173
    %2175 = vrot.lane.b32.xlu0 %v2174, 24
    %v2176 = vpop.permute.xlu0 %2175
    %v2179 = vunpack.c.l.b16 %v1883
    %v2180 = vunpack.c.l.b16 %v1884
    %v2181 = vpack.c.b16 %v2179, %v2179
    %v2182 = vpack.c.b16 %v2180, %v2180
    %v2183 = vunpack.c.l.b16 %v2181
    %v2184 = vunpack.c.l.b16 %v2182
    %v2185 = vrot.slane %v2184, 7
    %v2186 = vsel %vm1904, %v2185, %v2183
    %v2187 = vpack.c.b16 %v2186, %v2186
    %2188 = vrot.lane.b32.xlu0 %v2187, 64
    %v2189 = vpop.permute.xlu0 %2188
    %v2190 = vrot.slane %v2183, 1
    %v2191 = vsel %vm1904, %v2184, %v2190
    %v2192 = vpack.c.b16 %v2191, %v2191
    %2193 = vrot.lane.b32.xlu0 %v2192, 104
    %v2194 = vpop.permute.xlu0 %2193
    %v2197 = vunpack.c.l.b16 %v1885
    %v2198 = vunpack.c.l.b16 %v1886
    %v2199 = vpack.c.b16 %v2197, %v2197
    %v2200 = vpack.c.b16 %v2198, %v2198
    %v2201 = vunpack.c.l.b16 %v2199
    %v2202 = vunpack.c.l.b16 %v2200
    %v2203 = vrot.slane %v2201, 2
    %v2204 = vrot.slane %v2202, 1
    %v2205 = vsel %vm1904, %v2204, %v2203
    %v2206 = vpack.c.b16 %v2205, %v2205
    %2207 = vrot.lane.b32.xlu0 %v2206, 16
    %v2208 = vpop.permute.xlu0 %2207
    %v2209 = vrot.slane %v2201, 3
    %v2210 = vrot.slane %v2202, 2
    %v2211 = vsel %vm1904, %v2210, %v2209
    %v2212 = vpack.c.b16 %v2211, %v2211
    %2213 = vrot.lane.b32.xlu0 %v2212, 56
    %v2214 = vpop.permute.xlu0 %2213
    %v2217 = vunpack.c.l.b16 %v1887
    %v2218 = vunpack.c.l.b16 %v1888
    %v2219 = vpack.c.b16 %v2217, %v2217
    %v2220 = vpack.c.b16 %v2218, %v2218
    %v2221 = vunpack.c.l.b16 %v2219
    %v2222 = vunpack.c.l.b16 %v2220
    %v2223 = vrot.slane %v2221, 4
    %v2224 = vrot.slane %v2222, 3
    %v2225 = vsel %vm1904, %v2224, %v2223
    %v2226 = vpack.c.b16 %v2225, %v2225
    %2227 = vrot.lane.b32.xlu0 %v2226, 96
    %v2228 = vpop.permute.xlu0 %2227
    %v2229 = vrot.slane %v2221, 5
    %v2230 = vrot.slane %v2222, 4
    %v2231 = vsel %vm1904, %v2230, %v2229
    %v2232 = vpack.c.b16 %v2231, %v2231
    %2233 = vrot.lane.b32.xlu0 %v2232, 8
    %v2234 = vpop.permute.xlu0 %2233
    %v2237 = vunpack.c.l.b16 %v1889
    %v2238 = vunpack.c.l.b16 %v1890
    %v2239 = vpack.c.b16 %v2237, %v2237
    %v2240 = vpack.c.b16 %v2238, %v2238
    %v2241 = vunpack.c.l.b16 %v2239
    %v2242 = vunpack.c.l.b16 %v2240
    %v2243 = vrot.slane %v2241, 6
    %v2244 = vrot.slane %v2242, 5
    %v2245 = vsel %vm1904, %v2244, %v2243
    %v2246 = vpack.c.b16 %v2245, %v2245
    %2247 = vrot.lane.b32.xlu0 %v2246, 48
    %v2248 = vpop.permute.xlu0 %2247
    %v2249 = vrot.slane %v2241, 7
    %v2250 = vrot.slane %v2242, 6
    %v2251 = vsel %vm1904, %v2250, %v2249
    %v2252 = vpack.c.b16 %v2251, %v2251
    %2253 = vrot.lane.b32.xlu0 %v2252, 88
    %v2254 = vpop.permute.xlu0 %2253
    %v2257 = vsel %vm2050, %v2111, %v2116
    %v2259 = vsel %vm2054, %v2257, %v2130
    %v2261 = vsel %vm2057, %v2259, %v2136
    %v2264 = vsel %vm2061, %v2136, %v2150
    %v2266 = vsel %vm2064, %v2264, %v2156
    %v2268 = vsel %vm2067, %v2266, %v2170
    %v2271 = vsel %vm2071, %v2170, %v2176
    %v2273 = vsel %vm2074, %v2271, %v2189
    %v2275 = vsel %vm2077, %v2273, %v2194
    %v2278 = vsel %vm2081, %v2194, %v2208
    %v2280 = vsel %vm2084, %v2278, %v2214
    %v2282 = vsel %vm2087, %v2280, %v2228
    %v2285 = vsel %vm2091, %v2228, %v2234
    %v2287 = vsel %vm2094, %v2285, %v2248
    %v2289 = vsel %vm2097, %v2287, %v2254
    %v2293 = vunpack.c.l.b16 %v1891
    %v2294 = vunpack.c.l.b16 %v1892
    %v2295 = vpack.c.b16 %v2293, %v2293
    %v2296 = vpack.c.b16 %v2294, %v2294
    %v2297 = vunpack.c.l.b16 %v2295
    %v2298 = vunpack.c.l.b16 %v2296
    %v2299 = vrot.slane %v2298, 7
    %v2300 = vsel %vm1904, %v2299, %v2297
    %v2301 = vpack.c.b16 %v2300, %v2300
    %v2302 = vrot.slane %v2297, 1
    %v2303 = vsel %vm1904, %v2298, %v2302
    %v2304 = vpack.c.b16 %v2303, %v2303
    %2305 = vrot.lane.b32.xlu0 %v2304, 40
    %v2306 = vpop.permute.xlu0 %2305
    %v2309 = vunpack.c.l.b16 %v1893
    %v2310 = vunpack.c.l.b16 %v1894
    %v2311 = vpack.c.b16 %v2309, %v2309
    %v2312 = vpack.c.b16 %v2310, %v2310
    %v2313 = vunpack.c.l.b16 %v2311
    %v2314 = vunpack.c.l.b16 %v2312
    %v2315 = vrot.slane %v2313, 2
    %v2316 = vrot.slane %v2314, 1
    %v2317 = vsel %vm1904, %v2316, %v2315
    %v2318 = vpack.c.b16 %v2317, %v2317
    %2319 = vrot.lane.b32.xlu0 %v2318, 80
    %v2320 = vpop.permute.xlu0 %2319
    %v2321 = vrot.slane %v2313, 3
    %v2322 = vrot.slane %v2314, 2
    %v2323 = vsel %vm1904, %v2322, %v2321
    %v2324 = vpack.c.b16 %v2323, %v2323
    %2325 = vrot.lane.b32.xlu0 %v2324, 120
    %v2326 = vpop.permute.xlu0 %2325
    %v2329 = vsel %vm2050, %v2301, %v2306
    %v2331 = vsel %vm2054, %v2329, %v2320
    %v2333 = vsel %vm2057, %v2331, %v2326
    %v2335 = vld [vmem:[%s8] sm:$0xff]
    %v2336 = vld [vmem:[%s8 + $0x8] sm:$0xff]
    %v2337 = vld [vmem:[%s8 + $0x10] sm:$0xff]
    %v2338 = vld [vmem:[%s8 + $0x18] sm:$0xff]
    %v2339 = vld [vmem:[%s8 + $0x20] sm:$0xff]
    %v2340 = vld [vmem:[%s8 + $0x28] sm:$0xff]
    %v2341 = vld [vmem:[%s8 + $0x30] sm:$0xff]
    %v2342 = vld [vmem:[%s8 + $0x38] sm:$0xff]
    %v2343 = vld [vmem:[%s8 + $0x40] sm:$0xff]
    %v2344 = vld [vmem:[%s8 + $0x48] sm:$0xff]
    %v2345 = vld [vmem:[%s8 + $0x50] sm:$0xff]
    %v2346 = vld [vmem:[%s8 + $0x58] sm:$0xff]
    %v2347 = vld [vmem:[%s8 + $0x60] sm:$0xff]
    %v2348 = vld [vmem:[%s8 + $0x68] sm:$0xff]
    %v2349 = vld [vmem:[%s8 + $0x70] sm:$0xff]
    %v2350 = vld [vmem:[%s8 + $0x78] sm:$0xff]
    %v2351 = vld [vmem:[%s8 + $0x80] sm:$0xff]
    %v2352 = vld [vmem:[%s8 + $0x88] sm:$0xff]
    %v2353 = vld [vmem:[%s8 + $0x90] sm:$0xff]
    %v2354 = vld [vmem:[%s8 + $0x98] sm:$0xff]
    %v2355 = vld [vmem:[%s8 + $0xa0] sm:$0xff]
    %v2356 = vld [vmem:[%s8 + $0xa8] sm:$0xff]
    %v2357 = vld [vmem:[%s8 + $0xb0] sm:$0xff]
    %v2358 = vld [vmem:[%s8 + $0xb8] sm:$0xff]
    %v2359 = vld [vmem:[%s8 + $0xc0] sm:$0xff]
    %v2360 = vld [vmem:[%s8 + $0xc8] sm:$0xff]
    %v2361 = vld [vmem:[%s8 + $0xd0] sm:$0xff]
    %v2362 = vld [vmem:[%s8 + $0xd8] sm:$0xff]
    %v2363 = vld [vmem:[%s8 + $0xe0] sm:$0xff]
    %v2364 = vld [vmem:[%s8 + $0xe8] sm:$0xff]
    %v2365 = vld [vmem:[%s8 + $0xf0] sm:$0xff]
    %v2366 = vld [vmem:[%s8 + $0xf8] sm:$0xff]
    %v2367 = vld [vmem:[%s8 + $0x100] sm:$0xff]
    %v2368 = vld [vmem:[%s8 + $0x108] sm:$0xff]
    %v2369 = vld [vmem:[%s8 + $0x110] sm:$0xff]
    %v2370 = vld [vmem:[%s8 + $0x118] sm:$0xff]
    %v2371 = vld [vmem:[%s8 + $0x120] sm:$0xff]
    %v2372 = vld [vmem:[%s8 + $0x128] sm:$0xff]
    %v2373 = vld [vmem:[%s8 + $0x130] sm:$0xff]
    %v2374 = vld [vmem:[%s8 + $0x138] sm:$0xff]
    %v2375 = vld [vmem:[%s8 + $0x140] sm:$0xff]
    %v2376 = vld [vmem:[%s8 + $0x148] sm:$0xff]
    %v2377 = vld [vmem:[%s8 + $0x150] sm:$0xff]
    %v2378 = vld [vmem:[%s8 + $0x158] sm:$0xff]
    %v2379 = vld [vmem:[%s8 + $0x160] sm:$0xff]
    %v2380 = vld [vmem:[%s8 + $0x168] sm:$0xff]
    %v2381 = vld [vmem:[%s8 + $0x170] sm:$0xff]
    %v2382 = vld [vmem:[%s8 + $0x178] sm:$0xff]
    %v2383 = vld [vmem:[%s8 + $0x180] sm:$0xff]
    %v2384 = vld [vmem:[%s8 + $0x188] sm:$0xff]
    %v2385 = vld [vmem:[%s8 + $0x190] sm:$0xff]
    %v2386 = vld [vmem:[%s8 + $0x198] sm:$0xff]
    %v2387 = vld [vmem:[%s8 + $0x1a0] sm:$0xff]
    %v2388 = vld [vmem:[%s8 + $0x1a8] sm:$0xff]
    %v2389 = vld [vmem:[%s8 + $0x1b0] sm:$0xff]
    %v2390 = vld [vmem:[%s8 + $0x1b8] sm:$0xff]
    %v2391 = vld [vmem:[%s8 + $0x1c0] sm:$0xff]
    %v2392 = vld [vmem:[%s8 + $0x1c8] sm:$0xff]
    %v2393 = vld [vmem:[%s8 + $0x1d0] sm:$0xff]
    %v2394 = vld [vmem:[%s8 + $0x1d8] sm:$0xff]
    %v2395 = vld [vmem:[%s8 + $0x1e0] sm:$0xff]
    %v2396 = vld [vmem:[%s8 + $0x1e8] sm:$0xff]
    %v2397 = vld [vmem:[%s8 + $0x1f0] sm:$0xff]
    %v2398 = vld [vmem:[%s8 + $0x1f8] sm:$0xff]
    %v2399 = vld [vmem:[%s8 + $0x200] sm:$0xff]
    %v2400 = vld [vmem:[%s8 + $0x208] sm:$0xff]
    %v2401 = vld [vmem:[%s8 + $0x210] sm:$0xff]
    %v2402 = vld [vmem:[%s8 + $0x218] sm:$0xff]
    %v2403 = vld [vmem:[%s8 + $0x220] sm:$0xff]
    %v2404 = vld [vmem:[%s8 + $0x228] sm:$0xff]
    %v2405 = vld [vmem:[%s8 + $0x230] sm:$0xff]
    %v2406 = vld [vmem:[%s8 + $0x238] sm:$0xff]
    %v2407 = vld [vmem:[%s8 + $0x240] sm:$0xff]
    %v2408 = vld [vmem:[%s8 + $0x248] sm:$0xff]
    %v2409 = vld [vmem:[%s8 + $0x250] sm:$0xff]
    %v2410 = vld [vmem:[%s8 + $0x258] sm:$0xff]
    %v2411 = vld [vmem:[%s8 + $0x260] sm:$0xff]
    %v2412 = vld [vmem:[%s8 + $0x268] sm:$0xff]
    %v2413 = vld [vmem:[%s8 + $0x270] sm:$0xff]
    %v2414 = vld [vmem:[%s8 + $0x278] sm:$0xff]
    %v2415 = vld [vmem:[%s8 + $0x280] sm:$0xff]
    %v2416 = vld [vmem:[%s8 + $0x288] sm:$0xff]
    %v2417 = vld [vmem:[%s8 + $0x290] sm:$0xff]
    %v2418 = vld [vmem:[%s8 + $0x298] sm:$0xff]
    %v2419 = vld [vmem:[%s8 + $0x2a0] sm:$0xff]
    %v2420 = vld [vmem:[%s8 + $0x2a8] sm:$0xff]
    %v2421 = vld [vmem:[%s8 + $0x2b0] sm:$0xff]
    %v2422 = vld [vmem:[%s8 + $0x2b8] sm:$0xff]
    %v2423 = vld [vmem:[%s8 + $0x2c0] sm:$0xff]
    %v2424 = vld [vmem:[%s8 + $0x2c8] sm:$0xff]
    %v2425 = vld [vmem:[%s8 + $0x2d0] sm:$0xff]
    %v2426 = vld [vmem:[%s8 + $0x2d8] sm:$0xff]
    %v2427 = vld [vmem:[%s8 + $0x2e0] sm:$0xff]
    %v2428 = vld [vmem:[%s8 + $0x2e8] sm:$0xff]
    %v2429 = vld [vmem:[%s8 + $0x2f0] sm:$0xff]
    %v2430 = vld [vmem:[%s8 + $0x2f8] sm:$0xff]
    %v2431 = vld [vmem:[%s8 + $0x300] sm:$0xff]
    %v2432 = vld [vmem:[%s8 + $0x308] sm:$0xff]
    %v2433 = vld [vmem:[%s8 + $0x310] sm:$0xff]
    %v2434 = vld [vmem:[%s8 + $0x318] sm:$0xff]
    %v2435 = vld [vmem:[%s8 + $0x320] sm:$0xff]
    %v2436 = vld [vmem:[%s8 + $0x328] sm:$0xff]
    %v2437 = vld [vmem:[%s8 + $0x330] sm:$0xff]
    %v2438 = vld [vmem:[%s8 + $0x338] sm:$0xff]
    %v2439 = vld [vmem:[%s8 + $0x340] sm:$0xff]
    %v2440 = vld [vmem:[%s8 + $0x348] sm:$0xff]
    %v2441 = vld [vmem:[%s8 + $0x350] sm:$0xff]
    %v2442 = vld [vmem:[%s8 + $0x358] sm:$0xff]
    %v2443 = vld [vmem:[%s8 + $0x360] sm:$0xff]
    %v2444 = vld [vmem:[%s8 + $0x368] sm:$0xff]
    %v2445 = vld [vmem:[%s8 + $0x370] sm:$0xff]
    %v2446 = vld [vmem:[%s8 + $0x378] sm:$0xff]
    %v2447 = vld [vmem:[%s8 + $0x380] sm:$0xff]
    %v2448 = vld [vmem:[%s8 + $0x388] sm:$0xff]
    %v2449 = vld [vmem:[%s8 + $0x390] sm:$0xff]
    %v2450 = vld [vmem:[%s8 + $0x398] sm:$0xff]
    %v2451 = vld [vmem:[%s8 + $0x3a0] sm:$0xff]
    %v2452 = vld [vmem:[%s8 + $0x3a8] sm:$0xff]
    %v2453 = vld [vmem:[%s8 + $0x3b0] sm:$0xff]
    %v2454 = vld [vmem:[%s8 + $0x3b8] sm:$0xff]
    %v2455 = vld [vmem:[%s8 + $0x3c0] sm:$0xff]
    %v2456 = vld [vmem:[%s8 + $0x3c8] sm:$0xff]
    %v2457 = vld [vmem:[%s8 + $0x3d0] sm:$0xff]
    %v2458 = vld [vmem:[%s8 + $0x3d8] sm:$0xff]
    %v2459 = vld [vmem:[%s8 + $0x3e0] sm:$0xff]
    %v2460 = vld [vmem:[%s8 + $0x3e8] sm:$0xff]
    %v2461 = vld [vmem:[%s8 + $0x3f0] sm:$0xff]
    %v2462 = vld [vmem:[%s8 + $0x3f8] sm:$0xff]
    %v2463 = vld [vmem:[%s8 + $0x400] sm:$0xff]
    %v2464 = vld [vmem:[%s8 + $0x408] sm:$0xff]
    %v2465 = vld [vmem:[%s8 + $0x410] sm:$0xff]
    %v2466 = vld [vmem:[%s8 + $0x418] sm:$0xff]
    %v2467 = vld [vmem:[%s8 + $0x420] sm:$0xff]
    %v2468 = vld [vmem:[%s8 + $0x428] sm:$0xff]
    %v2469 = vld [vmem:[%s8 + $0x430] sm:$0xff]
    %v2470 = vld [vmem:[%s8 + $0x438] sm:$0xff]
    %v2471 = vld [vmem:[%s8 + $0x440] sm:$0xff]
    %v2472 = vld [vmem:[%s8 + $0x448] sm:$0xff]
    %v2473 = vld [vmem:[%s8 + $0x450] sm:$0xff]
    %v2474 = vld [vmem:[%s8 + $0x458] sm:$0xff]
    %v2475 = vld [vmem:[%s8 + $0x460] sm:$0xff]
    %v2476 = vld [vmem:[%s8 + $0x468] sm:$0xff]
    %v2477 = vld [vmem:[%s8 + $0x470] sm:$0xff]
    %v2478 = vld [vmem:[%s8 + $0x478] sm:$0xff]
    %v2479 = vld [vmem:[%s8 + $0x480] sm:$0xff]
    %v2480 = vld [vmem:[%s8 + $0x488] sm:$0xff]
    %v2481 = vld [vmem:[%s8 + $0x490] sm:$0xff]
    %v2482 = vld [vmem:[%s8 + $0x498] sm:$0xff]
    %v2483 = vld [vmem:[%s8 + $0x4a0] sm:$0xff]
    %v2484 = vld [vmem:[%s8 + $0x4a8] sm:$0xff]
    %v2485 = vld [vmem:[%s8 + $0x4b0] sm:$0xff]
    %v2486 = vld [vmem:[%s8 + $0x4b8] sm:$0xff]
    %v2487 = vld [vmem:[%s8 + $0x4c0] sm:$0xff]
    %v2488 = vld [vmem:[%s8 + $0x4c8] sm:$0xff]
    %v2489 = vld [vmem:[%s8 + $0x4d0] sm:$0xff]
    %v2490 = vld [vmem:[%s8 + $0x4d8] sm:$0xff]
    %v2491 = vld [vmem:[%s8 + $0x4e0] sm:$0xff]
    %v2492 = vld [vmem:[%s8 + $0x4e8] sm:$0xff]
    %v2493 = vld [vmem:[%s8 + $0x4f0] sm:$0xff]
    %v2494 = vld [vmem:[%s8 + $0x4f8] sm:$0xff]
    %v2495 = vld [vmem:[%s8 + $0x500] sm:$0xff]
    %v2496 = vld [vmem:[%s8 + $0x508] sm:$0xff]
    %v2497 = vld [vmem:[%s8 + $0x510] sm:$0xff]
    %v2498 = vld [vmem:[%s8 + $0x518] sm:$0xff]
    %v2499 = vld [vmem:[%s8 + $0x520] sm:$0xff]
    %v2500 = vld [vmem:[%s8 + $0x528] sm:$0xff]
    %v2501 = vld [vmem:[%s8 + $0x530] sm:$0xff]
    %v2502 = vld [vmem:[%s8 + $0x538] sm:$0xff]
    %v2503 = vld [vmem:[%s8 + $0x540] sm:$0xff]
    %v2504 = vld [vmem:[%s8 + $0x548] sm:$0xff]
    %v2505 = vld [vmem:[%s8 + $0x550] sm:$0xff]
    %v2506 = vld [vmem:[%s8 + $0x558] sm:$0xff]
    %v2507 = vld [vmem:[%s8 + $0x560] sm:$0xff]
    %v2508 = vld [vmem:[%s8 + $0x568] sm:$0xff]
    %v2509 = vld [vmem:[%s8 + $0x570] sm:$0xff]
    %v2510 = vld [vmem:[%s8 + $0x578] sm:$0xff]
    %v2511 = vld [vmem:[%s8 + $0x580] sm:$0xff]
    %v2512 = vld [vmem:[%s8 + $0x588] sm:$0xff]
    %v2513 = vld [vmem:[%s8 + $0x590] sm:$0xff]
    %v2514 = vld [vmem:[%s8 + $0x598] sm:$0xff]
    %v2515 = vld [vmem:[%s8 + $0x5a0] sm:$0xff]
    %v2516 = vld [vmem:[%s8 + $0x5a8] sm:$0xff]
    %v2517 = vld [vmem:[%s8 + $0x5b0] sm:$0xff]
    %v2518 = vld [vmem:[%s8 + $0x5b8] sm:$0xff]
    %v2519 = vld [vmem:[%s8 + $0x5c0] sm:$0xff]
    %v2520 = vld [vmem:[%s8 + $0x5c8] sm:$0xff]
    %v2521 = vld [vmem:[%s8 + $0x5d0] sm:$0xff]
    %v2522 = vld [vmem:[%s8 + $0x5d8] sm:$0xff]
    %v2523 = vld [vmem:[%s8 + $0x5e0] sm:$0xff]
    %v2524 = vld [vmem:[%s8 + $0x5e8] sm:$0xff]
    %v2525 = vld [vmem:[%s8 + $0x5f0] sm:$0xff]
    %v2526 = vld [vmem:[%s8 + $0x5f8] sm:$0xff]
    %v2527 = vld [vmem:[%s8 + $0x600] sm:$0xff]
    %v2528 = vld [vmem:[%s8 + $0x608] sm:$0xff]
    %v2529 = vld [vmem:[%s8 + $0x610] sm:$0xff]
    %v2530 = vld [vmem:[%s8 + $0x618] sm:$0xff]
    %v2531 = vld [vmem:[%s8 + $0x620] sm:$0xff]
    %v2532 = vld [vmem:[%s8 + $0x628] sm:$0xff]
    %v2533 = vld [vmem:[%s8 + $0x630] sm:$0xff]
    %v2534 = vld [vmem:[%s8 + $0x638] sm:$0xff]
    %v2535 = vld [vmem:[%s8 + $0x640] sm:$0xff]
    %v2536 = vld [vmem:[%s8 + $0x648] sm:$0xff]
    %v2537 = vld [vmem:[%s8 + $0x650] sm:$0xff]
    %v2538 = vld [vmem:[%s8 + $0x658] sm:$0xff]
    %v2539 = vld [vmem:[%s8 + $0x660] sm:$0xff]
    %v2540 = vld [vmem:[%s8 + $0x668] sm:$0xff]
    %v2541 = vld [vmem:[%s8 + $0x670] sm:$0xff]
    %v2542 = vld [vmem:[%s8 + $0x678] sm:$0xff]
    %v2543 = vld [vmem:[%s8 + $0x680] sm:$0xff]
    %v2544 = vld [vmem:[%s8 + $0x688] sm:$0xff]
    %v2545 = vld [vmem:[%s8 + $0x690] sm:$0xff]
    %v2546 = vld [vmem:[%s8 + $0x698] sm:$0xff]
    %v2547 = vld [vmem:[%s8 + $0x6a0] sm:$0xff]
    %v2548 = vld [vmem:[%s8 + $0x6a8] sm:$0xff]
    %v2549 = vld [vmem:[%s8 + $0x6b0] sm:$0xff]
    %v2550 = vld [vmem:[%s8 + $0x6b8] sm:$0xff]
    %v2551 = vld [vmem:[%s8 + $0x6c0] sm:$0xff]
    %v2552 = vld [vmem:[%s8 + $0x6c8] sm:$0xff]
    %v2553 = vld [vmem:[%s8 + $0x6d0] sm:$0xff]
    %v2554 = vld [vmem:[%s8 + $0x6d8] sm:$0xff]
    %v2555 = vld [vmem:[%s8 + $0x6e0] sm:$0xff]
    %v2556 = vld [vmem:[%s8 + $0x6e8] sm:$0xff]
    %v2557 = vld [vmem:[%s8 + $0x6f0] sm:$0xff]
    %v2558 = vld [vmem:[%s8 + $0x6f8] sm:$0xff]
    %v2559 = vld [vmem:[%s8 + $0x700] sm:$0xff]
    %v2560 = vld [vmem:[%s8 + $0x708] sm:$0xff]
    %v2561 = vld [vmem:[%s8 + $0x710] sm:$0xff]
    %v2562 = vld [vmem:[%s8 + $0x718] sm:$0xff]
    %v2563 = vld [vmem:[%s8 + $0x720] sm:$0xff]
    %v2564 = vld [vmem:[%s8 + $0x728] sm:$0xff]
    %v2565 = vld [vmem:[%s8 + $0x730] sm:$0xff]
    %v2566 = vld [vmem:[%s8 + $0x738] sm:$0xff]
    %v2567 = vld [vmem:[%s8 + $0x740] sm:$0xff]
    %v2568 = vld [vmem:[%s8 + $0x748] sm:$0xff]
    %v2569 = vld [vmem:[%s8 + $0x750] sm:$0xff]
    %v2570 = vld [vmem:[%s8 + $0x758] sm:$0xff]
    %v2571 = vld [vmem:[%s8 + $0x760] sm:$0xff]
    %v2572 = vld [vmem:[%s8 + $0x768] sm:$0xff]
    %v2573 = vld [vmem:[%s8 + $0x770] sm:$0xff]
    %v2574 = vld [vmem:[%s8 + $0x778] sm:$0xff]
    %v2575 = vld [vmem:[%s8 + $0x780] sm:$0xff]
    %v2576 = vld [vmem:[%s8 + $0x788] sm:$0xff]
    %v2577 = vld [vmem:[%s8 + $0x790] sm:$0xff]
    %v2578 = vld [vmem:[%s8 + $0x798] sm:$0xff]
    %v2579 = vld [vmem:[%s8 + $0x7a0] sm:$0xff]
    %v2580 = vld [vmem:[%s8 + $0x7a8] sm:$0xff]
    %v2581 = vld [vmem:[%s8 + $0x7b0] sm:$0xff]
    %v2582 = vld [vmem:[%s8 + $0x7b8] sm:$0xff]
    %v2583 = vld [vmem:[%s8 + $0x7c0] sm:$0xff]
    %v2584 = vld [vmem:[%s8 + $0x7c8] sm:$0xff]
    %v2585 = vld [vmem:[%s8 + $0x7d0] sm:$0xff]
    %v2586 = vld [vmem:[%s8 + $0x7d8] sm:$0xff]
    %v2587 = vld [vmem:[%s8 + $0x7e0] sm:$0xff]
    %v2588 = vld [vmem:[%s8 + $0x7e8] sm:$0xff]
    %v2589 = vld [vmem:[%s8 + $0x7f0] sm:$0xff]
    %v2590 = vld [vmem:[%s8 + $0x7f8] sm:$0xff]
    %v2591 = vld [vmem:[%s8 + $0x800] sm:$0xff]
    %v2592 = vld [vmem:[%s8 + $0x808] sm:$0xff]
    %v2593 = vld [vmem:[%s8 + $0x810] sm:$0xff]
    %v2594 = vld [vmem:[%s8 + $0x818] sm:$0xff]
    %v2595 = vld [vmem:[%s8 + $0x820] sm:$0xff]
    %v2596 = vld [vmem:[%s8 + $0x828] sm:$0xff]
    %v2597 = vld [vmem:[%s8 + $0x830] sm:$0xff]
    %v2598 = vld [vmem:[%s8 + $0x838] sm:$0xff]
    %v2599 = vld [vmem:[%s8 + $0x840] sm:$0xff]
    %v2600 = vld [vmem:[%s8 + $0x848] sm:$0xff]
    %v2601 = vld [vmem:[%s8 + $0x850] sm:$0xff]
    %v2602 = vld [vmem:[%s8 + $0x858] sm:$0xff]
    %v2603 = vld [vmem:[%s8 + $0x860] sm:$0xff]
    %v2604 = vld [vmem:[%s8 + $0x868] sm:$0xff]
    %v2605 = vld [vmem:[%s8 + $0x870] sm:$0xff]
    %v2606 = vld [vmem:[%s8 + $0x878] sm:$0xff]
    %v2607 = vld [vmem:[%s8 + $0x880] sm:$0xff]
    %v2608 = vld [vmem:[%s8 + $0x888] sm:$0xff]
    %v2609 = vld [vmem:[%s8 + $0x890] sm:$0xff]
    %v2610 = vld [vmem:[%s8 + $0x898] sm:$0xff]
    %v2611 = vld [vmem:[%s8 + $0x8a0] sm:$0xff]
    %v2612 = vld [vmem:[%s8 + $0x8a8] sm:$0xff]
    %v2613 = vld [vmem:[%s8 + $0x8b0] sm:$0xff]
    %v2614 = vld [vmem:[%s8 + $0x8b8] sm:$0xff]
    %v2615 = vld [vmem:[%s8 + $0x8c0] sm:$0xff]
    %v2616 = vld [vmem:[%s8 + $0x8c8] sm:$0xff]
    %v2617 = vld [vmem:[%s8 + $0x8d0] sm:$0xff]
    %v2618 = vld [vmem:[%s8 + $0x8d8] sm:$0xff]
    %v2619 = vld [vmem:[%s8 + $0x8e0] sm:$0xff]
    %v2620 = vld [vmem:[%s8 + $0x8e8] sm:$0xff]
    %v2621 = vld [vmem:[%s8 + $0x8f0] sm:$0xff]
    %v2622 = vld [vmem:[%s8 + $0x8f8] sm:$0xff]
    %v2623 = vld [vmem:[%s8 + $0x900] sm:$0xff]
    %v2624 = vld [vmem:[%s8 + $0x908] sm:$0xff]
    %v2625 = vld [vmem:[%s8 + $0x910] sm:$0xff]
    %v2626 = vld [vmem:[%s8 + $0x918] sm:$0xff]
    %v2627 = vld [vmem:[%s8 + $0x920] sm:$0xff]
    %v2628 = vld [vmem:[%s8 + $0x928] sm:$0xff]
    %v2629 = vld [vmem:[%s8 + $0x930] sm:$0xff]
    %v2630 = vld [vmem:[%s8 + $0x938] sm:$0xff]
    %v2631 = vld [vmem:[%s8 + $0x940] sm:$0xff]
    %v2632 = vld [vmem:[%s8 + $0x948] sm:$0xff]
    %v2633 = vld [vmem:[%s8 + $0x950] sm:$0xff]
    %v2634 = vld [vmem:[%s8 + $0x958] sm:$0xff]
    %v2635 = vld [vmem:[%s8 + $0x960] sm:$0xff]
    %v2636 = vld [vmem:[%s8 + $0x968] sm:$0xff]
    %v2637 = vld [vmem:[%s8 + $0x970] sm:$0xff]
    %v2638 = vld [vmem:[%s8 + $0x978] sm:$0xff]
    %v2639 = vld [vmem:[%s8 + $0x980] sm:$0xff]
    %v2640 = vld [vmem:[%s8 + $0x988] sm:$0xff]
    %v2641 = vld [vmem:[%s8 + $0x990] sm:$0xff]
    %v2642 = vld [vmem:[%s8 + $0x998] sm:$0xff]
    %v2643 = vld [vmem:[%s8 + $0x9a0] sm:$0xff]
    %v2644 = vld [vmem:[%s8 + $0x9a8] sm:$0xff]
    %v2645 = vld [vmem:[%s8 + $0x9b0] sm:$0xff]
    %v2646 = vld [vmem:[%s8 + $0x9b8] sm:$0xff]
    %v2647 = vld [vmem:[%s8 + $0x9c0] sm:$0xff]
    %v2648 = vld [vmem:[%s8 + $0x9c8] sm:$0xff]
    %v2649 = vld [vmem:[%s8 + $0x9d0] sm:$0xff]
    %v2650 = vld [vmem:[%s8 + $0x9d8] sm:$0xff]
    %v2651 = vld [vmem:[%s8 + $0x9e0] sm:$0xff]
    %v2652 = vld [vmem:[%s8 + $0x9e8] sm:$0xff]
    %v2653 = vld [vmem:[%s8 + $0x9f0] sm:$0xff]
    %v2654 = vld [vmem:[%s8 + $0x9f8] sm:$0xff]
    %v2655 = vld [vmem:[%s8 + $0xa00] sm:$0xff]
    %v2656 = vld [vmem:[%s8 + $0xa08] sm:$0xff]
    %v2657 = vld [vmem:[%s8 + $0xa10] sm:$0xff]
    %v2658 = vld [vmem:[%s8 + $0xa18] sm:$0xff]
    %v2659 = vld [vmem:[%s8 + $0xa20] sm:$0xff]
    %v2660 = vld [vmem:[%s8 + $0xa28] sm:$0xff]
    %v2661 = vld [vmem:[%s8 + $0xa30] sm:$0xff]
    %v2662 = vld [vmem:[%s8 + $0xa38] sm:$0xff]
    %v2663 = vld [vmem:[%s8 + $0xa40] sm:$0xff]
    %v2664 = vld [vmem:[%s8 + $0xa48] sm:$0xff]
    %v2665 = vld [vmem:[%s8 + $0xa50] sm:$0xff]
    %v2666 = vld [vmem:[%s8 + $0xa58] sm:$0xff]
    %v2667 = vld [vmem:[%s8 + $0xa60] sm:$0xff]
    %v2668 = vld [vmem:[%s8 + $0xa68] sm:$0xff]
    %v2669 = vld [vmem:[%s8 + $0xa70] sm:$0xff]
    %v2670 = vld [vmem:[%s8 + $0xa78] sm:$0xff]
    %v2671 = vld [vmem:[%s8 + $0xa80] sm:$0xff]
    %v2672 = vld [vmem:[%s8 + $0xa88] sm:$0xff]
    %v2673 = vld [vmem:[%s8 + $0xa90] sm:$0xff]
    %v2674 = vld [vmem:[%s8 + $0xa98] sm:$0xff]
    %v2675 = vld [vmem:[%s8 + $0xaa0] sm:$0xff]
    %v2676 = vld [vmem:[%s8 + $0xaa8] sm:$0xff]
    %v2677 = vld [vmem:[%s8 + $0xab0] sm:$0xff]
    %v2678 = vld [vmem:[%s8 + $0xab8] sm:$0xff]
    %v2679 = vld [vmem:[%s8 + $0xac0] sm:$0xff]
    %v2680 = vld [vmem:[%s8 + $0xac8] sm:$0xff]
    %v2681 = vld [vmem:[%s8 + $0xad0] sm:$0xff]
    %v2682 = vld [vmem:[%s8 + $0xad8] sm:$0xff]
    %v2683 = vld [vmem:[%s8 + $0xae0] sm:$0xff]
    %v2684 = vld [vmem:[%s8 + $0xae8] sm:$0xff]
    %v2685 = vld [vmem:[%s8 + $0xaf0] sm:$0xff]
    %v2686 = vld [vmem:[%s8 + $0xaf8] sm:$0xff]
    %v2687 = vld [vmem:[%s8 + $0xb00] sm:$0xff]
    %v2688 = vld [vmem:[%s8 + $0xb08] sm:$0xff]
    %v2689 = vld [vmem:[%s8 + $0xb10] sm:$0xff]
    %v2690 = vld [vmem:[%s8 + $0xb18] sm:$0xff]
    %v2691 = vld [vmem:[%s8 + $0xb20] sm:$0xff]
    %v2692 = vld [vmem:[%s8 + $0xb28] sm:$0xff]
    %v2693 = vld [vmem:[%s8 + $0xb30] sm:$0xff]
    %v2694 = vld [vmem:[%s8 + $0xb38] sm:$0xff]
    %v2695 = vld [vmem:[%s8 + $0xb40] sm:$0xff]
    %v2696 = vld [vmem:[%s8 + $0xb48] sm:$0xff]
    %v2697 = vld [vmem:[%s8 + $0xb50] sm:$0xff]
    %v2698 = vld [vmem:[%s8 + $0xb58] sm:$0xff]
    %v2699 = vld [vmem:[%s8 + $0xb60] sm:$0xff]
    %v2700 = vld [vmem:[%s8 + $0xb68] sm:$0xff]
    %v2701 = vld [vmem:[%s8 + $0xb70] sm:$0xff]
    %v2702 = vld [vmem:[%s8 + $0xb78] sm:$0xff]
    %v2703 = vld [vmem:[%s8 + $0xb80] sm:$0xff]
    %v2704 = vld [vmem:[%s8 + $0xb88] sm:$0xff]
    %v2705 = vld [vmem:[%s8 + $0xb90] sm:$0xff]
    %v2706 = vld [vmem:[%s8 + $0xb98] sm:$0xff]
    %v2707 = vld [vmem:[%s8 + $0xba0] sm:$0xff]
    %v2708 = vld [vmem:[%s8 + $0xba8] sm:$0xff]
    %v2709 = vld [vmem:[%s8 + $0xbb0] sm:$0xff]
    %v2710 = vld [vmem:[%s8 + $0xbb8] sm:$0xff]
    %v2711 = vld [vmem:[%s8 + $0xbc0] sm:$0xff]
    %v2712 = vld [vmem:[%s8 + $0xbc8] sm:$0xff]
    %v2713 = vld [vmem:[%s8 + $0xbd0] sm:$0xff]
    %v2714 = vld [vmem:[%s8 + $0xbd8] sm:$0xff]
    %v2715 = vld [vmem:[%s8 + $0xbe0] sm:$0xff]
    %v2716 = vld [vmem:[%s8 + $0xbe8] sm:$0xff]
    %v2717 = vld [vmem:[%s8 + $0xbf0] sm:$0xff]
    %v2718 = vld [vmem:[%s8 + $0xbf8] sm:$0xff]
    %v2719 = vld [vmem:[%s8 + $0xc00] sm:$0xff]
    %v2720 = vld [vmem:[%s8 + $0xc08] sm:$0xff]
    %v2721 = vld [vmem:[%s8 + $0xc10] sm:$0xff]
    %v2722 = vld [vmem:[%s8 + $0xc18] sm:$0xff]
    %v2723 = vld [vmem:[%s8 + $0xc20] sm:$0xff]
    %v2724 = vld [vmem:[%s8 + $0xc28] sm:$0xff]
    %v2725 = vld [vmem:[%s8 + $0xc30] sm:$0xff]
    %v2726 = vld [vmem:[%s8 + $0xc38] sm:$0xff]
    %v2727 = vld [vmem:[%s8 + $0xc40] sm:$0xff]
    %v2728 = vld [vmem:[%s8 + $0xc48] sm:$0xff]
    %v2729 = vld [vmem:[%s8 + $0xc50] sm:$0xff]
    %v2730 = vld [vmem:[%s8 + $0xc58] sm:$0xff]
    %v2731 = vld [vmem:[%s8 + $0xc60] sm:$0xff]
    %v2732 = vld [vmem:[%s8 + $0xc68] sm:$0xff]
    %v2733 = vld [vmem:[%s8 + $0xc70] sm:$0xff]
    %v2734 = vld [vmem:[%s8 + $0xc78] sm:$0xff]
    %v2735 = vld [vmem:[%s8 + $0xc80] sm:$0xff]
    %v2736 = vld [vmem:[%s8 + $0xc88] sm:$0xff]
    %v2737 = vld [vmem:[%s8 + $0xc90] sm:$0xff]
    %v2738 = vld [vmem:[%s8 + $0xc98] sm:$0xff]
    %v2739 = vld [vmem:[%s8 + $0xca0] sm:$0xff]
    %v2740 = vld [vmem:[%s8 + $0xca8] sm:$0xff]
    %v2741 = vld [vmem:[%s8 + $0xcb0] sm:$0xff]
    %v2742 = vld [vmem:[%s8 + $0xcb8] sm:$0xff]
    %v2743 = vld [vmem:[%s8 + $0xcc0] sm:$0xff]
    %v2744 = vld [vmem:[%s8 + $0xcc8] sm:$0xff]
    %v2745 = vld [vmem:[%s8 + $0xcd0] sm:$0xff]
    %v2746 = vld [vmem:[%s8 + $0xcd8] sm:$0xff]
    %v2747 = vld [vmem:[%s8 + $0xce0] sm:$0xff]
    %v2748 = vld [vmem:[%s8 + $0xce8] sm:$0xff]
    %v2749 = vld [vmem:[%s8 + $0xcf0] sm:$0xff]
    %v2750 = vld [vmem:[%s8 + $0xcf8] sm:$0xff]
    %v2751 = vld [vmem:[%s8 + $0xd00] sm:$0xff]
    %v2752 = vld [vmem:[%s8 + $0xd08] sm:$0xff]
    %v2753 = vld [vmem:[%s8 + $0xd10] sm:$0xff]
    %v2754 = vld [vmem:[%s8 + $0xd18] sm:$0xff]
    %v2755 = vld [vmem:[%s8 + $0xd20] sm:$0xff]
    %v2756 = vld [vmem:[%s8 + $0xd28] sm:$0xff]
    %v2757 = vld [vmem:[%s8 + $0xd30] sm:$0xff]
    %v2758 = vld [vmem:[%s8 + $0xd38] sm:$0xff]
    %v2759 = vld [vmem:[%s8 + $0xd40] sm:$0xff]
    %v2760 = vld [vmem:[%s8 + $0xd48] sm:$0xff]
    %v2761 = vld [vmem:[%s8 + $0xd50] sm:$0xff]
    %v2762 = vld [vmem:[%s8 + $0xd58] sm:$0xff]
    %v2763 = vld [vmem:[%s8 + $0xd60] sm:$0xff]
    %v2764 = vld [vmem:[%s8 + $0xd68] sm:$0xff]
    %v2765 = vld [vmem:[%s8 + $0xd70] sm:$0xff]
    %v2766 = vld [vmem:[%s8 + $0xd78] sm:$0xff]
    %v2767 = vld [vmem:[%s8 + $0xd80] sm:$0xff]
    %v2768 = vld [vmem:[%s8 + $0xd88] sm:$0xff]
    %v2769 = vld [vmem:[%s8 + $0xd90] sm:$0xff]
    %v2770 = vld [vmem:[%s8 + $0xd98] sm:$0xff]
    %v2771 = vld [vmem:[%s8 + $0xda0] sm:$0xff]
    %v2772 = vld [vmem:[%s8 + $0xda8] sm:$0xff]
    %v2773 = vld [vmem:[%s8 + $0xdb0] sm:$0xff]
    %v2774 = vld [vmem:[%s8 + $0xdb8] sm:$0xff]
    %v2775 = vld [vmem:[%s8 + $0xdc0] sm:$0xff]
    %v2776 = vld [vmem:[%s8 + $0xdc8] sm:$0xff]
    %v2777 = vld [vmem:[%s8 + $0xdd0] sm:$0xff]
    %v2778 = vld [vmem:[%s8 + $0xdd8] sm:$0xff]
    %v2779 = vld [vmem:[%s8 + $0xde0] sm:$0xff]
    %v2780 = vld [vmem:[%s8 + $0xde8] sm:$0xff]
    %v2781 = vld [vmem:[%s8 + $0xdf0] sm:$0xff]
    %v2782 = vld [vmem:[%s8 + $0xdf8] sm:$0xff]
    %v2783 = vld [vmem:[%s8 + $0xe00] sm:$0xff]
    %v2784 = vld [vmem:[%s8 + $0xe08] sm:$0xff]
    %v2785 = vld [vmem:[%s8 + $0xe10] sm:$0xff]
    %v2786 = vld [vmem:[%s8 + $0xe18] sm:$0xff]
    %v2787 = vld [vmem:[%s8 + $0xe20] sm:$0xff]
    %v2788 = vld [vmem:[%s8 + $0xe28] sm:$0xff]
    %v2789 = vld [vmem:[%s8 + $0xe30] sm:$0xff]
    %v2790 = vld [vmem:[%s8 + $0xe38] sm:$0xff]
    %v2791 = vld [vmem:[%s8 + $0xe40] sm:$0xff]
    %v2792 = vld [vmem:[%s8 + $0xe48] sm:$0xff]
    %v2793 = vld [vmem:[%s8 + $0xe50] sm:$0xff]
    %v2794 = vld [vmem:[%s8 + $0xe58] sm:$0xff]
    %v2795 = vld [vmem:[%s8 + $0xe60] sm:$0xff]
    %v2796 = vld [vmem:[%s8 + $0xe68] sm:$0xff]
    %v2797 = vld [vmem:[%s8 + $0xe70] sm:$0xff]
    %v2798 = vld [vmem:[%s8 + $0xe78] sm:$0xff]
    %v2799 = vld [vmem:[%s8 + $0xe80] sm:$0xff]
    %v2800 = vld [vmem:[%s8 + $0xe88] sm:$0xff]
    %v2801 = vld [vmem:[%s8 + $0xe90] sm:$0xff]
    %v2802 = vld [vmem:[%s8 + $0xe98] sm:$0xff]
    %v2803 = vld [vmem:[%s8 + $0xea0] sm:$0xff]
    %v2804 = vld [vmem:[%s8 + $0xea8] sm:$0xff]
    %v2805 = vld [vmem:[%s8 + $0xeb0] sm:$0xff]
    %v2806 = vld [vmem:[%s8 + $0xeb8] sm:$0xff]
    %v2807 = vld [vmem:[%s8 + $0xec0] sm:$0xff]
    %v2808 = vld [vmem:[%s8 + $0xec8] sm:$0xff]
    %v2809 = vld [vmem:[%s8 + $0xed0] sm:$0xff]
    %v2810 = vld [vmem:[%s8 + $0xed8] sm:$0xff]
    %v2811 = vld [vmem:[%s8 + $0xee0] sm:$0xff]
    %v2812 = vld [vmem:[%s8 + $0xee8] sm:$0xff]
    %v2813 = vld [vmem:[%s8 + $0xef0] sm:$0xff]
    %v2814 = vld [vmem:[%s8 + $0xef8] sm:$0xff]
    %v2815 = vld [vmem:[%s8 + $0xf00] sm:$0xff]
    %v2816 = vld [vmem:[%s8 + $0xf08] sm:$0xff]
    %v2817 = vld [vmem:[%s8 + $0xf10] sm:$0xff]
    %v2818 = vld [vmem:[%s8 + $0xf18] sm:$0xff]
    %v2819 = vld [vmem:[%s8 + $0xf20] sm:$0xff]
    %v2820 = vld [vmem:[%s8 + $0xf28] sm:$0xff]
    %v2821 = vld [vmem:[%s8 + $0xf30] sm:$0xff]
    %v2822 = vld [vmem:[%s8 + $0xf38] sm:$0xff]
    %v2823 = vld [vmem:[%s8 + $0xf40] sm:$0xff]
    %v2824 = vld [vmem:[%s8 + $0xf48] sm:$0xff]
    %v2825 = vld [vmem:[%s8 + $0xf50] sm:$0xff]
    %v2826 = vld [vmem:[%s8 + $0xf58] sm:$0xff]
    %v2827 = vld [vmem:[%s8 + $0xf60] sm:$0xff]
    %v2828 = vld [vmem:[%s8 + $0xf68] sm:$0xff]
    %v2829 = vld [vmem:[%s8 + $0xf70] sm:$0xff]
    %v2830 = vld [vmem:[%s8 + $0xf78] sm:$0xff]
    %v2831 = vld [vmem:[%s8 + $0xf80] sm:$0xff]
    %v2832 = vld [vmem:[%s8 + $0xf88] sm:$0xff]
    %v2833 = vld [vmem:[%s8 + $0xf90] sm:$0xff]
    %v2834 = vld [vmem:[%s8 + $0xf98] sm:$0xff]
    %v2835 = vld [vmem:[%s8 + $0xfa0] sm:$0xff]
    %v2836 = vld [vmem:[%s8 + $0xfa8] sm:$0xff]
    %v2837 = vld [vmem:[%s8 + $0xfb0] sm:$0xff]
    %v2838 = vld [vmem:[%s8 + $0xfb8] sm:$0xff]
    %v2839 = vld [vmem:[%s8 + $0xfc0] sm:$0xff]
    %v2840 = vld [vmem:[%s8 + $0xfc8] sm:$0xff]
    %v2841 = vld [vmem:[%s8 + $0xfd0] sm:$0xff]
    %v2842 = vld [vmem:[%s8 + $0xfd8] sm:$0xff]
    %v2843 = vld [vmem:[%s8 + $0xfe0] sm:$0xff]
    %v2844 = vld [vmem:[%s8 + $0xfe8] sm:$0xff]
    %v2845 = vld [vmem:[%s8 + $0xff0] sm:$0xff]
    %v2846 = vld [vmem:[%s8 + $0xff8] sm:$0xff]
    %v2847 = vld [vmem:[%s8 + $0x1000] sm:$0xff]
    %v2848 = vld [vmem:[%s8 + $0x1008] sm:$0xff]
    %v2849 = vld [vmem:[%s8 + $0x1010] sm:$0xff]
    %v2850 = vld [vmem:[%s8 + $0x1018] sm:$0xff]
    %v2851 = vld [vmem:[%s8 + $0x1020] sm:$0xff]
    %v2852 = vld [vmem:[%s8 + $0x1028] sm:$0xff]
    %v2853 = vld [vmem:[%s8 + $0x1030] sm:$0xff]
    %v2854 = vld [vmem:[%s8 + $0x1038] sm:$0xff]
    %v2855 = vld [vmem:[%s8 + $0x1040] sm:$0xff]
    %v2856 = vld [vmem:[%s8 + $0x1048] sm:$0xff]
    %v2857 = vld [vmem:[%s8 + $0x1050] sm:$0xff]
    %v2858 = vld [vmem:[%s8 + $0x1058] sm:$0xff]
    %v2859 = vld [vmem:[%s8 + $0x1060] sm:$0xff]
    %v2860 = vld [vmem:[%s8 + $0x1068] sm:$0xff]
    %v2861 = vld [vmem:[%s8 + $0x1070] sm:$0xff]
    %v2862 = vld [vmem:[%s8 + $0x1078] sm:$0xff]
    %v2863 = vld [vmem:[%s8 + $0x1080] sm:$0xff]
    %v2864 = vld [vmem:[%s8 + $0x1088] sm:$0xff]
    %v2865 = vld [vmem:[%s8 + $0x1090] sm:$0xff]
    %v2866 = vld [vmem:[%s8 + $0x1098] sm:$0xff]
    %v2867 = vld [vmem:[%s8 + $0x10a0] sm:$0xff]
    %v2868 = vld [vmem:[%s8 + $0x10a8] sm:$0xff]
    %v2869 = vld [vmem:[%s8 + $0x10b0] sm:$0xff]
    %v2870 = vld [vmem:[%s8 + $0x10b8] sm:$0xff]
    %v2871 = vld [vmem:[%s8 + $0x10c0] sm:$0xff]
    %v2872 = vld [vmem:[%s8 + $0x10c8] sm:$0xff]
    %v2873 = vld [vmem:[%s8 + $0x10d0] sm:$0xff]
    %v2874 = vld [vmem:[%s8 + $0x10d8] sm:$0xff]
    %v2875 = vld [vmem:[%s8 + $0x10e0] sm:$0xff]
    %v2876 = vld [vmem:[%s8 + $0x10e8] sm:$0xff]
    %v2877 = vld [vmem:[%s8 + $0x10f0] sm:$0xff]
    %v2878 = vld [vmem:[%s8 + $0x10f8] sm:$0xff]
    %v2879 = vld [vmem:[%s8 + $0x1100] sm:$0xff]
    %v2880 = vld [vmem:[%s8 + $0x1108] sm:$0xff]
    %v2881 = vld [vmem:[%s8 + $0x1110] sm:$0xff]
    %v2882 = vld [vmem:[%s8 + $0x1118] sm:$0xff]
    %v2883 = vld [vmem:[%s8 + $0x1120] sm:$0xff]
    %v2884 = vld [vmem:[%s8 + $0x1128] sm:$0xff]
    %v2885 = vld [vmem:[%s8 + $0x1130] sm:$0xff]
    %v2886 = vld [vmem:[%s8 + $0x1138] sm:$0xff]
    %v2887 = vld [vmem:[%s8 + $0x1140] sm:$0xff]
    %v2888 = vld [vmem:[%s8 + $0x1148] sm:$0xff]
    %v2889 = vld [vmem:[%s8 + $0x1150] sm:$0xff]
    %v2890 = vld [vmem:[%s8 + $0x1158] sm:$0xff]
    %v2891 = vld [vmem:[%s8 + $0x1160] sm:$0xff]
    %v2892 = vld [vmem:[%s8 + $0x1168] sm:$0xff]
    %v2893 = vld [vmem:[%s8 + $0x1170] sm:$0xff]
    %v2894 = vld [vmem:[%s8 + $0x1178] sm:$0xff]
    %v2895 = vld [vmem:[%s8 + $0x1180] sm:$0xff]
    %v2896 = vld [vmem:[%s8 + $0x1188] sm:$0xff]
    %v2897 = vld [vmem:[%s8 + $0x1190] sm:$0xff]
    %v2898 = vld [vmem:[%s8 + $0x1198] sm:$0xff]
    %v2899 = vld [vmem:[%s8 + $0x11a0] sm:$0xff]
    %v2900 = vld [vmem:[%s8 + $0x11a8] sm:$0xff]
    %v2901 = vld [vmem:[%s8 + $0x11b0] sm:$0xff]
    %v2902 = vld [vmem:[%s8 + $0x11b8] sm:$0xff]
    %v2903 = vld [vmem:[%s8 + $0x11c0] sm:$0xff]
    %v2904 = vld [vmem:[%s8 + $0x11c8] sm:$0xff]
    %v2905 = vld [vmem:[%s8 + $0x11d0] sm:$0xff]
    %v2906 = vld [vmem:[%s8 + $0x11d8] sm:$0xff]
    %v2907 = vld [vmem:[%s8 + $0x11e0] sm:$0xff]
    %v2908 = vld [vmem:[%s8 + $0x11e8] sm:$0xff]
    %v2909 = vld [vmem:[%s8 + $0x11f0] sm:$0xff]
    %v2910 = vld [vmem:[%s8 + $0x11f8] sm:$0xff]
    %v2911 = vld [vmem:[%s8 + $0x1200] sm:$0xff]
    %v2912 = vld [vmem:[%s8 + $0x1208] sm:$0xff]
    %v2913 = vld [vmem:[%s8 + $0x1210] sm:$0xff]
    %v2914 = vld [vmem:[%s8 + $0x1218] sm:$0xff]
    %v2915 = vld [vmem:[%s8 + $0x1220] sm:$0xff]
    %v2916 = vld [vmem:[%s8 + $0x1228] sm:$0xff]
    %v2917 = vld [vmem:[%s8 + $0x1230] sm:$0xff]
    %v2918 = vld [vmem:[%s8 + $0x1238] sm:$0xff]
    %v2919 = vld [vmem:[%s8 + $0x1240] sm:$0xff]
    %v2920 = vld [vmem:[%s8 + $0x1248] sm:$0xff]
    %v2921 = vld [vmem:[%s8 + $0x1250] sm:$0xff]
    %v2922 = vld [vmem:[%s8 + $0x1258] sm:$0xff]
    %v2923 = vld [vmem:[%s8 + $0x1260] sm:$0xff]
    %v2924 = vld [vmem:[%s8 + $0x1268] sm:$0xff]
    %v2925 = vld [vmem:[%s8 + $0x1270] sm:$0xff]
    %v2926 = vld [vmem:[%s8 + $0x1278] sm:$0xff]
    %v2927 = vld [vmem:[%s8 + $0x1280] sm:$0xff]
    %v2928 = vld [vmem:[%s8 + $0x1288] sm:$0xff]
    %v2929 = vld [vmem:[%s8 + $0x1290] sm:$0xff]
    %v2930 = vld [vmem:[%s8 + $0x1298] sm:$0xff]
    %v2931 = vld [vmem:[%s8 + $0x12a0] sm:$0xff]
    %v2932 = vld [vmem:[%s8 + $0x12a8] sm:$0xff]
    %v2933 = vld [vmem:[%s8 + $0x12b0] sm:$0xff]
    %v2934 = vld [vmem:[%s8 + $0x12b8] sm:$0xff]
    %v2935 = vld [vmem:[%s8 + $0x12c0] sm:$0xff]
    %v2936 = vld [vmem:[%s8 + $0x12c8] sm:$0xff]
    %v2937 = vld [vmem:[%s8 + $0x12d0] sm:$0xff]
    %v2938 = vld [vmem:[%s8 + $0x12d8] sm:$0xff]
    %v2939 = vld [vmem:[%s8 + $0x12e0] sm:$0xff]
    %v2940 = vld [vmem:[%s8 + $0x12e8] sm:$0xff]
    %v2941 = vld [vmem:[%s8 + $0x12f0] sm:$0xff]
    %v2942 = vld [vmem:[%s8 + $0x12f8] sm:$0xff]
    %v2943 = vld [vmem:[%s8 + $0x1300] sm:$0xff]
    %v2944 = vld [vmem:[%s8 + $0x1308] sm:$0xff]
    %v2945 = vld [vmem:[%s8 + $0x1310] sm:$0xff]
    %v2946 = vld [vmem:[%s8 + $0x1318] sm:$0xff]
    %v2947 = vld [vmem:[%s8 + $0x1320] sm:$0xff]
    %v2948 = vld [vmem:[%s8 + $0x1328] sm:$0xff]
    %v2949 = vld [vmem:[%s8 + $0x1330] sm:$0xff]
    %v2950 = vld [vmem:[%s8 + $0x1338] sm:$0xff]
    %v2951 = vld [vmem:[%s8 + $0x1340] sm:$0xff]
    %v2952 = vld [vmem:[%s8 + $0x1348] sm:$0xff]
    %v2953 = vld [vmem:[%s8 + $0x1350] sm:$0xff]
    %v2954 = vld [vmem:[%s8 + $0x1358] sm:$0xff]
    %v2955 = vld [vmem:[%s8 + $0x1360] sm:$0xff]
    %v2956 = vld [vmem:[%s8 + $0x1368] sm:$0xff]
    %v2957 = vld [vmem:[%s8 + $0x1370] sm:$0xff]
    %v2958 = vld [vmem:[%s8 + $0x1378] sm:$0xff]
    %v2959 = vld [vmem:[%s8 + $0x1380] sm:$0xff]
    %v2960 = vld [vmem:[%s8 + $0x1388] sm:$0xff]
    %v2961 = vld [vmem:[%s8 + $0x1390] sm:$0xff]
    %v2962 = vld [vmem:[%s8 + $0x1398] sm:$0xff]
    %v2963 = vld [vmem:[%s8 + $0x13a0] sm:$0xff]
    %v2964 = vld [vmem:[%s8 + $0x13a8] sm:$0xff]
    %v2965 = vld [vmem:[%s8 + $0x13b0] sm:$0xff]
    %v2966 = vld [vmem:[%s8 + $0x13b8] sm:$0xff]
    %v2967 = vld [vmem:[%s8 + $0x13c0] sm:$0xff]
    %v2968 = vld [vmem:[%s8 + $0x13c8] sm:$0xff]
    %v2969 = vld [vmem:[%s8 + $0x13d0] sm:$0xff]
    %v2970 = vld [vmem:[%s8 + $0x13d8] sm:$0xff]
    %v2971 = vld [vmem:[%s8 + $0x13e0] sm:$0xff]
    %v2972 = vld [vmem:[%s8 + $0x13e8] sm:$0xff]
    %v2973 = vld [vmem:[%s8 + $0x13f0] sm:$0xff]
    %v2974 = vld [vmem:[%s8 + $0x13f8] sm:$0xff]
    %v2975 = vld [vmem:[%s8 + $0x1400] sm:$0xff]
    %v2976 = vld [vmem:[%s8 + $0x1408] sm:$0xff]
    %v2977 = vld [vmem:[%s8 + $0x1410] sm:$0xff]
    %v2978 = vld [vmem:[%s8 + $0x1418] sm:$0xff]
    %v2979 = vld [vmem:[%s8 + $0x1420] sm:$0xff]
    %v2980 = vld [vmem:[%s8 + $0x1428] sm:$0xff]
    %v2981 = vld [vmem:[%s8 + $0x1430] sm:$0xff]
    %v2982 = vld [vmem:[%s8 + $0x1438] sm:$0xff]
    %v2983 = vld [vmem:[%s8 + $0x1440] sm:$0xff]
    %v2984 = vld [vmem:[%s8 + $0x1448] sm:$0xff]
    %v2985 = vld [vmem:[%s8 + $0x1450] sm:$0xff]
    %v2986 = vld [vmem:[%s8 + $0x1458] sm:$0xff]
    %v2987 = vld [vmem:[%s8 + $0x1460] sm:$0xff]
    %v2988 = vld [vmem:[%s8 + $0x1468] sm:$0xff]
    %v2989 = vld [vmem:[%s8 + $0x1470] sm:$0xff]
    %v2990 = vld [vmem:[%s8 + $0x1478] sm:$0xff]
    %v2991 = vld [vmem:[%s8 + $0x1480] sm:$0xff]
    %v2992 = vld [vmem:[%s8 + $0x1488] sm:$0xff]
    %v2993 = vld [vmem:[%s8 + $0x1490] sm:$0xff]
    %v2994 = vld [vmem:[%s8 + $0x1498] sm:$0xff]
    %v2995 = vld [vmem:[%s8 + $0x14a0] sm:$0xff]
    %v2996 = vld [vmem:[%s8 + $0x14a8] sm:$0xff]
    %v2997 = vld [vmem:[%s8 + $0x14b0] sm:$0xff]
    %v2998 = vld [vmem:[%s8 + $0x14b8] sm:$0xff]
    %v2999 = vld [vmem:[%s8 + $0x14c0] sm:$0xff]
    %v3000 = vld [vmem:[%s8 + $0x14c8] sm:$0xff]
    %v3001 = vld [vmem:[%s8 + $0x14d0] sm:$0xff]
    %v3002 = vld [vmem:[%s8 + $0x14d8] sm:$0xff]
    %v3003 = vld [vmem:[%s8 + $0x14e0] sm:$0xff]
    %v3004 = vld [vmem:[%s8 + $0x14e8] sm:$0xff]
    %v3005 = vld [vmem:[%s8 + $0x14f0] sm:$0xff]
    %v3006 = vld [vmem:[%s8 + $0x14f8] sm:$0xff]
    %v3007 = vld [vmem:[%s8 + $0x1500] sm:$0xff]
    %v3008 = vld [vmem:[%s8 + $0x1508] sm:$0xff]
    %v3009 = vld [vmem:[%s8 + $0x1510] sm:$0xff]
    %v3010 = vld [vmem:[%s8 + $0x1518] sm:$0xff]
    %v3011 = vld [vmem:[%s8 + $0x1520] sm:$0xff]
    %v3012 = vld [vmem:[%s8 + $0x1528] sm:$0xff]
    %v3013 = vld [vmem:[%s8 + $0x1530] sm:$0xff]
    %v3014 = vld [vmem:[%s8 + $0x1538] sm:$0xff]
    %v3015 = vld [vmem:[%s8 + $0x1540] sm:$0xff]
    %v3016 = vld [vmem:[%s8 + $0x1548] sm:$0xff]
    %v3017 = vld [vmem:[%s8 + $0x1550] sm:$0xff]
    %v3018 = vld [vmem:[%s8 + $0x1558] sm:$0xff]
    %v3019 = vld [vmem:[%s8 + $0x1560] sm:$0xff]
    %v3020 = vld [vmem:[%s8 + $0x1568] sm:$0xff]
    %v3021 = vld [vmem:[%s8 + $0x1570] sm:$0xff]
    %v3022 = vld [vmem:[%s8 + $0x1578] sm:$0xff]
    %v3023 = vld [vmem:[%s8 + $0x1580] sm:$0xff]
    %v3024 = vld [vmem:[%s8 + $0x1588] sm:$0xff]
    %v3025 = vld [vmem:[%s8 + $0x1590] sm:$0xff]
    %v3026 = vld [vmem:[%s8 + $0x1598] sm:$0xff]
    %v3027 = vld [vmem:[%s8 + $0x15a0] sm:$0xff]
    %v3028 = vld [vmem:[%s8 + $0x15a8] sm:$0xff]
    %v3029 = vld [vmem:[%s8 + $0x15b0] sm:$0xff]
    %v3030 = vld [vmem:[%s8 + $0x15b8] sm:$0xff]
    %v3031 = vld [vmem:[%s8 + $0x15c0] sm:$0xff]
    %v3032 = vld [vmem:[%s8 + $0x15c8] sm:$0xff]
    %v3033 = vld [vmem:[%s8 + $0x15d0] sm:$0xff]
    %v3034 = vld [vmem:[%s8 + $0x15d8] sm:$0xff]
    %v3035 = vld [vmem:[%s8 + $0x15e0] sm:$0xff]
    %v3036 = vld [vmem:[%s8 + $0x15e8] sm:$0xff]
    %v3037 = vld [vmem:[%s8 + $0x15f0] sm:$0xff]
    %v3038 = vld [vmem:[%s8 + $0x15f8] sm:$0xff]
    %v3039 = vld [vmem:[%s8 + $0x1600] sm:$0xff]
    %v3040 = vld [vmem:[%s8 + $0x1608] sm:$0xff]
    %v3041 = vld [vmem:[%s8 + $0x1610] sm:$0xff]
    %v3042 = vld [vmem:[%s8 + $0x1618] sm:$0xff]
    %v3043 = vld [vmem:[%s8 + $0x1620] sm:$0xff]
    %v3044 = vld [vmem:[%s8 + $0x1628] sm:$0xff]
    %v3045 = vld [vmem:[%s8 + $0x1630] sm:$0xff]
    %v3046 = vld [vmem:[%s8 + $0x1638] sm:$0xff]
    %v3047 = vld [vmem:[%s8 + $0x1640] sm:$0xff]
    %v3048 = vld [vmem:[%s8 + $0x1648] sm:$0xff]
    %v3049 = vld [vmem:[%s8 + $0x1650] sm:$0xff]
    %v3050 = vld [vmem:[%s8 + $0x1658] sm:$0xff]
    %v3051 = vld [vmem:[%s8 + $0x1660] sm:$0xff]
    %v3052 = vld [vmem:[%s8 + $0x1668] sm:$0xff]
    %v3053 = vld [vmem:[%s8 + $0x1670] sm:$0xff]
    %v3054 = vld [vmem:[%s8 + $0x1678] sm:$0xff]
    %v3055 = vld [vmem:[%s9] sm:$0xff]
    %v3057 = vlaneseq
    %v3058 = vshrl.u32 %v3057, 7
    %v3059 = vsub.s32 0, %v3058
    %v3060 = vrot.slane %v3055, %v3059
    %v3061 = vlaneseq
    %v3062 = vshrl.u32 %v3061, 7
    %v3063 = vsub.s32 1, %v3062
    %v3064 = vrot.slane %v3055, %v3063
    %v3065 = vlaneseq
    %v3066 = vshrl.u32 %v3065, 7
    %v3067 = vsub.s32 2, %v3066
    %v3068 = vrot.slane %v3055, %v3067
    %v3069 = vlaneseq
    %v3070 = vshrl.u32 %v3069, 7
    %v3071 = vsub.s32 3, %v3070
    %v3072 = vrot.slane %v3055, %v3071
    %v3073 = vlaneseq
    %v3074 = vshrl.u32 %v3073, 7
    %v3075 = vsub.s32 4, %v3074
    %v3076 = vrot.slane %v3055, %v3075
    %v3077 = vlaneseq
    %v3078 = vshrl.u32 %v3077, 7
    %v3079 = vsub.s32 5, %v3078
    %v3080 = vrot.slane %v3055, %v3079
    %v3081 = vlaneseq
    %v3082 = vshrl.u32 %v3081, 7
    %v3083 = vsub.s32 6, %v3082
    %v3084 = vrot.slane %v3055, %v3083
    %v3085 = vlaneseq
    %v3086 = vshrl.u32 %v3085, 7
    %v3087 = vsub.s32 7, %v3086
    %v3088 = vrot.slane %v3055, %v3087
    %v3817 = vunpack.c.l.b16 %v2335
    %v3818 = vunpack.c.h.b16 %v2335
    %v3819 = vunpack.c.l.b16 %v2336
    %v3820 = vunpack.c.h.b16 %v2336
    %v3821 = vunpack.c.l.b16 %v2337
    %v3822 = vunpack.c.h.b16 %v2337
    %v3823 = vunpack.c.l.b16 %v2338
    %v3824 = vunpack.c.h.b16 %v2338
    %v3825 = vunpack.c.l.b16 %v2339
    %v3826 = vunpack.c.h.b16 %v2339
    %v3827 = vunpack.c.l.b16 %v2340
    %v3828 = vunpack.c.h.b16 %v2340
    %v3829 = vunpack.c.l.b16 %v2341
    %v3830 = vunpack.c.h.b16 %v2341
    %v3831 = vunpack.c.l.b16 %v2342
    %v3832 = vunpack.c.h.b16 %v2342
    %v3833 = vunpack.c.l.b16 %v2343
    %v3834 = vunpack.c.h.b16 %v2343
    %v3835 = vunpack.c.l.b16 %v2344
    %v3836 = vunpack.c.h.b16 %v2344
    %v3837 = vunpack.c.l.b16 %v2345
    %v3838 = vunpack.c.h.b16 %v2345
    %v3839 = vunpack.c.l.b16 %v2346
    %v3840 = vunpack.c.h.b16 %v2346
    %v3841 = vunpack.c.l.b16 %v2347
    %v3842 = vunpack.c.h.b16 %v2347
    %v3843 = vunpack.c.l.b16 %v2348
    %v3844 = vunpack.c.h.b16 %v2348
    %v3845 = vunpack.c.l.b16 %v2349
    %v3846 = vunpack.c.h.b16 %v2349
    %v3847 = vunpack.c.l.b16 %v2350
    %v3848 = vunpack.c.h.b16 %v2350
    %v3849 = vunpack.c.l.b16 %v2351
    %v3850 = vunpack.c.h.b16 %v2351
    %v3851 = vunpack.c.l.b16 %v2352
    %v3852 = vunpack.c.h.b16 %v2352
    %v3853 = vunpack.c.l.b16 %v2353
    %v3854 = vunpack.c.h.b16 %v2353
    %v3855 = vunpack.c.l.b16 %v2354
    %v3856 = vunpack.c.h.b16 %v2354
    %v3857 = vunpack.c.l.b16 %v2355
    %v3858 = vunpack.c.h.b16 %v2355
    %v3859 = vunpack.c.l.b16 %v2356
    %v3860 = vunpack.c.h.b16 %v2356
    %v3861 = vunpack.c.l.b16 %v2357
    %v3862 = vunpack.c.h.b16 %v2357
    %v3863 = vunpack.c.l.b16 %v2358
    %v3864 = vunpack.c.h.b16 %v2358
    %v3865 = vunpack.c.l.b16 %v2359
    %v3866 = vunpack.c.h.b16 %v2359
    %v3867 = vunpack.c.l.b16 %v2360
    %v3868 = vunpack.c.h.b16 %v2360
    %v3869 = vunpack.c.l.b16 %v2361
    %v3870 = vunpack.c.h.b16 %v2361
    %v3871 = vunpack.c.l.b16 %v2362
    %v3872 = vunpack.c.h.b16 %v2362
    %v3873 = vunpack.c.l.b16 %v2363
    %v3874 = vunpack.c.h.b16 %v2363
    %v3875 = vunpack.c.l.b16 %v2364
    %v3876 = vunpack.c.h.b16 %v2364
    %v3877 = vunpack.c.l.b16 %v2365
    %v3878 = vunpack.c.h.b16 %v2365
    %v3879 = vunpack.c.l.b16 %v2366
    %v3880 = vunpack.c.h.b16 %v2366
    %v3881 = vunpack.c.l.b16 %v2367
    %v3882 = vunpack.c.h.b16 %v2367
    %v3883 = vunpack.c.l.b16 %v2368
    %v3884 = vunpack.c.h.b16 %v2368
    %v3885 = vunpack.c.l.b16 %v2369
    %v3886 = vunpack.c.h.b16 %v2369
    %v3887 = vunpack.c.l.b16 %v2370
    %v3888 = vunpack.c.h.b16 %v2370
    %v3889 = vunpack.c.l.b16 %v2371
    %v3890 = vunpack.c.h.b16 %v2371
    %v3891 = vunpack.c.l.b16 %v2372
    %v3892 = vunpack.c.h.b16 %v2372
    %v3893 = vunpack.c.l.b16 %v2373
    %v3894 = vunpack.c.h.b16 %v2373
    %v3895 = vunpack.c.l.b16 %v2374
    %v3896 = vunpack.c.h.b16 %v2374
    %v3897 = vunpack.c.l.b16 %v2375
    %v3898 = vunpack.c.h.b16 %v2375
    %v3899 = vunpack.c.l.b16 %v2376
    %v3900 = vunpack.c.h.b16 %v2376
    %v3901 = vunpack.c.l.b16 %v2377
    %v3902 = vunpack.c.h.b16 %v2377
    %v3903 = vunpack.c.l.b16 %v2378
    %v3904 = vunpack.c.h.b16 %v2378
    %v3905 = vunpack.c.l.b16 %v2379
    %v3906 = vunpack.c.h.b16 %v2379
    %v3907 = vunpack.c.l.b16 %v2380
    %v3908 = vunpack.c.h.b16 %v2380
    %v3909 = vunpack.c.l.b16 %v2381
    %v3910 = vunpack.c.h.b16 %v2381
    %v3911 = vunpack.c.l.b16 %v2382
    %v3912 = vunpack.c.h.b16 %v2382
    %v3913 = vunpack.c.l.b16 %v2383
    %v3914 = vunpack.c.h.b16 %v2383
    %v3915 = vunpack.c.l.b16 %v2384
    %v3916 = vunpack.c.h.b16 %v2384
    %v3917 = vunpack.c.l.b16 %v2385
    %v3918 = vunpack.c.h.b16 %v2385
    %v3919 = vunpack.c.l.b16 %v2386
    %v3920 = vunpack.c.h.b16 %v2386
    %v3921 = vunpack.c.l.b16 %v2387
    %v3922 = vunpack.c.h.b16 %v2387
    %v3923 = vunpack.c.l.b16 %v2388
    %v3924 = vunpack.c.h.b16 %v2388
    %v3925 = vunpack.c.l.b16 %v2389
    %v3926 = vunpack.c.h.b16 %v2389
    %v3927 = vunpack.c.l.b16 %v2390
    %v3928 = vunpack.c.h.b16 %v2390
    %v3929 = vunpack.c.l.b16 %v2391
    %v3930 = vunpack.c.h.b16 %v2391
    %v3931 = vunpack.c.l.b16 %v2392
    %v3932 = vunpack.c.h.b16 %v2392
    %v3933 = vunpack.c.l.b16 %v2393
    %v3934 = vunpack.c.h.b16 %v2393
    %v3935 = vunpack.c.l.b16 %v2394
    %v3936 = vunpack.c.h.b16 %v2394
    %v3937 = vunpack.c.l.b16 %v2395
    %v3938 = vunpack.c.h.b16 %v2395
    %v3939 = vunpack.c.l.b16 %v2396
    %v3940 = vunpack.c.h.b16 %v2396
    %v3941 = vunpack.c.l.b16 %v2397
    %v3942 = vunpack.c.h.b16 %v2397
    %v3943 = vunpack.c.l.b16 %v2398
    %v3944 = vunpack.c.h.b16 %v2398
    %v3945 = vunpack.c.l.b16 %v2399
    %v3946 = vunpack.c.h.b16 %v2399
    %v3947 = vunpack.c.l.b16 %v2400
    %v3948 = vunpack.c.h.b16 %v2400
    %v3949 = vunpack.c.l.b16 %v2401
    %v3950 = vunpack.c.h.b16 %v2401
    %v3951 = vunpack.c.l.b16 %v2402
    %v3952 = vunpack.c.h.b16 %v2402
    %v3953 = vunpack.c.l.b16 %v2403
    %v3954 = vunpack.c.h.b16 %v2403
    %v3955 = vunpack.c.l.b16 %v2404
    %v3956 = vunpack.c.h.b16 %v2404
    %v3957 = vunpack.c.l.b16 %v2405
    %v3958 = vunpack.c.h.b16 %v2405
    %v3959 = vunpack.c.l.b16 %v2406
    %v3960 = vunpack.c.h.b16 %v2406
    %v3961 = vunpack.c.l.b16 %v2407
    %v3962 = vunpack.c.h.b16 %v2407
    %v3963 = vunpack.c.l.b16 %v2408
    %v3964 = vunpack.c.h.b16 %v2408
    %v3965 = vunpack.c.l.b16 %v2409
    %v3966 = vunpack.c.h.b16 %v2409
    %v3967 = vunpack.c.l.b16 %v2410
    %v3968 = vunpack.c.h.b16 %v2410
    %v3969 = vunpack.c.l.b16 %v2411
    %v3970 = vunpack.c.h.b16 %v2411
    %v3971 = vunpack.c.l.b16 %v2412
    %v3972 = vunpack.c.h.b16 %v2412
    %v3973 = vunpack.c.l.b16 %v2413
    %v3974 = vunpack.c.h.b16 %v2413
    %v3975 = vunpack.c.l.b16 %v2414
    %v3976 = vunpack.c.h.b16 %v2414
    %v3977 = vunpack.c.l.b16 %v2415
    %v3978 = vunpack.c.h.b16 %v2415
    %v3979 = vunpack.c.l.b16 %v2416
    %v3980 = vunpack.c.h.b16 %v2416
    %v3981 = vunpack.c.l.b16 %v2417
    %v3982 = vunpack.c.h.b16 %v2417
    %v3983 = vunpack.c.l.b16 %v2418
    %v3984 = vunpack.c.h.b16 %v2418
    %v3985 = vunpack.c.l.b16 %v2419
    %v3986 = vunpack.c.h.b16 %v2419
    %v3987 = vunpack.c.l.b16 %v2420
    %v3988 = vunpack.c.h.b16 %v2420
    %v3989 = vunpack.c.l.b16 %v2421
    %v3990 = vunpack.c.h.b16 %v2421
    %v3991 = vunpack.c.l.b16 %v2422
    %v3992 = vunpack.c.h.b16 %v2422
    %v3993 = vunpack.c.l.b16 %v2423
    %v3994 = vunpack.c.h.b16 %v2423
    %v3995 = vunpack.c.l.b16 %v2424
    %v3996 = vunpack.c.h.b16 %v2424
    %v3997 = vunpack.c.l.b16 %v2425
    %v3998 = vunpack.c.h.b16 %v2425
    %v3999 = vunpack.c.l.b16 %v2426
    %v4000 = vunpack.c.h.b16 %v2426
    %v4001 = vunpack.c.l.b16 %v2427
    %v4002 = vunpack.c.h.b16 %v2427
    %v4003 = vunpack.c.l.b16 %v2428
    %v4004 = vunpack.c.h.b16 %v2428
    %v4005 = vunpack.c.l.b16 %v2429
    %v4006 = vunpack.c.h.b16 %v2429
    %v4007 = vunpack.c.l.b16 %v2430
    %v4008 = vunpack.c.h.b16 %v2430
    %v4009 = vunpack.c.l.b16 %v2431
    %v4010 = vunpack.c.h.b16 %v2431
    %v4011 = vunpack.c.l.b16 %v2432
    %v4012 = vunpack.c.h.b16 %v2432
    %v4013 = vunpack.c.l.b16 %v2433
    %v4014 = vunpack.c.h.b16 %v2433
    %v4015 = vunpack.c.l.b16 %v2434
    %v4016 = vunpack.c.h.b16 %v2434
    %v4017 = vunpack.c.l.b16 %v2435
    %v4018 = vunpack.c.h.b16 %v2435
    %v4019 = vunpack.c.l.b16 %v2436
    %v4020 = vunpack.c.h.b16 %v2436
    %v4021 = vunpack.c.l.b16 %v2437
    %v4022 = vunpack.c.h.b16 %v2437
    %v4023 = vunpack.c.l.b16 %v2438
    %v4024 = vunpack.c.h.b16 %v2438
    %v4025 = vunpack.c.l.b16 %v2439
    %v4026 = vunpack.c.h.b16 %v2439
    %v4027 = vunpack.c.l.b16 %v2440
    %v4028 = vunpack.c.h.b16 %v2440
    %v4029 = vunpack.c.l.b16 %v2441
    %v4030 = vunpack.c.h.b16 %v2441
    %v4031 = vunpack.c.l.b16 %v2442
    %v4032 = vunpack.c.h.b16 %v2442
    %v4033 = vunpack.c.l.b16 %v2443
    %v4034 = vunpack.c.h.b16 %v2443
    %v4035 = vunpack.c.l.b16 %v2444
    %v4036 = vunpack.c.h.b16 %v2444
    %v4037 = vunpack.c.l.b16 %v2445
    %v4038 = vunpack.c.h.b16 %v2445
    %v4039 = vunpack.c.l.b16 %v2446
    %v4040 = vunpack.c.h.b16 %v2446
    %v4041 = vunpack.c.l.b16 %v2447
    %v4042 = vunpack.c.h.b16 %v2447
    %v4043 = vunpack.c.l.b16 %v2448
    %v4044 = vunpack.c.h.b16 %v2448
    %v4045 = vunpack.c.l.b16 %v2449
    %v4046 = vunpack.c.h.b16 %v2449
    %v4047 = vunpack.c.l.b16 %v2450
    %v4048 = vunpack.c.h.b16 %v2450
    %v4049 = vunpack.c.l.b16 %v2451
    %v4050 = vunpack.c.h.b16 %v2451
    %v4051 = vunpack.c.l.b16 %v2452
    %v4052 = vunpack.c.h.b16 %v2452
    %v4053 = vunpack.c.l.b16 %v2453
    %v4054 = vunpack.c.h.b16 %v2453
    %v4055 = vunpack.c.l.b16 %v2454
    %v4056 = vunpack.c.h.b16 %v2454
    %v4057 = vunpack.c.l.b16 %v2455
    %v4058 = vunpack.c.h.b16 %v2455
    %v4059 = vunpack.c.l.b16 %v2456
    %v4060 = vunpack.c.h.b16 %v2456
    %v4061 = vunpack.c.l.b16 %v2457
    %v4062 = vunpack.c.h.b16 %v2457
    %v4063 = vunpack.c.l.b16 %v2458
    %v4064 = vunpack.c.h.b16 %v2458
    %v4065 = vunpack.c.l.b16 %v2459
    %v4066 = vunpack.c.h.b16 %v2459
    %v4067 = vunpack.c.l.b16 %v2460
    %v4068 = vunpack.c.h.b16 %v2460
    %v4069 = vunpack.c.l.b16 %v2461
    %v4070 = vunpack.c.h.b16 %v2461
    %v4071 = vunpack.c.l.b16 %v2462
    %v4072 = vunpack.c.h.b16 %v2462
    %v4073 = vunpack.c.l.b16 %v2463
    %v4074 = vunpack.c.h.b16 %v2463
    %v4075 = vunpack.c.l.b16 %v2464
    %v4076 = vunpack.c.h.b16 %v2464
    %v4077 = vunpack.c.l.b16 %v2465
    %v4078 = vunpack.c.h.b16 %v2465
    %v4079 = vunpack.c.l.b16 %v2466
    %v4080 = vunpack.c.h.b16 %v2466
    %v4081 = vunpack.c.l.b16 %v2467
    %v4082 = vunpack.c.h.b16 %v2467
    %v4083 = vunpack.c.l.b16 %v2468
    %v4084 = vunpack.c.h.b16 %v2468
    %v4085 = vunpack.c.l.b16 %v2469
    %v4086 = vunpack.c.h.b16 %v2469
    %v4087 = vunpack.c.l.b16 %v2470
    %v4088 = vunpack.c.h.b16 %v2470
    %v4089 = vunpack.c.l.b16 %v2471
    %v4090 = vunpack.c.h.b16 %v2471
    %v4091 = vunpack.c.l.b16 %v2472
    %v4092 = vunpack.c.h.b16 %v2472
    %v4093 = vunpack.c.l.b16 %v2473
    %v4094 = vunpack.c.h.b16 %v2473
    %v4095 = vunpack.c.l.b16 %v2474
    %v4096 = vunpack.c.h.b16 %v2474
    %v4097 = vunpack.c.l.b16 %v2475
    %v4098 = vunpack.c.h.b16 %v2475
    %v4099 = vunpack.c.l.b16 %v2476
    %v4100 = vunpack.c.h.b16 %v2476
    %v4101 = vunpack.c.l.b16 %v2477
    %v4102 = vunpack.c.h.b16 %v2477
    %v4103 = vunpack.c.l.b16 %v2478
    %v4104 = vunpack.c.h.b16 %v2478
    %v4105 = vunpack.c.l.b16 %v2479
    %v4106 = vunpack.c.h.b16 %v2479
    %v4107 = vunpack.c.l.b16 %v2480
    %v4108 = vunpack.c.h.b16 %v2480
    %v4109 = vunpack.c.l.b16 %v2481
    %v4110 = vunpack.c.h.b16 %v2481
    %v4111 = vunpack.c.l.b16 %v2482
    %v4112 = vunpack.c.h.b16 %v2482
    %v4113 = vunpack.c.l.b16 %v2483
    %v4114 = vunpack.c.h.b16 %v2483
    %v4115 = vunpack.c.l.b16 %v2484
    %v4116 = vunpack.c.h.b16 %v2484
    %v4117 = vunpack.c.l.b16 %v2485
    %v4118 = vunpack.c.h.b16 %v2485
    %v4119 = vunpack.c.l.b16 %v2486
    %v4120 = vunpack.c.h.b16 %v2486
    %v4121 = vunpack.c.l.b16 %v2487
    %v4122 = vunpack.c.h.b16 %v2487
    %v4123 = vunpack.c.l.b16 %v2488
    %v4124 = vunpack.c.h.b16 %v2488
    %v4125 = vunpack.c.l.b16 %v2489
    %v4126 = vunpack.c.h.b16 %v2489
    %v4127 = vunpack.c.l.b16 %v2490
    %v4128 = vunpack.c.h.b16 %v2490
    %v4129 = vunpack.c.l.b16 %v2491
    %v4130 = vunpack.c.h.b16 %v2491
    %v4131 = vunpack.c.l.b16 %v2492
    %v4132 = vunpack.c.h.b16 %v2492
    %v4133 = vunpack.c.l.b16 %v2493
    %v4134 = vunpack.c.h.b16 %v2493
    %v4135 = vunpack.c.l.b16 %v2494
    %v4136 = vunpack.c.h.b16 %v2494
    %v4137 = vunpack.c.l.b16 %v2495
    %v4138 = vunpack.c.h.b16 %v2495
    %v4139 = vunpack.c.l.b16 %v2496
    %v4140 = vunpack.c.h.b16 %v2496
    %v4141 = vunpack.c.l.b16 %v2497
    %v4142 = vunpack.c.h.b16 %v2497
    %v4143 = vunpack.c.l.b16 %v2498
    %v4144 = vunpack.c.h.b16 %v2498
    %v4145 = vunpack.c.l.b16 %v2499
    %v4146 = vunpack.c.h.b16 %v2499
    %v4147 = vunpack.c.l.b16 %v2500
    %v4148 = vunpack.c.h.b16 %v2500
    %v4149 = vunpack.c.l.b16 %v2501
    %v4150 = vunpack.c.h.b16 %v2501
    %v4151 = vunpack.c.l.b16 %v2502
    %v4152 = vunpack.c.h.b16 %v2502
    %v4153 = vunpack.c.l.b16 %v2503
    %v4154 = vunpack.c.h.b16 %v2503
    %v4155 = vunpack.c.l.b16 %v2504
    %v4156 = vunpack.c.h.b16 %v2504
    %v4157 = vunpack.c.l.b16 %v2505
    %v4158 = vunpack.c.h.b16 %v2505
    %v4159 = vunpack.c.l.b16 %v2506
    %v4160 = vunpack.c.h.b16 %v2506
    %v4161 = vunpack.c.l.b16 %v2507
    %v4162 = vunpack.c.h.b16 %v2507
    %v4163 = vunpack.c.l.b16 %v2508
    %v4164 = vunpack.c.h.b16 %v2508
    %v4165 = vunpack.c.l.b16 %v2509
    %v4166 = vunpack.c.h.b16 %v2509
    %v4167 = vunpack.c.l.b16 %v2510
    %v4168 = vunpack.c.h.b16 %v2510
    %v4169 = vunpack.c.l.b16 %v2511
    %v4170 = vunpack.c.h.b16 %v2511
    %v4171 = vunpack.c.l.b16 %v2512
    %v4172 = vunpack.c.h.b16 %v2512
    %v4173 = vunpack.c.l.b16 %v2513
    %v4174 = vunpack.c.h.b16 %v2513
    %v4175 = vunpack.c.l.b16 %v2514
    %v4176 = vunpack.c.h.b16 %v2514
    %v4177 = vunpack.c.l.b16 %v2515
    %v4178 = vunpack.c.h.b16 %v2515
    %v4179 = vunpack.c.l.b16 %v2516
    %v4180 = vunpack.c.h.b16 %v2516
    %v4181 = vunpack.c.l.b16 %v2517
    %v4182 = vunpack.c.h.b16 %v2517
    %v4183 = vunpack.c.l.b16 %v2518
    %v4184 = vunpack.c.h.b16 %v2518
    %v4185 = vunpack.c.l.b16 %v2519
    %v4186 = vunpack.c.h.b16 %v2519
    %v4187 = vunpack.c.l.b16 %v2520
    %v4188 = vunpack.c.h.b16 %v2520
    %v4189 = vunpack.c.l.b16 %v2521
    %v4190 = vunpack.c.h.b16 %v2521
    %v4191 = vunpack.c.l.b16 %v2522
    %v4192 = vunpack.c.h.b16 %v2522
    %v4193 = vunpack.c.l.b16 %v2523
    %v4194 = vunpack.c.h.b16 %v2523
    %v4195 = vunpack.c.l.b16 %v2524
    %v4196 = vunpack.c.h.b16 %v2524
    %v4197 = vunpack.c.l.b16 %v2525
    %v4198 = vunpack.c.h.b16 %v2525
    %v4199 = vunpack.c.l.b16 %v2526
    %v4200 = vunpack.c.h.b16 %v2526
    %v4201 = vunpack.c.l.b16 %v2527
    %v4202 = vunpack.c.h.b16 %v2527
    %v4203 = vunpack.c.l.b16 %v2528
    %v4204 = vunpack.c.h.b16 %v2528
    %v4205 = vunpack.c.l.b16 %v2529
    %v4206 = vunpack.c.h.b16 %v2529
    %v4207 = vunpack.c.l.b16 %v2530
    %v4208 = vunpack.c.h.b16 %v2530
    %v4209 = vunpack.c.l.b16 %v2531
    %v4210 = vunpack.c.h.b16 %v2531
    %v4211 = vunpack.c.l.b16 %v2532
    %v4212 = vunpack.c.h.b16 %v2532
    %v4213 = vunpack.c.l.b16 %v2533
    %v4214 = vunpack.c.h.b16 %v2533
    %v4215 = vunpack.c.l.b16 %v2534
    %v4216 = vunpack.c.h.b16 %v2534
    %v4217 = vunpack.c.l.b16 %v2535
    %v4218 = vunpack.c.h.b16 %v2535
    %v4219 = vunpack.c.l.b16 %v2536
    %v4220 = vunpack.c.h.b16 %v2536
    %v4221 = vunpack.c.l.b16 %v2537
    %v4222 = vunpack.c.h.b16 %v2537
    %v4223 = vunpack.c.l.b16 %v2538
    %v4224 = vunpack.c.h.b16 %v2538
    %v4225 = vunpack.c.l.b16 %v2539
    %v4226 = vunpack.c.h.b16 %v2539
    %v4227 = vunpack.c.l.b16 %v2540
    %v4228 = vunpack.c.h.b16 %v2540
    %v4229 = vunpack.c.l.b16 %v2541
    %v4230 = vunpack.c.h.b16 %v2541
    %v4231 = vunpack.c.l.b16 %v2542
    %v4232 = vunpack.c.h.b16 %v2542
    %v4233 = vunpack.c.l.b16 %v2543
    %v4234 = vunpack.c.h.b16 %v2543
    %v4235 = vunpack.c.l.b16 %v2544
    %v4236 = vunpack.c.h.b16 %v2544
    %v4237 = vunpack.c.l.b16 %v2545
    %v4238 = vunpack.c.h.b16 %v2545
    %v4239 = vunpack.c.l.b16 %v2546
    %v4240 = vunpack.c.h.b16 %v2546
    %v4241 = vunpack.c.l.b16 %v2547
    %v4242 = vunpack.c.h.b16 %v2547
    %v4243 = vunpack.c.l.b16 %v2548
    %v4244 = vunpack.c.h.b16 %v2548
    %v4245 = vunpack.c.l.b16 %v2549
    %v4246 = vunpack.c.h.b16 %v2549
    %v4247 = vunpack.c.l.b16 %v2550
    %v4248 = vunpack.c.h.b16 %v2550
    %v4249 = vunpack.c.l.b16 %v2551
    %v4250 = vunpack.c.h.b16 %v2551
    %v4251 = vunpack.c.l.b16 %v2552
    %v4252 = vunpack.c.h.b16 %v2552
    %v4253 = vunpack.c.l.b16 %v2553
    %v4254 = vunpack.c.h.b16 %v2553
    %v4255 = vunpack.c.l.b16 %v2554
    %v4256 = vunpack.c.h.b16 %v2554
    %v4257 = vunpack.c.l.b16 %v2555
    %v4258 = vunpack.c.h.b16 %v2555
    %v4259 = vunpack.c.l.b16 %v2556
    %v4260 = vunpack.c.h.b16 %v2556
    %v4261 = vunpack.c.l.b16 %v2557
    %v4262 = vunpack.c.h.b16 %v2557
    %v4263 = vunpack.c.l.b16 %v2558
    %v4264 = vunpack.c.h.b16 %v2558
    %v4265 = vunpack.c.l.b16 %v2559
    %v4266 = vunpack.c.h.b16 %v2559
    %v4267 = vunpack.c.l.b16 %v2560
    %v4268 = vunpack.c.h.b16 %v2560
    %v4269 = vunpack.c.l.b16 %v2561
    %v4270 = vunpack.c.h.b16 %v2561
    %v4271 = vunpack.c.l.b16 %v2562
    %v4272 = vunpack.c.h.b16 %v2562
    %v4273 = vunpack.c.l.b16 %v2563
    %v4274 = vunpack.c.h.b16 %v2563
    %v4275 = vunpack.c.l.b16 %v2564
    %v4276 = vunpack.c.h.b16 %v2564
    %v4277 = vunpack.c.l.b16 %v2565
    %v4278 = vunpack.c.h.b16 %v2565
    %v4279 = vunpack.c.l.b16 %v2566
    %v4280 = vunpack.c.h.b16 %v2566
    %v4281 = vunpack.c.l.b16 %v2567
    %v4282 = vunpack.c.h.b16 %v2567
    %v4283 = vunpack.c.l.b16 %v2568
    %v4284 = vunpack.c.h.b16 %v2568
    %v4285 = vunpack.c.l.b16 %v2569
    %v4286 = vunpack.c.h.b16 %v2569
    %v4287 = vunpack.c.l.b16 %v2570
    %v4288 = vunpack.c.h.b16 %v2570
    %v4289 = vunpack.c.l.b16 %v2571
    %v4290 = vunpack.c.h.b16 %v2571
    %v4291 = vunpack.c.l.b16 %v2572
    %v4292 = vunpack.c.h.b16 %v2572
    %v4293 = vunpack.c.l.b16 %v2573
    %v4294 = vunpack.c.h.b16 %v2573
    %v4295 = vunpack.c.l.b16 %v2574
    %v4296 = vunpack.c.h.b16 %v2574
    %v4297 = vunpack.c.l.b16 %v2575
    %v4298 = vunpack.c.h.b16 %v2575
    %v4299 = vunpack.c.l.b16 %v2576
    %v4300 = vunpack.c.h.b16 %v2576
    %v4301 = vunpack.c.l.b16 %v2577
    %v4302 = vunpack.c.h.b16 %v2577
    %v4303 = vunpack.c.l.b16 %v2578
    %v4304 = vunpack.c.h.b16 %v2578
    %v4305 = vunpack.c.l.b16 %v2579
    %v4306 = vunpack.c.h.b16 %v2579
    %v4307 = vunpack.c.l.b16 %v2580
    %v4308 = vunpack.c.h.b16 %v2580
    %v4309 = vunpack.c.l.b16 %v2581
    %v4310 = vunpack.c.h.b16 %v2581
    %v4311 = vunpack.c.l.b16 %v2582
    %v4312 = vunpack.c.h.b16 %v2582
    %v4313 = vunpack.c.l.b16 %v2583
    %v4314 = vunpack.c.h.b16 %v2583
    %v4315 = vunpack.c.l.b16 %v2584
    %v4316 = vunpack.c.h.b16 %v2584
    %v4317 = vunpack.c.l.b16 %v2585
    %v4318 = vunpack.c.h.b16 %v2585
    %v4319 = vunpack.c.l.b16 %v2586
    %v4320 = vunpack.c.h.b16 %v2586
    %v4321 = vunpack.c.l.b16 %v2587
    %v4322 = vunpack.c.h.b16 %v2587
    %v4323 = vunpack.c.l.b16 %v2588
    %v4324 = vunpack.c.h.b16 %v2588
    %v4325 = vunpack.c.l.b16 %v2589
    %v4326 = vunpack.c.h.b16 %v2589
    %v4327 = vunpack.c.l.b16 %v2590
    %v4328 = vunpack.c.h.b16 %v2590
    %v4329 = vunpack.c.l.b16 %v2591
    %v4330 = vunpack.c.h.b16 %v2591
    %v4331 = vunpack.c.l.b16 %v2592
    %v4332 = vunpack.c.h.b16 %v2592
    %v4333 = vunpack.c.l.b16 %v2593
    %v4334 = vunpack.c.h.b16 %v2593
    %v4335 = vunpack.c.l.b16 %v2594
    %v4336 = vunpack.c.h.b16 %v2594
    %v4337 = vunpack.c.l.b16 %v2595
    %v4338 = vunpack.c.h.b16 %v2595
    %v4339 = vunpack.c.l.b16 %v2596
    %v4340 = vunpack.c.h.b16 %v2596
    %v4341 = vunpack.c.l.b16 %v2597
    %v4342 = vunpack.c.h.b16 %v2597
    %v4343 = vunpack.c.l.b16 %v2598
    %v4344 = vunpack.c.h.b16 %v2598
    %v4345 = vunpack.c.l.b16 %v2599
    %v4346 = vunpack.c.h.b16 %v2599
    %v4347 = vunpack.c.l.b16 %v2600
    %v4348 = vunpack.c.h.b16 %v2600
    %v4349 = vunpack.c.l.b16 %v2601
    %v4350 = vunpack.c.h.b16 %v2601
    %v4351 = vunpack.c.l.b16 %v2602
    %v4352 = vunpack.c.h.b16 %v2602
    %v4353 = vunpack.c.l.b16 %v2603
    %v4354 = vunpack.c.h.b16 %v2603
    %v4355 = vunpack.c.l.b16 %v2604
    %v4356 = vunpack.c.h.b16 %v2604
    %v4357 = vunpack.c.l.b16 %v2605
    %v4358 = vunpack.c.h.b16 %v2605
    %v4359 = vunpack.c.l.b16 %v2606
    %v4360 = vunpack.c.h.b16 %v2606
    %v4361 = vunpack.c.l.b16 %v2607
    %v4362 = vunpack.c.h.b16 %v2607
    %v4363 = vunpack.c.l.b16 %v2608
    %v4364 = vunpack.c.h.b16 %v2608
    %v4365 = vunpack.c.l.b16 %v2609
    %v4366 = vunpack.c.h.b16 %v2609
    %v4367 = vunpack.c.l.b16 %v2610
    %v4368 = vunpack.c.h.b16 %v2610
    %v4369 = vunpack.c.l.b16 %v2611
    %v4370 = vunpack.c.h.b16 %v2611
    %v4371 = vunpack.c.l.b16 %v2612
    %v4372 = vunpack.c.h.b16 %v2612
    %v4373 = vunpack.c.l.b16 %v2613
    %v4374 = vunpack.c.h.b16 %v2613
    %v4375 = vunpack.c.l.b16 %v2614
    %v4376 = vunpack.c.h.b16 %v2614
    %v4377 = vunpack.c.l.b16 %v2615
    %v4378 = vunpack.c.h.b16 %v2615
    %v4379 = vunpack.c.l.b16 %v2616
    %v4380 = vunpack.c.h.b16 %v2616
    %v4381 = vunpack.c.l.b16 %v2617
    %v4382 = vunpack.c.h.b16 %v2617
    %v4383 = vunpack.c.l.b16 %v2618
    %v4384 = vunpack.c.h.b16 %v2618
    %v4385 = vunpack.c.l.b16 %v2619
    %v4386 = vunpack.c.h.b16 %v2619
    %v4387 = vunpack.c.l.b16 %v2620
    %v4388 = vunpack.c.h.b16 %v2620
    %v4389 = vunpack.c.l.b16 %v2621
    %v4390 = vunpack.c.h.b16 %v2621
    %v4391 = vunpack.c.l.b16 %v2622
    %v4392 = vunpack.c.h.b16 %v2622
    %v4393 = vunpack.c.l.b16 %v2623
    %v4394 = vunpack.c.h.b16 %v2623
    %v4395 = vunpack.c.l.b16 %v2624
    %v4396 = vunpack.c.h.b16 %v2624
    %v4397 = vunpack.c.l.b16 %v2625
    %v4398 = vunpack.c.h.b16 %v2625
    %v4399 = vunpack.c.l.b16 %v2626
    %v4400 = vunpack.c.h.b16 %v2626
    %v4401 = vunpack.c.l.b16 %v2627
    %v4402 = vunpack.c.h.b16 %v2627
    %v4403 = vunpack.c.l.b16 %v2628
    %v4404 = vunpack.c.h.b16 %v2628
    %v4405 = vunpack.c.l.b16 %v2629
    %v4406 = vunpack.c.h.b16 %v2629
    %v4407 = vunpack.c.l.b16 %v2630
    %v4408 = vunpack.c.h.b16 %v2630
    %v4409 = vunpack.c.l.b16 %v2631
    %v4410 = vunpack.c.h.b16 %v2631
    %v4411 = vunpack.c.l.b16 %v2632
    %v4412 = vunpack.c.h.b16 %v2632
    %v4413 = vunpack.c.l.b16 %v2633
    %v4414 = vunpack.c.h.b16 %v2633
    %v4415 = vunpack.c.l.b16 %v2634
    %v4416 = vunpack.c.h.b16 %v2634
    %v4417 = vunpack.c.l.b16 %v2635
    %v4418 = vunpack.c.h.b16 %v2635
    %v4419 = vunpack.c.l.b16 %v2636
    %v4420 = vunpack.c.h.b16 %v2636
    %v4421 = vunpack.c.l.b16 %v2637
    %v4422 = vunpack.c.h.b16 %v2637
    %v4423 = vunpack.c.l.b16 %v2638
    %v4424 = vunpack.c.h.b16 %v2638
    %v4425 = vunpack.c.l.b16 %v2639
    %v4426 = vunpack.c.h.b16 %v2639
    %v4427 = vunpack.c.l.b16 %v2640
    %v4428 = vunpack.c.h.b16 %v2640
    %v4429 = vunpack.c.l.b16 %v2641
    %v4430 = vunpack.c.h.b16 %v2641
    %v4431 = vunpack.c.l.b16 %v2642
    %v4432 = vunpack.c.h.b16 %v2642
    %v4433 = vunpack.c.l.b16 %v2643
    %v4434 = vunpack.c.h.b16 %v2643
    %v4435 = vunpack.c.l.b16 %v2644
    %v4436 = vunpack.c.h.b16 %v2644
    %v4437 = vunpack.c.l.b16 %v2645
    %v4438 = vunpack.c.h.b16 %v2645
    %v4439 = vunpack.c.l.b16 %v2646
    %v4440 = vunpack.c.h.b16 %v2646
    %v4441 = vunpack.c.l.b16 %v2647
    %v4442 = vunpack.c.h.b16 %v2647
    %v4443 = vunpack.c.l.b16 %v2648
    %v4444 = vunpack.c.h.b16 %v2648
    %v4445 = vunpack.c.l.b16 %v2649
    %v4446 = vunpack.c.h.b16 %v2649
    %v4447 = vunpack.c.l.b16 %v2650
    %v4448 = vunpack.c.h.b16 %v2650
    %v4449 = vunpack.c.l.b16 %v2651
    %v4450 = vunpack.c.h.b16 %v2651
    %v4451 = vunpack.c.l.b16 %v2652
    %v4452 = vunpack.c.h.b16 %v2652
    %v4453 = vunpack.c.l.b16 %v2653
    %v4454 = vunpack.c.h.b16 %v2653
    %v4455 = vunpack.c.l.b16 %v2654
    %v4456 = vunpack.c.h.b16 %v2654
    %v4457 = vunpack.c.l.b16 %v2655
    %v4458 = vunpack.c.h.b16 %v2655
    %v4459 = vunpack.c.l.b16 %v2656
    %v4460 = vunpack.c.h.b16 %v2656
    %v4461 = vunpack.c.l.b16 %v2657
    %v4462 = vunpack.c.h.b16 %v2657
    %v4463 = vunpack.c.l.b16 %v2658
    %v4464 = vunpack.c.h.b16 %v2658
    %v4465 = vunpack.c.l.b16 %v2659
    %v4466 = vunpack.c.h.b16 %v2659
    %v4467 = vunpack.c.l.b16 %v2660
    %v4468 = vunpack.c.h.b16 %v2660
    %v4469 = vunpack.c.l.b16 %v2661
    %v4470 = vunpack.c.h.b16 %v2661
    %v4471 = vunpack.c.l.b16 %v2662
    %v4472 = vunpack.c.h.b16 %v2662
    %v4473 = vunpack.c.l.b16 %v2663
    %v4474 = vunpack.c.h.b16 %v2663
    %v4475 = vunpack.c.l.b16 %v2664
    %v4476 = vunpack.c.h.b16 %v2664
    %v4477 = vunpack.c.l.b16 %v2665
    %v4478 = vunpack.c.h.b16 %v2665
    %v4479 = vunpack.c.l.b16 %v2666
    %v4480 = vunpack.c.h.b16 %v2666
    %v4481 = vunpack.c.l.b16 %v2667
    %v4482 = vunpack.c.h.b16 %v2667
    %v4483 = vunpack.c.l.b16 %v2668
    %v4484 = vunpack.c.h.b16 %v2668
    %v4485 = vunpack.c.l.b16 %v2669
    %v4486 = vunpack.c.h.b16 %v2669
    %v4487 = vunpack.c.l.b16 %v2670
    %v4488 = vunpack.c.h.b16 %v2670
    %v4489 = vunpack.c.l.b16 %v2671
    %v4490 = vunpack.c.h.b16 %v2671
    %v4491 = vunpack.c.l.b16 %v2672
    %v4492 = vunpack.c.h.b16 %v2672
    %v4493 = vunpack.c.l.b16 %v2673
    %v4494 = vunpack.c.h.b16 %v2673
    %v4495 = vunpack.c.l.b16 %v2674
    %v4496 = vunpack.c.h.b16 %v2674
    %v4497 = vunpack.c.l.b16 %v2675
    %v4498 = vunpack.c.h.b16 %v2675
    %v4499 = vunpack.c.l.b16 %v2676
    %v4500 = vunpack.c.h.b16 %v2676
    %v4501 = vunpack.c.l.b16 %v2677
    %v4502 = vunpack.c.h.b16 %v2677
    %v4503 = vunpack.c.l.b16 %v2678
    %v4504 = vunpack.c.h.b16 %v2678
    %v4505 = vunpack.c.l.b16 %v2679
    %v4506 = vunpack.c.h.b16 %v2679
    %v4507 = vunpack.c.l.b16 %v2680
    %v4508 = vunpack.c.h.b16 %v2680
    %v4509 = vunpack.c.l.b16 %v2681
    %v4510 = vunpack.c.h.b16 %v2681
    %v4511 = vunpack.c.l.b16 %v2682
    %v4512 = vunpack.c.h.b16 %v2682
    %v4513 = vunpack.c.l.b16 %v2683
    %v4514 = vunpack.c.h.b16 %v2683
    %v4515 = vunpack.c.l.b16 %v2684
    %v4516 = vunpack.c.h.b16 %v2684
    %v4517 = vunpack.c.l.b16 %v2685
    %v4518 = vunpack.c.h.b16 %v2685
    %v4519 = vunpack.c.l.b16 %v2686
    %v4520 = vunpack.c.h.b16 %v2686
    %v4521 = vunpack.c.l.b16 %v2687
    %v4522 = vunpack.c.h.b16 %v2687
    %v4523 = vunpack.c.l.b16 %v2688
    %v4524 = vunpack.c.h.b16 %v2688
    %v4525 = vunpack.c.l.b16 %v2689
    %v4526 = vunpack.c.h.b16 %v2689
    %v4527 = vunpack.c.l.b16 %v2690
    %v4528 = vunpack.c.h.b16 %v2690
    %v4529 = vunpack.c.l.b16 %v2691
    %v4530 = vunpack.c.h.b16 %v2691
    %v4531 = vunpack.c.l.b16 %v2692
    %v4532 = vunpack.c.h.b16 %v2692
    %v4533 = vunpack.c.l.b16 %v2693
    %v4534 = vunpack.c.h.b16 %v2693
    %v4535 = vunpack.c.l.b16 %v2694
    %v4536 = vunpack.c.h.b16 %v2694
    %v4537 = vunpack.c.l.b16 %v2695
    %v4538 = vunpack.c.h.b16 %v2695
    %v4539 = vunpack.c.l.b16 %v2696
    %v4540 = vunpack.c.h.b16 %v2696
    %v4541 = vunpack.c.l.b16 %v2697
    %v4542 = vunpack.c.h.b16 %v2697
    %v4543 = vunpack.c.l.b16 %v2698
    %v4544 = vunpack.c.h.b16 %v2698
    %v4545 = vunpack.c.l.b16 %v2699
    %v4546 = vunpack.c.h.b16 %v2699
    %v4547 = vunpack.c.l.b16 %v2700
    %v4548 = vunpack.c.h.b16 %v2700
    %v4549 = vunpack.c.l.b16 %v2701
    %v4550 = vunpack.c.h.b16 %v2701
    %v4551 = vunpack.c.l.b16 %v2702
    %v4552 = vunpack.c.h.b16 %v2702
    %v4553 = vunpack.c.l.b16 %v2703
    %v4554 = vunpack.c.h.b16 %v2703
    %v4555 = vunpack.c.l.b16 %v2704
    %v4556 = vunpack.c.h.b16 %v2704
    %v4557 = vunpack.c.l.b16 %v2705
    %v4558 = vunpack.c.h.b16 %v2705
    %v4559 = vunpack.c.l.b16 %v2706
    %v4560 = vunpack.c.h.b16 %v2706
    %v4561 = vunpack.c.l.b16 %v2707
    %v4562 = vunpack.c.h.b16 %v2707
    %v4563 = vunpack.c.l.b16 %v2708
    %v4564 = vunpack.c.h.b16 %v2708
    %v4565 = vunpack.c.l.b16 %v2709
    %v4566 = vunpack.c.h.b16 %v2709
    %v4567 = vunpack.c.l.b16 %v2710
    %v4568 = vunpack.c.h.b16 %v2710
    %v4569 = vunpack.c.l.b16 %v2711
    %v4570 = vunpack.c.h.b16 %v2711
    %v4571 = vunpack.c.l.b16 %v2712
    %v4572 = vunpack.c.h.b16 %v2712
    %v4573 = vunpack.c.l.b16 %v2713
    %v4574 = vunpack.c.h.b16 %v2713
    %v4575 = vunpack.c.l.b16 %v2714
    %v4576 = vunpack.c.h.b16 %v2714
    %v4577 = vunpack.c.l.b16 %v2715
    %v4578 = vunpack.c.h.b16 %v2715
    %v4579 = vunpack.c.l.b16 %v2716
    %v4580 = vunpack.c.h.b16 %v2716
    %v4581 = vunpack.c.l.b16 %v2717
    %v4582 = vunpack.c.h.b16 %v2717
    %v4583 = vunpack.c.l.b16 %v2718
    %v4584 = vunpack.c.h.b16 %v2718
    %v4585 = vunpack.c.l.b16 %v2719
    %v4586 = vunpack.c.h.b16 %v2719
    %v4587 = vunpack.c.l.b16 %v2720
    %v4588 = vunpack.c.h.b16 %v2720
    %v4589 = vunpack.c.l.b16 %v2721
    %v4590 = vunpack.c.h.b16 %v2721
    %v4591 = vunpack.c.l.b16 %v2722
    %v4592 = vunpack.c.h.b16 %v2722
    %v4593 = vunpack.c.l.b16 %v2723
    %v4594 = vunpack.c.h.b16 %v2723
    %v4595 = vunpack.c.l.b16 %v2724
    %v4596 = vunpack.c.h.b16 %v2724
    %v4597 = vunpack.c.l.b16 %v2725
    %v4598 = vunpack.c.h.b16 %v2725
    %v4599 = vunpack.c.l.b16 %v2726
    %v4600 = vunpack.c.h.b16 %v2726
    %v4601 = vunpack.c.l.b16 %v2727
    %v4602 = vunpack.c.h.b16 %v2727
    %v4603 = vunpack.c.l.b16 %v2728
    %v4604 = vunpack.c.h.b16 %v2728
    %v4605 = vunpack.c.l.b16 %v2729
    %v4606 = vunpack.c.h.b16 %v2729
    %v4607 = vunpack.c.l.b16 %v2730
    %v4608 = vunpack.c.h.b16 %v2730
    %v4609 = vunpack.c.l.b16 %v2731
    %v4610 = vunpack.c.h.b16 %v2731
    %v4611 = vunpack.c.l.b16 %v2732
    %v4612 = vunpack.c.h.b16 %v2732
    %v4613 = vunpack.c.l.b16 %v2733
    %v4614 = vunpack.c.h.b16 %v2733
    %v4615 = vunpack.c.l.b16 %v2734
    %v4616 = vunpack.c.h.b16 %v2734
    %v4617 = vunpack.c.l.b16 %v2735
    %v4618 = vunpack.c.h.b16 %v2735
    %v4619 = vunpack.c.l.b16 %v2736
    %v4620 = vunpack.c.h.b16 %v2736
    %v4621 = vunpack.c.l.b16 %v2737
    %v4622 = vunpack.c.h.b16 %v2737
    %v4623 = vunpack.c.l.b16 %v2738
    %v4624 = vunpack.c.h.b16 %v2738
    %v4625 = vunpack.c.l.b16 %v2739
    %v4626 = vunpack.c.h.b16 %v2739
    %v4627 = vunpack.c.l.b16 %v2740
    %v4628 = vunpack.c.h.b16 %v2740
    %v4629 = vunpack.c.l.b16 %v2741
    %v4630 = vunpack.c.h.b16 %v2741
    %v4631 = vunpack.c.l.b16 %v2742
    %v4632 = vunpack.c.h.b16 %v2742
    %v4633 = vunpack.c.l.b16 %v2743
    %v4634 = vunpack.c.h.b16 %v2743
    %v4635 = vunpack.c.l.b16 %v2744
    %v4636 = vunpack.c.h.b16 %v2744
    %v4637 = vunpack.c.l.b16 %v2745
    %v4638 = vunpack.c.h.b16 %v2745
    %v4639 = vunpack.c.l.b16 %v2746
    %v4640 = vunpack.c.h.b16 %v2746
    %v4641 = vunpack.c.l.b16 %v2747
    %v4642 = vunpack.c.h.b16 %v2747
    %v4643 = vunpack.c.l.b16 %v2748
    %v4644 = vunpack.c.h.b16 %v2748
    %v4645 = vunpack.c.l.b16 %v2749
    %v4646 = vunpack.c.h.b16 %v2749
    %v4647 = vunpack.c.l.b16 %v2750
    %v4648 = vunpack.c.h.b16 %v2750
    %v4649 = vunpack.c.l.b16 %v2751
    %v4650 = vunpack.c.h.b16 %v2751
    %v4651 = vunpack.c.l.b16 %v2752
    %v4652 = vunpack.c.h.b16 %v2752
    %v4653 = vunpack.c.l.b16 %v2753
    %v4654 = vunpack.c.h.b16 %v2753
    %v4655 = vunpack.c.l.b16 %v2754
    %v4656 = vunpack.c.h.b16 %v2754
    %v4657 = vunpack.c.l.b16 %v2755
    %v4658 = vunpack.c.h.b16 %v2755
    %v4659 = vunpack.c.l.b16 %v2756
    %v4660 = vunpack.c.h.b16 %v2756
    %v4661 = vunpack.c.l.b16 %v2757
    %v4662 = vunpack.c.h.b16 %v2757
    %v4663 = vunpack.c.l.b16 %v2758
    %v4664 = vunpack.c.h.b16 %v2758
    %v4665 = vunpack.c.l.b16 %v2759
    %v4666 = vunpack.c.h.b16 %v2759
    %v4667 = vunpack.c.l.b16 %v2760
    %v4668 = vunpack.c.h.b16 %v2760
    %v4669 = vunpack.c.l.b16 %v2761
    %v4670 = vunpack.c.h.b16 %v2761
    %v4671 = vunpack.c.l.b16 %v2762
    %v4672 = vunpack.c.h.b16 %v2762
    %v4673 = vunpack.c.l.b16 %v2763
    %v4674 = vunpack.c.h.b16 %v2763
    %v4675 = vunpack.c.l.b16 %v2764
    %v4676 = vunpack.c.h.b16 %v2764
    %v4677 = vunpack.c.l.b16 %v2765
    %v4678 = vunpack.c.h.b16 %v2765
    %v4679 = vunpack.c.l.b16 %v2766
    %v4680 = vunpack.c.h.b16 %v2766
    %v4681 = vunpack.c.l.b16 %v2767
    %v4682 = vunpack.c.h.b16 %v2767
    %v4683 = vunpack.c.l.b16 %v2768
    %v4684 = vunpack.c.h.b16 %v2768
    %v4685 = vunpack.c.l.b16 %v2769
    %v4686 = vunpack.c.h.b16 %v2769
    %v4687 = vunpack.c.l.b16 %v2770
    %v4688 = vunpack.c.h.b16 %v2770
    %v4689 = vunpack.c.l.b16 %v2771
    %v4690 = vunpack.c.h.b16 %v2771
    %v4691 = vunpack.c.l.b16 %v2772
    %v4692 = vunpack.c.h.b16 %v2772
    %v4693 = vunpack.c.l.b16 %v2773
    %v4694 = vunpack.c.h.b16 %v2773
    %v4695 = vunpack.c.l.b16 %v2774
    %v4696 = vunpack.c.h.b16 %v2774
    %v4697 = vunpack.c.l.b16 %v2775
    %v4698 = vunpack.c.h.b16 %v2775
    %v4699 = vunpack.c.l.b16 %v2776
    %v4700 = vunpack.c.h.b16 %v2776
    %v4701 = vunpack.c.l.b16 %v2777
    %v4702 = vunpack.c.h.b16 %v2777
    %v4703 = vunpack.c.l.b16 %v2778
    %v4704 = vunpack.c.h.b16 %v2778
    %v4705 = vunpack.c.l.b16 %v2779
    %v4706 = vunpack.c.h.b16 %v2779
    %v4707 = vunpack.c.l.b16 %v2780
    %v4708 = vunpack.c.h.b16 %v2780
    %v4709 = vunpack.c.l.b16 %v2781
    %v4710 = vunpack.c.h.b16 %v2781
    %v4711 = vunpack.c.l.b16 %v2782
    %v4712 = vunpack.c.h.b16 %v2782
    %v4713 = vunpack.c.l.b16 %v2783
    %v4714 = vunpack.c.h.b16 %v2783
    %v4715 = vunpack.c.l.b16 %v2784
    %v4716 = vunpack.c.h.b16 %v2784
    %v4717 = vunpack.c.l.b16 %v2785
    %v4718 = vunpack.c.h.b16 %v2785
    %v4719 = vunpack.c.l.b16 %v2786
    %v4720 = vunpack.c.h.b16 %v2786
    %v4721 = vunpack.c.l.b16 %v2787
    %v4722 = vunpack.c.h.b16 %v2787
    %v4723 = vunpack.c.l.b16 %v2788
    %v4724 = vunpack.c.h.b16 %v2788
    %v4725 = vunpack.c.l.b16 %v2789
    %v4726 = vunpack.c.h.b16 %v2789
    %v4727 = vunpack.c.l.b16 %v2790
    %v4728 = vunpack.c.h.b16 %v2790
    %v4729 = vunpack.c.l.b16 %v2791
    %v4730 = vunpack.c.h.b16 %v2791
    %v4731 = vunpack.c.l.b16 %v2792
    %v4732 = vunpack.c.h.b16 %v2792
    %v4733 = vunpack.c.l.b16 %v2793
    %v4734 = vunpack.c.h.b16 %v2793
    %v4735 = vunpack.c.l.b16 %v2794
    %v4736 = vunpack.c.h.b16 %v2794
    %v4737 = vunpack.c.l.b16 %v2795
    %v4738 = vunpack.c.h.b16 %v2795
    %v4739 = vunpack.c.l.b16 %v2796
    %v4740 = vunpack.c.h.b16 %v2796
    %v4741 = vunpack.c.l.b16 %v2797
    %v4742 = vunpack.c.h.b16 %v2797
    %v4743 = vunpack.c.l.b16 %v2798
    %v4744 = vunpack.c.h.b16 %v2798
    %v4745 = vunpack.c.l.b16 %v2799
    %v4746 = vunpack.c.h.b16 %v2799
    %v4747 = vunpack.c.l.b16 %v2800
    %v4748 = vunpack.c.h.b16 %v2800
    %v4749 = vunpack.c.l.b16 %v2801
    %v4750 = vunpack.c.h.b16 %v2801
    %v4751 = vunpack.c.l.b16 %v2802
    %v4752 = vunpack.c.h.b16 %v2802
    %v4753 = vunpack.c.l.b16 %v2803
    %v4754 = vunpack.c.h.b16 %v2803
    %v4755 = vunpack.c.l.b16 %v2804
    %v4756 = vunpack.c.h.b16 %v2804
    %v4757 = vunpack.c.l.b16 %v2805
    %v4758 = vunpack.c.h.b16 %v2805
    %v4759 = vunpack.c.l.b16 %v2806
    %v4760 = vunpack.c.h.b16 %v2806
    %v4761 = vunpack.c.l.b16 %v2807
    %v4762 = vunpack.c.h.b16 %v2807
    %v4763 = vunpack.c.l.b16 %v2808
    %v4764 = vunpack.c.h.b16 %v2808
    %v4765 = vunpack.c.l.b16 %v2809
    %v4766 = vunpack.c.h.b16 %v2809
    %v4767 = vunpack.c.l.b16 %v2810
    %v4768 = vunpack.c.h.b16 %v2810
    %v4769 = vunpack.c.l.b16 %v2811
    %v4770 = vunpack.c.h.b16 %v2811
    %v4771 = vunpack.c.l.b16 %v2812
    %v4772 = vunpack.c.h.b16 %v2812
    %v4773 = vunpack.c.l.b16 %v2813
    %v4774 = vunpack.c.h.b16 %v2813
    %v4775 = vunpack.c.l.b16 %v2814
    %v4776 = vunpack.c.h.b16 %v2814
    %v4777 = vunpack.c.l.b16 %v2815
    %v4778 = vunpack.c.h.b16 %v2815
    %v4779 = vunpack.c.l.b16 %v2816
    %v4780 = vunpack.c.h.b16 %v2816
    %v4781 = vunpack.c.l.b16 %v2817
    %v4782 = vunpack.c.h.b16 %v2817
    %v4783 = vunpack.c.l.b16 %v2818
    %v4784 = vunpack.c.h.b16 %v2818
    %v4785 = vunpack.c.l.b16 %v2819
    %v4786 = vunpack.c.h.b16 %v2819
    %v4787 = vunpack.c.l.b16 %v2820
    %v4788 = vunpack.c.h.b16 %v2820
    %v4789 = vunpack.c.l.b16 %v2821
    %v4790 = vunpack.c.h.b16 %v2821
    %v4791 = vunpack.c.l.b16 %v2822
    %v4792 = vunpack.c.h.b16 %v2822
    %v4793 = vunpack.c.l.b16 %v2823
    %v4794 = vunpack.c.h.b16 %v2823
    %v4795 = vunpack.c.l.b16 %v2824
    %v4796 = vunpack.c.h.b16 %v2824
    %v4797 = vunpack.c.l.b16 %v2825
    %v4798 = vunpack.c.h.b16 %v2825
    %v4799 = vunpack.c.l.b16 %v2826
    %v4800 = vunpack.c.h.b16 %v2826
    %v4801 = vunpack.c.l.b16 %v2827
    %v4802 = vunpack.c.h.b16 %v2827
    %v4803 = vunpack.c.l.b16 %v2828
    %v4804 = vunpack.c.h.b16 %v2828
    %v4805 = vunpack.c.l.b16 %v2829
    %v4806 = vunpack.c.h.b16 %v2829
    %v4807 = vunpack.c.l.b16 %v2830
    %v4808 = vunpack.c.h.b16 %v2830
    %v4809 = vunpack.c.l.b16 %v2831
    %v4810 = vunpack.c.h.b16 %v2831
    %v4811 = vunpack.c.l.b16 %v2832
    %v4812 = vunpack.c.h.b16 %v2832
    %v4813 = vunpack.c.l.b16 %v2833
    %v4814 = vunpack.c.h.b16 %v2833
    %v4815 = vunpack.c.l.b16 %v2834
    %v4816 = vunpack.c.h.b16 %v2834
    %v4817 = vunpack.c.l.b16 %v2835
    %v4818 = vunpack.c.h.b16 %v2835
    %v4819 = vunpack.c.l.b16 %v2836
    %v4820 = vunpack.c.h.b16 %v2836
    %v4821 = vunpack.c.l.b16 %v2837
    %v4822 = vunpack.c.h.b16 %v2837
    %v4823 = vunpack.c.l.b16 %v2838
    %v4824 = vunpack.c.h.b16 %v2838
    %v4825 = vunpack.c.l.b16 %v2839
    %v4826 = vunpack.c.h.b16 %v2839
    %v4827 = vunpack.c.l.b16 %v2840
    %v4828 = vunpack.c.h.b16 %v2840
    %v4829 = vunpack.c.l.b16 %v2841
    %v4830 = vunpack.c.h.b16 %v2841
    %v4831 = vunpack.c.l.b16 %v2842
    %v4832 = vunpack.c.h.b16 %v2842
    %v4833 = vunpack.c.l.b16 %v2843
    %v4834 = vunpack.c.h.b16 %v2843
    %v4835 = vunpack.c.l.b16 %v2844
    %v4836 = vunpack.c.h.b16 %v2844
    %v4837 = vunpack.c.l.b16 %v2845
    %v4838 = vunpack.c.h.b16 %v2845
    %v4839 = vunpack.c.l.b16 %v2846
    %v4840 = vunpack.c.h.b16 %v2846
    %v4841 = vunpack.c.l.b16 %v2847
    %v4842 = vunpack.c.h.b16 %v2847
    %v4843 = vunpack.c.l.b16 %v2848
    %v4844 = vunpack.c.h.b16 %v2848
    %v4845 = vunpack.c.l.b16 %v2849
    %v4846 = vunpack.c.h.b16 %v2849
    %v4847 = vunpack.c.l.b16 %v2850
    %v4848 = vunpack.c.h.b16 %v2850
    %v4849 = vunpack.c.l.b16 %v2851
    %v4850 = vunpack.c.h.b16 %v2851
    %v4851 = vunpack.c.l.b16 %v2852
    %v4852 = vunpack.c.h.b16 %v2852
    %v4853 = vunpack.c.l.b16 %v2853
    %v4854 = vunpack.c.h.b16 %v2853
    %v4855 = vunpack.c.l.b16 %v2854
    %v4856 = vunpack.c.h.b16 %v2854
    %v4857 = vunpack.c.l.b16 %v2855
    %v4858 = vunpack.c.h.b16 %v2855
    %v4859 = vunpack.c.l.b16 %v2856
    %v4860 = vunpack.c.h.b16 %v2856
    %v4861 = vunpack.c.l.b16 %v2857
    %v4862 = vunpack.c.h.b16 %v2857
    %v4863 = vunpack.c.l.b16 %v2858
    %v4864 = vunpack.c.h.b16 %v2858
    %v4865 = vunpack.c.l.b16 %v2859
    %v4866 = vunpack.c.h.b16 %v2859
    %v4867 = vunpack.c.l.b16 %v2860
    %v4868 = vunpack.c.h.b16 %v2860
    %v4869 = vunpack.c.l.b16 %v2861
    %v4870 = vunpack.c.h.b16 %v2861
    %v4871 = vunpack.c.l.b16 %v2862
    %v4872 = vunpack.c.h.b16 %v2862
    %v4873 = vunpack.c.l.b16 %v2863
    %v4874 = vunpack.c.h.b16 %v2863
    %v4875 = vunpack.c.l.b16 %v2864
    %v4876 = vunpack.c.h.b16 %v2864
    %v4877 = vunpack.c.l.b16 %v2865
    %v4878 = vunpack.c.h.b16 %v2865
    %v4879 = vunpack.c.l.b16 %v2866
    %v4880 = vunpack.c.h.b16 %v2866
    %v4881 = vunpack.c.l.b16 %v2867
    %v4882 = vunpack.c.h.b16 %v2867
    %v4883 = vunpack.c.l.b16 %v2868
    %v4884 = vunpack.c.h.b16 %v2868
    %v4885 = vunpack.c.l.b16 %v2869
    %v4886 = vunpack.c.h.b16 %v2869
    %v4887 = vunpack.c.l.b16 %v2870
    %v4888 = vunpack.c.h.b16 %v2870
    %v4889 = vunpack.c.l.b16 %v2871
    %v4890 = vunpack.c.h.b16 %v2871
    %v4891 = vunpack.c.l.b16 %v2872
    %v4892 = vunpack.c.h.b16 %v2872
    %v4893 = vunpack.c.l.b16 %v2873
    %v4894 = vunpack.c.h.b16 %v2873
    %v4895 = vunpack.c.l.b16 %v2874
    %v4896 = vunpack.c.h.b16 %v2874
    %v4897 = vunpack.c.l.b16 %v2875
    %v4898 = vunpack.c.h.b16 %v2875
    %v4899 = vunpack.c.l.b16 %v2876
    %v4900 = vunpack.c.h.b16 %v2876
    %v4901 = vunpack.c.l.b16 %v2877
    %v4902 = vunpack.c.h.b16 %v2877
    %v4903 = vunpack.c.l.b16 %v2878
    %v4904 = vunpack.c.h.b16 %v2878
    %v4905 = vunpack.c.l.b16 %v2879
    %v4906 = vunpack.c.h.b16 %v2879
    %v4907 = vunpack.c.l.b16 %v2880
    %v4908 = vunpack.c.h.b16 %v2880
    %v4909 = vunpack.c.l.b16 %v2881
    %v4910 = vunpack.c.h.b16 %v2881
    %v4911 = vunpack.c.l.b16 %v2882
    %v4912 = vunpack.c.h.b16 %v2882
    %v4913 = vunpack.c.l.b16 %v2883
    %v4914 = vunpack.c.h.b16 %v2883
    %v4915 = vunpack.c.l.b16 %v2884
    %v4916 = vunpack.c.h.b16 %v2884
    %v4917 = vunpack.c.l.b16 %v2885
    %v4918 = vunpack.c.h.b16 %v2885
    %v4919 = vunpack.c.l.b16 %v2886
    %v4920 = vunpack.c.h.b16 %v2886
    %v4921 = vunpack.c.l.b16 %v2887
    %v4922 = vunpack.c.h.b16 %v2887
    %v4923 = vunpack.c.l.b16 %v2888
    %v4924 = vunpack.c.h.b16 %v2888
    %v4925 = vunpack.c.l.b16 %v2889
    %v4926 = vunpack.c.h.b16 %v2889
    %v4927 = vunpack.c.l.b16 %v2890
    %v4928 = vunpack.c.h.b16 %v2890
    %v4929 = vunpack.c.l.b16 %v2891
    %v4930 = vunpack.c.h.b16 %v2891
    %v4931 = vunpack.c.l.b16 %v2892
    %v4932 = vunpack.c.h.b16 %v2892
    %v4933 = vunpack.c.l.b16 %v2893
    %v4934 = vunpack.c.h.b16 %v2893
    %v4935 = vunpack.c.l.b16 %v2894
    %v4936 = vunpack.c.h.b16 %v2894
    %v4937 = vunpack.c.l.b16 %v2895
    %v4938 = vunpack.c.h.b16 %v2895
    %v4939 = vunpack.c.l.b16 %v2896
    %v4940 = vunpack.c.h.b16 %v2896
    %v4941 = vunpack.c.l.b16 %v2897
    %v4942 = vunpack.c.h.b16 %v2897
    %v4943 = vunpack.c.l.b16 %v2898
    %v4944 = vunpack.c.h.b16 %v2898
    %v4945 = vunpack.c.l.b16 %v2899
    %v4946 = vunpack.c.h.b16 %v2899
    %v4947 = vunpack.c.l.b16 %v2900
    %v4948 = vunpack.c.h.b16 %v2900
    %v4949 = vunpack.c.l.b16 %v2901
    %v4950 = vunpack.c.h.b16 %v2901
    %v4951 = vunpack.c.l.b16 %v2902
    %v4952 = vunpack.c.h.b16 %v2902
    %v4953 = vunpack.c.l.b16 %v2903
    %v4954 = vunpack.c.h.b16 %v2903
    %v4955 = vunpack.c.l.b16 %v2904
    %v4956 = vunpack.c.h.b16 %v2904
    %v4957 = vunpack.c.l.b16 %v2905
    %v4958 = vunpack.c.h.b16 %v2905
    %v4959 = vunpack.c.l.b16 %v2906
    %v4960 = vunpack.c.h.b16 %v2906
    %v4961 = vunpack.c.l.b16 %v2907
    %v4962 = vunpack.c.h.b16 %v2907
    %v4963 = vunpack.c.l.b16 %v2908
    %v4964 = vunpack.c.h.b16 %v2908
    %v4965 = vunpack.c.l.b16 %v2909
    %v4966 = vunpack.c.h.b16 %v2909
    %v4967 = vunpack.c.l.b16 %v2910
    %v4968 = vunpack.c.h.b16 %v2910
    %v4969 = vunpack.c.l.b16 %v2911
    %v4970 = vunpack.c.h.b16 %v2911
    %v4971 = vunpack.c.l.b16 %v2912
    %v4972 = vunpack.c.h.b16 %v2912
    %v4973 = vunpack.c.l.b16 %v2913
    %v4974 = vunpack.c.h.b16 %v2913
    %v4975 = vunpack.c.l.b16 %v2914
    %v4976 = vunpack.c.h.b16 %v2914
    %v4977 = vunpack.c.l.b16 %v2915
    %v4978 = vunpack.c.h.b16 %v2915
    %v4979 = vunpack.c.l.b16 %v2916
    %v4980 = vunpack.c.h.b16 %v2916
    %v4981 = vunpack.c.l.b16 %v2917
    %v4982 = vunpack.c.h.b16 %v2917
    %v4983 = vunpack.c.l.b16 %v2918
    %v4984 = vunpack.c.h.b16 %v2918
    %v4985 = vunpack.c.l.b16 %v2919
    %v4986 = vunpack.c.h.b16 %v2919
    %v4987 = vunpack.c.l.b16 %v2920
    %v4988 = vunpack.c.h.b16 %v2920
    %v4989 = vunpack.c.l.b16 %v2921
    %v4990 = vunpack.c.h.b16 %v2921
    %v4991 = vunpack.c.l.b16 %v2922
    %v4992 = vunpack.c.h.b16 %v2922
    %v4993 = vunpack.c.l.b16 %v2923
    %v4994 = vunpack.c.h.b16 %v2923
    %v4995 = vunpack.c.l.b16 %v2924
    %v4996 = vunpack.c.h.b16 %v2924
    %v4997 = vunpack.c.l.b16 %v2925
    %v4998 = vunpack.c.h.b16 %v2925
    %v4999 = vunpack.c.l.b16 %v2926
    %v5000 = vunpack.c.h.b16 %v2926
    %v5001 = vunpack.c.l.b16 %v2927
    %v5002 = vunpack.c.h.b16 %v2927
    %v5003 = vunpack.c.l.b16 %v2928
    %v5004 = vunpack.c.h.b16 %v2928
    %v5005 = vunpack.c.l.b16 %v2929
    %v5006 = vunpack.c.h.b16 %v2929
    %v5007 = vunpack.c.l.b16 %v2930
    %v5008 = vunpack.c.h.b16 %v2930
    %v5009 = vunpack.c.l.b16 %v2931
    %v5010 = vunpack.c.h.b16 %v2931
    %v5011 = vunpack.c.l.b16 %v2932
    %v5012 = vunpack.c.h.b16 %v2932
    %v5013 = vunpack.c.l.b16 %v2933
    %v5014 = vunpack.c.h.b16 %v2933
    %v5015 = vunpack.c.l.b16 %v2934
    %v5016 = vunpack.c.h.b16 %v2934
    %v5017 = vunpack.c.l.b16 %v2935
    %v5018 = vunpack.c.h.b16 %v2935
    %v5019 = vunpack.c.l.b16 %v2936
    %v5020 = vunpack.c.h.b16 %v2936
    %v5021 = vunpack.c.l.b16 %v2937
    %v5022 = vunpack.c.h.b16 %v2937
    %v5023 = vunpack.c.l.b16 %v2938
    %v5024 = vunpack.c.h.b16 %v2938
    %v5025 = vunpack.c.l.b16 %v2939
    %v5026 = vunpack.c.h.b16 %v2939
    %v5027 = vunpack.c.l.b16 %v2940
    %v5028 = vunpack.c.h.b16 %v2940
    %v5029 = vunpack.c.l.b16 %v2941
    %v5030 = vunpack.c.h.b16 %v2941
    %v5031 = vunpack.c.l.b16 %v2942
    %v5032 = vunpack.c.h.b16 %v2942
    %v5033 = vunpack.c.l.b16 %v2943
    %v5034 = vunpack.c.h.b16 %v2943
    %v5035 = vunpack.c.l.b16 %v2944
    %v5036 = vunpack.c.h.b16 %v2944
    %v5037 = vunpack.c.l.b16 %v2945
    %v5038 = vunpack.c.h.b16 %v2945
    %v5039 = vunpack.c.l.b16 %v2946
    %v5040 = vunpack.c.h.b16 %v2946
    %v5041 = vunpack.c.l.b16 %v2947
    %v5042 = vunpack.c.h.b16 %v2947
    %v5043 = vunpack.c.l.b16 %v2948
    %v5044 = vunpack.c.h.b16 %v2948
    %v5045 = vunpack.c.l.b16 %v2949
    %v5046 = vunpack.c.h.b16 %v2949
    %v5047 = vunpack.c.l.b16 %v2950
    %v5048 = vunpack.c.h.b16 %v2950
    %v5049 = vunpack.c.l.b16 %v2951
    %v5050 = vunpack.c.h.b16 %v2951
    %v5051 = vunpack.c.l.b16 %v2952
    %v5052 = vunpack.c.h.b16 %v2952
    %v5053 = vunpack.c.l.b16 %v2953
    %v5054 = vunpack.c.h.b16 %v2953
    %v5055 = vunpack.c.l.b16 %v2954
    %v5056 = vunpack.c.h.b16 %v2954
    %v5057 = vunpack.c.l.b16 %v2955
    %v5058 = vunpack.c.h.b16 %v2955
    %v5059 = vunpack.c.l.b16 %v2956
    %v5060 = vunpack.c.h.b16 %v2956
    %v5061 = vunpack.c.l.b16 %v2957
    %v5062 = vunpack.c.h.b16 %v2957
    %v5063 = vunpack.c.l.b16 %v2958
    %v5064 = vunpack.c.h.b16 %v2958
    %v5065 = vunpack.c.l.b16 %v2959
    %v5066 = vunpack.c.h.b16 %v2959
    %v5067 = vunpack.c.l.b16 %v2960
    %v5068 = vunpack.c.h.b16 %v2960
    %v5069 = vunpack.c.l.b16 %v2961
    %v5070 = vunpack.c.h.b16 %v2961
    %v5071 = vunpack.c.l.b16 %v2962
    %v5072 = vunpack.c.h.b16 %v2962
    %v5073 = vunpack.c.l.b16 %v2963
    %v5074 = vunpack.c.h.b16 %v2963
    %v5075 = vunpack.c.l.b16 %v2964
    %v5076 = vunpack.c.h.b16 %v2964
    %v5077 = vunpack.c.l.b16 %v2965
    %v5078 = vunpack.c.h.b16 %v2965
    %v5079 = vunpack.c.l.b16 %v2966
    %v5080 = vunpack.c.h.b16 %v2966
    %v5081 = vunpack.c.l.b16 %v2967
    %v5082 = vunpack.c.h.b16 %v2967
    %v5083 = vunpack.c.l.b16 %v2968
    %v5084 = vunpack.c.h.b16 %v2968
    %v5085 = vunpack.c.l.b16 %v2969
    %v5086 = vunpack.c.h.b16 %v2969
    %v5087 = vunpack.c.l.b16 %v2970
    %v5088 = vunpack.c.h.b16 %v2970
    %v5089 = vunpack.c.l.b16 %v2971
    %v5090 = vunpack.c.h.b16 %v2971
    %v5091 = vunpack.c.l.b16 %v2972
    %v5092 = vunpack.c.h.b16 %v2972
    %v5093 = vunpack.c.l.b16 %v2973
    %v5094 = vunpack.c.h.b16 %v2973
    %v5095 = vunpack.c.l.b16 %v2974
    %v5096 = vunpack.c.h.b16 %v2974
    %v5097 = vunpack.c.l.b16 %v2975
    %v5098 = vunpack.c.h.b16 %v2975
    %v5099 = vunpack.c.l.b16 %v2976
    %v5100 = vunpack.c.h.b16 %v2976
    %v5101 = vunpack.c.l.b16 %v2977
    %v5102 = vunpack.c.h.b16 %v2977
    %v5103 = vunpack.c.l.b16 %v2978
    %v5104 = vunpack.c.h.b16 %v2978
    %v5105 = vunpack.c.l.b16 %v2979
    %v5106 = vunpack.c.h.b16 %v2979
    %v5107 = vunpack.c.l.b16 %v2980
    %v5108 = vunpack.c.h.b16 %v2980
    %v5109 = vunpack.c.l.b16 %v2981
    %v5110 = vunpack.c.h.b16 %v2981
    %v5111 = vunpack.c.l.b16 %v2982
    %v5112 = vunpack.c.h.b16 %v2982
    %v5113 = vunpack.c.l.b16 %v2983
    %v5114 = vunpack.c.h.b16 %v2983
    %v5115 = vunpack.c.l.b16 %v2984
    %v5116 = vunpack.c.h.b16 %v2984
    %v5117 = vunpack.c.l.b16 %v2985
    %v5118 = vunpack.c.h.b16 %v2985
    %v5119 = vunpack.c.l.b16 %v2986
    %v5120 = vunpack.c.h.b16 %v2986
    %v5121 = vunpack.c.l.b16 %v2987
    %v5122 = vunpack.c.h.b16 %v2987
    %v5123 = vunpack.c.l.b16 %v2988
    %v5124 = vunpack.c.h.b16 %v2988
    %v5125 = vunpack.c.l.b16 %v2989
    %v5126 = vunpack.c.h.b16 %v2989
    %v5127 = vunpack.c.l.b16 %v2990
    %v5128 = vunpack.c.h.b16 %v2990
    %v5129 = vunpack.c.l.b16 %v2991
    %v5130 = vunpack.c.h.b16 %v2991
    %v5131 = vunpack.c.l.b16 %v2992
    %v5132 = vunpack.c.h.b16 %v2992
    %v5133 = vunpack.c.l.b16 %v2993
    %v5134 = vunpack.c.h.b16 %v2993
    %v5135 = vunpack.c.l.b16 %v2994
    %v5136 = vunpack.c.h.b16 %v2994
    %v5137 = vunpack.c.l.b16 %v2995
    %v5138 = vunpack.c.h.b16 %v2995
    %v5139 = vunpack.c.l.b16 %v2996
    %v5140 = vunpack.c.h.b16 %v2996
    %v5141 = vunpack.c.l.b16 %v2997
    %v5142 = vunpack.c.h.b16 %v2997
    %v5143 = vunpack.c.l.b16 %v2998
    %v5144 = vunpack.c.h.b16 %v2998
    %v5145 = vunpack.c.l.b16 %v2999
    %v5146 = vunpack.c.h.b16 %v2999
    %v5147 = vunpack.c.l.b16 %v3000
    %v5148 = vunpack.c.h.b16 %v3000
    %v5149 = vunpack.c.l.b16 %v3001
    %v5150 = vunpack.c.h.b16 %v3001
    %v5151 = vunpack.c.l.b16 %v3002
    %v5152 = vunpack.c.h.b16 %v3002
    %v5153 = vunpack.c.l.b16 %v3003
    %v5154 = vunpack.c.h.b16 %v3003
    %v5155 = vunpack.c.l.b16 %v3004
    %v5156 = vunpack.c.h.b16 %v3004
    %v5157 = vunpack.c.l.b16 %v3005
    %v5158 = vunpack.c.h.b16 %v3005
    %v5159 = vunpack.c.l.b16 %v3006
    %v5160 = vunpack.c.h.b16 %v3006
    %v5161 = vunpack.c.l.b16 %v3007
    %v5162 = vunpack.c.h.b16 %v3007
    %v5163 = vunpack.c.l.b16 %v3008
    %v5164 = vunpack.c.h.b16 %v3008
    %v5165 = vunpack.c.l.b16 %v3009
    %v5166 = vunpack.c.h.b16 %v3009
    %v5167 = vunpack.c.l.b16 %v3010
    %v5168 = vunpack.c.h.b16 %v3010
    %v5169 = vunpack.c.l.b16 %v3011
    %v5170 = vunpack.c.h.b16 %v3011
    %v5171 = vunpack.c.l.b16 %v3012
    %v5172 = vunpack.c.h.b16 %v3012
    %v5173 = vunpack.c.l.b16 %v3013
    %v5174 = vunpack.c.h.b16 %v3013
    %v5175 = vunpack.c.l.b16 %v3014
    %v5176 = vunpack.c.h.b16 %v3014
    %v5177 = vunpack.c.l.b16 %v3015
    %v5178 = vunpack.c.h.b16 %v3015
    %v5179 = vunpack.c.l.b16 %v3016
    %v5180 = vunpack.c.h.b16 %v3016
    %v5181 = vunpack.c.l.b16 %v3017
    %v5182 = vunpack.c.h.b16 %v3017
    %v5183 = vunpack.c.l.b16 %v3018
    %v5184 = vunpack.c.h.b16 %v3018
    %v5185 = vunpack.c.l.b16 %v3019
    %v5186 = vunpack.c.h.b16 %v3019
    %v5187 = vunpack.c.l.b16 %v3020
    %v5188 = vunpack.c.h.b16 %v3020
    %v5189 = vunpack.c.l.b16 %v3021
    %v5190 = vunpack.c.h.b16 %v3021
    %v5191 = vunpack.c.l.b16 %v3022
    %v5192 = vunpack.c.h.b16 %v3022
    %v5193 = vunpack.c.l.b16 %v3023
    %v5194 = vunpack.c.h.b16 %v3023
    %v5195 = vunpack.c.l.b16 %v3024
    %v5196 = vunpack.c.h.b16 %v3024
    %v5197 = vunpack.c.l.b16 %v3025
    %v5198 = vunpack.c.h.b16 %v3025
    %v5199 = vunpack.c.l.b16 %v3026
    %v5200 = vunpack.c.h.b16 %v3026
    %v5201 = vunpack.c.l.b16 %v3027
    %v5202 = vunpack.c.h.b16 %v3027
    %v5203 = vunpack.c.l.b16 %v3028
    %v5204 = vunpack.c.h.b16 %v3028
    %v5205 = vunpack.c.l.b16 %v3029
    %v5206 = vunpack.c.h.b16 %v3029
    %v5207 = vunpack.c.l.b16 %v3030
    %v5208 = vunpack.c.h.b16 %v3030
    %v5209 = vunpack.c.l.b16 %v3031
    %v5210 = vunpack.c.h.b16 %v3031
    %v5211 = vunpack.c.l.b16 %v3032
    %v5212 = vunpack.c.h.b16 %v3032
    %v5213 = vunpack.c.l.b16 %v3033
    %v5214 = vunpack.c.h.b16 %v3033
    %v5215 = vunpack.c.l.b16 %v3034
    %v5216 = vunpack.c.h.b16 %v3034
    %v5217 = vunpack.c.l.b16 %v3035
    %v5218 = vunpack.c.h.b16 %v3035
    %v5219 = vunpack.c.l.b16 %v3036
    %v5220 = vunpack.c.h.b16 %v3036
    %v5221 = vunpack.c.l.b16 %v3037
    %v5222 = vunpack.c.h.b16 %v3037
    %v5223 = vunpack.c.l.b16 %v3038
    %v5224 = vunpack.c.h.b16 %v3038
    %v5225 = vunpack.c.l.b16 %v3039
    %v5226 = vunpack.c.h.b16 %v3039
    %v5227 = vunpack.c.l.b16 %v3040
    %v5228 = vunpack.c.h.b16 %v3040
    %v5229 = vunpack.c.l.b16 %v3041
    %v5230 = vunpack.c.h.b16 %v3041
    %v5231 = vunpack.c.l.b16 %v3042
    %v5232 = vunpack.c.h.b16 %v3042
    %v5233 = vunpack.c.l.b16 %v3043
    %v5234 = vunpack.c.h.b16 %v3043
    %v5235 = vunpack.c.l.b16 %v3044
    %v5236 = vunpack.c.h.b16 %v3044
    %v5237 = vunpack.c.l.b16 %v3045
    %v5238 = vunpack.c.h.b16 %v3045
    %v5239 = vunpack.c.l.b16 %v3046
    %v5240 = vunpack.c.h.b16 %v3046
    %v5241 = vunpack.c.l.b16 %v3047
    %v5242 = vunpack.c.h.b16 %v3047
    %v5243 = vunpack.c.l.b16 %v3048
    %v5244 = vunpack.c.h.b16 %v3048
    %v5245 = vunpack.c.l.b16 %v3049
    %v5246 = vunpack.c.h.b16 %v3049
    %v5247 = vunpack.c.l.b16 %v3050
    %v5248 = vunpack.c.h.b16 %v3050
    %v5249 = vunpack.c.l.b16 %v3051
    %v5250 = vunpack.c.h.b16 %v3051
    %v5251 = vunpack.c.l.b16 %v3052
    %v5252 = vunpack.c.h.b16 %v3052
    %v5253 = vunpack.c.l.b16 %v3053
    %v5254 = vunpack.c.h.b16 %v3053
    %v5255 = vunpack.c.l.b16 %v3054
    %v5256 = vunpack.c.h.b16 %v3054
    %v5257 = vpack.c.b16 %v3825, %v3817
    %v5258 = vpack.c.b16 %v3826, %v3818
    %v5259 = vpack.c.b16 %v3827, %v3819
    %v5260 = vpack.c.b16 %v3828, %v3820
    %v5261 = vpack.c.b16 %v3829, %v3821
    %v5262 = vpack.c.b16 %v3830, %v3822
    %v5263 = vpack.c.b16 %v3831, %v3823
    %v5264 = vpack.c.b16 %v3832, %v3824
    %v5265 = vpack.c.b16 %v3841, %v3833
    %v5266 = vpack.c.b16 %v3842, %v3834
    %v5267 = vpack.c.b16 %v3843, %v3835
    %v5268 = vpack.c.b16 %v3844, %v3836
    %v5269 = vpack.c.b16 %v3845, %v3837
    %v5270 = vpack.c.b16 %v3846, %v3838
    %v5271 = vpack.c.b16 %v3847, %v3839
    %v5272 = vpack.c.b16 %v3848, %v3840
    %v5273 = vpack.c.b16 %v3857, %v3849
    %v5274 = vpack.c.b16 %v3858, %v3850
    %v5275 = vpack.c.b16 %v3859, %v3851
    %v5276 = vpack.c.b16 %v3860, %v3852
    %v5277 = vpack.c.b16 %v3861, %v3853
    %v5278 = vpack.c.b16 %v3862, %v3854
    %v5279 = vpack.c.b16 %v3863, %v3855
    %v5280 = vpack.c.b16 %v3864, %v3856
    %v5281 = vpack.c.b16 %v3873, %v3865
    %v5282 = vpack.c.b16 %v3874, %v3866
    %v5283 = vpack.c.b16 %v3875, %v3867
    %v5284 = vpack.c.b16 %v3876, %v3868
    %v5285 = vpack.c.b16 %v3877, %v3869
    %v5286 = vpack.c.b16 %v3878, %v3870
    %v5287 = vpack.c.b16 %v3879, %v3871
    %v5288 = vpack.c.b16 %v3880, %v3872
    %v5289 = vpack.c.b16 %v3889, %v3881
    %v5290 = vpack.c.b16 %v3890, %v3882
    %v5291 = vpack.c.b16 %v3891, %v3883
    %v5292 = vpack.c.b16 %v3892, %v3884
    %v5293 = vpack.c.b16 %v3893, %v3885
    %v5294 = vpack.c.b16 %v3894, %v3886
    %v5295 = vpack.c.b16 %v3895, %v3887
    %v5296 = vpack.c.b16 %v3896, %v3888
    %v5297 = vpack.c.b16 %v3905, %v3897
    %v5298 = vpack.c.b16 %v3906, %v3898
    %v5299 = vpack.c.b16 %v3907, %v3899
    %v5300 = vpack.c.b16 %v3908, %v3900
    %v5301 = vpack.c.b16 %v3909, %v3901
    %v5302 = vpack.c.b16 %v3910, %v3902
    %v5303 = vpack.c.b16 %v3911, %v3903
    %v5304 = vpack.c.b16 %v3912, %v3904
    %v5305 = vpack.c.b16 %v3921, %v3913
    %v5306 = vpack.c.b16 %v3922, %v3914
    %v5307 = vpack.c.b16 %v3923, %v3915
    %v5308 = vpack.c.b16 %v3924, %v3916
    %v5309 = vpack.c.b16 %v3925, %v3917
    %v5310 = vpack.c.b16 %v3926, %v3918
    %v5311 = vpack.c.b16 %v3927, %v3919
    %v5312 = vpack.c.b16 %v3928, %v3920
    %v5313 = vpack.c.b16 %v3937, %v3929
    %v5314 = vpack.c.b16 %v3938, %v3930
    %v5315 = vpack.c.b16 %v3939, %v3931
    %v5316 = vpack.c.b16 %v3940, %v3932
    %v5317 = vpack.c.b16 %v3941, %v3933
    %v5318 = vpack.c.b16 %v3942, %v3934
    %v5319 = vpack.c.b16 %v3943, %v3935
    %v5320 = vpack.c.b16 %v3944, %v3936
    %v5321 = vpack.c.b16 %v3953, %v3945
    %v5322 = vpack.c.b16 %v3954, %v3946
    %v5323 = vpack.c.b16 %v3955, %v3947
    %v5324 = vpack.c.b16 %v3956, %v3948
    %v5325 = vpack.c.b16 %v3957, %v3949
    %v5326 = vpack.c.b16 %v3958, %v3950
    %v5327 = vpack.c.b16 %v3959, %v3951
    %v5328 = vpack.c.b16 %v3960, %v3952
    %v5329 = vpack.c.b16 %v3969, %v3961
    %v5330 = vpack.c.b16 %v3970, %v3962
    %v5331 = vpack.c.b16 %v3971, %v3963
    %v5332 = vpack.c.b16 %v3972, %v3964
    %v5333 = vpack.c.b16 %v3973, %v3965
    %v5334 = vpack.c.b16 %v3974, %v3966
    %v5335 = vpack.c.b16 %v3975, %v3967
    %v5336 = vpack.c.b16 %v3976, %v3968
    %v5337 = vpack.c.b16 %v3985, %v3977
    %v5338 = vpack.c.b16 %v3986, %v3978
    %v5339 = vpack.c.b16 %v3987, %v3979
    %v5340 = vpack.c.b16 %v3988, %v3980
    %v5341 = vpack.c.b16 %v3989, %v3981
    %v5342 = vpack.c.b16 %v3990, %v3982
    %v5343 = vpack.c.b16 %v3991, %v3983
    %v5344 = vpack.c.b16 %v3992, %v3984
    %v5345 = vpack.c.b16 %v4001, %v3993
    %v5346 = vpack.c.b16 %v4002, %v3994
    %v5347 = vpack.c.b16 %v4003, %v3995
    %v5348 = vpack.c.b16 %v4004, %v3996
    %v5349 = vpack.c.b16 %v4005, %v3997
    %v5350 = vpack.c.b16 %v4006, %v3998
    %v5351 = vpack.c.b16 %v4007, %v3999
    %v5352 = vpack.c.b16 %v4008, %v4000
    %v5353 = vpack.c.b16 %v4017, %v4009
    %v5354 = vpack.c.b16 %v4018, %v4010
    %v5355 = vpack.c.b16 %v4019, %v4011
    %v5356 = vpack.c.b16 %v4020, %v4012
    %v5357 = vpack.c.b16 %v4021, %v4013
    %v5358 = vpack.c.b16 %v4022, %v4014
    %v5359 = vpack.c.b16 %v4023, %v4015
    %v5360 = vpack.c.b16 %v4024, %v4016
    %v5361 = vpack.c.b16 %v4033, %v4025
    %v5362 = vpack.c.b16 %v4034, %v4026
    %v5363 = vpack.c.b16 %v4035, %v4027
    %v5364 = vpack.c.b16 %v4036, %v4028
    %v5365 = vpack.c.b16 %v4037, %v4029
    %v5366 = vpack.c.b16 %v4038, %v4030
    %v5367 = vpack.c.b16 %v4039, %v4031
    %v5368 = vpack.c.b16 %v4040, %v4032
    %v5369 = vpack.c.b16 %v4049, %v4041
    %v5370 = vpack.c.b16 %v4050, %v4042
    %v5371 = vpack.c.b16 %v4051, %v4043
    %v5372 = vpack.c.b16 %v4052, %v4044
    %v5373 = vpack.c.b16 %v4053, %v4045
    %v5374 = vpack.c.b16 %v4054, %v4046
    %v5375 = vpack.c.b16 %v4055, %v4047
    %v5376 = vpack.c.b16 %v4056, %v4048
    %v5377 = vpack.c.b16 %v4065, %v4057
    %v5378 = vpack.c.b16 %v4066, %v4058
    %v5379 = vpack.c.b16 %v4067, %v4059
    %v5380 = vpack.c.b16 %v4068, %v4060
    %v5381 = vpack.c.b16 %v4069, %v4061
    %v5382 = vpack.c.b16 %v4070, %v4062
    %v5383 = vpack.c.b16 %v4071, %v4063
    %v5384 = vpack.c.b16 %v4072, %v4064
    %v5385 = vpack.c.b16 %v4081, %v4073
    %v5386 = vpack.c.b16 %v4082, %v4074
    %v5387 = vpack.c.b16 %v4083, %v4075
    %v5388 = vpack.c.b16 %v4084, %v4076
    %v5389 = vpack.c.b16 %v4085, %v4077
    %v5390 = vpack.c.b16 %v4086, %v4078
    %v5391 = vpack.c.b16 %v4087, %v4079
    %v5392 = vpack.c.b16 %v4088, %v4080
    %v5393 = vpack.c.b16 %v4097, %v4089
    %v5394 = vpack.c.b16 %v4098, %v4090
    %v5395 = vpack.c.b16 %v4099, %v4091
    %v5396 = vpack.c.b16 %v4100, %v4092
    %v5397 = vpack.c.b16 %v4101, %v4093
    %v5398 = vpack.c.b16 %v4102, %v4094
    %v5399 = vpack.c.b16 %v4103, %v4095
    %v5400 = vpack.c.b16 %v4104, %v4096
    %v5401 = vpack.c.b16 %v4113, %v4105
    %v5402 = vpack.c.b16 %v4114, %v4106
    %v5403 = vpack.c.b16 %v4115, %v4107
    %v5404 = vpack.c.b16 %v4116, %v4108
    %v5405 = vpack.c.b16 %v4117, %v4109
    %v5406 = vpack.c.b16 %v4118, %v4110
    %v5407 = vpack.c.b16 %v4119, %v4111
    %v5408 = vpack.c.b16 %v4120, %v4112
    %v5409 = vpack.c.b16 %v4129, %v4121
    %v5410 = vpack.c.b16 %v4130, %v4122
    %v5411 = vpack.c.b16 %v4131, %v4123
    %v5412 = vpack.c.b16 %v4132, %v4124
    %v5413 = vpack.c.b16 %v4133, %v4125
    %v5414 = vpack.c.b16 %v4134, %v4126
    %v5415 = vpack.c.b16 %v4135, %v4127
    %v5416 = vpack.c.b16 %v4136, %v4128
    %v5417 = vpack.c.b16 %v4145, %v4137
    %v5418 = vpack.c.b16 %v4146, %v4138
    %v5419 = vpack.c.b16 %v4147, %v4139
    %v5420 = vpack.c.b16 %v4148, %v4140
    %v5421 = vpack.c.b16 %v4149, %v4141
    %v5422 = vpack.c.b16 %v4150, %v4142
    %v5423 = vpack.c.b16 %v4151, %v4143
    %v5424 = vpack.c.b16 %v4152, %v4144
    %v5425 = vpack.c.b16 %v4161, %v4153
    %v5426 = vpack.c.b16 %v4162, %v4154
    %v5427 = vpack.c.b16 %v4163, %v4155
    %v5428 = vpack.c.b16 %v4164, %v4156
    %v5429 = vpack.c.b16 %v4165, %v4157
    %v5430 = vpack.c.b16 %v4166, %v4158
    %v5431 = vpack.c.b16 %v4167, %v4159
    %v5432 = vpack.c.b16 %v4168, %v4160
    %v5433 = vpack.c.b16 %v4177, %v4169
    %v5434 = vpack.c.b16 %v4178, %v4170
    %v5435 = vpack.c.b16 %v4179, %v4171
    %v5436 = vpack.c.b16 %v4180, %v4172
    %v5437 = vpack.c.b16 %v4181, %v4173
    %v5438 = vpack.c.b16 %v4182, %v4174
    %v5439 = vpack.c.b16 %v4183, %v4175
    %v5440 = vpack.c.b16 %v4184, %v4176
    %v5441 = vpack.c.b16 %v4193, %v4185
    %v5442 = vpack.c.b16 %v4194, %v4186
    %v5443 = vpack.c.b16 %v4195, %v4187
    %v5444 = vpack.c.b16 %v4196, %v4188
    %v5445 = vpack.c.b16 %v4197, %v4189
    %v5446 = vpack.c.b16 %v4198, %v4190
    %v5447 = vpack.c.b16 %v4199, %v4191
    %v5448 = vpack.c.b16 %v4200, %v4192
    %v5449 = vpack.c.b16 %v4209, %v4201
    %v5450 = vpack.c.b16 %v4210, %v4202
    %v5451 = vpack.c.b16 %v4211, %v4203
    %v5452 = vpack.c.b16 %v4212, %v4204
    %v5453 = vpack.c.b16 %v4213, %v4205
    %v5454 = vpack.c.b16 %v4214, %v4206
    %v5455 = vpack.c.b16 %v4215, %v4207
    %v5456 = vpack.c.b16 %v4216, %v4208
    %v5457 = vpack.c.b16 %v4225, %v4217
    %v5458 = vpack.c.b16 %v4226, %v4218
    %v5459 = vpack.c.b16 %v4227, %v4219
    %v5460 = vpack.c.b16 %v4228, %v4220
    %v5461 = vpack.c.b16 %v4229, %v4221
    %v5462 = vpack.c.b16 %v4230, %v4222
    %v5463 = vpack.c.b16 %v4231, %v4223
    %v5464 = vpack.c.b16 %v4232, %v4224
    %v5465 = vpack.c.b16 %v4241, %v4233
    %v5466 = vpack.c.b16 %v4242, %v4234
    %v5467 = vpack.c.b16 %v4243, %v4235
    %v5468 = vpack.c.b16 %v4244, %v4236
    %v5469 = vpack.c.b16 %v4245, %v4237
    %v5470 = vpack.c.b16 %v4246, %v4238
    %v5471 = vpack.c.b16 %v4247, %v4239
    %v5472 = vpack.c.b16 %v4248, %v4240
    %v5473 = vpack.c.b16 %v4257, %v4249
    %v5474 = vpack.c.b16 %v4258, %v4250
    %v5475 = vpack.c.b16 %v4259, %v4251
    %v5476 = vpack.c.b16 %v4260, %v4252
    %v5477 = vpack.c.b16 %v4261, %v4253
    %v5478 = vpack.c.b16 %v4262, %v4254
    %v5479 = vpack.c.b16 %v4263, %v4255
    %v5480 = vpack.c.b16 %v4264, %v4256
    %v5481 = vpack.c.b16 %v4273, %v4265
    %v5482 = vpack.c.b16 %v4274, %v4266
    %v5483 = vpack.c.b16 %v4275, %v4267
    %v5484 = vpack.c.b16 %v4276, %v4268
    %v5485 = vpack.c.b16 %v4277, %v4269
    %v5486 = vpack.c.b16 %v4278, %v4270
    %v5487 = vpack.c.b16 %v4279, %v4271
    %v5488 = vpack.c.b16 %v4280, %v4272
    %v5489 = vpack.c.b16 %v4289, %v4281
    %v5490 = vpack.c.b16 %v4290, %v4282
    %v5491 = vpack.c.b16 %v4291, %v4283
    %v5492 = vpack.c.b16 %v4292, %v4284
    %v5493 = vpack.c.b16 %v4293, %v4285
    %v5494 = vpack.c.b16 %v4294, %v4286
    %v5495 = vpack.c.b16 %v4295, %v4287
    %v5496 = vpack.c.b16 %v4296, %v4288
    %v5497 = vpack.c.b16 %v4305, %v4297
    %v5498 = vpack.c.b16 %v4306, %v4298
    %v5499 = vpack.c.b16 %v4307, %v4299
    %v5500 = vpack.c.b16 %v4308, %v4300
    %v5501 = vpack.c.b16 %v4309, %v4301
    %v5502 = vpack.c.b16 %v4310, %v4302
    %v5503 = vpack.c.b16 %v4311, %v4303
    %v5504 = vpack.c.b16 %v4312, %v4304
    %v5505 = vpack.c.b16 %v4321, %v4313
    %v5506 = vpack.c.b16 %v4322, %v4314
    %v5507 = vpack.c.b16 %v4323, %v4315
    %v5508 = vpack.c.b16 %v4324, %v4316
    %v5509 = vpack.c.b16 %v4325, %v4317
    %v5510 = vpack.c.b16 %v4326, %v4318
    %v5511 = vpack.c.b16 %v4327, %v4319
    %v5512 = vpack.c.b16 %v4328, %v4320
    %v5513 = vpack.c.b16 %v4337, %v4329
    %v5514 = vpack.c.b16 %v4338, %v4330
    %v5515 = vpack.c.b16 %v4339, %v4331
    %v5516 = vpack.c.b16 %v4340, %v4332
    %v5517 = vpack.c.b16 %v4341, %v4333
    %v5518 = vpack.c.b16 %v4342, %v4334
    %v5519 = vpack.c.b16 %v4343, %v4335
    %v5520 = vpack.c.b16 %v4344, %v4336
    %v5521 = vpack.c.b16 %v4353, %v4345
    %v5522 = vpack.c.b16 %v4354, %v4346
    %v5523 = vpack.c.b16 %v4355, %v4347
    %v5524 = vpack.c.b16 %v4356, %v4348
    %v5525 = vpack.c.b16 %v4357, %v4349
    %v5526 = vpack.c.b16 %v4358, %v4350
    %v5527 = vpack.c.b16 %v4359, %v4351
    %v5528 = vpack.c.b16 %v4360, %v4352
    %v5529 = vpack.c.b16 %v4369, %v4361
    %v5530 = vpack.c.b16 %v4370, %v4362
    %v5531 = vpack.c.b16 %v4371, %v4363
    %v5532 = vpack.c.b16 %v4372, %v4364
    %v5533 = vpack.c.b16 %v4373, %v4365
    %v5534 = vpack.c.b16 %v4374, %v4366
    %v5535 = vpack.c.b16 %v4375, %v4367
    %v5536 = vpack.c.b16 %v4376, %v4368
    %v5537 = vpack.c.b16 %v4385, %v4377
    %v5538 = vpack.c.b16 %v4386, %v4378
    %v5539 = vpack.c.b16 %v4387, %v4379
    %v5540 = vpack.c.b16 %v4388, %v4380
    %v5541 = vpack.c.b16 %v4389, %v4381
    %v5542 = vpack.c.b16 %v4390, %v4382
    %v5543 = vpack.c.b16 %v4391, %v4383
    %v5544 = vpack.c.b16 %v4392, %v4384
    %v5545 = vpack.c.b16 %v4401, %v4393
    %v5546 = vpack.c.b16 %v4402, %v4394
    %v5547 = vpack.c.b16 %v4403, %v4395
    %v5548 = vpack.c.b16 %v4404, %v4396
    %v5549 = vpack.c.b16 %v4405, %v4397
    %v5550 = vpack.c.b16 %v4406, %v4398
    %v5551 = vpack.c.b16 %v4407, %v4399
    %v5552 = vpack.c.b16 %v4408, %v4400
    %v5553 = vpack.c.b16 %v4417, %v4409
    %v5554 = vpack.c.b16 %v4418, %v4410
    %v5555 = vpack.c.b16 %v4419, %v4411
    %v5556 = vpack.c.b16 %v4420, %v4412
    %v5557 = vpack.c.b16 %v4421, %v4413
    %v5558 = vpack.c.b16 %v4422, %v4414
    %v5559 = vpack.c.b16 %v4423, %v4415
    %v5560 = vpack.c.b16 %v4424, %v4416
    %v5561 = vpack.c.b16 %v4433, %v4425
    %v5562 = vpack.c.b16 %v4434, %v4426
    %v5563 = vpack.c.b16 %v4435, %v4427
    %v5564 = vpack.c.b16 %v4436, %v4428
    %v5565 = vpack.c.b16 %v4437, %v4429
    %v5566 = vpack.c.b16 %v4438, %v4430
    %v5567 = vpack.c.b16 %v4439, %v4431
    %v5568 = vpack.c.b16 %v4440, %v4432
    %v5569 = vpack.c.b16 %v4449, %v4441
    %v5570 = vpack.c.b16 %v4450, %v4442
    %v5571 = vpack.c.b16 %v4451, %v4443
    %v5572 = vpack.c.b16 %v4452, %v4444
    %v5573 = vpack.c.b16 %v4453, %v4445
    %v5574 = vpack.c.b16 %v4454, %v4446
    %v5575 = vpack.c.b16 %v4455, %v4447
    %v5576 = vpack.c.b16 %v4456, %v4448
    %v5577 = vpack.c.b16 %v4465, %v4457
    %v5578 = vpack.c.b16 %v4466, %v4458
    %v5579 = vpack.c.b16 %v4467, %v4459
    %v5580 = vpack.c.b16 %v4468, %v4460
    %v5581 = vpack.c.b16 %v4469, %v4461
    %v5582 = vpack.c.b16 %v4470, %v4462
    %v5583 = vpack.c.b16 %v4471, %v4463
    %v5584 = vpack.c.b16 %v4472, %v4464
    %v5585 = vpack.c.b16 %v4481, %v4473
    %v5586 = vpack.c.b16 %v4482, %v4474
    %v5587 = vpack.c.b16 %v4483, %v4475
    %v5588 = vpack.c.b16 %v4484, %v4476
    %v5589 = vpack.c.b16 %v4485, %v4477
    %v5590 = vpack.c.b16 %v4486, %v4478
    %v5591 = vpack.c.b16 %v4487, %v4479
    %v5592 = vpack.c.b16 %v4488, %v4480
    %v5593 = vpack.c.b16 %v4497, %v4489
    %v5594 = vpack.c.b16 %v4498, %v4490
    %v5595 = vpack.c.b16 %v4499, %v4491
    %v5596 = vpack.c.b16 %v4500, %v4492
    %v5597 = vpack.c.b16 %v4501, %v4493
    %v5598 = vpack.c.b16 %v4502, %v4494
    %v5599 = vpack.c.b16 %v4503, %v4495
    %v5600 = vpack.c.b16 %v4504, %v4496
    %v5601 = vpack.c.b16 %v4513, %v4505
    %v5602 = vpack.c.b16 %v4514, %v4506
    %v5603 = vpack.c.b16 %v4515, %v4507
    %v5604 = vpack.c.b16 %v4516, %v4508
    %v5605 = vpack.c.b16 %v4517, %v4509
    %v5606 = vpack.c.b16 %v4518, %v4510
    %v5607 = vpack.c.b16 %v4519, %v4511
    %v5608 = vpack.c.b16 %v4520, %v4512
    %v5609 = vpack.c.b16 %v4529, %v4521
    %v5610 = vpack.c.b16 %v4530, %v4522
    %v5611 = vpack.c.b16 %v4531, %v4523
    %v5612 = vpack.c.b16 %v4532, %v4524
    %v5613 = vpack.c.b16 %v4533, %v4525
    %v5614 = vpack.c.b16 %v4534, %v4526
    %v5615 = vpack.c.b16 %v4535, %v4527
    %v5616 = vpack.c.b16 %v4536, %v4528
    %v5617 = vpack.c.b16 %v4545, %v4537
    %v5618 = vpack.c.b16 %v4546, %v4538
    %v5619 = vpack.c.b16 %v4547, %v4539
    %v5620 = vpack.c.b16 %v4548, %v4540
    %v5621 = vpack.c.b16 %v4549, %v4541
    %v5622 = vpack.c.b16 %v4550, %v4542
    %v5623 = vpack.c.b16 %v4551, %v4543
    %v5624 = vpack.c.b16 %v4552, %v4544
    %v5625 = vpack.c.b16 %v4561, %v4553
    %v5626 = vpack.c.b16 %v4562, %v4554
    %v5627 = vpack.c.b16 %v4563, %v4555
    %v5628 = vpack.c.b16 %v4564, %v4556
    %v5629 = vpack.c.b16 %v4565, %v4557
    %v5630 = vpack.c.b16 %v4566, %v4558
    %v5631 = vpack.c.b16 %v4567, %v4559
    %v5632 = vpack.c.b16 %v4568, %v4560
    %v5633 = vpack.c.b16 %v4577, %v4569
    %v5634 = vpack.c.b16 %v4578, %v4570
    %v5635 = vpack.c.b16 %v4579, %v4571
    %v5636 = vpack.c.b16 %v4580, %v4572
    %v5637 = vpack.c.b16 %v4581, %v4573
    %v5638 = vpack.c.b16 %v4582, %v4574
    %v5639 = vpack.c.b16 %v4583, %v4575
    %v5640 = vpack.c.b16 %v4584, %v4576
    %v5641 = vpack.c.b16 %v4593, %v4585
    %v5642 = vpack.c.b16 %v4594, %v4586
    %v5643 = vpack.c.b16 %v4595, %v4587
    %v5644 = vpack.c.b16 %v4596, %v4588
    %v5645 = vpack.c.b16 %v4597, %v4589
    %v5646 = vpack.c.b16 %v4598, %v4590
    %v5647 = vpack.c.b16 %v4599, %v4591
    %v5648 = vpack.c.b16 %v4600, %v4592
    %v5649 = vpack.c.b16 %v4609, %v4601
    %v5650 = vpack.c.b16 %v4610, %v4602
    %v5651 = vpack.c.b16 %v4611, %v4603
    %v5652 = vpack.c.b16 %v4612, %v4604
    %v5653 = vpack.c.b16 %v4613, %v4605
    %v5654 = vpack.c.b16 %v4614, %v4606
    %v5655 = vpack.c.b16 %v4615, %v4607
    %v5656 = vpack.c.b16 %v4616, %v4608
    %v5657 = vpack.c.b16 %v4625, %v4617
    %v5658 = vpack.c.b16 %v4626, %v4618
    %v5659 = vpack.c.b16 %v4627, %v4619
    %v5660 = vpack.c.b16 %v4628, %v4620
    %v5661 = vpack.c.b16 %v4629, %v4621
    %v5662 = vpack.c.b16 %v4630, %v4622
    %v5663 = vpack.c.b16 %v4631, %v4623
    %v5664 = vpack.c.b16 %v4632, %v4624
    %v5665 = vpack.c.b16 %v4641, %v4633
    %v5666 = vpack.c.b16 %v4642, %v4634
    %v5667 = vpack.c.b16 %v4643, %v4635
    %v5668 = vpack.c.b16 %v4644, %v4636
    %v5669 = vpack.c.b16 %v4645, %v4637
    %v5670 = vpack.c.b16 %v4646, %v4638
    %v5671 = vpack.c.b16 %v4647, %v4639
    %v5672 = vpack.c.b16 %v4648, %v4640
    %v5673 = vpack.c.b16 %v4657, %v4649
    %v5674 = vpack.c.b16 %v4658, %v4650
    %v5675 = vpack.c.b16 %v4659, %v4651
    %v5676 = vpack.c.b16 %v4660, %v4652
    %v5677 = vpack.c.b16 %v4661, %v4653
    %v5678 = vpack.c.b16 %v4662, %v4654
    %v5679 = vpack.c.b16 %v4663, %v4655
    %v5680 = vpack.c.b16 %v4664, %v4656
    %v5681 = vpack.c.b16 %v4673, %v4665
    %v5682 = vpack.c.b16 %v4674, %v4666
    %v5683 = vpack.c.b16 %v4675, %v4667
    %v5684 = vpack.c.b16 %v4676, %v4668
    %v5685 = vpack.c.b16 %v4677, %v4669
    %v5686 = vpack.c.b16 %v4678, %v4670
    %v5687 = vpack.c.b16 %v4679, %v4671
    %v5688 = vpack.c.b16 %v4680, %v4672
    %v5689 = vpack.c.b16 %v4689, %v4681
    %v5690 = vpack.c.b16 %v4690, %v4682
    %v5691 = vpack.c.b16 %v4691, %v4683
    %v5692 = vpack.c.b16 %v4692, %v4684
    %v5693 = vpack.c.b16 %v4693, %v4685
    %v5694 = vpack.c.b16 %v4694, %v4686
    %v5695 = vpack.c.b16 %v4695, %v4687
    %v5696 = vpack.c.b16 %v4696, %v4688
    %v5697 = vpack.c.b16 %v4705, %v4697
    %v5698 = vpack.c.b16 %v4706, %v4698
    %v5699 = vpack.c.b16 %v4707, %v4699
    %v5700 = vpack.c.b16 %v4708, %v4700
    %v5701 = vpack.c.b16 %v4709, %v4701
    %v5702 = vpack.c.b16 %v4710, %v4702
    %v5703 = vpack.c.b16 %v4711, %v4703
    %v5704 = vpack.c.b16 %v4712, %v4704
    %v5705 = vpack.c.b16 %v4721, %v4713
    %v5706 = vpack.c.b16 %v4722, %v4714
    %v5707 = vpack.c.b16 %v4723, %v4715
    %v5708 = vpack.c.b16 %v4724, %v4716
    %v5709 = vpack.c.b16 %v4725, %v4717
    %v5710 = vpack.c.b16 %v4726, %v4718
    %v5711 = vpack.c.b16 %v4727, %v4719
    %v5712 = vpack.c.b16 %v4728, %v4720
    %v5713 = vpack.c.b16 %v4737, %v4729
    %v5714 = vpack.c.b16 %v4738, %v4730
    %v5715 = vpack.c.b16 %v4739, %v4731
    %v5716 = vpack.c.b16 %v4740, %v4732
    %v5717 = vpack.c.b16 %v4741, %v4733
    %v5718 = vpack.c.b16 %v4742, %v4734
    %v5719 = vpack.c.b16 %v4743, %v4735
    %v5720 = vpack.c.b16 %v4744, %v4736
    %v5721 = vpack.c.b16 %v4753, %v4745
    %v5722 = vpack.c.b16 %v4754, %v4746
    %v5723 = vpack.c.b16 %v4755, %v4747
    %v5724 = vpack.c.b16 %v4756, %v4748
    %v5725 = vpack.c.b16 %v4757, %v4749
    %v5726 = vpack.c.b16 %v4758, %v4750
    %v5727 = vpack.c.b16 %v4759, %v4751
    %v5728 = vpack.c.b16 %v4760, %v4752
    %v5729 = vpack.c.b16 %v4769, %v4761
    %v5730 = vpack.c.b16 %v4770, %v4762
    %v5731 = vpack.c.b16 %v4771, %v4763
    %v5732 = vpack.c.b16 %v4772, %v4764
    %v5733 = vpack.c.b16 %v4773, %v4765
    %v5734 = vpack.c.b16 %v4774, %v4766
    %v5735 = vpack.c.b16 %v4775, %v4767
    %v5736 = vpack.c.b16 %v4776, %v4768
    %v5737 = vpack.c.b16 %v4785, %v4777
    %v5738 = vpack.c.b16 %v4786, %v4778
    %v5739 = vpack.c.b16 %v4787, %v4779
    %v5740 = vpack.c.b16 %v4788, %v4780
    %v5741 = vpack.c.b16 %v4789, %v4781
    %v5742 = vpack.c.b16 %v4790, %v4782
    %v5743 = vpack.c.b16 %v4791, %v4783
    %v5744 = vpack.c.b16 %v4792, %v4784
    %v5745 = vpack.c.b16 %v4801, %v4793
    %v5746 = vpack.c.b16 %v4802, %v4794
    %v5747 = vpack.c.b16 %v4803, %v4795
    %v5748 = vpack.c.b16 %v4804, %v4796
    %v5749 = vpack.c.b16 %v4805, %v4797
    %v5750 = vpack.c.b16 %v4806, %v4798
    %v5751 = vpack.c.b16 %v4807, %v4799
    %v5752 = vpack.c.b16 %v4808, %v4800
    %v5753 = vpack.c.b16 %v4817, %v4809
    %v5754 = vpack.c.b16 %v4818, %v4810
    %v5755 = vpack.c.b16 %v4819, %v4811
    %v5756 = vpack.c.b16 %v4820, %v4812
    %v5757 = vpack.c.b16 %v4821, %v4813
    %v5758 = vpack.c.b16 %v4822, %v4814
    %v5759 = vpack.c.b16 %v4823, %v4815
    %v5760 = vpack.c.b16 %v4824, %v4816
    %v5761 = vpack.c.b16 %v4833, %v4825
    %v5762 = vpack.c.b16 %v4834, %v4826
    %v5763 = vpack.c.b16 %v4835, %v4827
    %v5764 = vpack.c.b16 %v4836, %v4828
    %v5765 = vpack.c.b16 %v4837, %v4829
    %v5766 = vpack.c.b16 %v4838, %v4830
    %v5767 = vpack.c.b16 %v4839, %v4831
    %v5768 = vpack.c.b16 %v4840, %v4832
    %v5769 = vpack.c.b16 %v4849, %v4841
    %v5770 = vpack.c.b16 %v4850, %v4842
    %v5771 = vpack.c.b16 %v4851, %v4843
    %v5772 = vpack.c.b16 %v4852, %v4844
    %v5773 = vpack.c.b16 %v4853, %v4845
    %v5774 = vpack.c.b16 %v4854, %v4846
    %v5775 = vpack.c.b16 %v4855, %v4847
    %v5776 = vpack.c.b16 %v4856, %v4848
    %v5777 = vpack.c.b16 %v4865, %v4857
    %v5778 = vpack.c.b16 %v4866, %v4858
    %v5779 = vpack.c.b16 %v4867, %v4859
    %v5780 = vpack.c.b16 %v4868, %v4860
    %v5781 = vpack.c.b16 %v4869, %v4861
    %v5782 = vpack.c.b16 %v4870, %v4862
    %v5783 = vpack.c.b16 %v4871, %v4863
    %v5784 = vpack.c.b16 %v4872, %v4864
    %v5785 = vpack.c.b16 %v4881, %v4873
    %v5786 = vpack.c.b16 %v4882, %v4874
    %v5787 = vpack.c.b16 %v4883, %v4875
    %v5788 = vpack.c.b16 %v4884, %v4876
    %v5789 = vpack.c.b16 %v4885, %v4877
    %v5790 = vpack.c.b16 %v4886, %v4878
    %v5791 = vpack.c.b16 %v4887, %v4879
    %v5792 = vpack.c.b16 %v4888, %v4880
    %v5793 = vpack.c.b16 %v4897, %v4889
    %v5794 = vpack.c.b16 %v4898, %v4890
    %v5795 = vpack.c.b16 %v4899, %v4891
    %v5796 = vpack.c.b16 %v4900, %v4892
    %v5797 = vpack.c.b16 %v4901, %v4893
    %v5798 = vpack.c.b16 %v4902, %v4894
    %v5799 = vpack.c.b16 %v4903, %v4895
    %v5800 = vpack.c.b16 %v4904, %v4896
    %v5801 = vpack.c.b16 %v4913, %v4905
    %v5802 = vpack.c.b16 %v4914, %v4906
    %v5803 = vpack.c.b16 %v4915, %v4907
    %v5804 = vpack.c.b16 %v4916, %v4908
    %v5805 = vpack.c.b16 %v4917, %v4909
    %v5806 = vpack.c.b16 %v4918, %v4910
    %v5807 = vpack.c.b16 %v4919, %v4911
    %v5808 = vpack.c.b16 %v4920, %v4912
    %v5809 = vpack.c.b16 %v4929, %v4921
    %v5810 = vpack.c.b16 %v4930, %v4922
    %v5811 = vpack.c.b16 %v4931, %v4923
    %v5812 = vpack.c.b16 %v4932, %v4924
    %v5813 = vpack.c.b16 %v4933, %v4925
    %v5814 = vpack.c.b16 %v4934, %v4926
    %v5815 = vpack.c.b16 %v4935, %v4927
    %v5816 = vpack.c.b16 %v4936, %v4928
    %v5817 = vpack.c.b16 %v4945, %v4937
    %v5818 = vpack.c.b16 %v4946, %v4938
    %v5819 = vpack.c.b16 %v4947, %v4939
    %v5820 = vpack.c.b16 %v4948, %v4940
    %v5821 = vpack.c.b16 %v4949, %v4941
    %v5822 = vpack.c.b16 %v4950, %v4942
    %v5823 = vpack.c.b16 %v4951, %v4943
    %v5824 = vpack.c.b16 %v4952, %v4944
    %v5825 = vpack.c.b16 %v4961, %v4953
    %v5826 = vpack.c.b16 %v4962, %v4954
    %v5827 = vpack.c.b16 %v4963, %v4955
    %v5828 = vpack.c.b16 %v4964, %v4956
    %v5829 = vpack.c.b16 %v4965, %v4957
    %v5830 = vpack.c.b16 %v4966, %v4958
    %v5831 = vpack.c.b16 %v4967, %v4959
    %v5832 = vpack.c.b16 %v4968, %v4960
    %v5833 = vpack.c.b16 %v4977, %v4969
    %v5834 = vpack.c.b16 %v4978, %v4970
    %v5835 = vpack.c.b16 %v4979, %v4971
    %v5836 = vpack.c.b16 %v4980, %v4972
    %v5837 = vpack.c.b16 %v4981, %v4973
    %v5838 = vpack.c.b16 %v4982, %v4974
    %v5839 = vpack.c.b16 %v4983, %v4975
    %v5840 = vpack.c.b16 %v4984, %v4976
    %v5841 = vpack.c.b16 %v4993, %v4985
    %v5842 = vpack.c.b16 %v4994, %v4986
    %v5843 = vpack.c.b16 %v4995, %v4987
    %v5844 = vpack.c.b16 %v4996, %v4988
    %v5845 = vpack.c.b16 %v4997, %v4989
    %v5846 = vpack.c.b16 %v4998, %v4990
    %v5847 = vpack.c.b16 %v4999, %v4991
    %v5848 = vpack.c.b16 %v5000, %v4992
    %v5849 = vpack.c.b16 %v5009, %v5001
    %v5850 = vpack.c.b16 %v5010, %v5002
    %v5851 = vpack.c.b16 %v5011, %v5003
    %v5852 = vpack.c.b16 %v5012, %v5004
    %v5853 = vpack.c.b16 %v5013, %v5005
    %v5854 = vpack.c.b16 %v5014, %v5006
    %v5855 = vpack.c.b16 %v5015, %v5007
    %v5856 = vpack.c.b16 %v5016, %v5008
    %v5857 = vpack.c.b16 %v5025, %v5017
    %v5858 = vpack.c.b16 %v5026, %v5018
    %v5859 = vpack.c.b16 %v5027, %v5019
    %v5860 = vpack.c.b16 %v5028, %v5020
    %v5861 = vpack.c.b16 %v5029, %v5021
    %v5862 = vpack.c.b16 %v5030, %v5022
    %v5863 = vpack.c.b16 %v5031, %v5023
    %v5864 = vpack.c.b16 %v5032, %v5024
    %v5865 = vpack.c.b16 %v5041, %v5033
    %v5866 = vpack.c.b16 %v5042, %v5034
    %v5867 = vpack.c.b16 %v5043, %v5035
    %v5868 = vpack.c.b16 %v5044, %v5036
    %v5869 = vpack.c.b16 %v5045, %v5037
    %v5870 = vpack.c.b16 %v5046, %v5038
    %v5871 = vpack.c.b16 %v5047, %v5039
    %v5872 = vpack.c.b16 %v5048, %v5040
    %v5873 = vpack.c.b16 %v5057, %v5049
    %v5874 = vpack.c.b16 %v5058, %v5050
    %v5875 = vpack.c.b16 %v5059, %v5051
    %v5876 = vpack.c.b16 %v5060, %v5052
    %v5877 = vpack.c.b16 %v5061, %v5053
    %v5878 = vpack.c.b16 %v5062, %v5054
    %v5879 = vpack.c.b16 %v5063, %v5055
    %v5880 = vpack.c.b16 %v5064, %v5056
    %v5881 = vpack.c.b16 %v5073, %v5065
    %v5882 = vpack.c.b16 %v5074, %v5066
    %v5883 = vpack.c.b16 %v5075, %v5067
    %v5884 = vpack.c.b16 %v5076, %v5068
    %v5885 = vpack.c.b16 %v5077, %v5069
    %v5886 = vpack.c.b16 %v5078, %v5070
    %v5887 = vpack.c.b16 %v5079, %v5071
    %v5888 = vpack.c.b16 %v5080, %v5072
    %v5889 = vpack.c.b16 %v5089, %v5081
    %v5890 = vpack.c.b16 %v5090, %v5082
    %v5891 = vpack.c.b16 %v5091, %v5083
    %v5892 = vpack.c.b16 %v5092, %v5084
    %v5893 = vpack.c.b16 %v5093, %v5085
    %v5894 = vpack.c.b16 %v5094, %v5086
    %v5895 = vpack.c.b16 %v5095, %v5087
    %v5896 = vpack.c.b16 %v5096, %v5088
    %v5897 = vpack.c.b16 %v5105, %v5097
    %v5898 = vpack.c.b16 %v5106, %v5098
    %v5899 = vpack.c.b16 %v5107, %v5099
    %v5900 = vpack.c.b16 %v5108, %v5100
    %v5901 = vpack.c.b16 %v5109, %v5101
    %v5902 = vpack.c.b16 %v5110, %v5102
    %v5903 = vpack.c.b16 %v5111, %v5103
    %v5904 = vpack.c.b16 %v5112, %v5104
    %v5905 = vpack.c.b16 %v5121, %v5113
    %v5906 = vpack.c.b16 %v5122, %v5114
    %v5907 = vpack.c.b16 %v5123, %v5115
    %v5908 = vpack.c.b16 %v5124, %v5116
    %v5909 = vpack.c.b16 %v5125, %v5117
    %v5910 = vpack.c.b16 %v5126, %v5118
    %v5911 = vpack.c.b16 %v5127, %v5119
    %v5912 = vpack.c.b16 %v5128, %v5120
    %v5913 = vpack.c.b16 %v5137, %v5129
    %v5914 = vpack.c.b16 %v5138, %v5130
    %v5915 = vpack.c.b16 %v5139, %v5131
    %v5916 = vpack.c.b16 %v5140, %v5132
    %v5917 = vpack.c.b16 %v5141, %v5133
    %v5918 = vpack.c.b16 %v5142, %v5134
    %v5919 = vpack.c.b16 %v5143, %v5135
    %v5920 = vpack.c.b16 %v5144, %v5136
    %v5921 = vpack.c.b16 %v5153, %v5145
    %v5922 = vpack.c.b16 %v5154, %v5146
    %v5923 = vpack.c.b16 %v5155, %v5147
    %v5924 = vpack.c.b16 %v5156, %v5148
    %v5925 = vpack.c.b16 %v5157, %v5149
    %v5926 = vpack.c.b16 %v5158, %v5150
    %v5927 = vpack.c.b16 %v5159, %v5151
    %v5928 = vpack.c.b16 %v5160, %v5152
    %v5929 = vpack.c.b16 %v5169, %v5161
    %v5930 = vpack.c.b16 %v5170, %v5162
    %v5931 = vpack.c.b16 %v5171, %v5163
    %v5932 = vpack.c.b16 %v5172, %v5164
    %v5933 = vpack.c.b16 %v5173, %v5165
    %v5934 = vpack.c.b16 %v5174, %v5166
    %v5935 = vpack.c.b16 %v5175, %v5167
    %v5936 = vpack.c.b16 %v5176, %v5168
    %v5937 = vpack.c.b16 %v5185, %v5177
    %v5938 = vpack.c.b16 %v5186, %v5178
    %v5939 = vpack.c.b16 %v5187, %v5179
    %v5940 = vpack.c.b16 %v5188, %v5180
    %v5941 = vpack.c.b16 %v5189, %v5181
    %v5942 = vpack.c.b16 %v5190, %v5182
    %v5943 = vpack.c.b16 %v5191, %v5183
    %v5944 = vpack.c.b16 %v5192, %v5184
    %v5945 = vpack.c.b16 %v5201, %v5193
    %v5946 = vpack.c.b16 %v5202, %v5194
    %v5947 = vpack.c.b16 %v5203, %v5195
    %v5948 = vpack.c.b16 %v5204, %v5196
    %v5949 = vpack.c.b16 %v5205, %v5197
    %v5950 = vpack.c.b16 %v5206, %v5198
    %v5951 = vpack.c.b16 %v5207, %v5199
    %v5952 = vpack.c.b16 %v5208, %v5200
    %v5953 = vpack.c.b16 %v5217, %v5209
    %v5954 = vpack.c.b16 %v5218, %v5210
    %v5955 = vpack.c.b16 %v5219, %v5211
    %v5956 = vpack.c.b16 %v5220, %v5212
    %v5957 = vpack.c.b16 %v5221, %v5213
    %v5958 = vpack.c.b16 %v5222, %v5214
    %v5959 = vpack.c.b16 %v5223, %v5215
    %v5960 = vpack.c.b16 %v5224, %v5216
    %v5961 = vpack.c.b16 %v5233, %v5225
    %v5962 = vpack.c.b16 %v5234, %v5226
    %v5963 = vpack.c.b16 %v5235, %v5227
    %v5964 = vpack.c.b16 %v5236, %v5228
    %v5965 = vpack.c.b16 %v5237, %v5229
    %v5966 = vpack.c.b16 %v5238, %v5230
    %v5967 = vpack.c.b16 %v5239, %v5231
    %v5968 = vpack.c.b16 %v5240, %v5232
    %v5969 = vpack.c.b16 %v5249, %v5241
    %v5970 = vpack.c.b16 %v5250, %v5242
    %v5971 = vpack.c.b16 %v5251, %v5243
    %v5972 = vpack.c.b16 %v5252, %v5244
    %v5973 = vpack.c.b16 %v5253, %v5245
    %v5974 = vpack.c.b16 %v5254, %v5246
    %v5975 = vpack.c.b16 %v5255, %v5247
    %v5976 = vpack.c.b16 %v5256, %v5248
    %v6697 = vsel %vm2061, %v2326, 0
    %6699 = vmatprep.subr.bf16.mxu0 %v5314
    %6700 = vmatpush1.bf16.msra.mxu0 %v5313
    %6701 = vmatprep.subr.bf16.mxu0 %v5306
    %6702 = vmatpush1.bf16.msra.mxu0 %v5305
    %6703 = vmatprep.subr.bf16.mxu0 %v5298
    %6704 = vmatpush1.bf16.msra.mxu0 %v5297
    %6705 = vmatprep.subr.bf16.mxu0 %v5290
    %6706 = vmatpush1.bf16.msra.mxu0 %v5289
    %6707 = vmatprep.subr.bf16.mxu0 %v5282
    %6708 = vmatpush1.bf16.msra.mxu0 %v5281
    %6709 = vmatprep.subr.bf16.mxu0 %v5274
    %6710 = vmatpush1.bf16.msra.mxu0 %v5273
    %6711 = vmatprep.subr.bf16.mxu0 %v5266
    %6712 = vmatpush1.bf16.msra.mxu0 %v5265
    %6713 = vmatprep.subr.bf16.mxu0 %v5258
    %6714 = vmatpush1.bf16.msra.mxu0 %v5257
    %6715 = vmatprep.subr.bf16.mxu0 %v5378
    %6716 = vmatpush2.bf16.msra.mxu0 %v5377
    %6717 = vmatprep.subr.bf16.mxu0 %v5370
    %6718 = vmatpush2.bf16.msra.mxu0 %v5369
    %6719 = vmatprep.subr.bf16.mxu0 %v5362
    %6720 = vmatpush2.bf16.msra.mxu0 %v5361
    %6721 = vmatprep.subr.bf16.mxu0 %v5354
    %6722 = vmatpush2.bf16.msra.mxu0 %v5353
    %6723 = vmatprep.subr.bf16.mxu0 %v5346
    %6724 = vmatpush2.bf16.msra.mxu0 %v5345
    %6725 = vmatprep.subr.bf16.mxu0 %v5338
    %6726 = vmatpush2.bf16.msra.mxu0 %v5337
    %6727 = vmatprep.subr.bf16.mxu0 %v5330
    %6728 = vmatpush2.bf16.msra.mxu0 %v5329
    %6729 = vmatprep.subr.bf16.mxu0 %v5322
    %6730 = vmatpush2.bf16.msra.mxu0 %v5321
    %6731 = vmatprep.mubr.bf16.mxu0 %v2069
    %6732 = vmatmul.mubr.bf16.gmra.mxu0 %v2059
    %v6733 = vpop.f32.mrf.mxu0
    %v6734 = vadd.f32 %v3060, %v6733
    %v6735 = vpop.f32.mrf.mxu0
    %v6736 = vadd.f32 %v3064, %v6735
    %v6737 = vpop.f32.mrf.mxu0
    %v6738 = vpop.f32.mrf.mxu0
    %6739 = vdwg.mxu0
    %6740 = vmatprep.subr.bf16.mxu0 %v5442
    %6741 = vmatpush1.bf16.msra.mxu0 %v5441
    %6742 = vmatprep.subr.bf16.mxu0 %v5434
    %6743 = vmatpush1.bf16.msra.mxu0 %v5433
    %6744 = vmatprep.subr.bf16.mxu0 %v5426
    %6745 = vmatpush1.bf16.msra.mxu0 %v5425
    %6746 = vmatprep.subr.bf16.mxu0 %v5418
    %6747 = vmatpush1.bf16.msra.mxu0 %v5417
    %6748 = vmatprep.subr.bf16.mxu0 %v5410
    %6749 = vmatpush1.bf16.msra.mxu0 %v5409
    %6750 = vmatprep.subr.bf16.mxu0 %v5402
    %6751 = vmatpush1.bf16.msra.mxu0 %v5401
    %6752 = vmatprep.subr.bf16.mxu0 %v5394
    %6753 = vmatpush1.bf16.msra.mxu0 %v5393
    %6754 = vmatprep.subr.bf16.mxu0 %v5386
    %6755 = vmatpush1.bf16.msra.mxu0 %v5385
    %6756 = vmatprep.subr.bf16.mxu0 %v5506
    %6757 = vmatpush2.bf16.msra.mxu0 %v5505
    %6758 = vmatprep.subr.bf16.mxu0 %v5498
    %6759 = vmatpush2.bf16.msra.mxu0 %v5497
    %6760 = vmatprep.subr.bf16.mxu0 %v5490
    %6761 = vmatpush2.bf16.msra.mxu0 %v5489
    %6762 = vmatprep.subr.bf16.mxu0 %v5482
    %6763 = vmatpush2.bf16.msra.mxu0 %v5481
    %6764 = vmatprep.subr.bf16.mxu0 %v5474
    %6765 = vmatpush2.bf16.msra.mxu0 %v5473
    %6766 = vmatprep.subr.bf16.mxu0 %v5466
    %6767 = vmatpush2.bf16.msra.mxu0 %v5465
    %6768 = vmatprep.subr.bf16.mxu0 %v5458
    %6769 = vmatpush2.bf16.msra.mxu0 %v5457
    %6770 = vmatprep.subr.bf16.mxu0 %v5450
    %6771 = vmatpush2.bf16.msra.mxu0 %v5449
    %6772 = vmatprep.mubr.bf16.mxu0 %v2089
    %6773 = vmatmul.mubr.bf16.gmra.mxu0 %v2079
    %v6774 = vpop.f32.mrf.mxu0
    %v6775 = vadd.f32 %v6734, %v6774
    %v6776 = vpop.f32.mrf.mxu0
    %v6777 = vadd.f32 %v6736, %v6776
    %v6778 = vpop.f32.mrf.mxu0
    %v6779 = vpop.f32.mrf.mxu0
    %6780 = vdwg.mxu0
    %6781 = vmatprep.subr.bf16.mxu0 %v5570
    %6782 = vmatpush1.bf16.msra.mxu0 %v5569
    %6783 = vmatprep.subr.bf16.mxu0 %v5562
    %6784 = vmatpush1.bf16.msra.mxu0 %v5561
    %6785 = vmatprep.subr.bf16.mxu0 %v5554
    %6786 = vmatpush1.bf16.msra.mxu0 %v5553
    %6787 = vmatprep.subr.bf16.mxu0 %v5546
    %6788 = vmatpush1.bf16.msra.mxu0 %v5545
    %6789 = vmatprep.subr.bf16.mxu0 %v5538
    %6790 = vmatpush1.bf16.msra.mxu0 %v5537
    %6791 = vmatprep.subr.bf16.mxu0 %v5530
    %6792 = vmatpush1.bf16.msra.mxu0 %v5529
    %6793 = vmatprep.subr.bf16.mxu0 %v5522
    %6794 = vmatpush1.bf16.msra.mxu0 %v5521
    %6795 = vmatprep.subr.bf16.mxu0 %v5514
    %6796 = vmatpush1.bf16.msra.mxu0 %v5513
    %6797 = vmatprep.subr.bf16.mxu0 %v5634
    %6798 = vmatpush2.bf16.msra.mxu0 %v5633
    %6799 = vmatprep.subr.bf16.mxu0 %v5626
    %6800 = vmatpush2.bf16.msra.mxu0 %v5625
    %6801 = vmatprep.subr.bf16.mxu0 %v5618
    %6802 = vmatpush2.bf16.msra.mxu0 %v5617
    %6803 = vmatprep.subr.bf16.mxu0 %v5610
    %6804 = vmatpush2.bf16.msra.mxu0 %v5609
    %6805 = vmatprep.subr.bf16.mxu0 %v5602
    %6806 = vmatpush2.bf16.msra.mxu0 %v5601
    %6807 = vmatprep.subr.bf16.mxu0 %v5594
    %6808 = vmatpush2.bf16.msra.mxu0 %v5593
    %6809 = vmatprep.subr.bf16.mxu0 %v5586
    %6810 = vmatpush2.bf16.msra.mxu0 %v5585
    %6811 = vmatprep.subr.bf16.mxu0 %v5578
    %6812 = vmatpush2.bf16.msra.mxu0 %v5577
    %6813 = vmatprep.mubr.bf16.mxu0 %v2261
    %6814 = vmatmul.mubr.bf16.gmra.mxu0 %v2099
    %v6815 = vpop.f32.mrf.mxu0
    %v6816 = vadd.f32 %v6775, %v6815
    %v6817 = vpop.f32.mrf.mxu0
    %v6818 = vadd.f32 %v6777, %v6817
    %v6819 = vpop.f32.mrf.mxu0
    %v6820 = vpop.f32.mrf.mxu0
    %6821 = vdwg.mxu0
    %6822 = vmatprep.subr.bf16.mxu0 %v5698
    %6823 = vmatpush1.bf16.msra.mxu0 %v5697
    %6824 = vmatprep.subr.bf16.mxu0 %v5690
    %6825 = vmatpush1.bf16.msra.mxu0 %v5689
    %6826 = vmatprep.subr.bf16.mxu0 %v5682
    %6827 = vmatpush1.bf16.msra.mxu0 %v5681
    %6828 = vmatprep.subr.bf16.mxu0 %v5674
    %6829 = vmatpush1.bf16.msra.mxu0 %v5673
    %6830 = vmatprep.subr.bf16.mxu0 %v5666
    %6831 = vmatpush1.bf16.msra.mxu0 %v5665
    %6832 = vmatprep.subr.bf16.mxu0 %v5658
    %6833 = vmatpush1.bf16.msra.mxu0 %v5657
    %6834 = vmatprep.subr.bf16.mxu0 %v5650
    %6835 = vmatpush1.bf16.msra.mxu0 %v5649
    %6836 = vmatprep.subr.bf16.mxu0 %v5642
    %6837 = vmatpush1.bf16.msra.mxu0 %v5641
    %6838 = vmatprep.subr.bf16.mxu0 %v5762
    %6839 = vmatpush2.bf16.msra.mxu0 %v5761
    %6840 = vmatprep.subr.bf16.mxu0 %v5754
    %6841 = vmatpush2.bf16.msra.mxu0 %v5753
    %6842 = vmatprep.subr.bf16.mxu0 %v5746
    %6843 = vmatpush2.bf16.msra.mxu0 %v5745
    %6844 = vmatprep.subr.bf16.mxu0 %v5738
    %6845 = vmatpush2.bf16.msra.mxu0 %v5737
    %6846 = vmatprep.subr.bf16.mxu0 %v5730
    %6847 = vmatpush2.bf16.msra.mxu0 %v5729
    %6848 = vmatprep.subr.bf16.mxu0 %v5722
    %6849 = vmatpush2.bf16.msra.mxu0 %v5721
    %6850 = vmatprep.subr.bf16.mxu0 %v5714
    %6851 = vmatpush2.bf16.msra.mxu0 %v5713
    %6852 = vmatprep.subr.bf16.mxu0 %v5706
    %6853 = vmatpush2.bf16.msra.mxu0 %v5705
    %6854 = vmatprep.mubr.bf16.mxu0 %v2275
    %6855 = vmatmul.mubr.bf16.gmra.mxu0 %v2268
    %v6856 = vpop.f32.mrf.mxu0
    %v6857 = vadd.f32 %v6816, %v6856
    %v6858 = vpop.f32.mrf.mxu0
    %v6859 = vadd.f32 %v6818, %v6858
    %v6860 = vpop.f32.mrf.mxu0
    %v6861 = vpop.f32.mrf.mxu0
    %6862 = vdwg.mxu0
    %6863 = vmatprep.subr.bf16.mxu0 %v5826
    %6864 = vmatpush1.bf16.msra.mxu0 %v5825
    %6865 = vmatprep.subr.bf16.mxu0 %v5818
    %6866 = vmatpush1.bf16.msra.mxu0 %v5817
    %6867 = vmatprep.subr.bf16.mxu0 %v5810
    %6868 = vmatpush1.bf16.msra.mxu0 %v5809
    %6869 = vmatprep.subr.bf16.mxu0 %v5802
    %6870 = vmatpush1.bf16.msra.mxu0 %v5801
    %6871 = vmatprep.subr.bf16.mxu0 %v5794
    %6872 = vmatpush1.bf16.msra.mxu0 %v5793
    %6873 = vmatprep.subr.bf16.mxu0 %v5786
    %6874 = vmatpush1.bf16.msra.mxu0 %v5785
    %6875 = vmatprep.subr.bf16.mxu0 %v5778
    %6876 = vmatpush1.bf16.msra.mxu0 %v5777
    %6877 = vmatprep.subr.bf16.mxu0 %v5770
    %6878 = vmatpush1.bf16.msra.mxu0 %v5769
    %6879 = vmatprep.subr.bf16.mxu0 %v5890
    %6880 = vmatpush2.bf16.msra.mxu0 %v5889
    %6881 = vmatprep.subr.bf16.mxu0 %v5882
    %6882 = vmatpush2.bf16.msra.mxu0 %v5881
    %6883 = vmatprep.subr.bf16.mxu0 %v5874
    %6884 = vmatpush2.bf16.msra.mxu0 %v5873
    %6885 = vmatprep.subr.bf16.mxu0 %v5866
    %6886 = vmatpush2.bf16.msra.mxu0 %v5865
    %6887 = vmatprep.subr.bf16.mxu0 %v5858
    %6888 = vmatpush2.bf16.msra.mxu0 %v5857
    %6889 = vmatprep.subr.bf16.mxu0 %v5850
    %6890 = vmatpush2.bf16.msra.mxu0 %v5849
    %6891 = vmatprep.subr.bf16.mxu0 %v5842
    %6892 = vmatpush2.bf16.msra.mxu0 %v5841
    %6893 = vmatprep.subr.bf16.mxu0 %v5834
    %6894 = vmatpush2.bf16.msra.mxu0 %v5833
    %6895 = vmatprep.mubr.bf16.mxu0 %v2289
    %6896 = vmatmul.mubr.bf16.gmra.mxu0 %v2282
    %v6897 = vpop.f32.mrf.mxu0
    %v6898 = vadd.f32 %v6857, %v6897
    %v6899 = vpop.f32.mrf.mxu0
    %v6900 = vadd.f32 %v6859, %v6899
    %v6901 = vpop.f32.mrf.mxu0
    %v6902 = vpop.f32.mrf.mxu0
    %6903 = vdwg.mxu0
    %6904 = vmatprep.subr.bf16.mxu0 %v5954
    %6905 = vmatpush1.bf16.msra.mxu0 %v5953
    %6906 = vmatprep.subr.bf16.mxu0 %v5946
    %6907 = vmatpush1.bf16.msra.mxu0 %v5945
    %6908 = vmatprep.subr.bf16.mxu0 %v5938
    %6909 = vmatpush1.bf16.msra.mxu0 %v5937
    %6910 = vmatprep.subr.bf16.mxu0 %v5930
    %6911 = vmatpush1.bf16.msra.mxu0 %v5929
    %6912 = vmatprep.subr.bf16.mxu0 %v5922
    %6913 = vmatpush1.bf16.msra.mxu0 %v5921
    %6914 = vmatprep.subr.bf16.mxu0 %v5914
    %6915 = vmatpush1.bf16.msra.mxu0 %v5913
    %6916 = vmatprep.subr.bf16.mxu0 %v5906
    %6917 = vmatpush1.bf16.msra.mxu0 %v5905
    %6918 = vmatprep.subr.bf16.mxu0 %v5898
    %6919 = vmatpush1.bf16.msra.mxu0 %v5897
    %6920 = vmatprep.subr.bf16.mxu0 0
    %6921 = vmatpush2.bf16.msra.mxu0 0
    %6922 = vmatprep.subr.bf16.mxu0 0
    %6923 = vmatpush2.bf16.msra.mxu0 0
    %6924 = vmatprep.subr.bf16.mxu0 0
    %6925 = vmatpush2.bf16.msra.mxu0 0
    %6926 = vmatprep.subr.bf16.mxu0 0
    %6927 = vmatpush2.bf16.msra.mxu0 0
    %6928 = vmatprep.subr.bf16.mxu0 0
    %6929 = vmatpush2.bf16.msra.mxu0 0
    %6930 = vmatprep.subr.bf16.mxu0 0
    %6931 = vmatpush2.bf16.msra.mxu0 0
    %6932 = vmatprep.subr.bf16.mxu0 %v5970
    %6933 = vmatpush2.bf16.msra.mxu0 %v5969
    %6934 = vmatprep.subr.bf16.mxu0 %v5962
    %6935 = vmatpush2.bf16.msra.mxu0 %v5961
    %6936 = vmatprep.mubr.bf16.mxu0 %v6697
    %6937 = vmatmul.mubr.bf16.gmra.mxu0 %v2333
    %v6938 = vpop.f32.mrf.mxu0
    %v6939 = vadd.f32 %v6898, %v6938
    %v6940 = vpop.f32.mrf.mxu0
    %v6941 = vadd.f32 %v6900, %v6940
    %v6942 = vpop.f32.mrf.mxu0
    %v6943 = vpop.f32.mrf.mxu0
    %6944 = vdwg.mxu0
    %6945 = vmatprep.subr.bf16.mxu0 %v5316
    %6946 = vmatpush1.bf16.msra.mxu0 %v5315
    %6947 = vmatprep.subr.bf16.mxu0 %v5308
    %6948 = vmatpush1.bf16.msra.mxu0 %v5307
    %6949 = vmatprep.subr.bf16.mxu0 %v5300
    %6950 = vmatpush1.bf16.msra.mxu0 %v5299
    %6951 = vmatprep.subr.bf16.mxu0 %v5292
    %6952 = vmatpush1.bf16.msra.mxu0 %v5291
    %6953 = vmatprep.subr.bf16.mxu0 %v5284
    %6954 = vmatpush1.bf16.msra.mxu0 %v5283
    %6955 = vmatprep.subr.bf16.mxu0 %v5276
    %6956 = vmatpush1.bf16.msra.mxu0 %v5275
    %6957 = vmatprep.subr.bf16.mxu0 %v5268
    %6958 = vmatpush1.bf16.msra.mxu0 %v5267
    %6959 = vmatprep.subr.bf16.mxu0 %v5260
    %6960 = vmatpush1.bf16.msra.mxu0 %v5259
    %6961 = vmatprep.subr.bf16.mxu0 %v5380
    %6962 = vmatpush2.bf16.msra.mxu0 %v5379
    %6963 = vmatprep.subr.bf16.mxu0 %v5372
    %6964 = vmatpush2.bf16.msra.mxu0 %v5371
    %6965 = vmatprep.subr.bf16.mxu0 %v5364
    %6966 = vmatpush2.bf16.msra.mxu0 %v5363
    %6967 = vmatprep.subr.bf16.mxu0 %v5356
    %6968 = vmatpush2.bf16.msra.mxu0 %v5355
    %6969 = vmatprep.subr.bf16.mxu0 %v5348
    %6970 = vmatpush2.bf16.msra.mxu0 %v5347
    %6971 = vmatprep.subr.bf16.mxu0 %v5340
    %6972 = vmatpush2.bf16.msra.mxu0 %v5339
    %6973 = vmatprep.subr.bf16.mxu0 %v5332
    %6974 = vmatpush2.bf16.msra.mxu0 %v5331
    %6975 = vmatprep.subr.bf16.mxu0 %v5324
    %6976 = vmatpush2.bf16.msra.mxu0 %v5323
    %6977 = vmatprep.mubr.bf16.mxu0 %v2069
    %6978 = vmatmul.mubr.bf16.gmra.mxu0 %v2059
    %v6979 = vpop.f32.mrf.mxu0
    %v6980 = vadd.f32 %v3068, %v6979
    %v6981 = vpop.f32.mrf.mxu0
    %v6982 = vadd.f32 %v3072, %v6981
    %v6983 = vpop.f32.mrf.mxu0
    %v6984 = vpop.f32.mrf.mxu0
    %6985 = vdwg.mxu0
    %6986 = vmatprep.subr.bf16.mxu0 %v5444
    %6987 = vmatpush1.bf16.msra.mxu0 %v5443
    %6988 = vmatprep.subr.bf16.mxu0 %v5436
    %6989 = vmatpush1.bf16.msra.mxu0 %v5435
    %6990 = vmatprep.subr.bf16.mxu0 %v5428
    %6991 = vmatpush1.bf16.msra.mxu0 %v5427
    %6992 = vmatprep.subr.bf16.mxu0 %v5420
    %6993 = vmatpush1.bf16.msra.mxu0 %v5419
    %6994 = vmatprep.subr.bf16.mxu0 %v5412
    %6995 = vmatpush1.bf16.msra.mxu0 %v5411
    %6996 = vmatprep.subr.bf16.mxu0 %v5404
    %6997 = vmatpush1.bf16.msra.mxu0 %v5403
    %6998 = vmatprep.subr.bf16.mxu0 %v5396
    %6999 = vmatpush1.bf16.msra.mxu0 %v5395
    %7000 = vmatprep.subr.bf16.mxu0 %v5388
    %7001 = vmatpush1.bf16.msra.mxu0 %v5387
    %7002 = vmatprep.subr.bf16.mxu0 %v5508
    %7003 = vmatpush2.bf16.msra.mxu0 %v5507
    %7004 = vmatprep.subr.bf16.mxu0 %v5500
    %7005 = vmatpush2.bf16.msra.mxu0 %v5499
    %7006 = vmatprep.subr.bf16.mxu0 %v5492
    %7007 = vmatpush2.bf16.msra.mxu0 %v5491
    %7008 = vmatprep.subr.bf16.mxu0 %v5484
    %7009 = vmatpush2.bf16.msra.mxu0 %v5483
    %7010 = vmatprep.subr.bf16.mxu0 %v5476
    %7011 = vmatpush2.bf16.msra.mxu0 %v5475
    %7012 = vmatprep.subr.bf16.mxu0 %v5468
    %7013 = vmatpush2.bf16.msra.mxu0 %v5467
    %7014 = vmatprep.subr.bf16.mxu0 %v5460
    %7015 = vmatpush2.bf16.msra.mxu0 %v5459
    %7016 = vmatprep.subr.bf16.mxu0 %v5452
    %7017 = vmatpush2.bf16.msra.mxu0 %v5451
    %7018 = vmatprep.mubr.bf16.mxu0 %v2089
    %7019 = vmatmul.mubr.bf16.gmra.mxu0 %v2079
    %v7020 = vpop.f32.mrf.mxu0
    %v7021 = vadd.f32 %v6980, %v7020
    %v7022 = vpop.f32.mrf.mxu0
    %v7023 = vadd.f32 %v6982, %v7022
    %v7024 = vpop.f32.mrf.mxu0
    %v7025 = vpop.f32.mrf.mxu0
    %7026 = vdwg.mxu0
    %7027 = vmatprep.subr.bf16.mxu0 %v5572
    %7028 = vmatpush1.bf16.msra.mxu0 %v5571
    %7029 = vmatprep.subr.bf16.mxu0 %v5564
    %7030 = vmatpush1.bf16.msra.mxu0 %v5563
    %7031 = vmatprep.subr.bf16.mxu0 %v5556
    %7032 = vmatpush1.bf16.msra.mxu0 %v5555
    %7033 = vmatprep.subr.bf16.mxu0 %v5548
    %7034 = vmatpush1.bf16.msra.mxu0 %v5547
    %7035 = vmatprep.subr.bf16.mxu0 %v5540
    %7036 = vmatpush1.bf16.msra.mxu0 %v5539
    %7037 = vmatprep.subr.bf16.mxu0 %v5532
    %7038 = vmatpush1.bf16.msra.mxu0 %v5531
    %7039 = vmatprep.subr.bf16.mxu0 %v5524
    %7040 = vmatpush1.bf16.msra.mxu0 %v5523
    %7041 = vmatprep.subr.bf16.mxu0 %v5516
    %7042 = vmatpush1.bf16.msra.mxu0 %v5515
    %7043 = vmatprep.subr.bf16.mxu0 %v5636
    %7044 = vmatpush2.bf16.msra.mxu0 %v5635
    %7045 = vmatprep.subr.bf16.mxu0 %v5628
    %7046 = vmatpush2.bf16.msra.mxu0 %v5627
    %7047 = vmatprep.subr.bf16.mxu0 %v5620
    %7048 = vmatpush2.bf16.msra.mxu0 %v5619
    %7049 = vmatprep.subr.bf16.mxu0 %v5612
    %7050 = vmatpush2.bf16.msra.mxu0 %v5611
    %7051 = vmatprep.subr.bf16.mxu0 %v5604
    %7052 = vmatpush2.bf16.msra.mxu0 %v5603
    %7053 = vmatprep.subr.bf16.mxu0 %v5596
    %7054 = vmatpush2.bf16.msra.mxu0 %v5595
    %7055 = vmatprep.subr.bf16.mxu0 %v5588
    %7056 = vmatpush2.bf16.msra.mxu0 %v5587
    %7057 = vmatprep.subr.bf16.mxu0 %v5580
    %7058 = vmatpush2.bf16.msra.mxu0 %v5579
    %7059 = vmatprep.mubr.bf16.mxu0 %v2261
    %7060 = vmatmul.mubr.bf16.gmra.mxu0 %v2099
    %v7061 = vpop.f32.mrf.mxu0
    %v7062 = vadd.f32 %v7021, %v7061
    %v7063 = vpop.f32.mrf.mxu0
    %v7064 = vadd.f32 %v7023, %v7063
    %v7065 = vpop.f32.mrf.mxu0
    %v7066 = vpop.f32.mrf.mxu0
    %7067 = vdwg.mxu0
    %7068 = vmatprep.subr.bf16.mxu0 %v5700
    %7069 = vmatpush1.bf16.msra.mxu0 %v5699
    %7070 = vmatprep.subr.bf16.mxu0 %v5692
    %7071 = vmatpush1.bf16.msra.mxu0 %v5691
    %7072 = vmatprep.subr.bf16.mxu0 %v5684
    %7073 = vmatpush1.bf16.msra.mxu0 %v5683
    %7074 = vmatprep.subr.bf16.mxu0 %v5676
    %7075 = vmatpush1.bf16.msra.mxu0 %v5675
    %7076 = vmatprep.subr.bf16.mxu0 %v5668
    %7077 = vmatpush1.bf16.msra.mxu0 %v5667
    %7078 = vmatprep.subr.bf16.mxu0 %v5660
    %7079 = vmatpush1.bf16.msra.mxu0 %v5659
    %7080 = vmatprep.subr.bf16.mxu0 %v5652
    %7081 = vmatpush1.bf16.msra.mxu0 %v5651
    %7082 = vmatprep.subr.bf16.mxu0 %v5644
    %7083 = vmatpush1.bf16.msra.mxu0 %v5643
    %7084 = vmatprep.subr.bf16.mxu0 %v5764
    %7085 = vmatpush2.bf16.msra.mxu0 %v5763
    %7086 = vmatprep.subr.bf16.mxu0 %v5756
    %7087 = vmatpush2.bf16.msra.mxu0 %v5755
    %7088 = vmatprep.subr.bf16.mxu0 %v5748
    %7089 = vmatpush2.bf16.msra.mxu0 %v5747
    %7090 = vmatprep.subr.bf16.mxu0 %v5740
    %7091 = vmatpush2.bf16.msra.mxu0 %v5739
    %7092 = vmatprep.subr.bf16.mxu0 %v5732
    %7093 = vmatpush2.bf16.msra.mxu0 %v5731
    %7094 = vmatprep.subr.bf16.mxu0 %v5724
    %7095 = vmatpush2.bf16.msra.mxu0 %v5723
    %7096 = vmatprep.subr.bf16.mxu0 %v5716
    %7097 = vmatpush2.bf16.msra.mxu0 %v5715
    %7098 = vmatprep.subr.bf16.mxu0 %v5708
    %7099 = vmatpush2.bf16.msra.mxu0 %v5707
    %7100 = vmatprep.mubr.bf16.mxu0 %v2275
    %7101 = vmatmul.mubr.bf16.gmra.mxu0 %v2268
    %v7102 = vpop.f32.mrf.mxu0
    %v7103 = vadd.f32 %v7062, %v7102
    %v7104 = vpop.f32.mrf.mxu0
    %v7105 = vadd.f32 %v7064, %v7104
    %v7106 = vpop.f32.mrf.mxu0
    %v7107 = vpop.f32.mrf.mxu0
    %7108 = vdwg.mxu0
    %7109 = vmatprep.subr.bf16.mxu0 %v5828
    %7110 = vmatpush1.bf16.msra.mxu0 %v5827
    %7111 = vmatprep.subr.bf16.mxu0 %v5820
    %7112 = vmatpush1.bf16.msra.mxu0 %v5819
    %7113 = vmatprep.subr.bf16.mxu0 %v5812
    %7114 = vmatpush1.bf16.msra.mxu0 %v5811
    %7115 = vmatprep.subr.bf16.mxu0 %v5804
    %7116 = vmatpush1.bf16.msra.mxu0 %v5803
    %7117 = vmatprep.subr.bf16.mxu0 %v5796
    %7118 = vmatpush1.bf16.msra.mxu0 %v5795
    %7119 = vmatprep.subr.bf16.mxu0 %v5788
    %7120 = vmatpush1.bf16.msra.mxu0 %v5787
    %7121 = vmatprep.subr.bf16.mxu0 %v5780
    %7122 = vmatpush1.bf16.msra.mxu0 %v5779
    %7123 = vmatprep.subr.bf16.mxu0 %v5772
    %7124 = vmatpush1.bf16.msra.mxu0 %v5771
    %7125 = vmatprep.subr.bf16.mxu0 %v5892
    %7126 = vmatpush2.bf16.msra.mxu0 %v5891
    %7127 = vmatprep.subr.bf16.mxu0 %v5884
    %7128 = vmatpush2.bf16.msra.mxu0 %v5883
    %7129 = vmatprep.subr.bf16.mxu0 %v5876
    %7130 = vmatpush2.bf16.msra.mxu0 %v5875
    %7131 = vmatprep.subr.bf16.mxu0 %v5868
    %7132 = vmatpush2.bf16.msra.mxu0 %v5867
    %7133 = vmatprep.subr.bf16.mxu0 %v5860
    %7134 = vmatpush2.bf16.msra.mxu0 %v5859
    %7135 = vmatprep.subr.bf16.mxu0 %v5852
    %7136 = vmatpush2.bf16.msra.mxu0 %v5851
    %7137 = vmatprep.subr.bf16.mxu0 %v5844
    %7138 = vmatpush2.bf16.msra.mxu0 %v5843
    %7139 = vmatprep.subr.bf16.mxu0 %v5836
    %7140 = vmatpush2.bf16.msra.mxu0 %v5835
    %7141 = vmatprep.mubr.bf16.mxu0 %v2289
    %7142 = vmatmul.mubr.bf16.gmra.mxu0 %v2282
    %v7143 = vpop.f32.mrf.mxu0
    %v7144 = vadd.f32 %v7103, %v7143
    %v7145 = vpop.f32.mrf.mxu0
    %v7146 = vadd.f32 %v7105, %v7145
    %v7147 = vpop.f32.mrf.mxu0
    %v7148 = vpop.f32.mrf.mxu0
    %7149 = vdwg.mxu0
    %7150 = vmatprep.subr.bf16.mxu0 %v5956
    %7151 = vmatpush1.bf16.msra.mxu0 %v5955
    %7152 = vmatprep.subr.bf16.mxu0 %v5948
    %7153 = vmatpush1.bf16.msra.mxu0 %v5947
    %7154 = vmatprep.subr.bf16.mxu0 %v5940
    %7155 = vmatpush1.bf16.msra.mxu0 %v5939
    %7156 = vmatprep.subr.bf16.mxu0 %v5932
    %7157 = vmatpush1.bf16.msra.mxu0 %v5931
    %7158 = vmatprep.subr.bf16.mxu0 %v5924
    %7159 = vmatpush1.bf16.msra.mxu0 %v5923
    %7160 = vmatprep.subr.bf16.mxu0 %v5916
    %7161 = vmatpush1.bf16.msra.mxu0 %v5915
    %7162 = vmatprep.subr.bf16.mxu0 %v5908
    %7163 = vmatpush1.bf16.msra.mxu0 %v5907
    %7164 = vmatprep.subr.bf16.mxu0 %v5900
    %7165 = vmatpush1.bf16.msra.mxu0 %v5899
    %7166 = vmatprep.subr.bf16.mxu0 0
    %7167 = vmatpush2.bf16.msra.mxu0 0
    %7168 = vmatprep.subr.bf16.mxu0 0
    %7169 = vmatpush2.bf16.msra.mxu0 0
    %7170 = vmatprep.subr.bf16.mxu0 0
    %7171 = vmatpush2.bf16.msra.mxu0 0
    %7172 = vmatprep.subr.bf16.mxu0 0
    %7173 = vmatpush2.bf16.msra.mxu0 0
    %7174 = vmatprep.subr.bf16.mxu0 0
    %7175 = vmatpush2.bf16.msra.mxu0 0
    %7176 = vmatprep.subr.bf16.mxu0 0
    %7177 = vmatpush2.bf16.msra.mxu0 0
    %7178 = vmatprep.subr.bf16.mxu0 %v5972
    %7179 = vmatpush2.bf16.msra.mxu0 %v5971
    %7180 = vmatprep.subr.bf16.mxu0 %v5964
    %7181 = vmatpush2.bf16.msra.mxu0 %v5963
    %7182 = vmatprep.mubr.bf16.mxu0 %v6697
    %7183 = vmatmul.mubr.bf16.gmra.mxu0 %v2333
    %v7184 = vpop.f32.mrf.mxu0
    %v7185 = vadd.f32 %v7144, %v7184
    %v7186 = vpop.f32.mrf.mxu0
    %v7187 = vadd.f32 %v7146, %v7186
    %v7188 = vpop.f32.mrf.mxu0
    %v7189 = vpop.f32.mrf.mxu0
    %7190 = vdwg.mxu0
    %7191 = vmatprep.subr.bf16.mxu0 %v5318
    %7192 = vmatpush1.bf16.msra.mxu0 %v5317
    %7193 = vmatprep.subr.bf16.mxu0 %v5310
    %7194 = vmatpush1.bf16.msra.mxu0 %v5309
    %7195 = vmatprep.subr.bf16.mxu0 %v5302
    %7196 = vmatpush1.bf16.msra.mxu0 %v5301
    %7197 = vmatprep.subr.bf16.mxu0 %v5294
    %7198 = vmatpush1.bf16.msra.mxu0 %v5293
    %7199 = vmatprep.subr.bf16.mxu0 %v5286
    %7200 = vmatpush1.bf16.msra.mxu0 %v5285
    %7201 = vmatprep.subr.bf16.mxu0 %v5278
    %7202 = vmatpush1.bf16.msra.mxu0 %v5277
    %7203 = vmatprep.subr.bf16.mxu0 %v5270
    %7204 = vmatpush1.bf16.msra.mxu0 %v5269
    %7205 = vmatprep.subr.bf16.mxu0 %v5262
    %7206 = vmatpush1.bf16.msra.mxu0 %v5261
    %7207 = vmatprep.subr.bf16.mxu0 %v5382
    %7208 = vmatpush2.bf16.msra.mxu0 %v5381
    %7209 = vmatprep.subr.bf16.mxu0 %v5374
    %7210 = vmatpush2.bf16.msra.mxu0 %v5373
    %7211 = vmatprep.subr.bf16.mxu0 %v5366
    %7212 = vmatpush2.bf16.msra.mxu0 %v5365
    %7213 = vmatprep.subr.bf16.mxu0 %v5358
    %7214 = vmatpush2.bf16.msra.mxu0 %v5357
    %7215 = vmatprep.subr.bf16.mxu0 %v5350
    %7216 = vmatpush2.bf16.msra.mxu0 %v5349
    %7217 = vmatprep.subr.bf16.mxu0 %v5342
    %7218 = vmatpush2.bf16.msra.mxu0 %v5341
    %7219 = vmatprep.subr.bf16.mxu0 %v5334
    %7220 = vmatpush2.bf16.msra.mxu0 %v5333
    %7221 = vmatprep.subr.bf16.mxu0 %v5326
    %7222 = vmatpush2.bf16.msra.mxu0 %v5325
    %7223 = vmatprep.mubr.bf16.mxu0 %v2069
    %7224 = vmatmul.mubr.bf16.gmra.mxu0 %v2059
    %v7225 = vpop.f32.mrf.mxu0
    %v7226 = vadd.f32 %v3076, %v7225
    %v7227 = vpop.f32.mrf.mxu0
    %v7228 = vadd.f32 %v3080, %v7227
    %v7229 = vpop.f32.mrf.mxu0
    %v7230 = vpop.f32.mrf.mxu0
    %7231 = vdwg.mxu0
    %7232 = vmatprep.subr.bf16.mxu0 %v5446
    %7233 = vmatpush1.bf16.msra.mxu0 %v5445
    %7234 = vmatprep.subr.bf16.mxu0 %v5438
    %7235 = vmatpush1.bf16.msra.mxu0 %v5437
    %7236 = vmatprep.subr.bf16.mxu0 %v5430
    %7237 = vmatpush1.bf16.msra.mxu0 %v5429
    %7238 = vmatprep.subr.bf16.mxu0 %v5422
    %7239 = vmatpush1.bf16.msra.mxu0 %v5421
    %7240 = vmatprep.subr.bf16.mxu0 %v5414
    %7241 = vmatpush1.bf16.msra.mxu0 %v5413
    %7242 = vmatprep.subr.bf16.mxu0 %v5406
    %7243 = vmatpush1.bf16.msra.mxu0 %v5405
    %7244 = vmatprep.subr.bf16.mxu0 %v5398
    %7245 = vmatpush1.bf16.msra.mxu0 %v5397
    %7246 = vmatprep.subr.bf16.mxu0 %v5390
    %7247 = vmatpush1.bf16.msra.mxu0 %v5389
    %7248 = vmatprep.subr.bf16.mxu0 %v5510
    %7249 = vmatpush2.bf16.msra.mxu0 %v5509
    %7250 = vmatprep.subr.bf16.mxu0 %v5502
    %7251 = vmatpush2.bf16.msra.mxu0 %v5501
    %7252 = vmatprep.subr.bf16.mxu0 %v5494
    %7253 = vmatpush2.bf16.msra.mxu0 %v5493
    %7254 = vmatprep.subr.bf16.mxu0 %v5486
    %7255 = vmatpush2.bf16.msra.mxu0 %v5485
    %7256 = vmatprep.subr.bf16.mxu0 %v5478
    %7257 = vmatpush2.bf16.msra.mxu0 %v5477
    %7258 = vmatprep.subr.bf16.mxu0 %v5470
    %7259 = vmatpush2.bf16.msra.mxu0 %v5469
    %7260 = vmatprep.subr.bf16.mxu0 %v5462
    %7261 = vmatpush2.bf16.msra.mxu0 %v5461
    %7262 = vmatprep.subr.bf16.mxu0 %v5454
    %7263 = vmatpush2.bf16.msra.mxu0 %v5453
    %7264 = vmatprep.mubr.bf16.mxu0 %v2089
    %7265 = vmatmul.mubr.bf16.gmra.mxu0 %v2079
    %v7266 = vpop.f32.mrf.mxu0
    %v7267 = vadd.f32 %v7226, %v7266
    %v7268 = vpop.f32.mrf.mxu0
    %v7269 = vadd.f32 %v7228, %v7268
    %v7270 = vpop.f32.mrf.mxu0
    %v7271 = vpop.f32.mrf.mxu0
    %7272 = vdwg.mxu0
    %7273 = vmatprep.subr.bf16.mxu0 %v5574
    %7274 = vmatpush1.bf16.msra.mxu0 %v5573
    %7275 = vmatprep.subr.bf16.mxu0 %v5566
    %7276 = vmatpush1.bf16.msra.mxu0 %v5565
    %7277 = vmatprep.subr.bf16.mxu0 %v5558
    %7278 = vmatpush1.bf16.msra.mxu0 %v5557
    %7279 = vmatprep.subr.bf16.mxu0 %v5550
    %7280 = vmatpush1.bf16.msra.mxu0 %v5549
    %7281 = vmatprep.subr.bf16.mxu0 %v5542
    %7282 = vmatpush1.bf16.msra.mxu0 %v5541
    %7283 = vmatprep.subr.bf16.mxu0 %v5534
    %7284 = vmatpush1.bf16.msra.mxu0 %v5533
    %7285 = vmatprep.subr.bf16.mxu0 %v5526
    %7286 = vmatpush1.bf16.msra.mxu0 %v5525
    %7287 = vmatprep.subr.bf16.mxu0 %v5518
    %7288 = vmatpush1.bf16.msra.mxu0 %v5517
    %7289 = vmatprep.subr.bf16.mxu0 %v5638
    %7290 = vmatpush2.bf16.msra.mxu0 %v5637
    %7291 = vmatprep.subr.bf16.mxu0 %v5630
    %7292 = vmatpush2.bf16.msra.mxu0 %v5629
    %7293 = vmatprep.subr.bf16.mxu0 %v5622
    %7294 = vmatpush2.bf16.msra.mxu0 %v5621
    %7295 = vmatprep.subr.bf16.mxu0 %v5614
    %7296 = vmatpush2.bf16.msra.mxu0 %v5613
    %7297 = vmatprep.subr.bf16.mxu0 %v5606
    %7298 = vmatpush2.bf16.msra.mxu0 %v5605
    %7299 = vmatprep.subr.bf16.mxu0 %v5598
    %7300 = vmatpush2.bf16.msra.mxu0 %v5597
    %7301 = vmatprep.subr.bf16.mxu0 %v5590
    %7302 = vmatpush2.bf16.msra.mxu0 %v5589
    %7303 = vmatprep.subr.bf16.mxu0 %v5582
    %7304 = vmatpush2.bf16.msra.mxu0 %v5581
    %7305 = vmatprep.mubr.bf16.mxu0 %v2261
    %7306 = vmatmul.mubr.bf16.gmra.mxu0 %v2099
    %v7307 = vpop.f32.mrf.mxu0
    %v7308 = vadd.f32 %v7267, %v7307
    %v7309 = vpop.f32.mrf.mxu0
    %v7310 = vadd.f32 %v7269, %v7309
    %v7311 = vpop.f32.mrf.mxu0
    %v7312 = vpop.f32.mrf.mxu0
    %7313 = vdwg.mxu0
    %7314 = vmatprep.subr.bf16.mxu0 %v5702
    %7315 = vmatpush1.bf16.msra.mxu0 %v5701
    %7316 = vmatprep.subr.bf16.mxu0 %v5694
    %7317 = vmatpush1.bf16.msra.mxu0 %v5693
    %7318 = vmatprep.subr.bf16.mxu0 %v5686
    %7319 = vmatpush1.bf16.msra.mxu0 %v5685
    %7320 = vmatprep.subr.bf16.mxu0 %v5678
    %7321 = vmatpush1.bf16.msra.mxu0 %v5677
    %7322 = vmatprep.subr.bf16.mxu0 %v5670
    %7323 = vmatpush1.bf16.msra.mxu0 %v5669
    %7324 = vmatprep.subr.bf16.mxu0 %v5662
    %7325 = vmatpush1.bf16.msra.mxu0 %v5661
    %7326 = vmatprep.subr.bf16.mxu0 %v5654
    %7327 = vmatpush1.bf16.msra.mxu0 %v5653
    %7328 = vmatprep.subr.bf16.mxu0 %v5646
    %7329 = vmatpush1.bf16.msra.mxu0 %v5645
    %7330 = vmatprep.subr.bf16.mxu0 %v5766
    %7331 = vmatpush2.bf16.msra.mxu0 %v5765
    %7332 = vmatprep.subr.bf16.mxu0 %v5758
    %7333 = vmatpush2.bf16.msra.mxu0 %v5757
    %7334 = vmatprep.subr.bf16.mxu0 %v5750
    %7335 = vmatpush2.bf16.msra.mxu0 %v5749
    %7336 = vmatprep.subr.bf16.mxu0 %v5742
    %7337 = vmatpush2.bf16.msra.mxu0 %v5741
    %7338 = vmatprep.subr.bf16.mxu0 %v5734
    %7339 = vmatpush2.bf16.msra.mxu0 %v5733
    %7340 = vmatprep.subr.bf16.mxu0 %v5726
    %7341 = vmatpush2.bf16.msra.mxu0 %v5725
    %7342 = vmatprep.subr.bf16.mxu0 %v5718
    %7343 = vmatpush2.bf16.msra.mxu0 %v5717
    %7344 = vmatprep.subr.bf16.mxu0 %v5710
    %7345 = vmatpush2.bf16.msra.mxu0 %v5709
    %7346 = vmatprep.mubr.bf16.mxu0 %v2275
    %7347 = vmatmul.mubr.bf16.gmra.mxu0 %v2268
    %v7348 = vpop.f32.mrf.mxu0
    %v7349 = vadd.f32 %v7308, %v7348
    %v7350 = vpop.f32.mrf.mxu0
    %v7351 = vadd.f32 %v7310, %v7350
    %v7352 = vpop.f32.mrf.mxu0
    %v7353 = vpop.f32.mrf.mxu0
    %7354 = vdwg.mxu0
    %7355 = vmatprep.subr.bf16.mxu0 %v5830
    %7356 = vmatpush1.bf16.msra.mxu0 %v5829
    %7357 = vmatprep.subr.bf16.mxu0 %v5822
    %7358 = vmatpush1.bf16.msra.mxu0 %v5821
    %7359 = vmatprep.subr.bf16.mxu0 %v5814
    %7360 = vmatpush1.bf16.msra.mxu0 %v5813
    %7361 = vmatprep.subr.bf16.mxu0 %v5806
    %7362 = vmatpush1.bf16.msra.mxu0 %v5805
    %7363 = vmatprep.subr.bf16.mxu0 %v5798
    %7364 = vmatpush1.bf16.msra.mxu0 %v5797
    %7365 = vmatprep.subr.bf16.mxu0 %v5790
    %7366 = vmatpush1.bf16.msra.mxu0 %v5789
    %7367 = vmatprep.subr.bf16.mxu0 %v5782
    %7368 = vmatpush1.bf16.msra.mxu0 %v5781
    %7369 = vmatprep.subr.bf16.mxu0 %v5774
    %7370 = vmatpush1.bf16.msra.mxu0 %v5773
    %7371 = vmatprep.subr.bf16.mxu0 %v5894
    %7372 = vmatpush2.bf16.msra.mxu0 %v5893
    %7373 = vmatprep.subr.bf16.mxu0 %v5886
    %7374 = vmatpush2.bf16.msra.mxu0 %v5885
    %7375 = vmatprep.subr.bf16.mxu0 %v5878
    %7376 = vmatpush2.bf16.msra.mxu0 %v5877
    %7377 = vmatprep.subr.bf16.mxu0 %v5870
    %7378 = vmatpush2.bf16.msra.mxu0 %v5869
    %7379 = vmatprep.subr.bf16.mxu0 %v5862
    %7380 = vmatpush2.bf16.msra.mxu0 %v5861
    %7381 = vmatprep.subr.bf16.mxu0 %v5854
    %7382 = vmatpush2.bf16.msra.mxu0 %v5853
    %7383 = vmatprep.subr.bf16.mxu0 %v5846
    %7384 = vmatpush2.bf16.msra.mxu0 %v5845
    %7385 = vmatprep.subr.bf16.mxu0 %v5838
    %7386 = vmatpush2.bf16.msra.mxu0 %v5837
    %7387 = vmatprep.mubr.bf16.mxu0 %v2289
    %7388 = vmatmul.mubr.bf16.gmra.mxu0 %v2282
    %v7389 = vpop.f32.mrf.mxu0
    %v7390 = vadd.f32 %v7349, %v7389
    %v7391 = vpop.f32.mrf.mxu0
    %v7392 = vadd.f32 %v7351, %v7391
    %v7393 = vpop.f32.mrf.mxu0
    %v7394 = vpop.f32.mrf.mxu0
    %7395 = vdwg.mxu0
    %7396 = vmatprep.subr.bf16.mxu0 %v5958
    %7397 = vmatpush1.bf16.msra.mxu0 %v5957
    %7398 = vmatprep.subr.bf16.mxu0 %v5950
    %7399 = vmatpush1.bf16.msra.mxu0 %v5949
    %7400 = vmatprep.subr.bf16.mxu0 %v5942
    %7401 = vmatpush1.bf16.msra.mxu0 %v5941
    %7402 = vmatprep.subr.bf16.mxu0 %v5934
    %7403 = vmatpush1.bf16.msra.mxu0 %v5933
    %7404 = vmatprep.subr.bf16.mxu0 %v5926
    %7405 = vmatpush1.bf16.msra.mxu0 %v5925
    %7406 = vmatprep.subr.bf16.mxu0 %v5918
    %7407 = vmatpush1.bf16.msra.mxu0 %v5917
    %7408 = vmatprep.subr.bf16.mxu0 %v5910
    %7409 = vmatpush1.bf16.msra.mxu0 %v5909
    %7410 = vmatprep.subr.bf16.mxu0 %v5902
    %7411 = vmatpush1.bf16.msra.mxu0 %v5901
    %7412 = vmatprep.subr.bf16.mxu0 0
    %7413 = vmatpush2.bf16.msra.mxu0 0
    %7414 = vmatprep.subr.bf16.mxu0 0
    %7415 = vmatpush2.bf16.msra.mxu0 0
    %7416 = vmatprep.subr.bf16.mxu0 0
    %7417 = vmatpush2.bf16.msra.mxu0 0
    %7418 = vmatprep.subr.bf16.mxu0 0
    %7419 = vmatpush2.bf16.msra.mxu0 0
    %7420 = vmatprep.subr.bf16.mxu0 0
    %7421 = vmatpush2.bf16.msra.mxu0 0
    %7422 = vmatprep.subr.bf16.mxu0 0
    %7423 = vmatpush2.bf16.msra.mxu0 0
    %7424 = vmatprep.subr.bf16.mxu0 %v5974
    %7425 = vmatpush2.bf16.msra.mxu0 %v5973
    %7426 = vmatprep.subr.bf16.mxu0 %v5966
    %7427 = vmatpush2.bf16.msra.mxu0 %v5965
    %7428 = vmatprep.mubr.bf16.mxu0 %v6697
    %7429 = vmatmul.mubr.bf16.gmra.mxu0 %v2333
    %v7430 = vpop.f32.mrf.mxu0
    %v7431 = vadd.f32 %v7390, %v7430
    %v7432 = vpop.f32.mrf.mxu0
    %v7433 = vadd.f32 %v7392, %v7432
    %v7434 = vpop.f32.mrf.mxu0
    %v7435 = vpop.f32.mrf.mxu0
    %7436 = vdwg.mxu0
    %7437 = vmatprep.subr.bf16.mxu0 %v5320
    %7438 = vmatpush1.bf16.msra.mxu0 %v5319
    %7439 = vmatprep.subr.bf16.mxu0 %v5312
    %7440 = vmatpush1.bf16.msra.mxu0 %v5311
    %7441 = vmatprep.subr.bf16.mxu0 %v5304
    %7442 = vmatpush1.bf16.msra.mxu0 %v5303
    %7443 = vmatprep.subr.bf16.mxu0 %v5296
    %7444 = vmatpush1.bf16.msra.mxu0 %v5295
    %7445 = vmatprep.subr.bf16.mxu0 %v5288
    %7446 = vmatpush1.bf16.msra.mxu0 %v5287
    %7447 = vmatprep.subr.bf16.mxu0 %v5280
    %7448 = vmatpush1.bf16.msra.mxu0 %v5279
    %7449 = vmatprep.subr.bf16.mxu0 %v5272
    %7450 = vmatpush1.bf16.msra.mxu0 %v5271
    %7451 = vmatprep.subr.bf16.mxu0 %v5264
    %7452 = vmatpush1.bf16.msra.mxu0 %v5263
    %7453 = vmatprep.subr.bf16.mxu0 %v5384
    %7454 = vmatpush2.bf16.msra.mxu0 %v5383
    %7455 = vmatprep.subr.bf16.mxu0 %v5376
    %7456 = vmatpush2.bf16.msra.mxu0 %v5375
    %7457 = vmatprep.subr.bf16.mxu0 %v5368
    %7458 = vmatpush2.bf16.msra.mxu0 %v5367
    %7459 = vmatprep.subr.bf16.mxu0 %v5360
    %7460 = vmatpush2.bf16.msra.mxu0 %v5359
    %7461 = vmatprep.subr.bf16.mxu0 %v5352
    %7462 = vmatpush2.bf16.msra.mxu0 %v5351
    %7463 = vmatprep.subr.bf16.mxu0 %v5344
    %7464 = vmatpush2.bf16.msra.mxu0 %v5343
    %7465 = vmatprep.subr.bf16.mxu0 %v5336
    %7466 = vmatpush2.bf16.msra.mxu0 %v5335
    %7467 = vmatprep.subr.bf16.mxu0 %v5328
    %7468 = vmatpush2.bf16.msra.mxu0 %v5327
    %7469 = vmatprep.mubr.bf16.mxu0 %v2069
    %7470 = vmatmul.mubr.bf16.gmra.mxu0 %v2059
    %v7471 = vpop.f32.mrf.mxu0
    %v7472 = vadd.f32 %v3084, %v7471
    %v7473 = vpop.f32.mrf.mxu0
    %v7474 = vadd.f32 %v3088, %v7473
    %v7475 = vpop.f32.mrf.mxu0
    %v7476 = vpop.f32.mrf.mxu0
    %7477 = vdwg.mxu0
    %7478 = vmatprep.subr.bf16.mxu0 %v5448
    %7479 = vmatpush1.bf16.msra.mxu0 %v5447
    %7480 = vmatprep.subr.bf16.mxu0 %v5440
    %7481 = vmatpush1.bf16.msra.mxu0 %v5439
    %7482 = vmatprep.subr.bf16.mxu0 %v5432
    %7483 = vmatpush1.bf16.msra.mxu0 %v5431
    %7484 = vmatprep.subr.bf16.mxu0 %v5424
    %7485 = vmatpush1.bf16.msra.mxu0 %v5423
    %7486 = vmatprep.subr.bf16.mxu0 %v5416
    %7487 = vmatpush1.bf16.msra.mxu0 %v5415
    %7488 = vmatprep.subr.bf16.mxu0 %v5408
    %7489 = vmatpush1.bf16.msra.mxu0 %v5407
    %7490 = vmatprep.subr.bf16.mxu0 %v5400
    %7491 = vmatpush1.bf16.msra.mxu0 %v5399
    %7492 = vmatprep.subr.bf16.mxu0 %v5392
    %7493 = vmatpush1.bf16.msra.mxu0 %v5391
    %7494 = vmatprep.subr.bf16.mxu0 %v5512
    %7495 = vmatpush2.bf16.msra.mxu0 %v5511
    %7496 = vmatprep.subr.bf16.mxu0 %v5504
    %7497 = vmatpush2.bf16.msra.mxu0 %v5503
    %7498 = vmatprep.subr.bf16.mxu0 %v5496
    %7499 = vmatpush2.bf16.msra.mxu0 %v5495
    %7500 = vmatprep.subr.bf16.mxu0 %v5488
    %7501 = vmatpush2.bf16.msra.mxu0 %v5487
    %7502 = vmatprep.subr.bf16.mxu0 %v5480
    %7503 = vmatpush2.bf16.msra.mxu0 %v5479
    %7504 = vmatprep.subr.bf16.mxu0 %v5472
    %7505 = vmatpush2.bf16.msra.mxu0 %v5471
    %7506 = vmatprep.subr.bf16.mxu0 %v5464
    %7507 = vmatpush2.bf16.msra.mxu0 %v5463
    %7508 = vmatprep.subr.bf16.mxu0 %v5456
    %7509 = vmatpush2.bf16.msra.mxu0 %v5455
    %7510 = vmatprep.mubr.bf16.mxu0 %v2089
    %7511 = vmatmul.mubr.bf16.gmra.mxu0 %v2079
    %v7512 = vpop.f32.mrf.mxu0
    %v7513 = vadd.f32 %v7472, %v7512
    %v7514 = vpop.f32.mrf.mxu0
    %v7515 = vadd.f32 %v7474, %v7514
    %v7516 = vpop.f32.mrf.mxu0
    %v7517 = vpop.f32.mrf.mxu0
    %7518 = vdwg.mxu0
    %7519 = vmatprep.subr.bf16.mxu0 %v5576
    %7520 = vmatpush1.bf16.msra.mxu0 %v5575
    %7521 = vmatprep.subr.bf16.mxu0 %v5568
    %7522 = vmatpush1.bf16.msra.mxu0 %v5567
    %7523 = vmatprep.subr.bf16.mxu0 %v5560
    %7524 = vmatpush1.bf16.msra.mxu0 %v5559
    %7525 = vmatprep.subr.bf16.mxu0 %v5552
    %7526 = vmatpush1.bf16.msra.mxu0 %v5551
    %7527 = vmatprep.subr.bf16.mxu0 %v5544
    %7528 = vmatpush1.bf16.msra.mxu0 %v5543
    %7529 = vmatprep.subr.bf16.mxu0 %v5536
    %7530 = vmatpush1.bf16.msra.mxu0 %v5535
    %7531 = vmatprep.subr.bf16.mxu0 %v5528
    %7532 = vmatpush1.bf16.msra.mxu0 %v5527
    %7533 = vmatprep.subr.bf16.mxu0 %v5520
    %7534 = vmatpush1.bf16.msra.mxu0 %v5519
    %7535 = vmatprep.subr.bf16.mxu0 %v5640
    %7536 = vmatpush2.bf16.msra.mxu0 %v5639
    %7537 = vmatprep.subr.bf16.mxu0 %v5632
    %7538 = vmatpush2.bf16.msra.mxu0 %v5631
    %7539 = vmatprep.subr.bf16.mxu0 %v5624
    %7540 = vmatpush2.bf16.msra.mxu0 %v5623
    %7541 = vmatprep.subr.bf16.mxu0 %v5616
    %7542 = vmatpush2.bf16.msra.mxu0 %v5615
    %7543 = vmatprep.subr.bf16.mxu0 %v5608
    %7544 = vmatpush2.bf16.msra.mxu0 %v5607
    %7545 = vmatprep.subr.bf16.mxu0 %v5600
    %7546 = vmatpush2.bf16.msra.mxu0 %v5599
    %7547 = vmatprep.subr.bf16.mxu0 %v5592
    %7548 = vmatpush2.bf16.msra.mxu0 %v5591
    %7549 = vmatprep.subr.bf16.mxu0 %v5584
    %7550 = vmatpush2.bf16.msra.mxu0 %v5583
    %7551 = vmatprep.mubr.bf16.mxu0 %v2261
    %7552 = vmatmul.mubr.bf16.gmra.mxu0 %v2099
    %v7553 = vpop.f32.mrf.mxu0
    %v7554 = vadd.f32 %v7513, %v7553
    %v7555 = vpop.f32.mrf.mxu0
    %v7556 = vadd.f32 %v7515, %v7555
    %v7557 = vpop.f32.mrf.mxu0
    %v7558 = vpop.f32.mrf.mxu0
    %7559 = vdwg.mxu0
    %7560 = vmatprep.subr.bf16.mxu0 %v5704
    %7561 = vmatpush1.bf16.msra.mxu0 %v5703
    %7562 = vmatprep.subr.bf16.mxu0 %v5696
    %7563 = vmatpush1.bf16.msra.mxu0 %v5695
    %7564 = vmatprep.subr.bf16.mxu0 %v5688
    %7565 = vmatpush1.bf16.msra.mxu0 %v5687
    %7566 = vmatprep.subr.bf16.mxu0 %v5680
    %7567 = vmatpush1.bf16.msra.mxu0 %v5679
    %7568 = vmatprep.subr.bf16.mxu0 %v5672
    %7569 = vmatpush1.bf16.msra.mxu0 %v5671
    %7570 = vmatprep.subr.bf16.mxu0 %v5664
    %7571 = vmatpush1.bf16.msra.mxu0 %v5663
    %7572 = vmatprep.subr.bf16.mxu0 %v5656
    %7573 = vmatpush1.bf16.msra.mxu0 %v5655
    %7574 = vmatprep.subr.bf16.mxu0 %v5648
    %7575 = vmatpush1.bf16.msra.mxu0 %v5647
    %7576 = vmatprep.subr.bf16.mxu0 %v5768
    %7577 = vmatpush2.bf16.msra.mxu0 %v5767
    %7578 = vmatprep.subr.bf16.mxu0 %v5760
    %7579 = vmatpush2.bf16.msra.mxu0 %v5759
    %7580 = vmatprep.subr.bf16.mxu0 %v5752
    %7581 = vmatpush2.bf16.msra.mxu0 %v5751
    %7582 = vmatprep.subr.bf16.mxu0 %v5744
    %7583 = vmatpush2.bf16.msra.mxu0 %v5743
    %7584 = vmatprep.subr.bf16.mxu0 %v5736
    %7585 = vmatpush2.bf16.msra.mxu0 %v5735
    %7586 = vmatprep.subr.bf16.mxu0 %v5728
    %7587 = vmatpush2.bf16.msra.mxu0 %v5727
    %7588 = vmatprep.subr.bf16.mxu0 %v5720
    %7589 = vmatpush2.bf16.msra.mxu0 %v5719
    %7590 = vmatprep.subr.bf16.mxu0 %v5712
    %7591 = vmatpush2.bf16.msra.mxu0 %v5711
    %7592 = vmatprep.mubr.bf16.mxu0 %v2275
    %7593 = vmatmul.mubr.bf16.gmra.mxu0 %v2268
    %v7594 = vpop.f32.mrf.mxu0
    %v7595 = vadd.f32 %v7554, %v7594
    %v7596 = vpop.f32.mrf.mxu0
    %v7597 = vadd.f32 %v7556, %v7596
    %v7598 = vpop.f32.mrf.mxu0
    %v7599 = vpop.f32.mrf.mxu0
    %7600 = vdwg.mxu0
    %7601 = vmatprep.subr.bf16.mxu0 %v5832
    %7602 = vmatpush1.bf16.msra.mxu0 %v5831
    %7603 = vmatprep.subr.bf16.mxu0 %v5824
    %7604 = vmatpush1.bf16.msra.mxu0 %v5823
    %7605 = vmatprep.subr.bf16.mxu0 %v5816
    %7606 = vmatpush1.bf16.msra.mxu0 %v5815
    %7607 = vmatprep.subr.bf16.mxu0 %v5808
    %7608 = vmatpush1.bf16.msra.mxu0 %v5807
    %7609 = vmatprep.subr.bf16.mxu0 %v5800
    %7610 = vmatpush1.bf16.msra.mxu0 %v5799
    %7611 = vmatprep.subr.bf16.mxu0 %v5792
    %7612 = vmatpush1.bf16.msra.mxu0 %v5791
    %7613 = vmatprep.subr.bf16.mxu0 %v5784
    %7614 = vmatpush1.bf16.msra.mxu0 %v5783
    %7615 = vmatprep.subr.bf16.mxu0 %v5776
    %7616 = vmatpush1.bf16.msra.mxu0 %v5775
    %7617 = vmatprep.subr.bf16.mxu0 %v5896
    %7618 = vmatpush2.bf16.msra.mxu0 %v5895
    %7619 = vmatprep.subr.bf16.mxu0 %v5888
    %7620 = vmatpush2.bf16.msra.mxu0 %v5887
    %7621 = vmatprep.subr.bf16.mxu0 %v5880
    %7622 = vmatpush2.bf16.msra.mxu0 %v5879
    %7623 = vmatprep.subr.bf16.mxu0 %v5872
    %7624 = vmatpush2.bf16.msra.mxu0 %v5871
    %7625 = vmatprep.subr.bf16.mxu0 %v5864
    %7626 = vmatpush2.bf16.msra.mxu0 %v5863
    %7627 = vmatprep.subr.bf16.mxu0 %v5856
    %7628 = vmatpush2.bf16.msra.mxu0 %v5855
    %7629 = vmatprep.subr.bf16.mxu0 %v5848
    %7630 = vmatpush2.bf16.msra.mxu0 %v5847
    %7631 = vmatprep.subr.bf16.mxu0 %v5840
    %7632 = vmatpush2.bf16.msra.mxu0 %v5839
    %7633 = vmatprep.mubr.bf16.mxu0 %v2289
    %7634 = vmatmul.mubr.bf16.gmra.mxu0 %v2282
    %v7635 = vpop.f32.mrf.mxu0
    %v7636 = vadd.f32 %v7595, %v7635
    %v7637 = vpop.f32.mrf.mxu0
    %v7638 = vadd.f32 %v7597, %v7637
    %v7639 = vpop.f32.mrf.mxu0
    %v7640 = vpop.f32.mrf.mxu0
    %7641 = vdwg.mxu0
    %7642 = vmatprep.subr.bf16.mxu0 %v5960
    %7643 = vmatpush1.bf16.msra.mxu0 %v5959
    %7644 = vmatprep.subr.bf16.mxu0 %v5952
    %7645 = vmatpush1.bf16.msra.mxu0 %v5951
    %7646 = vmatprep.subr.bf16.mxu0 %v5944
    %7647 = vmatpush1.bf16.msra.mxu0 %v5943
    %7648 = vmatprep.subr.bf16.mxu0 %v5936
    %7649 = vmatpush1.bf16.msra.mxu0 %v5935
    %7650 = vmatprep.subr.bf16.mxu0 %v5928
    %7651 = vmatpush1.bf16.msra.mxu0 %v5927
    %7652 = vmatprep.subr.bf16.mxu0 %v5920
    %7653 = vmatpush1.bf16.msra.mxu0 %v5919
    %7654 = vmatprep.subr.bf16.mxu0 %v5912
    %7655 = vmatpush1.bf16.msra.mxu0 %v5911
    %7656 = vmatprep.subr.bf16.mxu0 %v5904
    %7657 = vmatpush1.bf16.msra.mxu0 %v5903
    %7658 = vmatprep.subr.bf16.mxu0 0
    %7659 = vmatpush2.bf16.msra.mxu0 0
    %7660 = vmatprep.subr.bf16.mxu0 0
    %7661 = vmatpush2.bf16.msra.mxu0 0
    %7662 = vmatprep.subr.bf16.mxu0 0
    %7663 = vmatpush2.bf16.msra.mxu0 0
    %7664 = vmatprep.subr.bf16.mxu0 0
    %7665 = vmatpush2.bf16.msra.mxu0 0
    %7666 = vmatprep.subr.bf16.mxu0 0
    %7667 = vmatpush2.bf16.msra.mxu0 0
    %7668 = vmatprep.subr.bf16.mxu0 0
    %7669 = vmatpush2.bf16.msra.mxu0 0
    %7670 = vmatprep.subr.bf16.mxu0 %v5976
    %7671 = vmatpush2.bf16.msra.mxu0 %v5975
    %7672 = vmatprep.subr.bf16.mxu0 %v5968
    %7673 = vmatpush2.bf16.msra.mxu0 %v5967
    %7674 = vmatprep.mubr.bf16.mxu0 %v6697
    %7675 = vmatmul.mubr.bf16.gmra.mxu0 %v2333
    %v7676 = vpop.f32.mrf.mxu0
    %v7677 = vadd.f32 %v7636, %v7676
    %v7678 = vpop.f32.mrf.mxu0
    %v7679 = vadd.f32 %v7638, %v7678
    %v7680 = vpop.f32.mrf.mxu0
    %v7681 = vpop.f32.mrf.mxu0
    %7682 = vdwg.mxu0
    %v7683 = vmul.f32 %v6939, 0.5
    %v7684 = vmul.f32 %v6941, 0.5
    %v7685 = vmul.f32 %v7185, 0.5
    %v7686 = vmul.f32 %v7187, 0.5
    %v7687 = vmul.f32 %v7431, 0.5
    %v7688 = vmul.f32 %v7433, 0.5
    %v7689 = vmul.f32 %v7677, 0.5
    %v7690 = vmul.f32 %v7679, 0.5
    %v7691 = vmul.f32 %v6939, %v6939
    %v7692 = vmul.f32 %v6941, %v6941
    %v7693 = vmul.f32 %v7185, %v7185
    %v7694 = vmul.f32 %v7187, %v7187
    %v7695 = vmul.f32 %v7431, %v7431
    %v7696 = vmul.f32 %v7433, %v7433
    %v7697 = vmul.f32 %v7677, %v7677
    %v7698 = vmul.f32 %v7679, %v7679
    %v7699 = vmul.f32 %v7691, %v6939
    %v7700 = vmul.f32 %v7692, %v6941
    %v7701 = vmul.f32 %v7693, %v7185
    %v7702 = vmul.f32 %v7694, %v7187
    %v7703 = vmul.f32 %v7695, %v7431
    %v7704 = vmul.f32 %v7696, %v7433
    %v7705 = vmul.f32 %v7697, %v7677
    %v7706 = vmul.f32 %v7698, %v7679
    %v7707 = vmul.f32 %v7699, 0.044715
    %v7708 = vmul.f32 %v7700, 0.044715
    %v7709 = vmul.f32 %v7701, 0.044715
    %v7710 = vmul.f32 %v7702, 0.044715
    %v7711 = vmul.f32 %v7703, 0.044715
    %v7712 = vmul.f32 %v7704, 0.044715
    %v7713 = vmul.f32 %v7705, 0.044715
    %v7714 = vmul.f32 %v7706, 0.044715
    %v7715 = vadd.f32 %v6939, %v7707
    %v7716 = vadd.f32 %v6941, %v7708
    %v7717 = vadd.f32 %v7185, %v7709
    %v7718 = vadd.f32 %v7187, %v7710
    %v7719 = vadd.f32 %v7431, %v7711
    %v7720 = vadd.f32 %v7433, %v7712
    %v7721 = vadd.f32 %v7677, %v7713
    %v7722 = vadd.f32 %v7679, %v7714
    %v7723 = vmul.f32 %v7715, 0.7978846
    %v7724 = vmul.f32 %v7716, 0.7978846
    %v7725 = vmul.f32 %v7717, 0.7978846
    %v7726 = vmul.f32 %v7718, 0.7978846
    %v7727 = vmul.f32 %v7719, 0.7978846
    %v7728 = vmul.f32 %v7720, 0.7978846
    %v7729 = vmul.f32 %v7721, 0.7978846
    %v7730 = vmul.f32 %v7722, 0.7978846
    %v7731 = vtanh.pop %v7723
    %v7732 = vtanh.pop %v7724
    %v7733 = vtanh.pop %v7725
    %v7734 = vtanh.pop %v7726
    %v7735 = vtanh.pop %v7727
    %v7736 = vtanh.pop %v7728
    %v7737 = vtanh.pop %v7729
    %v7738 = vtanh.pop %v7730
    %v7739 = vadd.f32 %v7731, 1.0
    %v7740 = vadd.f32 %v7732, 1.0
    %v7741 = vadd.f32 %v7733, 1.0
    %v7742 = vadd.f32 %v7734, 1.0
    %v7743 = vadd.f32 %v7735, 1.0
    %v7744 = vadd.f32 %v7736, 1.0
    %v7745 = vadd.f32 %v7737, 1.0
    %v7746 = vadd.f32 %v7738, 1.0
    %v7747 = vmul.f32 %v7683, %v7739
    %v7748 = vmul.f32 %v7684, %v7740
    %v7749 = vmul.f32 %v7685, %v7741
    %v7750 = vmul.f32 %v7686, %v7742
    %v7751 = vmul.f32 %v7687, %v7743
    %v7752 = vmul.f32 %v7688, %v7744
    %v7753 = vmul.f32 %v7689, %v7745
    %v7754 = vmul.f32 %v7690, %v7746
    %v7755 = vpack.c.bf16 %v7747, %v7747
    %v7756 = vpack.c.bf16 %v7748, %v7748
    %v7757 = vpack.c.bf16 %v7749, %v7749
    %v7758 = vpack.c.bf16 %v7750, %v7750
    %v7759 = vpack.c.bf16 %v7751, %v7751
    %v7760 = vpack.c.bf16 %v7752, %v7752
    %v7761 = vpack.c.bf16 %v7753, %v7753
    %v7762 = vpack.c.bf16 %v7754, %v7754
    %v7763 = vld [vmem:[%s10] sm:$0xff]
    %v7764 = vld [vmem:[%s10 + $0x8] sm:$0xff]
    %v7765 = vld [vmem:[%s10 + $0x10] sm:$0xff]
    %v7766 = vld [vmem:[%s10 + $0x18] sm:$0xff]
    %v7767 = vld [vmem:[%s10 + $0x20] sm:$0xff]
    %v7768 = vld [vmem:[%s10 + $0x28] sm:$0xff]
    %v7769 = vld [vmem:[%s10 + $0x30] sm:$0xff]
    %v7770 = vld [vmem:[%s10 + $0x38] sm:$0xff]
    %v7771 = vld [vmem:[%s10 + $0x40] sm:$0xff]
    %v7772 = vld [vmem:[%s10 + $0x48] sm:$0xff]
    %v7773 = vld [vmem:[%s10 + $0x50] sm:$0xff]
    %v7774 = vld [vmem:[%s10 + $0x58] sm:$0xff]
    %v7775 = vld [vmem:[%s10 + $0x60] sm:$0xff]
    %v7776 = vld [vmem:[%s10 + $0x68] sm:$0xff]
    %v7777 = vld [vmem:[%s10 + $0x70] sm:$0xff]
    %v7778 = vld [vmem:[%s10 + $0x78] sm:$0xff]
    %v7779 = vld [vmem:[%s10 + $0x80] sm:$0xff]
    %v7780 = vld [vmem:[%s10 + $0x88] sm:$0xff]
    %v7781 = vld [vmem:[%s10 + $0x90] sm:$0xff]
    %v7782 = vld [vmem:[%s10 + $0x98] sm:$0xff]
    %v7783 = vld [vmem:[%s10 + $0xa0] sm:$0xff]
    %v7784 = vld [vmem:[%s10 + $0xa8] sm:$0xff]
    %v7785 = vld [vmem:[%s10 + $0xb0] sm:$0xff]
    %v7786 = vld [vmem:[%s10 + $0xb8] sm:$0xff]
    %v7787 = vld [vmem:[%s10 + $0xc0] sm:$0xff]
    %v7788 = vld [vmem:[%s10 + $0xc8] sm:$0xff]
    %v7789 = vld [vmem:[%s10 + $0xd0] sm:$0xff]
    %v7790 = vld [vmem:[%s10 + $0xd8] sm:$0xff]
    %v7791 = vld [vmem:[%s10 + $0xe0] sm:$0xff]
    %v7792 = vld [vmem:[%s10 + $0xe8] sm:$0xff]
    %v7793 = vld [vmem:[%s10 + $0xf0] sm:$0xff]
    %v7794 = vld [vmem:[%s10 + $0xf8] sm:$0xff]
    %v7795 = vld [vmem:[%s10 + $0x100] sm:$0xff]
    %v7796 = vld [vmem:[%s10 + $0x108] sm:$0xff]
    %v7797 = vld [vmem:[%s10 + $0x110] sm:$0xff]
    %v7798 = vld [vmem:[%s10 + $0x118] sm:$0xff]
    %v7799 = vld [vmem:[%s10 + $0x120] sm:$0xff]
    %v7800 = vld [vmem:[%s10 + $0x128] sm:$0xff]
    %v7801 = vld [vmem:[%s10 + $0x130] sm:$0xff]
    %v7802 = vld [vmem:[%s10 + $0x138] sm:$0xff]
    %v7803 = vld [vmem:[%s10 + $0x140] sm:$0xff]
    %v7804 = vld [vmem:[%s10 + $0x148] sm:$0xff]
    %v7805 = vld [vmem:[%s10 + $0x150] sm:$0xff]
    %v7806 = vld [vmem:[%s10 + $0x158] sm:$0xff]
    %v7807 = vld [vmem:[%s10 + $0x160] sm:$0xff]
    %v7808 = vld [vmem:[%s10 + $0x168] sm:$0xff]
    %v7809 = vld [vmem:[%s10 + $0x170] sm:$0xff]
    %v7810 = vld [vmem:[%s10 + $0x178] sm:$0xff]
    %v7811 = vld [vmem:[%s10 + $0x180] sm:$0xff]
    %v7812 = vld [vmem:[%s10 + $0x188] sm:$0xff]
    %v7813 = vld [vmem:[%s10 + $0x190] sm:$0xff]
    %v7814 = vld [vmem:[%s10 + $0x198] sm:$0xff]
    %v7815 = vld [vmem:[%s10 + $0x1a0] sm:$0xff]
    %v7816 = vld [vmem:[%s10 + $0x1a8] sm:$0xff]
    %v7817 = vld [vmem:[%s10 + $0x1b0] sm:$0xff]
    %v7818 = vld [vmem:[%s10 + $0x1b8] sm:$0xff]
    %v7819 = vld [vmem:[%s10 + $0x1c0] sm:$0xff]
    %v7820 = vld [vmem:[%s10 + $0x1c8] sm:$0xff]
    %v7821 = vld [vmem:[%s10 + $0x1d0] sm:$0xff]
    %v7822 = vld [vmem:[%s10 + $0x1d8] sm:$0xff]
    %v7823 = vld [vmem:[%s10 + $0x1e0] sm:$0xff]
    %v7824 = vld [vmem:[%s10 + $0x1e8] sm:$0xff]
    %v7825 = vld [vmem:[%s10 + $0x1f0] sm:$0xff]
    %v7826 = vld [vmem:[%s10 + $0x1f8] sm:$0xff]
    %v7827 = vld [vmem:[%s10 + $0x200] sm:$0xff]
    %v7828 = vld [vmem:[%s10 + $0x208] sm:$0xff]
    %v7829 = vld [vmem:[%s10 + $0x210] sm:$0xff]
    %v7830 = vld [vmem:[%s10 + $0x218] sm:$0xff]
    %v7831 = vld [vmem:[%s10 + $0x220] sm:$0xff]
    %v7832 = vld [vmem:[%s10 + $0x228] sm:$0xff]
    %v7833 = vld [vmem:[%s10 + $0x230] sm:$0xff]
    %v7834 = vld [vmem:[%s10 + $0x238] sm:$0xff]
    %v7835 = vld [vmem:[%s10 + $0x240] sm:$0xff]
    %v7836 = vld [vmem:[%s10 + $0x248] sm:$0xff]
    %v7837 = vld [vmem:[%s10 + $0x250] sm:$0xff]
    %v7838 = vld [vmem:[%s10 + $0x258] sm:$0xff]
    %v7839 = vld [vmem:[%s10 + $0x260] sm:$0xff]
    %v7840 = vld [vmem:[%s10 + $0x268] sm:$0xff]
    %v7841 = vld [vmem:[%s10 + $0x270] sm:$0xff]
    %v7842 = vld [vmem:[%s10 + $0x278] sm:$0xff]
    %v7843 = vld [vmem:[%s10 + $0x280] sm:$0xff]
    %v7844 = vld [vmem:[%s10 + $0x288] sm:$0xff]
    %v7845 = vld [vmem:[%s10 + $0x290] sm:$0xff]
    %v7846 = vld [vmem:[%s10 + $0x298] sm:$0xff]
    %v7847 = vld [vmem:[%s10 + $0x2a0] sm:$0xff]
    %v7848 = vld [vmem:[%s10 + $0x2a8] sm:$0xff]
    %v7849 = vld [vmem:[%s10 + $0x2b0] sm:$0xff]
    %v7850 = vld [vmem:[%s10 + $0x2b8] sm:$0xff]
    %v7851 = vld [vmem:[%s10 + $0x2c0] sm:$0xff]
    %v7852 = vld [vmem:[%s10 + $0x2c8] sm:$0xff]
    %v7853 = vld [vmem:[%s10 + $0x2d0] sm:$0xff]
    %v7854 = vld [vmem:[%s10 + $0x2d8] sm:$0xff]
    %v7855 = vld [vmem:[%s10 + $0x2e0] sm:$0xff]
    %v7856 = vld [vmem:[%s10 + $0x2e8] sm:$0xff]
    %v7857 = vld [vmem:[%s10 + $0x2f0] sm:$0xff]
    %v7858 = vld [vmem:[%s10 + $0x2f8] sm:$0xff]
    %v7859 = vld [vmem:[%s10 + $0x300] sm:$0xff]
    %v7860 = vld [vmem:[%s10 + $0x308] sm:$0xff]
    %v7861 = vld [vmem:[%s10 + $0x310] sm:$0xff]
    %v7862 = vld [vmem:[%s10 + $0x318] sm:$0xff]
    %v7863 = vld [vmem:[%s10 + $0x320] sm:$0xff]
    %v7864 = vld [vmem:[%s10 + $0x328] sm:$0xff]
    %v7865 = vld [vmem:[%s10 + $0x330] sm:$0xff]
    %v7866 = vld [vmem:[%s10 + $0x338] sm:$0xff]
    %v7867 = vld [vmem:[%s10 + $0x340] sm:$0xff]
    %v7868 = vld [vmem:[%s10 + $0x348] sm:$0xff]
    %v7869 = vld [vmem:[%s10 + $0x350] sm:$0xff]
    %v7870 = vld [vmem:[%s10 + $0x358] sm:$0xff]
    %v7871 = vld [vmem:[%s10 + $0x360] sm:$0xff]
    %v7872 = vld [vmem:[%s10 + $0x368] sm:$0xff]
    %v7873 = vld [vmem:[%s10 + $0x370] sm:$0xff]
    %v7874 = vld [vmem:[%s10 + $0x378] sm:$0xff]
    %v7875 = vld [vmem:[%s10 + $0x380] sm:$0xff]
    %v7876 = vld [vmem:[%s10 + $0x388] sm:$0xff]
    %v7877 = vld [vmem:[%s10 + $0x390] sm:$0xff]
    %v7878 = vld [vmem:[%s10 + $0x398] sm:$0xff]
    %v7879 = vld [vmem:[%s10 + $0x3a0] sm:$0xff]
    %v7880 = vld [vmem:[%s10 + $0x3a8] sm:$0xff]
    %v7881 = vld [vmem:[%s10 + $0x3b0] sm:$0xff]
    %v7882 = vld [vmem:[%s10 + $0x3b8] sm:$0xff]
    %v7883 = vld [vmem:[%s10 + $0x3c0] sm:$0xff]
    %v7884 = vld [vmem:[%s10 + $0x3c8] sm:$0xff]
    %v7885 = vld [vmem:[%s10 + $0x3d0] sm:$0xff]
    %v7886 = vld [vmem:[%s10 + $0x3d8] sm:$0xff]
    %v7887 = vld [vmem:[%s10 + $0x3e0] sm:$0xff]
    %v7888 = vld [vmem:[%s10 + $0x3e8] sm:$0xff]
    %v7889 = vld [vmem:[%s10 + $0x3f0] sm:$0xff]
    %v7890 = vld [vmem:[%s10 + $0x3f8] sm:$0xff]
    %v7891 = vld [vmem:[%s10 + $0x400] sm:$0xff]
    %v7892 = vld [vmem:[%s10 + $0x408] sm:$0xff]
    %v7893 = vld [vmem:[%s10 + $0x410] sm:$0xff]
    %v7894 = vld [vmem:[%s10 + $0x418] sm:$0xff]
    %v7895 = vld [vmem:[%s10 + $0x420] sm:$0xff]
    %v7896 = vld [vmem:[%s10 + $0x428] sm:$0xff]
    %v7897 = vld [vmem:[%s10 + $0x430] sm:$0xff]
    %v7898 = vld [vmem:[%s10 + $0x438] sm:$0xff]
    %v7899 = vld [vmem:[%s10 + $0x440] sm:$0xff]
    %v7900 = vld [vmem:[%s10 + $0x448] sm:$0xff]
    %v7901 = vld [vmem:[%s10 + $0x450] sm:$0xff]
    %v7902 = vld [vmem:[%s10 + $0x458] sm:$0xff]
    %v7903 = vld [vmem:[%s10 + $0x460] sm:$0xff]
    %v7904 = vld [vmem:[%s10 + $0x468] sm:$0xff]
    %v7905 = vld [vmem:[%s10 + $0x470] sm:$0xff]
    %v7906 = vld [vmem:[%s10 + $0x478] sm:$0xff]
    %v7907 = vld [vmem:[%s10 + $0x480] sm:$0xff]
    %v7908 = vld [vmem:[%s10 + $0x488] sm:$0xff]
    %v7909 = vld [vmem:[%s10 + $0x490] sm:$0xff]
    %v7910 = vld [vmem:[%s10 + $0x498] sm:$0xff]
    %v7911 = vld [vmem:[%s10 + $0x4a0] sm:$0xff]
    %v7912 = vld [vmem:[%s10 + $0x4a8] sm:$0xff]
    %v7913 = vld [vmem:[%s10 + $0x4b0] sm:$0xff]
    %v7914 = vld [vmem:[%s10 + $0x4b8] sm:$0xff]
    %v7915 = vld [vmem:[%s10 + $0x4c0] sm:$0xff]
    %v7916 = vld [vmem:[%s10 + $0x4c8] sm:$0xff]
    %v7917 = vld [vmem:[%s10 + $0x4d0] sm:$0xff]
    %v7918 = vld [vmem:[%s10 + $0x4d8] sm:$0xff]
    %v7919 = vld [vmem:[%s10 + $0x4e0] sm:$0xff]
    %v7920 = vld [vmem:[%s10 + $0x4e8] sm:$0xff]
    %v7921 = vld [vmem:[%s10 + $0x4f0] sm:$0xff]
    %v7922 = vld [vmem:[%s10 + $0x4f8] sm:$0xff]
    %v7923 = vld [vmem:[%s10 + $0x500] sm:$0xff]
    %v7924 = vld [vmem:[%s10 + $0x508] sm:$0xff]
    %v7925 = vld [vmem:[%s10 + $0x510] sm:$0xff]
    %v7926 = vld [vmem:[%s10 + $0x518] sm:$0xff]
    %v7927 = vld [vmem:[%s10 + $0x520] sm:$0xff]
    %v7928 = vld [vmem:[%s10 + $0x528] sm:$0xff]
    %v7929 = vld [vmem:[%s10 + $0x530] sm:$0xff]
    %v7930 = vld [vmem:[%s10 + $0x538] sm:$0xff]
    %v7931 = vld [vmem:[%s10 + $0x540] sm:$0xff]
    %v7932 = vld [vmem:[%s10 + $0x548] sm:$0xff]
    %v7933 = vld [vmem:[%s10 + $0x550] sm:$0xff]
    %v7934 = vld [vmem:[%s10 + $0x558] sm:$0xff]
    %v7935 = vld [vmem:[%s10 + $0x560] sm:$0xff]
    %v7936 = vld [vmem:[%s10 + $0x568] sm:$0xff]
    %v7937 = vld [vmem:[%s10 + $0x570] sm:$0xff]
    %v7938 = vld [vmem:[%s10 + $0x578] sm:$0xff]
    %v7939 = vld [vmem:[%s10 + $0x580] sm:$0xff]
    %v7940 = vld [vmem:[%s10 + $0x588] sm:$0xff]
    %v7941 = vld [vmem:[%s10 + $0x590] sm:$0xff]
    %v7942 = vld [vmem:[%s10 + $0x598] sm:$0xff]
    %v7943 = vld [vmem:[%s10 + $0x5a0] sm:$0xff]
    %v7944 = vld [vmem:[%s10 + $0x5a8] sm:$0xff]
    %v7945 = vld [vmem:[%s10 + $0x5b0] sm:$0xff]
    %v7946 = vld [vmem:[%s10 + $0x5b8] sm:$0xff]
    %v7947 = vld [vmem:[%s10 + $0x5c0] sm:$0xff]
    %v7948 = vld [vmem:[%s10 + $0x5c8] sm:$0xff]
    %v7949 = vld [vmem:[%s10 + $0x5d0] sm:$0xff]
    %v7950 = vld [vmem:[%s10 + $0x5d8] sm:$0xff]
    %v7951 = vld [vmem:[%s10 + $0x5e0] sm:$0xff]
    %v7952 = vld [vmem:[%s10 + $0x5e8] sm:$0xff]
    %v7953 = vld [vmem:[%s10 + $0x5f0] sm:$0xff]
    %v7954 = vld [vmem:[%s10 + $0x5f8] sm:$0xff]
    %v7955 = vld [vmem:[%s10 + $0x600] sm:$0xff]
    %v7956 = vld [vmem:[%s10 + $0x608] sm:$0xff]
    %v7957 = vld [vmem:[%s10 + $0x610] sm:$0xff]
    %v7958 = vld [vmem:[%s10 + $0x618] sm:$0xff]
    %v7959 = vld [vmem:[%s10 + $0x620] sm:$0xff]
    %v7960 = vld [vmem:[%s10 + $0x628] sm:$0xff]
    %v7961 = vld [vmem:[%s10 + $0x630] sm:$0xff]
    %v7962 = vld [vmem:[%s10 + $0x638] sm:$0xff]
    %v7963 = vld [vmem:[%s10 + $0x640] sm:$0xff]
    %v7964 = vld [vmem:[%s10 + $0x648] sm:$0xff]
    %v7965 = vld [vmem:[%s10 + $0x650] sm:$0xff]
    %v7966 = vld [vmem:[%s10 + $0x658] sm:$0xff]
    %v7967 = vld [vmem:[%s10 + $0x660] sm:$0xff]
    %v7968 = vld [vmem:[%s10 + $0x668] sm:$0xff]
    %v7969 = vld [vmem:[%s10 + $0x670] sm:$0xff]
    %v7970 = vld [vmem:[%s10 + $0x678] sm:$0xff]
    %v7971 = vld [vmem:[%s10 + $0x680] sm:$0xff]
    %v7972 = vld [vmem:[%s10 + $0x688] sm:$0xff]
    %v7973 = vld [vmem:[%s10 + $0x690] sm:$0xff]
    %v7974 = vld [vmem:[%s10 + $0x698] sm:$0xff]
    %v7975 = vld [vmem:[%s10 + $0x6a0] sm:$0xff]
    %v7976 = vld [vmem:[%s10 + $0x6a8] sm:$0xff]
    %v7977 = vld [vmem:[%s10 + $0x6b0] sm:$0xff]
    %v7978 = vld [vmem:[%s10 + $0x6b8] sm:$0xff]
    %v7979 = vld [vmem:[%s10 + $0x6c0] sm:$0xff]
    %v7980 = vld [vmem:[%s10 + $0x6c8] sm:$0xff]
    %v7981 = vld [vmem:[%s10 + $0x6d0] sm:$0xff]
    %v7982 = vld [vmem:[%s10 + $0x6d8] sm:$0xff]
    %v7983 = vld [vmem:[%s10 + $0x6e0] sm:$0xff]
    %v7984 = vld [vmem:[%s10 + $0x6e8] sm:$0xff]
    %v7985 = vld [vmem:[%s10 + $0x6f0] sm:$0xff]
    %v7986 = vld [vmem:[%s10 + $0x6f8] sm:$0xff]
    %v7987 = vld [vmem:[%s10 + $0x700] sm:$0xff]
    %v7988 = vld [vmem:[%s10 + $0x708] sm:$0xff]
    %v7989 = vld [vmem:[%s10 + $0x710] sm:$0xff]
    %v7990 = vld [vmem:[%s10 + $0x718] sm:$0xff]
    %v7991 = vld [vmem:[%s10 + $0x720] sm:$0xff]
    %v7992 = vld [vmem:[%s10 + $0x728] sm:$0xff]
    %v7993 = vld [vmem:[%s10 + $0x730] sm:$0xff]
    %v7994 = vld [vmem:[%s10 + $0x738] sm:$0xff]
    %v7995 = vld [vmem:[%s10 + $0x740] sm:$0xff]
    %v7996 = vld [vmem:[%s10 + $0x748] sm:$0xff]
    %v7997 = vld [vmem:[%s10 + $0x750] sm:$0xff]
    %v7998 = vld [vmem:[%s10 + $0x758] sm:$0xff]
    %v7999 = vld [vmem:[%s10 + $0x760] sm:$0xff]
    %v8000 = vld [vmem:[%s10 + $0x768] sm:$0xff]
    %v8001 = vld [vmem:[%s10 + $0x770] sm:$0xff]
    %v8002 = vld [vmem:[%s10 + $0x778] sm:$0xff]
    %v8003 = vld [vmem:[%s10 + $0x780] sm:$0xff]
    %v8004 = vld [vmem:[%s10 + $0x788] sm:$0xff]
    %v8005 = vld [vmem:[%s10 + $0x790] sm:$0xff]
    %v8006 = vld [vmem:[%s10 + $0x798] sm:$0xff]
    %v8007 = vld [vmem:[%s10 + $0x7a0] sm:$0xff]
    %v8008 = vld [vmem:[%s10 + $0x7a8] sm:$0xff]
    %v8009 = vld [vmem:[%s10 + $0x7b0] sm:$0xff]
    %v8010 = vld [vmem:[%s10 + $0x7b8] sm:$0xff]
    %v8011 = vld [vmem:[%s10 + $0x7c0] sm:$0xff]
    %v8012 = vld [vmem:[%s10 + $0x7c8] sm:$0xff]
    %v8013 = vld [vmem:[%s10 + $0x7d0] sm:$0xff]
    %v8014 = vld [vmem:[%s10 + $0x7d8] sm:$0xff]
    %v8015 = vld [vmem:[%s10 + $0x7e0] sm:$0xff]
    %v8016 = vld [vmem:[%s10 + $0x7e8] sm:$0xff]
    %v8017 = vld [vmem:[%s10 + $0x7f0] sm:$0xff]
    %v8018 = vld [vmem:[%s10 + $0x7f8] sm:$0xff]
    %v8019 = vld [vmem:[%s10 + $0x800] sm:$0xff]
    %v8020 = vld [vmem:[%s10 + $0x808] sm:$0xff]
    %v8021 = vld [vmem:[%s10 + $0x810] sm:$0xff]
    %v8022 = vld [vmem:[%s10 + $0x818] sm:$0xff]
    %v8023 = vld [vmem:[%s10 + $0x820] sm:$0xff]
    %v8024 = vld [vmem:[%s10 + $0x828] sm:$0xff]
    %v8025 = vld [vmem:[%s10 + $0x830] sm:$0xff]
    %v8026 = vld [vmem:[%s10 + $0x838] sm:$0xff]
    %v8027 = vld [vmem:[%s10 + $0x840] sm:$0xff]
    %v8028 = vld [vmem:[%s10 + $0x848] sm:$0xff]
    %v8029 = vld [vmem:[%s10 + $0x850] sm:$0xff]
    %v8030 = vld [vmem:[%s10 + $0x858] sm:$0xff]
    %v8031 = vld [vmem:[%s10 + $0x860] sm:$0xff]
    %v8032 = vld [vmem:[%s10 + $0x868] sm:$0xff]
    %v8033 = vld [vmem:[%s10 + $0x870] sm:$0xff]
    %v8034 = vld [vmem:[%s10 + $0x878] sm:$0xff]
    %v8035 = vld [vmem:[%s10 + $0x880] sm:$0xff]
    %v8036 = vld [vmem:[%s10 + $0x888] sm:$0xff]
    %v8037 = vld [vmem:[%s10 + $0x890] sm:$0xff]
    %v8038 = vld [vmem:[%s10 + $0x898] sm:$0xff]
    %v8039 = vld [vmem:[%s10 + $0x8a0] sm:$0xff]
    %v8040 = vld [vmem:[%s10 + $0x8a8] sm:$0xff]
    %v8041 = vld [vmem:[%s10 + $0x8b0] sm:$0xff]
    %v8042 = vld [vmem:[%s10 + $0x8b8] sm:$0xff]
    %v8043 = vld [vmem:[%s10 + $0x8c0] sm:$0xff]
    %v8044 = vld [vmem:[%s10 + $0x8c8] sm:$0xff]
    %v8045 = vld [vmem:[%s10 + $0x8d0] sm:$0xff]
    %v8046 = vld [vmem:[%s10 + $0x8d8] sm:$0xff]
    %v8047 = vld [vmem:[%s10 + $0x8e0] sm:$0xff]
    %v8048 = vld [vmem:[%s10 + $0x8e8] sm:$0xff]
    %v8049 = vld [vmem:[%s10 + $0x8f0] sm:$0xff]
    %v8050 = vld [vmem:[%s10 + $0x8f8] sm:$0xff]
    %v8051 = vld [vmem:[%s10 + $0x900] sm:$0xff]
    %v8052 = vld [vmem:[%s10 + $0x908] sm:$0xff]
    %v8053 = vld [vmem:[%s10 + $0x910] sm:$0xff]
    %v8054 = vld [vmem:[%s10 + $0x918] sm:$0xff]
    %v8055 = vld [vmem:[%s10 + $0x920] sm:$0xff]
    %v8056 = vld [vmem:[%s10 + $0x928] sm:$0xff]
    %v8057 = vld [vmem:[%s10 + $0x930] sm:$0xff]
    %v8058 = vld [vmem:[%s10 + $0x938] sm:$0xff]
    %v8059 = vld [vmem:[%s10 + $0x940] sm:$0xff]
    %v8060 = vld [vmem:[%s10 + $0x948] sm:$0xff]
    %v8061 = vld [vmem:[%s10 + $0x950] sm:$0xff]
    %v8062 = vld [vmem:[%s10 + $0x958] sm:$0xff]
    %v8063 = vld [vmem:[%s10 + $0x960] sm:$0xff]
    %v8064 = vld [vmem:[%s10 + $0x968] sm:$0xff]
    %v8065 = vld [vmem:[%s10 + $0x970] sm:$0xff]
    %v8066 = vld [vmem:[%s10 + $0x978] sm:$0xff]
    %v8067 = vld [vmem:[%s10 + $0x980] sm:$0xff]
    %v8068 = vld [vmem:[%s10 + $0x988] sm:$0xff]
    %v8069 = vld [vmem:[%s10 + $0x990] sm:$0xff]
    %v8070 = vld [vmem:[%s10 + $0x998] sm:$0xff]
    %v8071 = vld [vmem:[%s10 + $0x9a0] sm:$0xff]
    %v8072 = vld [vmem:[%s10 + $0x9a8] sm:$0xff]
    %v8073 = vld [vmem:[%s10 + $0x9b0] sm:$0xff]
    %v8074 = vld [vmem:[%s10 + $0x9b8] sm:$0xff]
    %v8075 = vld [vmem:[%s10 + $0x9c0] sm:$0xff]
    %v8076 = vld [vmem:[%s10 + $0x9c8] sm:$0xff]
    %v8077 = vld [vmem:[%s10 + $0x9d0] sm:$0xff]
    %v8078 = vld [vmem:[%s10 + $0x9d8] sm:$0xff]
    %v8079 = vld [vmem:[%s10 + $0x9e0] sm:$0xff]
    %v8080 = vld [vmem:[%s10 + $0x9e8] sm:$0xff]
    %v8081 = vld [vmem:[%s10 + $0x9f0] sm:$0xff]
    %v8082 = vld [vmem:[%s10 + $0x9f8] sm:$0xff]
    %v8083 = vld [vmem:[%s10 + $0xa00] sm:$0xff]
    %v8084 = vld [vmem:[%s10 + $0xa08] sm:$0xff]
    %v8085 = vld [vmem:[%s10 + $0xa10] sm:$0xff]
    %v8086 = vld [vmem:[%s10 + $0xa18] sm:$0xff]
    %v8087 = vld [vmem:[%s10 + $0xa20] sm:$0xff]
    %v8088 = vld [vmem:[%s10 + $0xa28] sm:$0xff]
    %v8089 = vld [vmem:[%s10 + $0xa30] sm:$0xff]
    %v8090 = vld [vmem:[%s10 + $0xa38] sm:$0xff]
    %v8091 = vld [vmem:[%s10 + $0xa40] sm:$0xff]
    %v8092 = vld [vmem:[%s10 + $0xa48] sm:$0xff]
    %v8093 = vld [vmem:[%s10 + $0xa50] sm:$0xff]
    %v8094 = vld [vmem:[%s10 + $0xa58] sm:$0xff]
    %v8095 = vld [vmem:[%s10 + $0xa60] sm:$0xff]
    %v8096 = vld [vmem:[%s10 + $0xa68] sm:$0xff]
    %v8097 = vld [vmem:[%s10 + $0xa70] sm:$0xff]
    %v8098 = vld [vmem:[%s10 + $0xa78] sm:$0xff]
    %v8099 = vld [vmem:[%s10 + $0xa80] sm:$0xff]
    %v8100 = vld [vmem:[%s10 + $0xa88] sm:$0xff]
    %v8101 = vld [vmem:[%s10 + $0xa90] sm:$0xff]
    %v8102 = vld [vmem:[%s10 + $0xa98] sm:$0xff]
    %v8103 = vld [vmem:[%s10 + $0xaa0] sm:$0xff]
    %v8104 = vld [vmem:[%s10 + $0xaa8] sm:$0xff]
    %v8105 = vld [vmem:[%s10 + $0xab0] sm:$0xff]
    %v8106 = vld [vmem:[%s10 + $0xab8] sm:$0xff]
    %v8107 = vld [vmem:[%s10 + $0xac0] sm:$0xff]
    %v8108 = vld [vmem:[%s10 + $0xac8] sm:$0xff]
    %v8109 = vld [vmem:[%s10 + $0xad0] sm:$0xff]
    %v8110 = vld [vmem:[%s10 + $0xad8] sm:$0xff]
    %v8111 = vld [vmem:[%s10 + $0xae0] sm:$0xff]
    %v8112 = vld [vmem:[%s10 + $0xae8] sm:$0xff]
    %v8113 = vld [vmem:[%s10 + $0xaf0] sm:$0xff]
    %v8114 = vld [vmem:[%s10 + $0xaf8] sm:$0xff]
    %v8115 = vld [vmem:[%s10 + $0xb00] sm:$0xff]
    %v8116 = vld [vmem:[%s10 + $0xb08] sm:$0xff]
    %v8117 = vld [vmem:[%s10 + $0xb10] sm:$0xff]
    %v8118 = vld [vmem:[%s10 + $0xb18] sm:$0xff]
    %v8119 = vld [vmem:[%s10 + $0xb20] sm:$0xff]
    %v8120 = vld [vmem:[%s10 + $0xb28] sm:$0xff]
    %v8121 = vld [vmem:[%s10 + $0xb30] sm:$0xff]
    %v8122 = vld [vmem:[%s10 + $0xb38] sm:$0xff]
    %v8123 = vld [vmem:[%s10 + $0xb40] sm:$0xff]
    %v8124 = vld [vmem:[%s10 + $0xb48] sm:$0xff]
    %v8125 = vld [vmem:[%s10 + $0xb50] sm:$0xff]
    %v8126 = vld [vmem:[%s10 + $0xb58] sm:$0xff]
    %v8127 = vld [vmem:[%s10 + $0xb60] sm:$0xff]
    %v8128 = vld [vmem:[%s10 + $0xb68] sm:$0xff]
    %v8129 = vld [vmem:[%s10 + $0xb70] sm:$0xff]
    %v8130 = vld [vmem:[%s10 + $0xb78] sm:$0xff]
    %v8131 = vld [vmem:[%s10 + $0xb80] sm:$0xff]
    %v8132 = vld [vmem:[%s10 + $0xb88] sm:$0xff]
    %v8133 = vld [vmem:[%s10 + $0xb90] sm:$0xff]
    %v8134 = vld [vmem:[%s10 + $0xb98] sm:$0xff]
    %v8135 = vld [vmem:[%s10 + $0xba0] sm:$0xff]
    %v8136 = vld [vmem:[%s10 + $0xba8] sm:$0xff]
    %v8137 = vld [vmem:[%s10 + $0xbb0] sm:$0xff]
    %v8138 = vld [vmem:[%s10 + $0xbb8] sm:$0xff]
    %v8139 = vld [vmem:[%s10 + $0xbc0] sm:$0xff]
    %v8140 = vld [vmem:[%s10 + $0xbc8] sm:$0xff]
    %v8141 = vld [vmem:[%s10 + $0xbd0] sm:$0xff]
    %v8142 = vld [vmem:[%s10 + $0xbd8] sm:$0xff]
    %v8143 = vld [vmem:[%s10 + $0xbe0] sm:$0xff]
    %v8144 = vld [vmem:[%s10 + $0xbe8] sm:$0xff]
    %v8145 = vld [vmem:[%s10 + $0xbf0] sm:$0xff]
    %v8146 = vld [vmem:[%s10 + $0xbf8] sm:$0xff]
    %v8147 = vld [vmem:[%s10 + $0xc00] sm:$0xff]
    %v8148 = vld [vmem:[%s10 + $0xc08] sm:$0xff]
    %v8149 = vld [vmem:[%s10 + $0xc10] sm:$0xff]
    %v8150 = vld [vmem:[%s10 + $0xc18] sm:$0xff]
    %v8151 = vld [vmem:[%s10 + $0xc20] sm:$0xff]
    %v8152 = vld [vmem:[%s10 + $0xc28] sm:$0xff]
    %v8153 = vld [vmem:[%s10 + $0xc30] sm:$0xff]
    %v8154 = vld [vmem:[%s10 + $0xc38] sm:$0xff]
    %v8155 = vld [vmem:[%s10 + $0xc40] sm:$0xff]
    %v8156 = vld [vmem:[%s10 + $0xc48] sm:$0xff]
    %v8157 = vld [vmem:[%s10 + $0xc50] sm:$0xff]
    %v8158 = vld [vmem:[%s10 + $0xc58] sm:$0xff]
    %v8159 = vld [vmem:[%s10 + $0xc60] sm:$0xff]
    %v8160 = vld [vmem:[%s10 + $0xc68] sm:$0xff]
    %v8161 = vld [vmem:[%s10 + $0xc70] sm:$0xff]
    %v8162 = vld [vmem:[%s10 + $0xc78] sm:$0xff]
    %v8163 = vld [vmem:[%s10 + $0xc80] sm:$0xff]
    %v8164 = vld [vmem:[%s10 + $0xc88] sm:$0xff]
    %v8165 = vld [vmem:[%s10 + $0xc90] sm:$0xff]
    %v8166 = vld [vmem:[%s10 + $0xc98] sm:$0xff]
    %v8167 = vld [vmem:[%s10 + $0xca0] sm:$0xff]
    %v8168 = vld [vmem:[%s10 + $0xca8] sm:$0xff]
    %v8169 = vld [vmem:[%s10 + $0xcb0] sm:$0xff]
    %v8170 = vld [vmem:[%s10 + $0xcb8] sm:$0xff]
    %v8171 = vld [vmem:[%s10 + $0xcc0] sm:$0xff]
    %v8172 = vld [vmem:[%s10 + $0xcc8] sm:$0xff]
    %v8173 = vld [vmem:[%s10 + $0xcd0] sm:$0xff]
    %v8174 = vld [vmem:[%s10 + $0xcd8] sm:$0xff]
    %v8175 = vld [vmem:[%s10 + $0xce0] sm:$0xff]
    %v8176 = vld [vmem:[%s10 + $0xce8] sm:$0xff]
    %v8177 = vld [vmem:[%s10 + $0xcf0] sm:$0xff]
    %v8178 = vld [vmem:[%s10 + $0xcf8] sm:$0xff]
    %v8179 = vld [vmem:[%s10 + $0xd00] sm:$0xff]
    %v8180 = vld [vmem:[%s10 + $0xd08] sm:$0xff]
    %v8181 = vld [vmem:[%s10 + $0xd10] sm:$0xff]
    %v8182 = vld [vmem:[%s10 + $0xd18] sm:$0xff]
    %v8183 = vld [vmem:[%s10 + $0xd20] sm:$0xff]
    %v8184 = vld [vmem:[%s10 + $0xd28] sm:$0xff]
    %v8185 = vld [vmem:[%s10 + $0xd30] sm:$0xff]
    %v8186 = vld [vmem:[%s10 + $0xd38] sm:$0xff]
    %v8187 = vld [vmem:[%s10 + $0xd40] sm:$0xff]
    %v8188 = vld [vmem:[%s10 + $0xd48] sm:$0xff]
    %v8189 = vld [vmem:[%s10 + $0xd50] sm:$0xff]
    %v8190 = vld [vmem:[%s10 + $0xd58] sm:$0xff]
    %v8191 = vld [vmem:[%s10 + $0xd60] sm:$0xff]
    %v8192 = vld [vmem:[%s10 + $0xd68] sm:$0xff]
    %v8193 = vld [vmem:[%s10 + $0xd70] sm:$0xff]
    %v8194 = vld [vmem:[%s10 + $0xd78] sm:$0xff]
    %v8195 = vld [vmem:[%s10 + $0xd80] sm:$0xff]
    %v8196 = vld [vmem:[%s10 + $0xd88] sm:$0xff]
    %v8197 = vld [vmem:[%s10 + $0xd90] sm:$0xff]
    %v8198 = vld [vmem:[%s10 + $0xd98] sm:$0xff]
    %v8199 = vld [vmem:[%s10 + $0xda0] sm:$0xff]
    %v8200 = vld [vmem:[%s10 + $0xda8] sm:$0xff]
    %v8201 = vld [vmem:[%s10 + $0xdb0] sm:$0xff]
    %v8202 = vld [vmem:[%s10 + $0xdb8] sm:$0xff]
    %v8203 = vld [vmem:[%s10 + $0xdc0] sm:$0xff]
    %v8204 = vld [vmem:[%s10 + $0xdc8] sm:$0xff]
    %v8205 = vld [vmem:[%s10 + $0xdd0] sm:$0xff]
    %v8206 = vld [vmem:[%s10 + $0xdd8] sm:$0xff]
    %v8207 = vld [vmem:[%s10 + $0xde0] sm:$0xff]
    %v8208 = vld [vmem:[%s10 + $0xde8] sm:$0xff]
    %v8209 = vld [vmem:[%s10 + $0xdf0] sm:$0xff]
    %v8210 = vld [vmem:[%s10 + $0xdf8] sm:$0xff]
    %v8211 = vld [vmem:[%s10 + $0xe00] sm:$0xff]
    %v8212 = vld [vmem:[%s10 + $0xe08] sm:$0xff]
    %v8213 = vld [vmem:[%s10 + $0xe10] sm:$0xff]
    %v8214 = vld [vmem:[%s10 + $0xe18] sm:$0xff]
    %v8215 = vld [vmem:[%s10 + $0xe20] sm:$0xff]
    %v8216 = vld [vmem:[%s10 + $0xe28] sm:$0xff]
    %v8217 = vld [vmem:[%s10 + $0xe30] sm:$0xff]
    %v8218 = vld [vmem:[%s10 + $0xe38] sm:$0xff]
    %v8219 = vld [vmem:[%s10 + $0xe40] sm:$0xff]
    %v8220 = vld [vmem:[%s10 + $0xe48] sm:$0xff]
    %v8221 = vld [vmem:[%s10 + $0xe50] sm:$0xff]
    %v8222 = vld [vmem:[%s10 + $0xe58] sm:$0xff]
    %v8223 = vld [vmem:[%s10 + $0xe60] sm:$0xff]
    %v8224 = vld [vmem:[%s10 + $0xe68] sm:$0xff]
    %v8225 = vld [vmem:[%s10 + $0xe70] sm:$0xff]
    %v8226 = vld [vmem:[%s10 + $0xe78] sm:$0xff]
    %v8227 = vld [vmem:[%s10 + $0xe80] sm:$0xff]
    %v8228 = vld [vmem:[%s10 + $0xe88] sm:$0xff]
    %v8229 = vld [vmem:[%s10 + $0xe90] sm:$0xff]
    %v8230 = vld [vmem:[%s10 + $0xe98] sm:$0xff]
    %v8231 = vld [vmem:[%s10 + $0xea0] sm:$0xff]
    %v8232 = vld [vmem:[%s10 + $0xea8] sm:$0xff]
    %v8233 = vld [vmem:[%s10 + $0xeb0] sm:$0xff]
    %v8234 = vld [vmem:[%s10 + $0xeb8] sm:$0xff]
    %v8235 = vld [vmem:[%s10 + $0xec0] sm:$0xff]
    %v8236 = vld [vmem:[%s10 + $0xec8] sm:$0xff]
    %v8237 = vld [vmem:[%s10 + $0xed0] sm:$0xff]
    %v8238 = vld [vmem:[%s10 + $0xed8] sm:$0xff]
    %v8239 = vld [vmem:[%s10 + $0xee0] sm:$0xff]
    %v8240 = vld [vmem:[%s10 + $0xee8] sm:$0xff]
    %v8241 = vld [vmem:[%s10 + $0xef0] sm:$0xff]
    %v8242 = vld [vmem:[%s10 + $0xef8] sm:$0xff]
    %v8243 = vld [vmem:[%s10 + $0xf00] sm:$0xff]
    %v8244 = vld [vmem:[%s10 + $0xf08] sm:$0xff]
    %v8245 = vld [vmem:[%s10 + $0xf10] sm:$0xff]
    %v8246 = vld [vmem:[%s10 + $0xf18] sm:$0xff]
    %v8247 = vld [vmem:[%s10 + $0xf20] sm:$0xff]
    %v8248 = vld [vmem:[%s10 + $0xf28] sm:$0xff]
    %v8249 = vld [vmem:[%s10 + $0xf30] sm:$0xff]
    %v8250 = vld [vmem:[%s10 + $0xf38] sm:$0xff]
    %v8251 = vld [vmem:[%s10 + $0xf40] sm:$0xff]
    %v8252 = vld [vmem:[%s10 + $0xf48] sm:$0xff]
    %v8253 = vld [vmem:[%s10 + $0xf50] sm:$0xff]
    %v8254 = vld [vmem:[%s10 + $0xf58] sm:$0xff]
    %v8255 = vld [vmem:[%s10 + $0xf60] sm:$0xff]
    %v8256 = vld [vmem:[%s10 + $0xf68] sm:$0xff]
    %v8257 = vld [vmem:[%s10 + $0xf70] sm:$0xff]
    %v8258 = vld [vmem:[%s10 + $0xf78] sm:$0xff]
    %v8259 = vld [vmem:[%s10 + $0xf80] sm:$0xff]
    %v8260 = vld [vmem:[%s10 + $0xf88] sm:$0xff]
    %v8261 = vld [vmem:[%s10 + $0xf90] sm:$0xff]
    %v8262 = vld [vmem:[%s10 + $0xf98] sm:$0xff]
    %v8263 = vld [vmem:[%s10 + $0xfa0] sm:$0xff]
    %v8264 = vld [vmem:[%s10 + $0xfa8] sm:$0xff]
    %v8265 = vld [vmem:[%s10 + $0xfb0] sm:$0xff]
    %v8266 = vld [vmem:[%s10 + $0xfb8] sm:$0xff]
    %v8267 = vld [vmem:[%s10 + $0xfc0] sm:$0xff]
    %v8268 = vld [vmem:[%s10 + $0xfc8] sm:$0xff]
    %v8269 = vld [vmem:[%s10 + $0xfd0] sm:$0xff]
    %v8270 = vld [vmem:[%s10 + $0xfd8] sm:$0xff]
    %v8271 = vld [vmem:[%s10 + $0xfe0] sm:$0xff]
    %v8272 = vld [vmem:[%s10 + $0xfe8] sm:$0xff]
    %v8273 = vld [vmem:[%s10 + $0xff0] sm:$0xff]
    %v8274 = vld [vmem:[%s10 + $0xff8] sm:$0xff]
    %v8275 = vld [vmem:[%s11] sm:$0xff]
    %v8277 = vlaneseq
    %v8278 = vshrl.u32 %v8277, 7
    %v8279 = vsub.s32 0, %v8278
    %v8280 = vrot.slane %v8275, %v8279
    %v8281 = vlaneseq
    %v8282 = vshrl.u32 %v8281, 7
    %v8283 = vsub.s32 1, %v8282
    %v8284 = vrot.slane %v8275, %v8283
    %v8285 = vlaneseq
    %v8286 = vshrl.u32 %v8285, 7
    %v8287 = vsub.s32 2, %v8286
    %v8288 = vrot.slane %v8275, %v8287
    %v8289 = vlaneseq
    %v8290 = vshrl.u32 %v8289, 7
    %v8291 = vsub.s32 3, %v8290
    %v8292 = vrot.slane %v8275, %v8291
    %v8293 = vlaneseq
    %v8294 = vshrl.u32 %v8293, 7
    %v8295 = vsub.s32 4, %v8294
    %v8296 = vrot.slane %v8275, %v8295
    %v8297 = vlaneseq
    %v8298 = vshrl.u32 %v8297, 7
    %v8299 = vsub.s32 5, %v8298
    %v8300 = vrot.slane %v8275, %v8299
    %v8301 = vlaneseq
    %v8302 = vshrl.u32 %v8301, 7
    %v8303 = vsub.s32 6, %v8302
    %v8304 = vrot.slane %v8275, %v8303
    %v8305 = vlaneseq
    %v8306 = vshrl.u32 %v8305, 7
    %v8307 = vsub.s32 7, %v8306
    %v8308 = vrot.slane %v8275, %v8307
    %v8829 = vunpack.c.l.b16 %v7763
    %v8830 = vunpack.c.h.b16 %v7763
    %v8831 = vunpack.c.l.b16 %v7764
    %v8832 = vunpack.c.h.b16 %v7764
    %v8833 = vunpack.c.l.b16 %v7765
    %v8834 = vunpack.c.h.b16 %v7765
    %v8835 = vunpack.c.l.b16 %v7766
    %v8836 = vunpack.c.h.b16 %v7766
    %v8837 = vunpack.c.l.b16 %v7767
    %v8838 = vunpack.c.h.b16 %v7767
    %v8839 = vunpack.c.l.b16 %v7768
    %v8840 = vunpack.c.h.b16 %v7768
    %v8841 = vunpack.c.l.b16 %v7769
    %v8842 = vunpack.c.h.b16 %v7769
    %v8843 = vunpack.c.l.b16 %v7770
    %v8844 = vunpack.c.h.b16 %v7770
    %v8845 = vunpack.c.l.b16 %v7771
    %v8846 = vunpack.c.h.b16 %v7771
    %v8847 = vunpack.c.l.b16 %v7772
    %v8848 = vunpack.c.h.b16 %v7772
    %v8849 = vunpack.c.l.b16 %v7773
    %v8850 = vunpack.c.h.b16 %v7773
    %v8851 = vunpack.c.l.b16 %v7774
    %v8852 = vunpack.c.h.b16 %v7774
    %v8853 = vunpack.c.l.b16 %v7775
    %v8854 = vunpack.c.h.b16 %v7775
    %v8855 = vunpack.c.l.b16 %v7776
    %v8856 = vunpack.c.h.b16 %v7776
    %v8857 = vunpack.c.l.b16 %v7777
    %v8858 = vunpack.c.h.b16 %v7777
    %v8859 = vunpack.c.l.b16 %v7778
    %v8860 = vunpack.c.h.b16 %v7778
    %v8861 = vunpack.c.l.b16 %v7779
    %v8862 = vunpack.c.h.b16 %v7779
    %v8863 = vunpack.c.l.b16 %v7780
    %v8864 = vunpack.c.h.b16 %v7780
    %v8865 = vunpack.c.l.b16 %v7781
    %v8866 = vunpack.c.h.b16 %v7781
    %v8867 = vunpack.c.l.b16 %v7782
    %v8868 = vunpack.c.h.b16 %v7782
    %v8869 = vunpack.c.l.b16 %v7783
    %v8870 = vunpack.c.h.b16 %v7783
    %v8871 = vunpack.c.l.b16 %v7784
    %v8872 = vunpack.c.h.b16 %v7784
    %v8873 = vunpack.c.l.b16 %v7785
    %v8874 = vunpack.c.h.b16 %v7785
    %v8875 = vunpack.c.l.b16 %v7786
    %v8876 = vunpack.c.h.b16 %v7786
    %v8877 = vunpack.c.l.b16 %v7787
    %v8878 = vunpack.c.h.b16 %v7787
    %v8879 = vunpack.c.l.b16 %v7788
    %v8880 = vunpack.c.h.b16 %v7788
    %v8881 = vunpack.c.l.b16 %v7789
    %v8882 = vunpack.c.h.b16 %v7789
    %v8883 = vunpack.c.l.b16 %v7790
    %v8884 = vunpack.c.h.b16 %v7790
    %v8885 = vunpack.c.l.b16 %v7791
    %v8886 = vunpack.c.h.b16 %v7791
    %v8887 = vunpack.c.l.b16 %v7792
    %v8888 = vunpack.c.h.b16 %v7792
    %v8889 = vunpack.c.l.b16 %v7793
    %v8890 = vunpack.c.h.b16 %v7793
    %v8891 = vunpack.c.l.b16 %v7794
    %v8892 = vunpack.c.h.b16 %v7794
    %v8893 = vunpack.c.l.b16 %v7795
    %v8894 = vunpack.c.h.b16 %v7795
    %v8895 = vunpack.c.l.b16 %v7796
    %v8896 = vunpack.c.h.b16 %v7796
    %v8897 = vunpack.c.l.b16 %v7797
    %v8898 = vunpack.c.h.b16 %v7797
    %v8899 = vunpack.c.l.b16 %v7798
    %v8900 = vunpack.c.h.b16 %v7798
    %v8901 = vunpack.c.l.b16 %v7799
    %v8902 = vunpack.c.h.b16 %v7799
    %v8903 = vunpack.c.l.b16 %v7800
    %v8904 = vunpack.c.h.b16 %v7800
    %v8905 = vunpack.c.l.b16 %v7801
    %v8906 = vunpack.c.h.b16 %v7801
    %v8907 = vunpack.c.l.b16 %v7802
    %v8908 = vunpack.c.h.b16 %v7802
    %v8909 = vunpack.c.l.b16 %v7803
    %v8910 = vunpack.c.h.b16 %v7803
    %v8911 = vunpack.c.l.b16 %v7804
    %v8912 = vunpack.c.h.b16 %v7804
    %v8913 = vunpack.c.l.b16 %v7805
    %v8914 = vunpack.c.h.b16 %v7805
    %v8915 = vunpack.c.l.b16 %v7806
    %v8916 = vunpack.c.h.b16 %v7806
    %v8917 = vunpack.c.l.b16 %v7807
    %v8918 = vunpack.c.h.b16 %v7807
    %v8919 = vunpack.c.l.b16 %v7808
    %v8920 = vunpack.c.h.b16 %v7808
    %v8921 = vunpack.c.l.b16 %v7809
    %v8922 = vunpack.c.h.b16 %v7809
    %v8923 = vunpack.c.l.b16 %v7810
    %v8924 = vunpack.c.h.b16 %v7810
    %v8925 = vunpack.c.l.b16 %v7811
    %v8926 = vunpack.c.h.b16 %v7811
    %v8927 = vunpack.c.l.b16 %v7812
    %v8928 = vunpack.c.h.b16 %v7812
    %v8929 = vunpack.c.l.b16 %v7813
    %v8930 = vunpack.c.h.b16 %v7813
    %v8931 = vunpack.c.l.b16 %v7814
    %v8932 = vunpack.c.h.b16 %v7814
    %v8933 = vunpack.c.l.b16 %v7815
    %v8934 = vunpack.c.h.b16 %v7815
    %v8935 = vunpack.c.l.b16 %v7816
    %v8936 = vunpack.c.h.b16 %v7816
    %v8937 = vunpack.c.l.b16 %v7817
    %v8938 = vunpack.c.h.b16 %v7817
    %v8939 = vunpack.c.l.b16 %v7818
    %v8940 = vunpack.c.h.b16 %v7818
    %v8941 = vunpack.c.l.b16 %v7819
    %v8942 = vunpack.c.h.b16 %v7819
    %v8943 = vunpack.c.l.b16 %v7820
    %v8944 = vunpack.c.h.b16 %v7820
    %v8945 = vunpack.c.l.b16 %v7821
    %v8946 = vunpack.c.h.b16 %v7821
    %v8947 = vunpack.c.l.b16 %v7822
    %v8948 = vunpack.c.h.b16 %v7822
    %v8949 = vunpack.c.l.b16 %v7823
    %v8950 = vunpack.c.h.b16 %v7823
    %v8951 = vunpack.c.l.b16 %v7824
    %v8952 = vunpack.c.h.b16 %v7824
    %v8953 = vunpack.c.l.b16 %v7825
    %v8954 = vunpack.c.h.b16 %v7825
    %v8955 = vunpack.c.l.b16 %v7826
    %v8956 = vunpack.c.h.b16 %v7826
    %v8957 = vunpack.c.l.b16 %v7827
    %v8958 = vunpack.c.h.b16 %v7827
    %v8959 = vunpack.c.l.b16 %v7828
    %v8960 = vunpack.c.h.b16 %v7828
    %v8961 = vunpack.c.l.b16 %v7829
    %v8962 = vunpack.c.h.b16 %v7829
    %v8963 = vunpack.c.l.b16 %v7830
    %v8964 = vunpack.c.h.b16 %v7830
    %v8965 = vunpack.c.l.b16 %v7831
    %v8966 = vunpack.c.h.b16 %v7831
    %v8967 = vunpack.c.l.b16 %v7832
    %v8968 = vunpack.c.h.b16 %v7832
    %v8969 = vunpack.c.l.b16 %v7833
    %v8970 = vunpack.c.h.b16 %v7833
    %v8971 = vunpack.c.l.b16 %v7834
    %v8972 = vunpack.c.h.b16 %v7834
    %v8973 = vunpack.c.l.b16 %v7835
    %v8974 = vunpack.c.h.b16 %v7835
    %v8975 = vunpack.c.l.b16 %v7836
    %v8976 = vunpack.c.h.b16 %v7836
    %v8977 = vunpack.c.l.b16 %v7837
    %v8978 = vunpack.c.h.b16 %v7837
    %v8979 = vunpack.c.l.b16 %v7838
    %v8980 = vunpack.c.h.b16 %v7838
    %v8981 = vunpack.c.l.b16 %v7839
    %v8982 = vunpack.c.h.b16 %v7839
    %v8983 = vunpack.c.l.b16 %v7840
    %v8984 = vunpack.c.h.b16 %v7840
    %v8985 = vunpack.c.l.b16 %v7841
    %v8986 = vunpack.c.h.b16 %v7841
    %v8987 = vunpack.c.l.b16 %v7842
    %v8988 = vunpack.c.h.b16 %v7842
    %v8989 = vunpack.c.l.b16 %v7843
    %v8990 = vunpack.c.h.b16 %v7843
    %v8991 = vunpack.c.l.b16 %v7844
    %v8992 = vunpack.c.h.b16 %v7844
    %v8993 = vunpack.c.l.b16 %v7845
    %v8994 = vunpack.c.h.b16 %v7845
    %v8995 = vunpack.c.l.b16 %v7846
    %v8996 = vunpack.c.h.b16 %v7846
    %v8997 = vunpack.c.l.b16 %v7847
    %v8998 = vunpack.c.h.b16 %v7847
    %v8999 = vunpack.c.l.b16 %v7848
    %v9000 = vunpack.c.h.b16 %v7848
    %v9001 = vunpack.c.l.b16 %v7849
    %v9002 = vunpack.c.h.b16 %v7849
    %v9003 = vunpack.c.l.b16 %v7850
    %v9004 = vunpack.c.h.b16 %v7850
    %v9005 = vunpack.c.l.b16 %v7851
    %v9006 = vunpack.c.h.b16 %v7851
    %v9007 = vunpack.c.l.b16 %v7852
    %v9008 = vunpack.c.h.b16 %v7852
    %v9009 = vunpack.c.l.b16 %v7853
    %v9010 = vunpack.c.h.b16 %v7853
    %v9011 = vunpack.c.l.b16 %v7854
    %v9012 = vunpack.c.h.b16 %v7854
    %v9013 = vunpack.c.l.b16 %v7855
    %v9014 = vunpack.c.h.b16 %v7855
    %v9015 = vunpack.c.l.b16 %v7856
    %v9016 = vunpack.c.h.b16 %v7856
    %v9017 = vunpack.c.l.b16 %v7857
    %v9018 = vunpack.c.h.b16 %v7857
    %v9019 = vunpack.c.l.b16 %v7858
    %v9020 = vunpack.c.h.b16 %v7858
    %v9021 = vunpack.c.l.b16 %v7859
    %v9022 = vunpack.c.h.b16 %v7859
    %v9023 = vunpack.c.l.b16 %v7860
    %v9024 = vunpack.c.h.b16 %v7860
    %v9025 = vunpack.c.l.b16 %v7861
    %v9026 = vunpack.c.h.b16 %v7861
    %v9027 = vunpack.c.l.b16 %v7862
    %v9028 = vunpack.c.h.b16 %v7862
    %v9029 = vunpack.c.l.b16 %v7863
    %v9030 = vunpack.c.h.b16 %v7863
    %v9031 = vunpack.c.l.b16 %v7864
    %v9032 = vunpack.c.h.b16 %v7864
    %v9033 = vunpack.c.l.b16 %v7865
    %v9034 = vunpack.c.h.b16 %v7865
    %v9035 = vunpack.c.l.b16 %v7866
    %v9036 = vunpack.c.h.b16 %v7866
    %v9037 = vunpack.c.l.b16 %v7867
    %v9038 = vunpack.c.h.b16 %v7867
    %v9039 = vunpack.c.l.b16 %v7868
    %v9040 = vunpack.c.h.b16 %v7868
    %v9041 = vunpack.c.l.b16 %v7869
    %v9042 = vunpack.c.h.b16 %v7869
    %v9043 = vunpack.c.l.b16 %v7870
    %v9044 = vunpack.c.h.b16 %v7870
    %v9045 = vunpack.c.l.b16 %v7871
    %v9046 = vunpack.c.h.b16 %v7871
    %v9047 = vunpack.c.l.b16 %v7872
    %v9048 = vunpack.c.h.b16 %v7872
    %v9049 = vunpack.c.l.b16 %v7873
    %v9050 = vunpack.c.h.b16 %v7873
    %v9051 = vunpack.c.l.b16 %v7874
    %v9052 = vunpack.c.h.b16 %v7874
    %v9053 = vunpack.c.l.b16 %v7875
    %v9054 = vunpack.c.h.b16 %v7875
    %v9055 = vunpack.c.l.b16 %v7876
    %v9056 = vunpack.c.h.b16 %v7876
    %v9057 = vunpack.c.l.b16 %v7877
    %v9058 = vunpack.c.h.b16 %v7877
    %v9059 = vunpack.c.l.b16 %v7878
    %v9060 = vunpack.c.h.b16 %v7878
    %v9061 = vunpack.c.l.b16 %v7879
    %v9062 = vunpack.c.h.b16 %v7879
    %v9063 = vunpack.c.l.b16 %v7880
    %v9064 = vunpack.c.h.b16 %v7880
    %v9065 = vunpack.c.l.b16 %v7881
    %v9066 = vunpack.c.h.b16 %v7881
    %v9067 = vunpack.c.l.b16 %v7882
    %v9068 = vunpack.c.h.b16 %v7882
    %v9069 = vunpack.c.l.b16 %v7883
    %v9070 = vunpack.c.h.b16 %v7883
    %v9071 = vunpack.c.l.b16 %v7884
    %v9072 = vunpack.c.h.b16 %v7884
    %v9073 = vunpack.c.l.b16 %v7885
    %v9074 = vunpack.c.h.b16 %v7885
    %v9075 = vunpack.c.l.b16 %v7886
    %v9076 = vunpack.c.h.b16 %v7886
    %v9077 = vunpack.c.l.b16 %v7887
    %v9078 = vunpack.c.h.b16 %v7887
    %v9079 = vunpack.c.l.b16 %v7888
    %v9080 = vunpack.c.h.b16 %v7888
    %v9081 = vunpack.c.l.b16 %v7889
    %v9082 = vunpack.c.h.b16 %v7889
    %v9083 = vunpack.c.l.b16 %v7890
    %v9084 = vunpack.c.h.b16 %v7890
    %v9085 = vunpack.c.l.b16 %v7891
    %v9086 = vunpack.c.h.b16 %v7891
    %v9087 = vunpack.c.l.b16 %v7892
    %v9088 = vunpack.c.h.b16 %v7892
    %v9089 = vunpack.c.l.b16 %v7893
    %v9090 = vunpack.c.h.b16 %v7893
    %v9091 = vunpack.c.l.b16 %v7894
    %v9092 = vunpack.c.h.b16 %v7894
    %v9093 = vunpack.c.l.b16 %v7895
    %v9094 = vunpack.c.h.b16 %v7895
    %v9095 = vunpack.c.l.b16 %v7896
    %v9096 = vunpack.c.h.b16 %v7896
    %v9097 = vunpack.c.l.b16 %v7897
    %v9098 = vunpack.c.h.b16 %v7897
    %v9099 = vunpack.c.l.b16 %v7898
    %v9100 = vunpack.c.h.b16 %v7898
    %v9101 = vunpack.c.l.b16 %v7899
    %v9102 = vunpack.c.h.b16 %v7899
    %v9103 = vunpack.c.l.b16 %v7900
    %v9104 = vunpack.c.h.b16 %v7900
    %v9105 = vunpack.c.l.b16 %v7901
    %v9106 = vunpack.c.h.b16 %v7901
    %v9107 = vunpack.c.l.b16 %v7902
    %v9108 = vunpack.c.h.b16 %v7902
    %v9109 = vunpack.c.l.b16 %v7903
    %v9110 = vunpack.c.h.b16 %v7903
    %v9111 = vunpack.c.l.b16 %v7904
    %v9112 = vunpack.c.h.b16 %v7904
    %v9113 = vunpack.c.l.b16 %v7905
    %v9114 = vunpack.c.h.b16 %v7905
    %v9115 = vunpack.c.l.b16 %v7906
    %v9116 = vunpack.c.h.b16 %v7906
    %v9117 = vunpack.c.l.b16 %v7907
    %v9118 = vunpack.c.h.b16 %v7907
    %v9119 = vunpack.c.l.b16 %v7908
    %v9120 = vunpack.c.h.b16 %v7908
    %v9121 = vunpack.c.l.b16 %v7909
    %v9122 = vunpack.c.h.b16 %v7909
    %v9123 = vunpack.c.l.b16 %v7910
    %v9124 = vunpack.c.h.b16 %v7910
    %v9125 = vunpack.c.l.b16 %v7911
    %v9126 = vunpack.c.h.b16 %v7911
    %v9127 = vunpack.c.l.b16 %v7912
    %v9128 = vunpack.c.h.b16 %v7912
    %v9129 = vunpack.c.l.b16 %v7913
    %v9130 = vunpack.c.h.b16 %v7913
    %v9131 = vunpack.c.l.b16 %v7914
    %v9132 = vunpack.c.h.b16 %v7914
    %v9133 = vunpack.c.l.b16 %v7915
    %v9134 = vunpack.c.h.b16 %v7915
    %v9135 = vunpack.c.l.b16 %v7916
    %v9136 = vunpack.c.h.b16 %v7916
    %v9137 = vunpack.c.l.b16 %v7917
    %v9138 = vunpack.c.h.b16 %v7917
    %v9139 = vunpack.c.l.b16 %v7918
    %v9140 = vunpack.c.h.b16 %v7918
    %v9141 = vunpack.c.l.b16 %v7919
    %v9142 = vunpack.c.h.b16 %v7919
    %v9143 = vunpack.c.l.b16 %v7920
    %v9144 = vunpack.c.h.b16 %v7920
    %v9145 = vunpack.c.l.b16 %v7921
    %v9146 = vunpack.c.h.b16 %v7921
    %v9147 = vunpack.c.l.b16 %v7922
    %v9148 = vunpack.c.h.b16 %v7922
    %v9149 = vunpack.c.l.b16 %v7923
    %v9150 = vunpack.c.h.b16 %v7923
    %v9151 = vunpack.c.l.b16 %v7924
    %v9152 = vunpack.c.h.b16 %v7924
    %v9153 = vunpack.c.l.b16 %v7925
    %v9154 = vunpack.c.h.b16 %v7925
    %v9155 = vunpack.c.l.b16 %v7926
    %v9156 = vunpack.c.h.b16 %v7926
    %v9157 = vunpack.c.l.b16 %v7927
    %v9158 = vunpack.c.h.b16 %v7927
    %v9159 = vunpack.c.l.b16 %v7928
    %v9160 = vunpack.c.h.b16 %v7928
    %v9161 = vunpack.c.l.b16 %v7929
    %v9162 = vunpack.c.h.b16 %v7929
    %v9163 = vunpack.c.l.b16 %v7930
    %v9164 = vunpack.c.h.b16 %v7930
    %v9165 = vunpack.c.l.b16 %v7931
    %v9166 = vunpack.c.h.b16 %v7931
    %v9167 = vunpack.c.l.b16 %v7932
    %v9168 = vunpack.c.h.b16 %v7932
    %v9169 = vunpack.c.l.b16 %v7933
    %v9170 = vunpack.c.h.b16 %v7933
    %v9171 = vunpack.c.l.b16 %v7934
    %v9172 = vunpack.c.h.b16 %v7934
    %v9173 = vunpack.c.l.b16 %v7935
    %v9174 = vunpack.c.h.b16 %v7935
    %v9175 = vunpack.c.l.b16 %v7936
    %v9176 = vunpack.c.h.b16 %v7936
    %v9177 = vunpack.c.l.b16 %v7937
    %v9178 = vunpack.c.h.b16 %v7937
    %v9179 = vunpack.c.l.b16 %v7938
    %v9180 = vunpack.c.h.b16 %v7938
    %v9181 = vunpack.c.l.b16 %v7939
    %v9182 = vunpack.c.h.b16 %v7939
    %v9183 = vunpack.c.l.b16 %v7940
    %v9184 = vunpack.c.h.b16 %v7940
    %v9185 = vunpack.c.l.b16 %v7941
    %v9186 = vunpack.c.h.b16 %v7941
    %v9187 = vunpack.c.l.b16 %v7942
    %v9188 = vunpack.c.h.b16 %v7942
    %v9189 = vunpack.c.l.b16 %v7943
    %v9190 = vunpack.c.h.b16 %v7943
    %v9191 = vunpack.c.l.b16 %v7944
    %v9192 = vunpack.c.h.b16 %v7944
    %v9193 = vunpack.c.l.b16 %v7945
    %v9194 = vunpack.c.h.b16 %v7945
    %v9195 = vunpack.c.l.b16 %v7946
    %v9196 = vunpack.c.h.b16 %v7946
    %v9197 = vunpack.c.l.b16 %v7947
    %v9198 = vunpack.c.h.b16 %v7947
    %v9199 = vunpack.c.l.b16 %v7948
    %v9200 = vunpack.c.h.b16 %v7948
    %v9201 = vunpack.c.l.b16 %v7949
    %v9202 = vunpack.c.h.b16 %v7949
    %v9203 = vunpack.c.l.b16 %v7950
    %v9204 = vunpack.c.h.b16 %v7950
    %v9205 = vunpack.c.l.b16 %v7951
    %v9206 = vunpack.c.h.b16 %v7951
    %v9207 = vunpack.c.l.b16 %v7952
    %v9208 = vunpack.c.h.b16 %v7952
    %v9209 = vunpack.c.l.b16 %v7953
    %v9210 = vunpack.c.h.b16 %v7953
    %v9211 = vunpack.c.l.b16 %v7954
    %v9212 = vunpack.c.h.b16 %v7954
    %v9213 = vunpack.c.l.b16 %v7955
    %v9214 = vunpack.c.h.b16 %v7955
    %v9215 = vunpack.c.l.b16 %v7956
    %v9216 = vunpack.c.h.b16 %v7956
    %v9217 = vunpack.c.l.b16 %v7957
    %v9218 = vunpack.c.h.b16 %v7957
    %v9219 = vunpack.c.l.b16 %v7958
    %v9220 = vunpack.c.h.b16 %v7958
    %v9221 = vunpack.c.l.b16 %v7959
    %v9222 = vunpack.c.h.b16 %v7959
    %v9223 = vunpack.c.l.b16 %v7960
    %v9224 = vunpack.c.h.b16 %v7960
    %v9225 = vunpack.c.l.b16 %v7961
    %v9226 = vunpack.c.h.b16 %v7961
    %v9227 = vunpack.c.l.b16 %v7962
    %v9228 = vunpack.c.h.b16 %v7962
    %v9229 = vunpack.c.l.b16 %v7963
    %v9230 = vunpack.c.h.b16 %v7963
    %v9231 = vunpack.c.l.b16 %v7964
    %v9232 = vunpack.c.h.b16 %v7964
    %v9233 = vunpack.c.l.b16 %v7965
    %v9234 = vunpack.c.h.b16 %v7965
    %v9235 = vunpack.c.l.b16 %v7966
    %v9236 = vunpack.c.h.b16 %v7966
    %v9237 = vunpack.c.l.b16 %v7967
    %v9238 = vunpack.c.h.b16 %v7967
    %v9239 = vunpack.c.l.b16 %v7968
    %v9240 = vunpack.c.h.b16 %v7968
    %v9241 = vunpack.c.l.b16 %v7969
    %v9242 = vunpack.c.h.b16 %v7969
    %v9243 = vunpack.c.l.b16 %v7970
    %v9244 = vunpack.c.h.b16 %v7970
    %v9245 = vunpack.c.l.b16 %v7971
    %v9246 = vunpack.c.h.b16 %v7971
    %v9247 = vunpack.c.l.b16 %v7972
    %v9248 = vunpack.c.h.b16 %v7972
    %v9249 = vunpack.c.l.b16 %v7973
    %v9250 = vunpack.c.h.b16 %v7973
    %v9251 = vunpack.c.l.b16 %v7974
    %v9252 = vunpack.c.h.b16 %v7974
    %v9253 = vunpack.c.l.b16 %v7975
    %v9254 = vunpack.c.h.b16 %v7975
    %v9255 = vunpack.c.l.b16 %v7976
    %v9256 = vunpack.c.h.b16 %v7976
    %v9257 = vunpack.c.l.b16 %v7977
    %v9258 = vunpack.c.h.b16 %v7977
    %v9259 = vunpack.c.l.b16 %v7978
    %v9260 = vunpack.c.h.b16 %v7978
    %v9261 = vunpack.c.l.b16 %v7979
    %v9262 = vunpack.c.h.b16 %v7979
    %v9263 = vunpack.c.l.b16 %v7980
    %v9264 = vunpack.c.h.b16 %v7980
    %v9265 = vunpack.c.l.b16 %v7981
    %v9266 = vunpack.c.h.b16 %v7981
    %v9267 = vunpack.c.l.b16 %v7982
    %v9268 = vunpack.c.h.b16 %v7982
    %v9269 = vunpack.c.l.b16 %v7983
    %v9270 = vunpack.c.h.b16 %v7983
    %v9271 = vunpack.c.l.b16 %v7984
    %v9272 = vunpack.c.h.b16 %v7984
    %v9273 = vunpack.c.l.b16 %v7985
    %v9274 = vunpack.c.h.b16 %v7985
    %v9275 = vunpack.c.l.b16 %v7986
    %v9276 = vunpack.c.h.b16 %v7986
    %v9277 = vunpack.c.l.b16 %v7987
    %v9278 = vunpack.c.h.b16 %v7987
    %v9279 = vunpack.c.l.b16 %v7988
    %v9280 = vunpack.c.h.b16 %v7988
    %v9281 = vunpack.c.l.b16 %v7989
    %v9282 = vunpack.c.h.b16 %v7989
    %v9283 = vunpack.c.l.b16 %v7990
    %v9284 = vunpack.c.h.b16 %v7990
    %v9285 = vunpack.c.l.b16 %v7991
    %v9286 = vunpack.c.h.b16 %v7991
    %v9287 = vunpack.c.l.b16 %v7992
    %v9288 = vunpack.c.h.b16 %v7992
    %v9289 = vunpack.c.l.b16 %v7993
    %v9290 = vunpack.c.h.b16 %v7993
    %v9291 = vunpack.c.l.b16 %v7994
    %v9292 = vunpack.c.h.b16 %v7994
    %v9293 = vunpack.c.l.b16 %v7995
    %v9294 = vunpack.c.h.b16 %v7995
    %v9295 = vunpack.c.l.b16 %v7996
    %v9296 = vunpack.c.h.b16 %v7996
    %v9297 = vunpack.c.l.b16 %v7997
    %v9298 = vunpack.c.h.b16 %v7997
    %v9299 = vunpack.c.l.b16 %v7998
    %v9300 = vunpack.c.h.b16 %v7998
    %v9301 = vunpack.c.l.b16 %v7999
    %v9302 = vunpack.c.h.b16 %v7999
    %v9303 = vunpack.c.l.b16 %v8000
    %v9304 = vunpack.c.h.b16 %v8000
    %v9305 = vunpack.c.l.b16 %v8001
    %v9306 = vunpack.c.h.b16 %v8001
    %v9307 = vunpack.c.l.b16 %v8002
    %v9308 = vunpack.c.h.b16 %v8002
    %v9309 = vunpack.c.l.b16 %v8003
    %v9310 = vunpack.c.h.b16 %v8003
    %v9311 = vunpack.c.l.b16 %v8004
    %v9312 = vunpack.c.h.b16 %v8004
    %v9313 = vunpack.c.l.b16 %v8005
    %v9314 = vunpack.c.h.b16 %v8005
    %v9315 = vunpack.c.l.b16 %v8006
    %v9316 = vunpack.c.h.b16 %v8006
    %v9317 = vunpack.c.l.b16 %v8007
    %v9318 = vunpack.c.h.b16 %v8007
    %v9319 = vunpack.c.l.b16 %v8008
    %v9320 = vunpack.c.h.b16 %v8008
    %v9321 = vunpack.c.l.b16 %v8009
    %v9322 = vunpack.c.h.b16 %v8009
    %v9323 = vunpack.c.l.b16 %v8010
    %v9324 = vunpack.c.h.b16 %v8010
    %v9325 = vunpack.c.l.b16 %v8011
    %v9326 = vunpack.c.h.b16 %v8011
    %v9327 = vunpack.c.l.b16 %v8012
    %v9328 = vunpack.c.h.b16 %v8012
    %v9329 = vunpack.c.l.b16 %v8013
    %v9330 = vunpack.c.h.b16 %v8013
    %v9331 = vunpack.c.l.b16 %v8014
    %v9332 = vunpack.c.h.b16 %v8014
    %v9333 = vunpack.c.l.b16 %v8015
    %v9334 = vunpack.c.h.b16 %v8015
    %v9335 = vunpack.c.l.b16 %v8016
    %v9336 = vunpack.c.h.b16 %v8016
    %v9337 = vunpack.c.l.b16 %v8017
    %v9338 = vunpack.c.h.b16 %v8017
    %v9339 = vunpack.c.l.b16 %v8018
    %v9340 = vunpack.c.h.b16 %v8018
    %v9341 = vunpack.c.l.b16 %v8019
    %v9342 = vunpack.c.h.b16 %v8019
    %v9343 = vunpack.c.l.b16 %v8020
    %v9344 = vunpack.c.h.b16 %v8020
    %v9345 = vunpack.c.l.b16 %v8021
    %v9346 = vunpack.c.h.b16 %v8021
    %v9347 = vunpack.c.l.b16 %v8022
    %v9348 = vunpack.c.h.b16 %v8022
    %v9349 = vunpack.c.l.b16 %v8023
    %v9350 = vunpack.c.h.b16 %v8023
    %v9351 = vunpack.c.l.b16 %v8024
    %v9352 = vunpack.c.h.b16 %v8024
    %v9353 = vunpack.c.l.b16 %v8025
    %v9354 = vunpack.c.h.b16 %v8025
    %v9355 = vunpack.c.l.b16 %v8026
    %v9356 = vunpack.c.h.b16 %v8026
    %v9357 = vunpack.c.l.b16 %v8027
    %v9358 = vunpack.c.h.b16 %v8027
    %v9359 = vunpack.c.l.b16 %v8028
    %v9360 = vunpack.c.h.b16 %v8028
    %v9361 = vunpack.c.l.b16 %v8029
    %v9362 = vunpack.c.h.b16 %v8029
    %v9363 = vunpack.c.l.b16 %v8030
    %v9364 = vunpack.c.h.b16 %v8030
    %v9365 = vunpack.c.l.b16 %v8031
    %v9366 = vunpack.c.h.b16 %v8031
    %v9367 = vunpack.c.l.b16 %v8032
    %v9368 = vunpack.c.h.b16 %v8032
    %v9369 = vunpack.c.l.b16 %v8033
    %v9370 = vunpack.c.h.b16 %v8033
    %v9371 = vunpack.c.l.b16 %v8034
    %v9372 = vunpack.c.h.b16 %v8034
    %v9373 = vunpack.c.l.b16 %v8035
    %v9374 = vunpack.c.h.b16 %v8035
    %v9375 = vunpack.c.l.b16 %v8036
    %v9376 = vunpack.c.h.b16 %v8036
    %v9377 = vunpack.c.l.b16 %v8037
    %v9378 = vunpack.c.h.b16 %v8037
    %v9379 = vunpack.c.l.b16 %v8038
    %v9380 = vunpack.c.h.b16 %v8038
    %v9381 = vunpack.c.l.b16 %v8039
    %v9382 = vunpack.c.h.b16 %v8039
    %v9383 = vunpack.c.l.b16 %v8040
    %v9384 = vunpack.c.h.b16 %v8040
    %v9385 = vunpack.c.l.b16 %v8041
    %v9386 = vunpack.c.h.b16 %v8041
    %v9387 = vunpack.c.l.b16 %v8042
    %v9388 = vunpack.c.h.b16 %v8042
    %v9389 = vunpack.c.l.b16 %v8043
    %v9390 = vunpack.c.h.b16 %v8043
    %v9391 = vunpack.c.l.b16 %v8044
    %v9392 = vunpack.c.h.b16 %v8044
    %v9393 = vunpack.c.l.b16 %v8045
    %v9394 = vunpack.c.h.b16 %v8045
    %v9395 = vunpack.c.l.b16 %v8046
    %v9396 = vunpack.c.h.b16 %v8046
    %v9397 = vunpack.c.l.b16 %v8047
    %v9398 = vunpack.c.h.b16 %v8047
    %v9399 = vunpack.c.l.b16 %v8048
    %v9400 = vunpack.c.h.b16 %v8048
    %v9401 = vunpack.c.l.b16 %v8049
    %v9402 = vunpack.c.h.b16 %v8049
    %v9403 = vunpack.c.l.b16 %v8050
    %v9404 = vunpack.c.h.b16 %v8050
    %v9405 = vunpack.c.l.b16 %v8051
    %v9406 = vunpack.c.h.b16 %v8051
    %v9407 = vunpack.c.l.b16 %v8052
    %v9408 = vunpack.c.h.b16 %v8052
    %v9409 = vunpack.c.l.b16 %v8053
    %v9410 = vunpack.c.h.b16 %v8053
    %v9411 = vunpack.c.l.b16 %v8054
    %v9412 = vunpack.c.h.b16 %v8054
    %v9413 = vunpack.c.l.b16 %v8055
    %v9414 = vunpack.c.h.b16 %v8055
    %v9415 = vunpack.c.l.b16 %v8056
    %v9416 = vunpack.c.h.b16 %v8056
    %v9417 = vunpack.c.l.b16 %v8057
    %v9418 = vunpack.c.h.b16 %v8057
    %v9419 = vunpack.c.l.b16 %v8058
    %v9420 = vunpack.c.h.b16 %v8058
    %v9421 = vunpack.c.l.b16 %v8059
    %v9422 = vunpack.c.h.b16 %v8059
    %v9423 = vunpack.c.l.b16 %v8060
    %v9424 = vunpack.c.h.b16 %v8060
    %v9425 = vunpack.c.l.b16 %v8061
    %v9426 = vunpack.c.h.b16 %v8061
    %v9427 = vunpack.c.l.b16 %v8062
    %v9428 = vunpack.c.h.b16 %v8062
    %v9429 = vunpack.c.l.b16 %v8063
    %v9430 = vunpack.c.h.b16 %v8063
    %v9431 = vunpack.c.l.b16 %v8064
    %v9432 = vunpack.c.h.b16 %v8064
    %v9433 = vunpack.c.l.b16 %v8065
    %v9434 = vunpack.c.h.b16 %v8065
    %v9435 = vunpack.c.l.b16 %v8066
    %v9436 = vunpack.c.h.b16 %v8066
    %v9437 = vunpack.c.l.b16 %v8067
    %v9438 = vunpack.c.h.b16 %v8067
    %v9439 = vunpack.c.l.b16 %v8068
    %v9440 = vunpack.c.h.b16 %v8068
    %v9441 = vunpack.c.l.b16 %v8069
    %v9442 = vunpack.c.h.b16 %v8069
    %v9443 = vunpack.c.l.b16 %v8070
    %v9444 = vunpack.c.h.b16 %v8070
    %v9445 = vunpack.c.l.b16 %v8071
    %v9446 = vunpack.c.h.b16 %v8071
    %v9447 = vunpack.c.l.b16 %v8072
    %v9448 = vunpack.c.h.b16 %v8072
    %v9449 = vunpack.c.l.b16 %v8073
    %v9450 = vunpack.c.h.b16 %v8073
    %v9451 = vunpack.c.l.b16 %v8074
    %v9452 = vunpack.c.h.b16 %v8074
    %v9453 = vunpack.c.l.b16 %v8075
    %v9454 = vunpack.c.h.b16 %v8075
    %v9455 = vunpack.c.l.b16 %v8076
    %v9456 = vunpack.c.h.b16 %v8076
    %v9457 = vunpack.c.l.b16 %v8077
    %v9458 = vunpack.c.h.b16 %v8077
    %v9459 = vunpack.c.l.b16 %v8078
    %v9460 = vunpack.c.h.b16 %v8078
    %v9461 = vunpack.c.l.b16 %v8079
    %v9462 = vunpack.c.h.b16 %v8079
    %v9463 = vunpack.c.l.b16 %v8080
    %v9464 = vunpack.c.h.b16 %v8080
    %v9465 = vunpack.c.l.b16 %v8081
    %v9466 = vunpack.c.h.b16 %v8081
    %v9467 = vunpack.c.l.b16 %v8082
    %v9468 = vunpack.c.h.b16 %v8082
    %v9469 = vunpack.c.l.b16 %v8083
    %v9470 = vunpack.c.h.b16 %v8083
    %v9471 = vunpack.c.l.b16 %v8084
    %v9472 = vunpack.c.h.b16 %v8084
    %v9473 = vunpack.c.l.b16 %v8085
    %v9474 = vunpack.c.h.b16 %v8085
    %v9475 = vunpack.c.l.b16 %v8086
    %v9476 = vunpack.c.h.b16 %v8086
    %v9477 = vunpack.c.l.b16 %v8087
    %v9478 = vunpack.c.h.b16 %v8087
    %v9479 = vunpack.c.l.b16 %v8088
    %v9480 = vunpack.c.h.b16 %v8088
    %v9481 = vunpack.c.l.b16 %v8089
    %v9482 = vunpack.c.h.b16 %v8089
    %v9483 = vunpack.c.l.b16 %v8090
    %v9484 = vunpack.c.h.b16 %v8090
    %v9485 = vunpack.c.l.b16 %v8091
    %v9486 = vunpack.c.h.b16 %v8091
    %v9487 = vunpack.c.l.b16 %v8092
    %v9488 = vunpack.c.h.b16 %v8092
    %v9489 = vunpack.c.l.b16 %v8093
    %v9490 = vunpack.c.h.b16 %v8093
    %v9491 = vunpack.c.l.b16 %v8094
    %v9492 = vunpack.c.h.b16 %v8094
    %v9493 = vunpack.c.l.b16 %v8095
    %v9494 = vunpack.c.h.b16 %v8095
    %v9495 = vunpack.c.l.b16 %v8096
    %v9496 = vunpack.c.h.b16 %v8096
    %v9497 = vunpack.c.l.b16 %v8097
    %v9498 = vunpack.c.h.b16 %v8097
    %v9499 = vunpack.c.l.b16 %v8098
    %v9500 = vunpack.c.h.b16 %v8098
    %v9501 = vunpack.c.l.b16 %v8099
    %v9502 = vunpack.c.h.b16 %v8099
    %v9503 = vunpack.c.l.b16 %v8100
    %v9504 = vunpack.c.h.b16 %v8100
    %v9505 = vunpack.c.l.b16 %v8101
    %v9506 = vunpack.c.h.b16 %v8101
    %v9507 = vunpack.c.l.b16 %v8102
    %v9508 = vunpack.c.h.b16 %v8102
    %v9509 = vunpack.c.l.b16 %v8103
    %v9510 = vunpack.c.h.b16 %v8103
    %v9511 = vunpack.c.l.b16 %v8104
    %v9512 = vunpack.c.h.b16 %v8104
    %v9513 = vunpack.c.l.b16 %v8105
    %v9514 = vunpack.c.h.b16 %v8105
    %v9515 = vunpack.c.l.b16 %v8106
    %v9516 = vunpack.c.h.b16 %v8106
    %v9517 = vunpack.c.l.b16 %v8107
    %v9518 = vunpack.c.h.b16 %v8107
    %v9519 = vunpack.c.l.b16 %v8108
    %v9520 = vunpack.c.h.b16 %v8108
    %v9521 = vunpack.c.l.b16 %v8109
    %v9522 = vunpack.c.h.b16 %v8109
    %v9523 = vunpack.c.l.b16 %v8110
    %v9524 = vunpack.c.h.b16 %v8110
    %v9525 = vunpack.c.l.b16 %v8111
    %v9526 = vunpack.c.h.b16 %v8111
    %v9527 = vunpack.c.l.b16 %v8112
    %v9528 = vunpack.c.h.b16 %v8112
    %v9529 = vunpack.c.l.b16 %v8113
    %v9530 = vunpack.c.h.b16 %v8113
    %v9531 = vunpack.c.l.b16 %v8114
    %v9532 = vunpack.c.h.b16 %v8114
    %v9533 = vunpack.c.l.b16 %v8115
    %v9534 = vunpack.c.h.b16 %v8115
    %v9535 = vunpack.c.l.b16 %v8116
    %v9536 = vunpack.c.h.b16 %v8116
    %v9537 = vunpack.c.l.b16 %v8117
    %v9538 = vunpack.c.h.b16 %v8117
    %v9539 = vunpack.c.l.b16 %v8118
    %v9540 = vunpack.c.h.b16 %v8118
    %v9541 = vunpack.c.l.b16 %v8119
    %v9542 = vunpack.c.h.b16 %v8119
    %v9543 = vunpack.c.l.b16 %v8120
    %v9544 = vunpack.c.h.b16 %v8120
    %v9545 = vunpack.c.l.b16 %v8121
    %v9546 = vunpack.c.h.b16 %v8121
    %v9547 = vunpack.c.l.b16 %v8122
    %v9548 = vunpack.c.h.b16 %v8122
    %v9549 = vunpack.c.l.b16 %v8123
    %v9550 = vunpack.c.h.b16 %v8123
    %v9551 = vunpack.c.l.b16 %v8124
    %v9552 = vunpack.c.h.b16 %v8124
    %v9553 = vunpack.c.l.b16 %v8125
    %v9554 = vunpack.c.h.b16 %v8125
    %v9555 = vunpack.c.l.b16 %v8126
    %v9556 = vunpack.c.h.b16 %v8126
    %v9557 = vunpack.c.l.b16 %v8127
    %v9558 = vunpack.c.h.b16 %v8127
    %v9559 = vunpack.c.l.b16 %v8128
    %v9560 = vunpack.c.h.b16 %v8128
    %v9561 = vunpack.c.l.b16 %v8129
    %v9562 = vunpack.c.h.b16 %v8129
    %v9563 = vunpack.c.l.b16 %v8130
    %v9564 = vunpack.c.h.b16 %v8130
    %v9565 = vunpack.c.l.b16 %v8131
    %v9566 = vunpack.c.h.b16 %v8131
    %v9567 = vunpack.c.l.b16 %v8132
    %v9568 = vunpack.c.h.b16 %v8132
    %v9569 = vunpack.c.l.b16 %v8133
    %v9570 = vunpack.c.h.b16 %v8133
    %v9571 = vunpack.c.l.b16 %v8134
    %v9572 = vunpack.c.h.b16 %v8134
    %v9573 = vunpack.c.l.b16 %v8135
    %v9574 = vunpack.c.h.b16 %v8135
    %v9575 = vunpack.c.l.b16 %v8136
    %v9576 = vunpack.c.h.b16 %v8136
    %v9577 = vunpack.c.l.b16 %v8137
    %v9578 = vunpack.c.h.b16 %v8137
    %v9579 = vunpack.c.l.b16 %v8138
    %v9580 = vunpack.c.h.b16 %v8138
    %v9581 = vunpack.c.l.b16 %v8139
    %v9582 = vunpack.c.h.b16 %v8139
    %v9583 = vunpack.c.l.b16 %v8140
    %v9584 = vunpack.c.h.b16 %v8140
    %v9585 = vunpack.c.l.b16 %v8141
    %v9586 = vunpack.c.h.b16 %v8141
    %v9587 = vunpack.c.l.b16 %v8142
    %v9588 = vunpack.c.h.b16 %v8142
    %v9589 = vunpack.c.l.b16 %v8143
    %v9590 = vunpack.c.h.b16 %v8143
    %v9591 = vunpack.c.l.b16 %v8144
    %v9592 = vunpack.c.h.b16 %v8144
    %v9593 = vunpack.c.l.b16 %v8145
    %v9594 = vunpack.c.h.b16 %v8145
    %v9595 = vunpack.c.l.b16 %v8146
    %v9596 = vunpack.c.h.b16 %v8146
    %v9597 = vunpack.c.l.b16 %v8147
    %v9598 = vunpack.c.h.b16 %v8147
    %v9599 = vunpack.c.l.b16 %v8148
    %v9600 = vunpack.c.h.b16 %v8148
    %v9601 = vunpack.c.l.b16 %v8149
    %v9602 = vunpack.c.h.b16 %v8149
    %v9603 = vunpack.c.l.b16 %v8150
    %v9604 = vunpack.c.h.b16 %v8150
    %v9605 = vunpack.c.l.b16 %v8151
    %v9606 = vunpack.c.h.b16 %v8151
    %v9607 = vunpack.c.l.b16 %v8152
    %v9608 = vunpack.c.h.b16 %v8152
    %v9609 = vunpack.c.l.b16 %v8153
    %v9610 = vunpack.c.h.b16 %v8153
    %v9611 = vunpack.c.l.b16 %v8154
    %v9612 = vunpack.c.h.b16 %v8154
    %v9613 = vunpack.c.l.b16 %v8155
    %v9614 = vunpack.c.h.b16 %v8155
    %v9615 = vunpack.c.l.b16 %v8156
    %v9616 = vunpack.c.h.b16 %v8156
    %v9617 = vunpack.c.l.b16 %v8157
    %v9618 = vunpack.c.h.b16 %v8157
    %v9619 = vunpack.c.l.b16 %v8158
    %v9620 = vunpack.c.h.b16 %v8158
    %v9621 = vunpack.c.l.b16 %v8159
    %v9622 = vunpack.c.h.b16 %v8159
    %v9623 = vunpack.c.l.b16 %v8160
    %v9624 = vunpack.c.h.b16 %v8160
    %v9625 = vunpack.c.l.b16 %v8161
    %v9626 = vunpack.c.h.b16 %v8161
    %v9627 = vunpack.c.l.b16 %v8162
    %v9628 = vunpack.c.h.b16 %v8162
    %v9629 = vunpack.c.l.b16 %v8163
    %v9630 = vunpack.c.h.b16 %v8163
    %v9631 = vunpack.c.l.b16 %v8164
    %v9632 = vunpack.c.h.b16 %v8164
    %v9633 = vunpack.c.l.b16 %v8165
    %v9634 = vunpack.c.h.b16 %v8165
    %v9635 = vunpack.c.l.b16 %v8166
    %v9636 = vunpack.c.h.b16 %v8166
    %v9637 = vunpack.c.l.b16 %v8167
    %v9638 = vunpack.c.h.b16 %v8167
    %v9639 = vunpack.c.l.b16 %v8168
    %v9640 = vunpack.c.h.b16 %v8168
    %v9641 = vunpack.c.l.b16 %v8169
    %v9642 = vunpack.c.h.b16 %v8169
    %v9643 = vunpack.c.l.b16 %v8170
    %v9644 = vunpack.c.h.b16 %v8170
    %v9645 = vunpack.c.l.b16 %v8171
    %v9646 = vunpack.c.h.b16 %v8171
    %v9647 = vunpack.c.l.b16 %v8172
    %v9648 = vunpack.c.h.b16 %v8172
    %v9649 = vunpack.c.l.b16 %v8173
    %v9650 = vunpack.c.h.b16 %v8173
    %v9651 = vunpack.c.l.b16 %v8174
    %v9652 = vunpack.c.h.b16 %v8174
    %v9653 = vunpack.c.l.b16 %v8175
    %v9654 = vunpack.c.h.b16 %v8175
    %v9655 = vunpack.c.l.b16 %v8176
    %v9656 = vunpack.c.h.b16 %v8176
    %v9657 = vunpack.c.l.b16 %v8177
    %v9658 = vunpack.c.h.b16 %v8177
    %v9659 = vunpack.c.l.b16 %v8178
    %v9660 = vunpack.c.h.b16 %v8178
    %v9661 = vunpack.c.l.b16 %v8179
    %v9662 = vunpack.c.h.b16 %v8179
    %v9663 = vunpack.c.l.b16 %v8180
    %v9664 = vunpack.c.h.b16 %v8180
    %v9665 = vunpack.c.l.b16 %v8181
    %v9666 = vunpack.c.h.b16 %v8181
    %v9667 = vunpack.c.l.b16 %v8182
    %v9668 = vunpack.c.h.b16 %v8182
    %v9669 = vunpack.c.l.b16 %v8183
    %v9670 = vunpack.c.h.b16 %v8183
    %v9671 = vunpack.c.l.b16 %v8184
    %v9672 = vunpack.c.h.b16 %v8184
    %v9673 = vunpack.c.l.b16 %v8185
    %v9674 = vunpack.c.h.b16 %v8185
    %v9675 = vunpack.c.l.b16 %v8186
    %v9676 = vunpack.c.h.b16 %v8186
    %v9677 = vunpack.c.l.b16 %v8187
    %v9678 = vunpack.c.h.b16 %v8187
    %v9679 = vunpack.c.l.b16 %v8188
    %v9680 = vunpack.c.h.b16 %v8188
    %v9681 = vunpack.c.l.b16 %v8189
    %v9682 = vunpack.c.h.b16 %v8189
    %v9683 = vunpack.c.l.b16 %v8190
    %v9684 = vunpack.c.h.b16 %v8190
    %v9685 = vunpack.c.l.b16 %v8191
    %v9686 = vunpack.c.h.b16 %v8191
    %v9687 = vunpack.c.l.b16 %v8192
    %v9688 = vunpack.c.h.b16 %v8192
    %v9689 = vunpack.c.l.b16 %v8193
    %v9690 = vunpack.c.h.b16 %v8193
    %v9691 = vunpack.c.l.b16 %v8194
    %v9692 = vunpack.c.h.b16 %v8194
    %v9693 = vunpack.c.l.b16 %v8195
    %v9694 = vunpack.c.h.b16 %v8195
    %v9695 = vunpack.c.l.b16 %v8196
    %v9696 = vunpack.c.h.b16 %v8196
    %v9697 = vunpack.c.l.b16 %v8197
    %v9698 = vunpack.c.h.b16 %v8197
    %v9699 = vunpack.c.l.b16 %v8198
    %v9700 = vunpack.c.h.b16 %v8198
    %v9701 = vunpack.c.l.b16 %v8199
    %v9702 = vunpack.c.h.b16 %v8199
    %v9703 = vunpack.c.l.b16 %v8200
    %v9704 = vunpack.c.h.b16 %v8200
    %v9705 = vunpack.c.l.b16 %v8201
    %v9706 = vunpack.c.h.b16 %v8201
    %v9707 = vunpack.c.l.b16 %v8202
    %v9708 = vunpack.c.h.b16 %v8202
    %v9709 = vunpack.c.l.b16 %v8203
    %v9710 = vunpack.c.h.b16 %v8203
    %v9711 = vunpack.c.l.b16 %v8204
    %v9712 = vunpack.c.h.b16 %v8204
    %v9713 = vunpack.c.l.b16 %v8205
    %v9714 = vunpack.c.h.b16 %v8205
    %v9715 = vunpack.c.l.b16 %v8206
    %v9716 = vunpack.c.h.b16 %v8206
    %v9717 = vunpack.c.l.b16 %v8207
    %v9718 = vunpack.c.h.b16 %v8207
    %v9719 = vunpack.c.l.b16 %v8208
    %v9720 = vunpack.c.h.b16 %v8208
    %v9721 = vunpack.c.l.b16 %v8209
    %v9722 = vunpack.c.h.b16 %v8209
    %v9723 = vunpack.c.l.b16 %v8210
    %v9724 = vunpack.c.h.b16 %v8210
    %v9725 = vunpack.c.l.b16 %v8211
    %v9726 = vunpack.c.h.b16 %v8211
    %v9727 = vunpack.c.l.b16 %v8212
    %v9728 = vunpack.c.h.b16 %v8212
    %v9729 = vunpack.c.l.b16 %v8213
    %v9730 = vunpack.c.h.b16 %v8213
    %v9731 = vunpack.c.l.b16 %v8214
    %v9732 = vunpack.c.h.b16 %v8214
    %v9733 = vunpack.c.l.b16 %v8215
    %v9734 = vunpack.c.h.b16 %v8215
    %v9735 = vunpack.c.l.b16 %v8216
    %v9736 = vunpack.c.h.b16 %v8216
    %v9737 = vunpack.c.l.b16 %v8217
    %v9738 = vunpack.c.h.b16 %v8217
    %v9739 = vunpack.c.l.b16 %v8218
    %v9740 = vunpack.c.h.b16 %v8218
    %v9741 = vunpack.c.l.b16 %v8219
    %v9742 = vunpack.c.h.b16 %v8219
    %v9743 = vunpack.c.l.b16 %v8220
    %v9744 = vunpack.c.h.b16 %v8220
    %v9745 = vunpack.c.l.b16 %v8221
    %v9746 = vunpack.c.h.b16 %v8221
    %v9747 = vunpack.c.l.b16 %v8222
    %v9748 = vunpack.c.h.b16 %v8222
    %v9749 = vunpack.c.l.b16 %v8223
    %v9750 = vunpack.c.h.b16 %v8223
    %v9751 = vunpack.c.l.b16 %v8224
    %v9752 = vunpack.c.h.b16 %v8224
    %v9753 = vunpack.c.l.b16 %v8225
    %v9754 = vunpack.c.h.b16 %v8225
    %v9755 = vunpack.c.l.b16 %v8226
    %v9756 = vunpack.c.h.b16 %v8226
    %v9757 = vunpack.c.l.b16 %v8227
    %v9758 = vunpack.c.h.b16 %v8227
    %v9759 = vunpack.c.l.b16 %v8228
    %v9760 = vunpack.c.h.b16 %v8228
    %v9761 = vunpack.c.l.b16 %v8229
    %v9762 = vunpack.c.h.b16 %v8229
    %v9763 = vunpack.c.l.b16 %v8230
    %v9764 = vunpack.c.h.b16 %v8230
    %v9765 = vunpack.c.l.b16 %v8231
    %v9766 = vunpack.c.h.b16 %v8231
    %v9767 = vunpack.c.l.b16 %v8232
    %v9768 = vunpack.c.h.b16 %v8232
    %v9769 = vunpack.c.l.b16 %v8233
    %v9770 = vunpack.c.h.b16 %v8233
    %v9771 = vunpack.c.l.b16 %v8234
    %v9772 = vunpack.c.h.b16 %v8234
    %v9773 = vunpack.c.l.b16 %v8235
    %v9774 = vunpack.c.h.b16 %v8235
    %v9775 = vunpack.c.l.b16 %v8236
    %v9776 = vunpack.c.h.b16 %v8236
    %v9777 = vunpack.c.l.b16 %v8237
    %v9778 = vunpack.c.h.b16 %v8237
    %v9779 = vunpack.c.l.b16 %v8238
    %v9780 = vunpack.c.h.b16 %v8238
    %v9781 = vunpack.c.l.b16 %v8239
    %v9782 = vunpack.c.h.b16 %v8239
    %v9783 = vunpack.c.l.b16 %v8240
    %v9784 = vunpack.c.h.b16 %v8240
    %v9785 = vunpack.c.l.b16 %v8241
    %v9786 = vunpack.c.h.b16 %v8241
    %v9787 = vunpack.c.l.b16 %v8242
    %v9788 = vunpack.c.h.b16 %v8242
    %v9789 = vunpack.c.l.b16 %v8243
    %v9790 = vunpack.c.h.b16 %v8243
    %v9791 = vunpack.c.l.b16 %v8244
    %v9792 = vunpack.c.h.b16 %v8244
    %v9793 = vunpack.c.l.b16 %v8245
    %v9794 = vunpack.c.h.b16 %v8245
    %v9795 = vunpack.c.l.b16 %v8246
    %v9796 = vunpack.c.h.b16 %v8246
    %v9797 = vunpack.c.l.b16 %v8247
    %v9798 = vunpack.c.h.b16 %v8247
    %v9799 = vunpack.c.l.b16 %v8248
    %v9800 = vunpack.c.h.b16 %v8248
    %v9801 = vunpack.c.l.b16 %v8249
    %v9802 = vunpack.c.h.b16 %v8249
    %v9803 = vunpack.c.l.b16 %v8250
    %v9804 = vunpack.c.h.b16 %v8250
    %v9805 = vunpack.c.l.b16 %v8251
    %v9806 = vunpack.c.h.b16 %v8251
    %v9807 = vunpack.c.l.b16 %v8252
    %v9808 = vunpack.c.h.b16 %v8252
    %v9809 = vunpack.c.l.b16 %v8253
    %v9810 = vunpack.c.h.b16 %v8253
    %v9811 = vunpack.c.l.b16 %v8254
    %v9812 = vunpack.c.h.b16 %v8254
    %v9813 = vunpack.c.l.b16 %v8255
    %v9814 = vunpack.c.h.b16 %v8255
    %v9815 = vunpack.c.l.b16 %v8256
    %v9816 = vunpack.c.h.b16 %v8256
    %v9817 = vunpack.c.l.b16 %v8257
    %v9818 = vunpack.c.h.b16 %v8257
    %v9819 = vunpack.c.l.b16 %v8258
    %v9820 = vunpack.c.h.b16 %v8258
    %v9821 = vunpack.c.l.b16 %v8259
    %v9822 = vunpack.c.h.b16 %v8259
    %v9823 = vunpack.c.l.b16 %v8260
    %v9824 = vunpack.c.h.b16 %v8260
    %v9825 = vunpack.c.l.b16 %v8261
    %v9826 = vunpack.c.h.b16 %v8261
    %v9827 = vunpack.c.l.b16 %v8262
    %v9828 = vunpack.c.h.b16 %v8262
    %v9829 = vunpack.c.l.b16 %v8263
    %v9830 = vunpack.c.h.b16 %v8263
    %v9831 = vunpack.c.l.b16 %v8264
    %v9832 = vunpack.c.h.b16 %v8264
    %v9833 = vunpack.c.l.b16 %v8265
    %v9834 = vunpack.c.h.b16 %v8265
    %v9835 = vunpack.c.l.b16 %v8266
    %v9836 = vunpack.c.h.b16 %v8266
    %v9837 = vunpack.c.l.b16 %v8267
    %v9838 = vunpack.c.h.b16 %v8267
    %v9839 = vunpack.c.l.b16 %v8268
    %v9840 = vunpack.c.h.b16 %v8268
    %v9841 = vunpack.c.l.b16 %v8269
    %v9842 = vunpack.c.h.b16 %v8269
    %v9843 = vunpack.c.l.b16 %v8270
    %v9844 = vunpack.c.h.b16 %v8270
    %v9845 = vunpack.c.l.b16 %v8271
    %v9846 = vunpack.c.h.b16 %v8271
    %v9847 = vunpack.c.l.b16 %v8272
    %v9848 = vunpack.c.h.b16 %v8272
    %v9849 = vunpack.c.l.b16 %v8273
    %v9850 = vunpack.c.h.b16 %v8273
    %v9851 = vunpack.c.l.b16 %v8274
    %v9852 = vunpack.c.h.b16 %v8274
    %v9853 = vpack.c.b16 %v8837, %v8829
    %v9854 = vpack.c.b16 %v8838, %v8830
    %v9855 = vpack.c.b16 %v8839, %v8831
    %v9856 = vpack.c.b16 %v8840, %v8832
    %v9857 = vpack.c.b16 %v8841, %v8833
    %v9858 = vpack.c.b16 %v8842, %v8834
    %v9859 = vpack.c.b16 %v8843, %v8835
    %v9860 = vpack.c.b16 %v8844, %v8836
    %v9861 = vpack.c.b16 %v8853, %v8845
    %v9862 = vpack.c.b16 %v8854, %v8846
    %v9863 = vpack.c.b16 %v8855, %v8847
    %v9864 = vpack.c.b16 %v8856, %v8848
    %v9865 = vpack.c.b16 %v8857, %v8849
    %v9866 = vpack.c.b16 %v8858, %v8850
    %v9867 = vpack.c.b16 %v8859, %v8851
    %v9868 = vpack.c.b16 %v8860, %v8852
    %v9869 = vpack.c.b16 %v8869, %v8861
    %v9870 = vpack.c.b16 %v8870, %v8862
    %v9871 = vpack.c.b16 %v8871, %v8863
    %v9872 = vpack.c.b16 %v8872, %v8864
    %v9873 = vpack.c.b16 %v8873, %v8865
    %v9874 = vpack.c.b16 %v8874, %v8866
    %v9875 = vpack.c.b16 %v8875, %v8867
    %v9876 = vpack.c.b16 %v8876, %v8868
    %v9877 = vpack.c.b16 %v8885, %v8877
    %v9878 = vpack.c.b16 %v8886, %v8878
    %v9879 = vpack.c.b16 %v8887, %v8879
    %v9880 = vpack.c.b16 %v8888, %v8880
    %v9881 = vpack.c.b16 %v8889, %v8881
    %v9882 = vpack.c.b16 %v8890, %v8882
    %v9883 = vpack.c.b16 %v8891, %v8883
    %v9884 = vpack.c.b16 %v8892, %v8884
    %v9885 = vpack.c.b16 %v8901, %v8893
    %v9886 = vpack.c.b16 %v8902, %v8894
    %v9887 = vpack.c.b16 %v8903, %v8895
    %v9888 = vpack.c.b16 %v8904, %v8896
    %v9889 = vpack.c.b16 %v8905, %v8897
    %v9890 = vpack.c.b16 %v8906, %v8898
    %v9891 = vpack.c.b16 %v8907, %v8899
    %v9892 = vpack.c.b16 %v8908, %v8900
    %v9893 = vpack.c.b16 %v8917, %v8909
    %v9894 = vpack.c.b16 %v8918, %v8910
    %v9895 = vpack.c.b16 %v8919, %v8911
    %v9896 = vpack.c.b16 %v8920, %v8912
    %v9897 = vpack.c.b16 %v8921, %v8913
    %v9898 = vpack.c.b16 %v8922, %v8914
    %v9899 = vpack.c.b16 %v8923, %v8915
    %v9900 = vpack.c.b16 %v8924, %v8916
    %v9901 = vpack.c.b16 %v8933, %v8925
    %v9902 = vpack.c.b16 %v8934, %v8926
    %v9903 = vpack.c.b16 %v8935, %v8927
    %v9904 = vpack.c.b16 %v8936, %v8928
    %v9905 = vpack.c.b16 %v8937, %v8929
    %v9906 = vpack.c.b16 %v8938, %v8930
    %v9907 = vpack.c.b16 %v8939, %v8931
    %v9908 = vpack.c.b16 %v8940, %v8932
    %v9909 = vpack.c.b16 %v8949, %v8941
    %v9910 = vpack.c.b16 %v8950, %v8942
    %v9911 = vpack.c.b16 %v8951, %v8943
    %v9912 = vpack.c.b16 %v8952, %v8944
    %v9913 = vpack.c.b16 %v8953, %v8945
    %v9914 = vpack.c.b16 %v8954, %v8946
    %v9915 = vpack.c.b16 %v8955, %v8947
    %v9916 = vpack.c.b16 %v8956, %v8948
    %v9917 = vpack.c.b16 %v8965, %v8957
    %v9918 = vpack.c.b16 %v8966, %v8958
    %v9919 = vpack.c.b16 %v8967, %v8959
    %v9920 = vpack.c.b16 %v8968, %v8960
    %v9921 = vpack.c.b16 %v8969, %v8961
    %v9922 = vpack.c.b16 %v8970, %v8962
    %v9923 = vpack.c.b16 %v8971, %v8963
    %v9924 = vpack.c.b16 %v8972, %v8964
    %v9925 = vpack.c.b16 %v8981, %v8973
    %v9926 = vpack.c.b16 %v8982, %v8974
    %v9927 = vpack.c.b16 %v8983, %v8975
    %v9928 = vpack.c.b16 %v8984, %v8976
    %v9929 = vpack.c.b16 %v8985, %v8977
    %v9930 = vpack.c.b16 %v8986, %v8978
    %v9931 = vpack.c.b16 %v8987, %v8979
    %v9932 = vpack.c.b16 %v8988, %v8980
    %v9933 = vpack.c.b16 %v8997, %v8989
    %v9934 = vpack.c.b16 %v8998, %v8990
    %v9935 = vpack.c.b16 %v8999, %v8991
    %v9936 = vpack.c.b16 %v9000, %v8992
    %v9937 = vpack.c.b16 %v9001, %v8993
    %v9938 = vpack.c.b16 %v9002, %v8994
    %v9939 = vpack.c.b16 %v9003, %v8995
    %v9940 = vpack.c.b16 %v9004, %v8996
    %v9941 = vpack.c.b16 %v9013, %v9005
    %v9942 = vpack.c.b16 %v9014, %v9006
    %v9943 = vpack.c.b16 %v9015, %v9007
    %v9944 = vpack.c.b16 %v9016, %v9008
    %v9945 = vpack.c.b16 %v9017, %v9009
    %v9946 = vpack.c.b16 %v9018, %v9010
    %v9947 = vpack.c.b16 %v9019, %v9011
    %v9948 = vpack.c.b16 %v9020, %v9012
    %v9949 = vpack.c.b16 %v9029, %v9021
    %v9950 = vpack.c.b16 %v9030, %v9022
    %v9951 = vpack.c.b16 %v9031, %v9023
    %v9952 = vpack.c.b16 %v9032, %v9024
    %v9953 = vpack.c.b16 %v9033, %v9025
    %v9954 = vpack.c.b16 %v9034, %v9026
    %v9955 = vpack.c.b16 %v9035, %v9027
    %v9956 = vpack.c.b16 %v9036, %v9028
    %v9957 = vpack.c.b16 %v9045, %v9037
    %v9958 = vpack.c.b16 %v9046, %v9038
    %v9959 = vpack.c.b16 %v9047, %v9039
    %v9960 = vpack.c.b16 %v9048, %v9040
    %v9961 = vpack.c.b16 %v9049, %v9041
    %v9962 = vpack.c.b16 %v9050, %v9042
    %v9963 = vpack.c.b16 %v9051, %v9043
    %v9964 = vpack.c.b16 %v9052, %v9044
    %v9965 = vpack.c.b16 %v9061, %v9053
    %v9966 = vpack.c.b16 %v9062, %v9054
    %v9967 = vpack.c.b16 %v9063, %v9055
    %v9968 = vpack.c.b16 %v9064, %v9056
    %v9969 = vpack.c.b16 %v9065, %v9057
    %v9970 = vpack.c.b16 %v9066, %v9058
    %v9971 = vpack.c.b16 %v9067, %v9059
    %v9972 = vpack.c.b16 %v9068, %v9060
    %v9973 = vpack.c.b16 %v9077, %v9069
    %v9974 = vpack.c.b16 %v9078, %v9070
    %v9975 = vpack.c.b16 %v9079, %v9071
    %v9976 = vpack.c.b16 %v9080, %v9072
    %v9977 = vpack.c.b16 %v9081, %v9073
    %v9978 = vpack.c.b16 %v9082, %v9074
    %v9979 = vpack.c.b16 %v9083, %v9075
    %v9980 = vpack.c.b16 %v9084, %v9076
    %v9981 = vpack.c.b16 %v9093, %v9085
    %v9982 = vpack.c.b16 %v9094, %v9086
    %v9983 = vpack.c.b16 %v9095, %v9087
    %v9984 = vpack.c.b16 %v9096, %v9088
    %v9985 = vpack.c.b16 %v9097, %v9089
    %v9986 = vpack.c.b16 %v9098, %v9090
    %v9987 = vpack.c.b16 %v9099, %v9091
    %v9988 = vpack.c.b16 %v9100, %v9092
    %v9989 = vpack.c.b16 %v9109, %v9101
    %v9990 = vpack.c.b16 %v9110, %v9102
    %v9991 = vpack.c.b16 %v9111, %v9103
    %v9992 = vpack.c.b16 %v9112, %v9104
    %v9993 = vpack.c.b16 %v9113, %v9105
    %v9994 = vpack.c.b16 %v9114, %v9106
    %v9995 = vpack.c.b16 %v9115, %v9107
    %v9996 = vpack.c.b16 %v9116, %v9108
    %v9997 = vpack.c.b16 %v9125, %v9117
    %v9998 = vpack.c.b16 %v9126, %v9118
    %v9999 = vpack.c.b16 %v9127, %v9119
    %v10000 = vpack.c.b16 %v9128, %v9120
    %v10001 = vpack.c.b16 %v9129, %v9121
    %v10002 = vpack.c.b16 %v9130, %v9122
    %v10003 = vpack.c.b16 %v9131, %v9123
    %v10004 = vpack.c.b16 %v9132, %v9124
    %v10005 = vpack.c.b16 %v9141, %v9133
    %v10006 = vpack.c.b16 %v9142, %v9134
    %v10007 = vpack.c.b16 %v9143, %v9135
    %v10008 = vpack.c.b16 %v9144, %v9136
    %v10009 = vpack.c.b16 %v9145, %v9137
    %v10010 = vpack.c.b16 %v9146, %v9138
    %v10011 = vpack.c.b16 %v9147, %v9139
    %v10012 = vpack.c.b16 %v9148, %v9140
    %v10013 = vpack.c.b16 %v9157, %v9149
    %v10014 = vpack.c.b16 %v9158, %v9150
    %v10015 = vpack.c.b16 %v9159, %v9151
    %v10016 = vpack.c.b16 %v9160, %v9152
    %v10017 = vpack.c.b16 %v9161, %v9153
    %v10018 = vpack.c.b16 %v9162, %v9154
    %v10019 = vpack.c.b16 %v9163, %v9155
    %v10020 = vpack.c.b16 %v9164, %v9156
    %v10021 = vpack.c.b16 %v9173, %v9165
    %v10022 = vpack.c.b16 %v9174, %v9166
    %v10023 = vpack.c.b16 %v9175, %v9167
    %v10024 = vpack.c.b16 %v9176, %v9168
    %v10025 = vpack.c.b16 %v9177, %v9169
    %v10026 = vpack.c.b16 %v9178, %v9170
    %v10027 = vpack.c.b16 %v9179, %v9171
    %v10028 = vpack.c.b16 %v9180, %v9172
    %v10029 = vpack.c.b16 %v9189, %v9181
    %v10030 = vpack.c.b16 %v9190, %v9182
    %v10031 = vpack.c.b16 %v9191, %v9183
    %v10032 = vpack.c.b16 %v9192, %v9184
    %v10033 = vpack.c.b16 %v9193, %v9185
    %v10034 = vpack.c.b16 %v9194, %v9186
    %v10035 = vpack.c.b16 %v9195, %v9187
    %v10036 = vpack.c.b16 %v9196, %v9188
    %v10037 = vpack.c.b16 %v9205, %v9197
    %v10038 = vpack.c.b16 %v9206, %v9198
    %v10039 = vpack.c.b16 %v9207, %v9199
    %v10040 = vpack.c.b16 %v9208, %v9200
    %v10041 = vpack.c.b16 %v9209, %v9201
    %v10042 = vpack.c.b16 %v9210, %v9202
    %v10043 = vpack.c.b16 %v9211, %v9203
    %v10044 = vpack.c.b16 %v9212, %v9204
    %v10045 = vpack.c.b16 %v9221, %v9213
    %v10046 = vpack.c.b16 %v9222, %v9214
    %v10047 = vpack.c.b16 %v9223, %v9215
    %v10048 = vpack.c.b16 %v9224, %v9216
    %v10049 = vpack.c.b16 %v9225, %v9217
    %v10050 = vpack.c.b16 %v9226, %v9218
    %v10051 = vpack.c.b16 %v9227, %v9219
    %v10052 = vpack.c.b16 %v9228, %v9220
    %v10053 = vpack.c.b16 %v9237, %v9229
    %v10054 = vpack.c.b16 %v9238, %v9230
    %v10055 = vpack.c.b16 %v9239, %v9231
    %v10056 = vpack.c.b16 %v9240, %v9232
    %v10057 = vpack.c.b16 %v9241, %v9233
    %v10058 = vpack.c.b16 %v9242, %v9234
    %v10059 = vpack.c.b16 %v9243, %v9235
    %v10060 = vpack.c.b16 %v9244, %v9236
    %v10061 = vpack.c.b16 %v9253, %v9245
    %v10062 = vpack.c.b16 %v9254, %v9246
    %v10063 = vpack.c.b16 %v9255, %v9247
    %v10064 = vpack.c.b16 %v9256, %v9248
    %v10065 = vpack.c.b16 %v9257, %v9249
    %v10066 = vpack.c.b16 %v9258, %v9250
    %v10067 = vpack.c.b16 %v9259, %v9251
    %v10068 = vpack.c.b16 %v9260, %v9252
    %v10069 = vpack.c.b16 %v9269, %v9261
    %v10070 = vpack.c.b16 %v9270, %v9262
    %v10071 = vpack.c.b16 %v9271, %v9263
    %v10072 = vpack.c.b16 %v9272, %v9264
    %v10073 = vpack.c.b16 %v9273, %v9265
    %v10074 = vpack.c.b16 %v9274, %v9266
    %v10075 = vpack.c.b16 %v9275, %v9267
    %v10076 = vpack.c.b16 %v9276, %v9268
    %v10077 = vpack.c.b16 %v9285, %v9277
    %v10078 = vpack.c.b16 %v9286, %v9278
    %v10079 = vpack.c.b16 %v9287, %v9279
    %v10080 = vpack.c.b16 %v9288, %v9280
    %v10081 = vpack.c.b16 %v9289, %v9281
    %v10082 = vpack.c.b16 %v9290, %v9282
    %v10083 = vpack.c.b16 %v9291, %v9283
    %v10084 = vpack.c.b16 %v9292, %v9284
    %v10085 = vpack.c.b16 %v9301, %v9293
    %v10086 = vpack.c.b16 %v9302, %v9294
    %v10087 = vpack.c.b16 %v9303, %v9295
    %v10088 = vpack.c.b16 %v9304, %v9296
    %v10089 = vpack.c.b16 %v9305, %v9297
    %v10090 = vpack.c.b16 %v9306, %v9298
    %v10091 = vpack.c.b16 %v9307, %v9299
    %v10092 = vpack.c.b16 %v9308, %v9300
    %v10093 = vpack.c.b16 %v9317, %v9309
    %v10094 = vpack.c.b16 %v9318, %v9310
    %v10095 = vpack.c.b16 %v9319, %v9311
    %v10096 = vpack.c.b16 %v9320, %v9312
    %v10097 = vpack.c.b16 %v9321, %v9313
    %v10098 = vpack.c.b16 %v9322, %v9314
    %v10099 = vpack.c.b16 %v9323, %v9315
    %v10100 = vpack.c.b16 %v9324, %v9316
    %v10101 = vpack.c.b16 %v9333, %v9325
    %v10102 = vpack.c.b16 %v9334, %v9326
    %v10103 = vpack.c.b16 %v9335, %v9327
    %v10104 = vpack.c.b16 %v9336, %v9328
    %v10105 = vpack.c.b16 %v9337, %v9329
    %v10106 = vpack.c.b16 %v9338, %v9330
    %v10107 = vpack.c.b16 %v9339, %v9331
    %v10108 = vpack.c.b16 %v9340, %v9332
    %v10109 = vpack.c.b16 %v9349, %v9341
    %v10110 = vpack.c.b16 %v9350, %v9342
    %v10111 = vpack.c.b16 %v9351, %v9343
    %v10112 = vpack.c.b16 %v9352, %v9344
    %v10113 = vpack.c.b16 %v9353, %v9345
    %v10114 = vpack.c.b16 %v9354, %v9346
    %v10115 = vpack.c.b16 %v9355, %v9347
    %v10116 = vpack.c.b16 %v9356, %v9348
    %v10117 = vpack.c.b16 %v9365, %v9357
    %v10118 = vpack.c.b16 %v9366, %v9358
    %v10119 = vpack.c.b16 %v9367, %v9359
    %v10120 = vpack.c.b16 %v9368, %v9360
    %v10121 = vpack.c.b16 %v9369, %v9361
    %v10122 = vpack.c.b16 %v9370, %v9362
    %v10123 = vpack.c.b16 %v9371, %v9363
    %v10124 = vpack.c.b16 %v9372, %v9364
    %v10125 = vpack.c.b16 %v9381, %v9373
    %v10126 = vpack.c.b16 %v9382, %v9374
    %v10127 = vpack.c.b16 %v9383, %v9375
    %v10128 = vpack.c.b16 %v9384, %v9376
    %v10129 = vpack.c.b16 %v9385, %v9377
    %v10130 = vpack.c.b16 %v9386, %v9378
    %v10131 = vpack.c.b16 %v9387, %v9379
    %v10132 = vpack.c.b16 %v9388, %v9380
    %v10133 = vpack.c.b16 %v9397, %v9389
    %v10134 = vpack.c.b16 %v9398, %v9390
    %v10135 = vpack.c.b16 %v9399, %v9391
    %v10136 = vpack.c.b16 %v9400, %v9392
    %v10137 = vpack.c.b16 %v9401, %v9393
    %v10138 = vpack.c.b16 %v9402, %v9394
    %v10139 = vpack.c.b16 %v9403, %v9395
    %v10140 = vpack.c.b16 %v9404, %v9396
    %v10141 = vpack.c.b16 %v9413, %v9405
    %v10142 = vpack.c.b16 %v9414, %v9406
    %v10143 = vpack.c.b16 %v9415, %v9407
    %v10144 = vpack.c.b16 %v9416, %v9408
    %v10145 = vpack.c.b16 %v9417, %v9409
    %v10146 = vpack.c.b16 %v9418, %v9410
    %v10147 = vpack.c.b16 %v9419, %v9411
    %v10148 = vpack.c.b16 %v9420, %v9412
    %v10149 = vpack.c.b16 %v9429, %v9421
    %v10150 = vpack.c.b16 %v9430, %v9422
    %v10151 = vpack.c.b16 %v9431, %v9423
    %v10152 = vpack.c.b16 %v9432, %v9424
    %v10153 = vpack.c.b16 %v9433, %v9425
    %v10154 = vpack.c.b16 %v9434, %v9426
    %v10155 = vpack.c.b16 %v9435, %v9427
    %v10156 = vpack.c.b16 %v9436, %v9428
    %v10157 = vpack.c.b16 %v9445, %v9437
    %v10158 = vpack.c.b16 %v9446, %v9438
    %v10159 = vpack.c.b16 %v9447, %v9439
    %v10160 = vpack.c.b16 %v9448, %v9440
    %v10161 = vpack.c.b16 %v9449, %v9441
    %v10162 = vpack.c.b16 %v9450, %v9442
    %v10163 = vpack.c.b16 %v9451, %v9443
    %v10164 = vpack.c.b16 %v9452, %v9444
    %v10165 = vpack.c.b16 %v9461, %v9453
    %v10166 = vpack.c.b16 %v9462, %v9454
    %v10167 = vpack.c.b16 %v9463, %v9455
    %v10168 = vpack.c.b16 %v9464, %v9456
    %v10169 = vpack.c.b16 %v9465, %v9457
    %v10170 = vpack.c.b16 %v9466, %v9458
    %v10171 = vpack.c.b16 %v9467, %v9459
    %v10172 = vpack.c.b16 %v9468, %v9460
    %v10173 = vpack.c.b16 %v9477, %v9469
    %v10174 = vpack.c.b16 %v9478, %v9470
    %v10175 = vpack.c.b16 %v9479, %v9471
    %v10176 = vpack.c.b16 %v9480, %v9472
    %v10177 = vpack.c.b16 %v9481, %v9473
    %v10178 = vpack.c.b16 %v9482, %v9474
    %v10179 = vpack.c.b16 %v9483, %v9475
    %v10180 = vpack.c.b16 %v9484, %v9476
    %v10181 = vpack.c.b16 %v9493, %v9485
    %v10182 = vpack.c.b16 %v9494, %v9486
    %v10183 = vpack.c.b16 %v9495, %v9487
    %v10184 = vpack.c.b16 %v9496, %v9488
    %v10185 = vpack.c.b16 %v9497, %v9489
    %v10186 = vpack.c.b16 %v9498, %v9490
    %v10187 = vpack.c.b16 %v9499, %v9491
    %v10188 = vpack.c.b16 %v9500, %v9492
    %v10189 = vpack.c.b16 %v9509, %v9501
    %v10190 = vpack.c.b16 %v9510, %v9502
    %v10191 = vpack.c.b16 %v9511, %v9503
    %v10192 = vpack.c.b16 %v9512, %v9504
    %v10193 = vpack.c.b16 %v9513, %v9505
    %v10194 = vpack.c.b16 %v9514, %v9506
    %v10195 = vpack.c.b16 %v9515, %v9507
    %v10196 = vpack.c.b16 %v9516, %v9508
    %v10197 = vpack.c.b16 %v9525, %v9517
    %v10198 = vpack.c.b16 %v9526, %v9518
    %v10199 = vpack.c.b16 %v9527, %v9519
    %v10200 = vpack.c.b16 %v9528, %v9520
    %v10201 = vpack.c.b16 %v9529, %v9521
    %v10202 = vpack.c.b16 %v9530, %v9522
    %v10203 = vpack.c.b16 %v9531, %v9523
    %v10204 = vpack.c.b16 %v9532, %v9524
    %v10205 = vpack.c.b16 %v9541, %v9533
    %v10206 = vpack.c.b16 %v9542, %v9534
    %v10207 = vpack.c.b16 %v9543, %v9535
    %v10208 = vpack.c.b16 %v9544, %v9536
    %v10209 = vpack.c.b16 %v9545, %v9537
    %v10210 = vpack.c.b16 %v9546, %v9538
    %v10211 = vpack.c.b16 %v9547, %v9539
    %v10212 = vpack.c.b16 %v9548, %v9540
    %v10213 = vpack.c.b16 %v9557, %v9549
    %v10214 = vpack.c.b16 %v9558, %v9550
    %v10215 = vpack.c.b16 %v9559, %v9551
    %v10216 = vpack.c.b16 %v9560, %v9552
    %v10217 = vpack.c.b16 %v9561, %v9553
    %v10218 = vpack.c.b16 %v9562, %v9554
    %v10219 = vpack.c.b16 %v9563, %v9555
    %v10220 = vpack.c.b16 %v9564, %v9556
    %v10221 = vpack.c.b16 %v9573, %v9565
    %v10222 = vpack.c.b16 %v9574, %v9566
    %v10223 = vpack.c.b16 %v9575, %v9567
    %v10224 = vpack.c.b16 %v9576, %v9568
    %v10225 = vpack.c.b16 %v9577, %v9569
    %v10226 = vpack.c.b16 %v9578, %v9570
    %v10227 = vpack.c.b16 %v9579, %v9571
    %v10228 = vpack.c.b16 %v9580, %v9572
    %v10229 = vpack.c.b16 %v9589, %v9581
    %v10230 = vpack.c.b16 %v9590, %v9582
    %v10231 = vpack.c.b16 %v9591, %v9583
    %v10232 = vpack.c.b16 %v9592, %v9584
    %v10233 = vpack.c.b16 %v9593, %v9585
    %v10234 = vpack.c.b16 %v9594, %v9586
    %v10235 = vpack.c.b16 %v9595, %v9587
    %v10236 = vpack.c.b16 %v9596, %v9588
    %v10237 = vpack.c.b16 %v9605, %v9597
    %v10238 = vpack.c.b16 %v9606, %v9598
    %v10239 = vpack.c.b16 %v9607, %v9599
    %v10240 = vpack.c.b16 %v9608, %v9600
    %v10241 = vpack.c.b16 %v9609, %v9601
    %v10242 = vpack.c.b16 %v9610, %v9602
    %v10243 = vpack.c.b16 %v9611, %v9603
    %v10244 = vpack.c.b16 %v9612, %v9604
    %v10245 = vpack.c.b16 %v9621, %v9613
    %v10246 = vpack.c.b16 %v9622, %v9614
    %v10247 = vpack.c.b16 %v9623, %v9615
    %v10248 = vpack.c.b16 %v9624, %v9616
    %v10249 = vpack.c.b16 %v9625, %v9617
    %v10250 = vpack.c.b16 %v9626, %v9618
    %v10251 = vpack.c.b16 %v9627, %v9619
    %v10252 = vpack.c.b16 %v9628, %v9620
    %v10253 = vpack.c.b16 %v9637, %v9629
    %v10254 = vpack.c.b16 %v9638, %v9630
    %v10255 = vpack.c.b16 %v9639, %v9631
    %v10256 = vpack.c.b16 %v9640, %v9632
    %v10257 = vpack.c.b16 %v9641, %v9633
    %v10258 = vpack.c.b16 %v9642, %v9634
    %v10259 = vpack.c.b16 %v9643, %v9635
    %v10260 = vpack.c.b16 %v9644, %v9636
    %v10261 = vpack.c.b16 %v9653, %v9645
    %v10262 = vpack.c.b16 %v9654, %v9646
    %v10263 = vpack.c.b16 %v9655, %v9647
    %v10264 = vpack.c.b16 %v9656, %v9648
    %v10265 = vpack.c.b16 %v9657, %v9649
    %v10266 = vpack.c.b16 %v9658, %v9650
    %v10267 = vpack.c.b16 %v9659, %v9651
    %v10268 = vpack.c.b16 %v9660, %v9652
    %v10269 = vpack.c.b16 %v9669, %v9661
    %v10270 = vpack.c.b16 %v9670, %v9662
    %v10271 = vpack.c.b16 %v9671, %v9663
    %v10272 = vpack.c.b16 %v9672, %v9664
    %v10273 = vpack.c.b16 %v9673, %v9665
    %v10274 = vpack.c.b16 %v9674, %v9666
    %v10275 = vpack.c.b16 %v9675, %v9667
    %v10276 = vpack.c.b16 %v9676, %v9668
    %v10277 = vpack.c.b16 %v9685, %v9677
    %v10278 = vpack.c.b16 %v9686, %v9678
    %v10279 = vpack.c.b16 %v9687, %v9679
    %v10280 = vpack.c.b16 %v9688, %v9680
    %v10281 = vpack.c.b16 %v9689, %v9681
    %v10282 = vpack.c.b16 %v9690, %v9682
    %v10283 = vpack.c.b16 %v9691, %v9683
    %v10284 = vpack.c.b16 %v9692, %v9684
    %v10285 = vpack.c.b16 %v9701, %v9693
    %v10286 = vpack.c.b16 %v9702, %v9694
    %v10287 = vpack.c.b16 %v9703, %v9695
    %v10288 = vpack.c.b16 %v9704, %v9696
    %v10289 = vpack.c.b16 %v9705, %v9697
    %v10290 = vpack.c.b16 %v9706, %v9698
    %v10291 = vpack.c.b16 %v9707, %v9699
    %v10292 = vpack.c.b16 %v9708, %v9700
    %v10293 = vpack.c.b16 %v9717, %v9709
    %v10294 = vpack.c.b16 %v9718, %v9710
    %v10295 = vpack.c.b16 %v9719, %v9711
    %v10296 = vpack.c.b16 %v9720, %v9712
    %v10297 = vpack.c.b16 %v9721, %v9713
    %v10298 = vpack.c.b16 %v9722, %v9714
    %v10299 = vpack.c.b16 %v9723, %v9715
    %v10300 = vpack.c.b16 %v9724, %v9716
    %v10301 = vpack.c.b16 %v9733, %v9725
    %v10302 = vpack.c.b16 %v9734, %v9726
    %v10303 = vpack.c.b16 %v9735, %v9727
    %v10304 = vpack.c.b16 %v9736, %v9728
    %v10305 = vpack.c.b16 %v9737, %v9729
    %v10306 = vpack.c.b16 %v9738, %v9730
    %v10307 = vpack.c.b16 %v9739, %v9731
    %v10308 = vpack.c.b16 %v9740, %v9732
    %v10309 = vpack.c.b16 %v9749, %v9741
    %v10310 = vpack.c.b16 %v9750, %v9742
    %v10311 = vpack.c.b16 %v9751, %v9743
    %v10312 = vpack.c.b16 %v9752, %v9744
    %v10313 = vpack.c.b16 %v9753, %v9745
    %v10314 = vpack.c.b16 %v9754, %v9746
    %v10315 = vpack.c.b16 %v9755, %v9747
    %v10316 = vpack.c.b16 %v9756, %v9748
    %v10317 = vpack.c.b16 %v9765, %v9757
    %v10318 = vpack.c.b16 %v9766, %v9758
    %v10319 = vpack.c.b16 %v9767, %v9759
    %v10320 = vpack.c.b16 %v9768, %v9760
    %v10321 = vpack.c.b16 %v9769, %v9761
    %v10322 = vpack.c.b16 %v9770, %v9762
    %v10323 = vpack.c.b16 %v9771, %v9763
    %v10324 = vpack.c.b16 %v9772, %v9764
    %v10325 = vpack.c.b16 %v9781, %v9773
    %v10326 = vpack.c.b16 %v9782, %v9774
    %v10327 = vpack.c.b16 %v9783, %v9775
    %v10328 = vpack.c.b16 %v9784, %v9776
    %v10329 = vpack.c.b16 %v9785, %v9777
    %v10330 = vpack.c.b16 %v9786, %v9778
    %v10331 = vpack.c.b16 %v9787, %v9779
    %v10332 = vpack.c.b16 %v9788, %v9780
    %v10333 = vpack.c.b16 %v9797, %v9789
    %v10334 = vpack.c.b16 %v9798, %v9790
    %v10335 = vpack.c.b16 %v9799, %v9791
    %v10336 = vpack.c.b16 %v9800, %v9792
    %v10337 = vpack.c.b16 %v9801, %v9793
    %v10338 = vpack.c.b16 %v9802, %v9794
    %v10339 = vpack.c.b16 %v9803, %v9795
    %v10340 = vpack.c.b16 %v9804, %v9796
    %v10341 = vpack.c.b16 %v9813, %v9805
    %v10342 = vpack.c.b16 %v9814, %v9806
    %v10343 = vpack.c.b16 %v9815, %v9807
    %v10344 = vpack.c.b16 %v9816, %v9808
    %v10345 = vpack.c.b16 %v9817, %v9809
    %v10346 = vpack.c.b16 %v9818, %v9810
    %v10347 = vpack.c.b16 %v9819, %v9811
    %v10348 = vpack.c.b16 %v9820, %v9812
    %v10349 = vpack.c.b16 %v9829, %v9821
    %v10350 = vpack.c.b16 %v9830, %v9822
    %v10351 = vpack.c.b16 %v9831, %v9823
    %v10352 = vpack.c.b16 %v9832, %v9824
    %v10353 = vpack.c.b16 %v9833, %v9825
    %v10354 = vpack.c.b16 %v9834, %v9826
    %v10355 = vpack.c.b16 %v9835, %v9827
    %v10356 = vpack.c.b16 %v9836, %v9828
    %v10357 = vpack.c.b16 %v9845, %v9837
    %v10358 = vpack.c.b16 %v9846, %v9838
    %v10359 = vpack.c.b16 %v9847, %v9839
    %v10360 = vpack.c.b16 %v9848, %v9840
    %v10361 = vpack.c.b16 %v9849, %v9841
    %v10362 = vpack.c.b16 %v9850, %v9842
    %v10363 = vpack.c.b16 %v9851, %v9843
    %v10364 = vpack.c.b16 %v9852, %v9844
    %10877 = vmatprep.subr.bf16.mxu0 %v9910
    %10878 = vmatpush1.bf16.msra.mxu0 %v9909
    %10879 = vmatprep.subr.bf16.mxu0 %v9902
    %10880 = vmatpush1.bf16.msra.mxu0 %v9901
    %10881 = vmatprep.subr.bf16.mxu0 %v9894
    %10882 = vmatpush1.bf16.msra.mxu0 %v9893
    %10883 = vmatprep.subr.bf16.mxu0 %v9886
    %10884 = vmatpush1.bf16.msra.mxu0 %v9885
    %10885 = vmatprep.subr.bf16.mxu0 %v9878
    %10886 = vmatpush1.bf16.msra.mxu0 %v9877
    %10887 = vmatprep.subr.bf16.mxu0 %v9870
    %10888 = vmatpush1.bf16.msra.mxu0 %v9869
    %10889 = vmatprep.subr.bf16.mxu0 %v9862
    %10890 = vmatpush1.bf16.msra.mxu0 %v9861
    %10891 = vmatprep.subr.bf16.mxu0 %v9854
    %10892 = vmatpush1.bf16.msra.mxu0 %v9853
    %10893 = vmatprep.subr.bf16.mxu0 %v9974
    %10894 = vmatpush2.bf16.msra.mxu0 %v9973
    %10895 = vmatprep.subr.bf16.mxu0 %v9966
    %10896 = vmatpush2.bf16.msra.mxu0 %v9965
    %10897 = vmatprep.subr.bf16.mxu0 %v9958
    %10898 = vmatpush2.bf16.msra.mxu0 %v9957
    %10899 = vmatprep.subr.bf16.mxu0 %v9950
    %10900 = vmatpush2.bf16.msra.mxu0 %v9949
    %10901 = vmatprep.subr.bf16.mxu0 %v9942
    %10902 = vmatpush2.bf16.msra.mxu0 %v9941
    %10903 = vmatprep.subr.bf16.mxu0 %v9934
    %10904 = vmatpush2.bf16.msra.mxu0 %v9933
    %10905 = vmatprep.subr.bf16.mxu0 %v9926
    %10906 = vmatpush2.bf16.msra.mxu0 %v9925
    %10907 = vmatprep.subr.bf16.mxu0 %v9918
    %10908 = vmatpush2.bf16.msra.mxu0 %v9917
    %10909 = vmatprep.mubr.bf16.mxu0 %v7756
    %10910 = vmatmul.mubr.bf16.gmra.mxu0 %v7755
    %v10911 = vpop.f32.mrf.mxu0
    %v10912 = vadd.f32 %v8280, %v10911
    %v10913 = vpop.f32.mrf.mxu0
    %v10914 = vadd.f32 %v8284, %v10913
    %v10915 = vpop.f32.mrf.mxu0
    %v10916 = vpop.f32.mrf.mxu0
    %10917 = vdwg.mxu0
    %10918 = vmatprep.subr.bf16.mxu0 %v10038
    %10919 = vmatpush1.bf16.msra.mxu0 %v10037
    %10920 = vmatprep.subr.bf16.mxu0 %v10030
    %10921 = vmatpush1.bf16.msra.mxu0 %v10029
    %10922 = vmatprep.subr.bf16.mxu0 %v10022
    %10923 = vmatpush1.bf16.msra.mxu0 %v10021
    %10924 = vmatprep.subr.bf16.mxu0 %v10014
    %10925 = vmatpush1.bf16.msra.mxu0 %v10013
    %10926 = vmatprep.subr.bf16.mxu0 %v10006
    %10927 = vmatpush1.bf16.msra.mxu0 %v10005
    %10928 = vmatprep.subr.bf16.mxu0 %v9998
    %10929 = vmatpush1.bf16.msra.mxu0 %v9997
    %10930 = vmatprep.subr.bf16.mxu0 %v9990
    %10931 = vmatpush1.bf16.msra.mxu0 %v9989
    %10932 = vmatprep.subr.bf16.mxu0 %v9982
    %10933 = vmatpush1.bf16.msra.mxu0 %v9981
    %10934 = vmatprep.subr.bf16.mxu0 %v10102
    %10935 = vmatpush2.bf16.msra.mxu0 %v10101
    %10936 = vmatprep.subr.bf16.mxu0 %v10094
    %10937 = vmatpush2.bf16.msra.mxu0 %v10093
    %10938 = vmatprep.subr.bf16.mxu0 %v10086
    %10939 = vmatpush2.bf16.msra.mxu0 %v10085
    %10940 = vmatprep.subr.bf16.mxu0 %v10078
    %10941 = vmatpush2.bf16.msra.mxu0 %v10077
    %10942 = vmatprep.subr.bf16.mxu0 %v10070
    %10943 = vmatpush2.bf16.msra.mxu0 %v10069
    %10944 = vmatprep.subr.bf16.mxu0 %v10062
    %10945 = vmatpush2.bf16.msra.mxu0 %v10061
    %10946 = vmatprep.subr.bf16.mxu0 %v10054
    %10947 = vmatpush2.bf16.msra.mxu0 %v10053
    %10948 = vmatprep.subr.bf16.mxu0 %v10046
    %10949 = vmatpush2.bf16.msra.mxu0 %v10045
    %10950 = vmatprep.mubr.bf16.mxu0 %v7758
    %10951 = vmatmul.mubr.bf16.gmra.mxu0 %v7757
    %v10952 = vpop.f32.mrf.mxu0
    %v10953 = vadd.f32 %v10912, %v10952
    %v10954 = vpop.f32.mrf.mxu0
    %v10955 = vadd.f32 %v10914, %v10954
    %v10956 = vpop.f32.mrf.mxu0
    %v10957 = vpop.f32.mrf.mxu0
    %10958 = vdwg.mxu0
    %10959 = vmatprep.subr.bf16.mxu0 %v10166
    %10960 = vmatpush1.bf16.msra.mxu0 %v10165
    %10961 = vmatprep.subr.bf16.mxu0 %v10158
    %10962 = vmatpush1.bf16.msra.mxu0 %v10157
    %10963 = vmatprep.subr.bf16.mxu0 %v10150
    %10964 = vmatpush1.bf16.msra.mxu0 %v10149
    %10965 = vmatprep.subr.bf16.mxu0 %v10142
    %10966 = vmatpush1.bf16.msra.mxu0 %v10141
    %10967 = vmatprep.subr.bf16.mxu0 %v10134
    %10968 = vmatpush1.bf16.msra.mxu0 %v10133
    %10969 = vmatprep.subr.bf16.mxu0 %v10126
    %10970 = vmatpush1.bf16.msra.mxu0 %v10125
    %10971 = vmatprep.subr.bf16.mxu0 %v10118
    %10972 = vmatpush1.bf16.msra.mxu0 %v10117
    %10973 = vmatprep.subr.bf16.mxu0 %v10110
    %10974 = vmatpush1.bf16.msra.mxu0 %v10109
    %10975 = vmatprep.subr.bf16.mxu0 %v10230
    %10976 = vmatpush2.bf16.msra.mxu0 %v10229
    %10977 = vmatprep.subr.bf16.mxu0 %v10222
    %10978 = vmatpush2.bf16.msra.mxu0 %v10221
    %10979 = vmatprep.subr.bf16.mxu0 %v10214
    %10980 = vmatpush2.bf16.msra.mxu0 %v10213
    %10981 = vmatprep.subr.bf16.mxu0 %v10206
    %10982 = vmatpush2.bf16.msra.mxu0 %v10205
    %10983 = vmatprep.subr.bf16.mxu0 %v10198
    %10984 = vmatpush2.bf16.msra.mxu0 %v10197
    %10985 = vmatprep.subr.bf16.mxu0 %v10190
    %10986 = vmatpush2.bf16.msra.mxu0 %v10189
    %10987 = vmatprep.subr.bf16.mxu0 %v10182
    %10988 = vmatpush2.bf16.msra.mxu0 %v10181
    %10989 = vmatprep.subr.bf16.mxu0 %v10174
    %10990 = vmatpush2.bf16.msra.mxu0 %v10173
    %10991 = vmatprep.mubr.bf16.mxu0 %v7760
    %10992 = vmatmul.mubr.bf16.gmra.mxu0 %v7759
    %v10993 = vpop.f32.mrf.mxu0
    %v10994 = vadd.f32 %v10953, %v10993
    %v10995 = vpop.f32.mrf.mxu0
    %v10996 = vadd.f32 %v10955, %v10995
    %v10997 = vpop.f32.mrf.mxu0
    %v10998 = vpop.f32.mrf.mxu0
    %10999 = vdwg.mxu0
    %11000 = vmatprep.subr.bf16.mxu0 %v10294
    %11001 = vmatpush1.bf16.msra.mxu0 %v10293
    %11002 = vmatprep.subr.bf16.mxu0 %v10286
    %11003 = vmatpush1.bf16.msra.mxu0 %v10285
    %11004 = vmatprep.subr.bf16.mxu0 %v10278
    %11005 = vmatpush1.bf16.msra.mxu0 %v10277
    %11006 = vmatprep.subr.bf16.mxu0 %v10270
    %11007 = vmatpush1.bf16.msra.mxu0 %v10269
    %11008 = vmatprep.subr.bf16.mxu0 %v10262
    %11009 = vmatpush1.bf16.msra.mxu0 %v10261
    %11010 = vmatprep.subr.bf16.mxu0 %v10254
    %11011 = vmatpush1.bf16.msra.mxu0 %v10253
    %11012 = vmatprep.subr.bf16.mxu0 %v10246
    %11013 = vmatpush1.bf16.msra.mxu0 %v10245
    %11014 = vmatprep.subr.bf16.mxu0 %v10238
    %11015 = vmatpush1.bf16.msra.mxu0 %v10237
    %11016 = vmatprep.subr.bf16.mxu0 %v10358
    %11017 = vmatpush2.bf16.msra.mxu0 %v10357
    %11018 = vmatprep.subr.bf16.mxu0 %v10350
    %11019 = vmatpush2.bf16.msra.mxu0 %v10349
    %11020 = vmatprep.subr.bf16.mxu0 %v10342
    %11021 = vmatpush2.bf16.msra.mxu0 %v10341
    %11022 = vmatprep.subr.bf16.mxu0 %v10334
    %11023 = vmatpush2.bf16.msra.mxu0 %v10333
    %11024 = vmatprep.subr.bf16.mxu0 %v10326
    %11025 = vmatpush2.bf16.msra.mxu0 %v10325
    %11026 = vmatprep.subr.bf16.mxu0 %v10318
    %11027 = vmatpush2.bf16.msra.mxu0 %v10317
    %11028 = vmatprep.subr.bf16.mxu0 %v10310
    %11029 = vmatpush2.bf16.msra.mxu0 %v10309
    %11030 = vmatprep.subr.bf16.mxu0 %v10302
    %11031 = vmatpush2.bf16.msra.mxu0 %v10301
    %11032 = vmatprep.mubr.bf16.mxu0 %v7762
    %11033 = vmatmul.mubr.bf16.gmra.mxu0 %v7761
    %v11034 = vpop.f32.mrf.mxu0
    %v11035 = vadd.f32 %v10994, %v11034
    %v11036 = vpop.f32.mrf.mxu0
    %v11037 = vadd.f32 %v10996, %v11036
    %v11038 = vpop.f32.mrf.mxu0
    %v11039 = vpop.f32.mrf.mxu0
    %11040 = vdwg.mxu0
    %11041 = vmatprep.subr.bf16.mxu0 %v9912
    %11042 = vmatpush1.bf16.msra.mxu0 %v9911
    %11043 = vmatprep.subr.bf16.mxu0 %v9904
    %11044 = vmatpush1.bf16.msra.mxu0 %v9903
    %11045 = vmatprep.subr.bf16.mxu0 %v9896
    %11046 = vmatpush1.bf16.msra.mxu0 %v9895
    %11047 = vmatprep.subr.bf16.mxu0 %v9888
    %11048 = vmatpush1.bf16.msra.mxu0 %v9887
    %11049 = vmatprep.subr.bf16.mxu0 %v9880
    %11050 = vmatpush1.bf16.msra.mxu0 %v9879
    %11051 = vmatprep.subr.bf16.mxu0 %v9872
    %11052 = vmatpush1.bf16.msra.mxu0 %v9871
    %11053 = vmatprep.subr.bf16.mxu0 %v9864
    %11054 = vmatpush1.bf16.msra.mxu0 %v9863
    %11055 = vmatprep.subr.bf16.mxu0 %v9856
    %11056 = vmatpush1.bf16.msra.mxu0 %v9855
    %11057 = vmatprep.subr.bf16.mxu0 %v9976
    %11058 = vmatpush2.bf16.msra.mxu0 %v9975
    %11059 = vmatprep.subr.bf16.mxu0 %v9968
    %11060 = vmatpush2.bf16.msra.mxu0 %v9967
    %11061 = vmatprep.subr.bf16.mxu0 %v9960
    %11062 = vmatpush2.bf16.msra.mxu0 %v9959
    %11063 = vmatprep.subr.bf16.mxu0 %v9952
    %11064 = vmatpush2.bf16.msra.mxu0 %v9951
    %11065 = vmatprep.subr.bf16.mxu0 %v9944
    %11066 = vmatpush2.bf16.msra.mxu0 %v9943
    %11067 = vmatprep.subr.bf16.mxu0 %v9936
    %11068 = vmatpush2.bf16.msra.mxu0 %v9935
    %11069 = vmatprep.subr.bf16.mxu0 %v9928
    %11070 = vmatpush2.bf16.msra.mxu0 %v9927
    %11071 = vmatprep.subr.bf16.mxu0 %v9920
    %11072 = vmatpush2.bf16.msra.mxu0 %v9919
    %11073 = vmatprep.mubr.bf16.mxu0 %v7756
    %11074 = vmatmul.mubr.bf16.gmra.mxu0 %v7755
    %v11075 = vpop.f32.mrf.mxu0
    %v11076 = vadd.f32 %v8288, %v11075
    %v11077 = vpop.f32.mrf.mxu0
    %v11078 = vadd.f32 %v8292, %v11077
    %v11079 = vpop.f32.mrf.mxu0
    %v11080 = vpop.f32.mrf.mxu0
    %11081 = vdwg.mxu0
    %11082 = vmatprep.subr.bf16.mxu0 %v10040
    %11083 = vmatpush1.bf16.msra.mxu0 %v10039
    %11084 = vmatprep.subr.bf16.mxu0 %v10032
    %11085 = vmatpush1.bf16.msra.mxu0 %v10031
    %11086 = vmatprep.subr.bf16.mxu0 %v10024
    %11087 = vmatpush1.bf16.msra.mxu0 %v10023
    %11088 = vmatprep.subr.bf16.mxu0 %v10016
    %11089 = vmatpush1.bf16.msra.mxu0 %v10015
    %11090 = vmatprep.subr.bf16.mxu0 %v10008
    %11091 = vmatpush1.bf16.msra.mxu0 %v10007
    %11092 = vmatprep.subr.bf16.mxu0 %v10000
    %11093 = vmatpush1.bf16.msra.mxu0 %v9999
    %11094 = vmatprep.subr.bf16.mxu0 %v9992
    %11095 = vmatpush1.bf16.msra.mxu0 %v9991
    %11096 = vmatprep.subr.bf16.mxu0 %v9984
    %11097 = vmatpush1.bf16.msra.mxu0 %v9983
    %11098 = vmatprep.subr.bf16.mxu0 %v10104
    %11099 = vmatpush2.bf16.msra.mxu0 %v10103
    %11100 = vmatprep.subr.bf16.mxu0 %v10096
    %11101 = vmatpush2.bf16.msra.mxu0 %v10095
    %11102 = vmatprep.subr.bf16.mxu0 %v10088
    %11103 = vmatpush2.bf16.msra.mxu0 %v10087
    %11104 = vmatprep.subr.bf16.mxu0 %v10080
    %11105 = vmatpush2.bf16.msra.mxu0 %v10079
    %11106 = vmatprep.subr.bf16.mxu0 %v10072
    %11107 = vmatpush2.bf16.msra.mxu0 %v10071
    %11108 = vmatprep.subr.bf16.mxu0 %v10064
    %11109 = vmatpush2.bf16.msra.mxu0 %v10063
    %11110 = vmatprep.subr.bf16.mxu0 %v10056
    %11111 = vmatpush2.bf16.msra.mxu0 %v10055
    %11112 = vmatprep.subr.bf16.mxu0 %v10048
    %11113 = vmatpush2.bf16.msra.mxu0 %v10047
    %11114 = vmatprep.mubr.bf16.mxu0 %v7758
    %11115 = vmatmul.mubr.bf16.gmra.mxu0 %v7757
    %v11116 = vpop.f32.mrf.mxu0
    %v11117 = vadd.f32 %v11076, %v11116
    %v11118 = vpop.f32.mrf.mxu0
    %v11119 = vadd.f32 %v11078, %v11118
    %v11120 = vpop.f32.mrf.mxu0
    %v11121 = vpop.f32.mrf.mxu0
    %11122 = vdwg.mxu0
    %11123 = vmatprep.subr.bf16.mxu0 %v10168
    %11124 = vmatpush1.bf16.msra.mxu0 %v10167
    %11125 = vmatprep.subr.bf16.mxu0 %v10160
    %11126 = vmatpush1.bf16.msra.mxu0 %v10159
    %11127 = vmatprep.subr.bf16.mxu0 %v10152
    %11128 = vmatpush1.bf16.msra.mxu0 %v10151
    %11129 = vmatprep.subr.bf16.mxu0 %v10144
    %11130 = vmatpush1.bf16.msra.mxu0 %v10143
    %11131 = vmatprep.subr.bf16.mxu0 %v10136
    %11132 = vmatpush1.bf16.msra.mxu0 %v10135
    %11133 = vmatprep.subr.bf16.mxu0 %v10128
    %11134 = vmatpush1.bf16.msra.mxu0 %v10127
    %11135 = vmatprep.subr.bf16.mxu0 %v10120
    %11136 = vmatpush1.bf16.msra.mxu0 %v10119
    %11137 = vmatprep.subr.bf16.mxu0 %v10112
    %11138 = vmatpush1.bf16.msra.mxu0 %v10111
    %11139 = vmatprep.subr.bf16.mxu0 %v10232
    %11140 = vmatpush2.bf16.msra.mxu0 %v10231
    %11141 = vmatprep.subr.bf16.mxu0 %v10224
    %11142 = vmatpush2.bf16.msra.mxu0 %v10223
    %11143 = vmatprep.subr.bf16.mxu0 %v10216
    %11144 = vmatpush2.bf16.msra.mxu0 %v10215
    %11145 = vmatprep.subr.bf16.mxu0 %v10208
    %11146 = vmatpush2.bf16.msra.mxu0 %v10207
    %11147 = vmatprep.subr.bf16.mxu0 %v10200
    %11148 = vmatpush2.bf16.msra.mxu0 %v10199
    %11149 = vmatprep.subr.bf16.mxu0 %v10192
    %11150 = vmatpush2.bf16.msra.mxu0 %v10191
    %11151 = vmatprep.subr.bf16.mxu0 %v10184
    %11152 = vmatpush2.bf16.msra.mxu0 %v10183
    %11153 = vmatprep.subr.bf16.mxu0 %v10176
    %11154 = vmatpush2.bf16.msra.mxu0 %v10175
    %11155 = vmatprep.mubr.bf16.mxu0 %v7760
    %11156 = vmatmul.mubr.bf16.gmra.mxu0 %v7759
    %v11157 = vpop.f32.mrf.mxu0
    %v11158 = vadd.f32 %v11117, %v11157
    %v11159 = vpop.f32.mrf.mxu0
    %v11160 = vadd.f32 %v11119, %v11159
    %v11161 = vpop.f32.mrf.mxu0
    %v11162 = vpop.f32.mrf.mxu0
    %11163 = vdwg.mxu0
    %11164 = vmatprep.subr.bf16.mxu0 %v10296
    %11165 = vmatpush1.bf16.msra.mxu0 %v10295
    %11166 = vmatprep.subr.bf16.mxu0 %v10288
    %11167 = vmatpush1.bf16.msra.mxu0 %v10287
    %11168 = vmatprep.subr.bf16.mxu0 %v10280
    %11169 = vmatpush1.bf16.msra.mxu0 %v10279
    %11170 = vmatprep.subr.bf16.mxu0 %v10272
    %11171 = vmatpush1.bf16.msra.mxu0 %v10271
    %11172 = vmatprep.subr.bf16.mxu0 %v10264
    %11173 = vmatpush1.bf16.msra.mxu0 %v10263
    %11174 = vmatprep.subr.bf16.mxu0 %v10256
    %11175 = vmatpush1.bf16.msra.mxu0 %v10255
    %11176 = vmatprep.subr.bf16.mxu0 %v10248
    %11177 = vmatpush1.bf16.msra.mxu0 %v10247
    %11178 = vmatprep.subr.bf16.mxu0 %v10240
    %11179 = vmatpush1.bf16.msra.mxu0 %v10239
    %11180 = vmatprep.subr.bf16.mxu0 %v10360
    %11181 = vmatpush2.bf16.msra.mxu0 %v10359
    %11182 = vmatprep.subr.bf16.mxu0 %v10352
    %11183 = vmatpush2.bf16.msra.mxu0 %v10351
    %11184 = vmatprep.subr.bf16.mxu0 %v10344
    %11185 = vmatpush2.bf16.msra.mxu0 %v10343
    %11186 = vmatprep.subr.bf16.mxu0 %v10336
    %11187 = vmatpush2.bf16.msra.mxu0 %v10335
    %11188 = vmatprep.subr.bf16.mxu0 %v10328
    %11189 = vmatpush2.bf16.msra.mxu0 %v10327
    %11190 = vmatprep.subr.bf16.mxu0 %v10320
    %11191 = vmatpush2.bf16.msra.mxu0 %v10319
    %11192 = vmatprep.subr.bf16.mxu0 %v10312
    %11193 = vmatpush2.bf16.msra.mxu0 %v10311
    %11194 = vmatprep.subr.bf16.mxu0 %v10304
    %11195 = vmatpush2.bf16.msra.mxu0 %v10303
    %11196 = vmatprep.mubr.bf16.mxu0 %v7762
    %11197 = vmatmul.mubr.bf16.gmra.mxu0 %v7761
    %v11198 = vpop.f32.mrf.mxu0
    %v11199 = vadd.f32 %v11158, %v11198
    %v11200 = vpop.f32.mrf.mxu0
    %v11201 = vadd.f32 %v11160, %v11200
    %v11202 = vpop.f32.mrf.mxu0
    %v11203 = vpop.f32.mrf.mxu0
    %11204 = vdwg.mxu0
    %11205 = vmatprep.subr.bf16.mxu0 %v9914
    %11206 = vmatpush1.bf16.msra.mxu0 %v9913
    %11207 = vmatprep.subr.bf16.mxu0 %v9906
    %11208 = vmatpush1.bf16.msra.mxu0 %v9905
    %11209 = vmatprep.subr.bf16.mxu0 %v9898
    %11210 = vmatpush1.bf16.msra.mxu0 %v9897
    %11211 = vmatprep.subr.bf16.mxu0 %v9890
    %11212 = vmatpush1.bf16.msra.mxu0 %v9889
    %11213 = vmatprep.subr.bf16.mxu0 %v9882
    %11214 = vmatpush1.bf16.msra.mxu0 %v9881
    %11215 = vmatprep.subr.bf16.mxu0 %v9874
    %11216 = vmatpush1.bf16.msra.mxu0 %v9873
    %11217 = vmatprep.subr.bf16.mxu0 %v9866
    %11218 = vmatpush1.bf16.msra.mxu0 %v9865
    %11219 = vmatprep.subr.bf16.mxu0 %v9858
    %11220 = vmatpush1.bf16.msra.mxu0 %v9857
    %11221 = vmatprep.subr.bf16.mxu0 %v9978
    %11222 = vmatpush2.bf16.msra.mxu0 %v9977
    %11223 = vmatprep.subr.bf16.mxu0 %v9970
    %11224 = vmatpush2.bf16.msra.mxu0 %v9969
    %11225 = vmatprep.subr.bf16.mxu0 %v9962
    %11226 = vmatpush2.bf16.msra.mxu0 %v9961
    %11227 = vmatprep.subr.bf16.mxu0 %v9954
    %11228 = vmatpush2.bf16.msra.mxu0 %v9953
    %11229 = vmatprep.subr.bf16.mxu0 %v9946
    %11230 = vmatpush2.bf16.msra.mxu0 %v9945
    %11231 = vmatprep.subr.bf16.mxu0 %v9938
    %11232 = vmatpush2.bf16.msra.mxu0 %v9937
    %11233 = vmatprep.subr.bf16.mxu0 %v9930
    %11234 = vmatpush2.bf16.msra.mxu0 %v9929
    %11235 = vmatprep.subr.bf16.mxu0 %v9922
    %11236 = vmatpush2.bf16.msra.mxu0 %v9921
    %11237 = vmatprep.mubr.bf16.mxu0 %v7756
    %11238 = vmatmul.mubr.bf16.gmra.mxu0 %v7755
    %v11239 = vpop.f32.mrf.mxu0
    %v11240 = vadd.f32 %v8296, %v11239
    %v11241 = vpop.f32.mrf.mxu0
    %v11242 = vadd.f32 %v8300, %v11241
    %v11243 = vpop.f32.mrf.mxu0
    %v11244 = vpop.f32.mrf.mxu0
    %11245 = vdwg.mxu0
    %11246 = vmatprep.subr.bf16.mxu0 %v10042
    %11247 = vmatpush1.bf16.msra.mxu0 %v10041
    %11248 = vmatprep.subr.bf16.mxu0 %v10034
    %11249 = vmatpush1.bf16.msra.mxu0 %v10033
    %11250 = vmatprep.subr.bf16.mxu0 %v10026
    %11251 = vmatpush1.bf16.msra.mxu0 %v10025
    %11252 = vmatprep.subr.bf16.mxu0 %v10018
    %11253 = vmatpush1.bf16.msra.mxu0 %v10017
    %11254 = vmatprep.subr.bf16.mxu0 %v10010
    %11255 = vmatpush1.bf16.msra.mxu0 %v10009
    %11256 = vmatprep.subr.bf16.mxu0 %v10002
    %11257 = vmatpush1.bf16.msra.mxu0 %v10001
    %11258 = vmatprep.subr.bf16.mxu0 %v9994
    %11259 = vmatpush1.bf16.msra.mxu0 %v9993
    %11260 = vmatprep.subr.bf16.mxu0 %v9986
    %11261 = vmatpush1.bf16.msra.mxu0 %v9985
    %11262 = vmatprep.subr.bf16.mxu0 %v10106
    %11263 = vmatpush2.bf16.msra.mxu0 %v10105
    %11264 = vmatprep.subr.bf16.mxu0 %v10098
    %11265 = vmatpush2.bf16.msra.mxu0 %v10097
    %11266 = vmatprep.subr.bf16.mxu0 %v10090
    %11267 = vmatpush2.bf16.msra.mxu0 %v10089
    %11268 = vmatprep.subr.bf16.mxu0 %v10082
    %11269 = vmatpush2.bf16.msra.mxu0 %v10081
    %11270 = vmatprep.subr.bf16.mxu0 %v10074
    %11271 = vmatpush2.bf16.msra.mxu0 %v10073
    %11272 = vmatprep.subr.bf16.mxu0 %v10066
    %11273 = vmatpush2.bf16.msra.mxu0 %v10065
    %11274 = vmatprep.subr.bf16.mxu0 %v10058
    %11275 = vmatpush2.bf16.msra.mxu0 %v10057
    %11276 = vmatprep.subr.bf16.mxu0 %v10050
    %11277 = vmatpush2.bf16.msra.mxu0 %v10049
    %11278 = vmatprep.mubr.bf16.mxu0 %v7758
    %11279 = vmatmul.mubr.bf16.gmra.mxu0 %v7757
    %v11280 = vpop.f32.mrf.mxu0
    %v11281 = vadd.f32 %v11240, %v11280
    %v11282 = vpop.f32.mrf.mxu0
    %v11283 = vadd.f32 %v11242, %v11282
    %v11284 = vpop.f32.mrf.mxu0
    %v11285 = vpop.f32.mrf.mxu0
    %11286 = vdwg.mxu0
    %11287 = vmatprep.subr.bf16.mxu0 %v10170
    %11288 = vmatpush1.bf16.msra.mxu0 %v10169
    %11289 = vmatprep.subr.bf16.mxu0 %v10162
    %11290 = vmatpush1.bf16.msra.mxu0 %v10161
    %11291 = vmatprep.subr.bf16.mxu0 %v10154
    %11292 = vmatpush1.bf16.msra.mxu0 %v10153
    %11293 = vmatprep.subr.bf16.mxu0 %v10146
    %11294 = vmatpush1.bf16.msra.mxu0 %v10145
    %11295 = vmatprep.subr.bf16.mxu0 %v10138
    %11296 = vmatpush1.bf16.msra.mxu0 %v10137
    %11297 = vmatprep.subr.bf16.mxu0 %v10130
    %11298 = vmatpush1.bf16.msra.mxu0 %v10129
    %11299 = vmatprep.subr.bf16.mxu0 %v10122
    %11300 = vmatpush1.bf16.msra.mxu0 %v10121
    %11301 = vmatprep.subr.bf16.mxu0 %v10114
    %11302 = vmatpush1.bf16.msra.mxu0 %v10113
    %11303 = vmatprep.subr.bf16.mxu0 %v10234
    %11304 = vmatpush2.bf16.msra.mxu0 %v10233
    %11305 = vmatprep.subr.bf16.mxu0 %v10226
    %11306 = vmatpush2.bf16.msra.mxu0 %v10225
    %11307 = vmatprep.subr.bf16.mxu0 %v10218
    %11308 = vmatpush2.bf16.msra.mxu0 %v10217
    %11309 = vmatprep.subr.bf16.mxu0 %v10210
    %11310 = vmatpush2.bf16.msra.mxu0 %v10209
    %11311 = vmatprep.subr.bf16.mxu0 %v10202
    %11312 = vmatpush2.bf16.msra.mxu0 %v10201
    %11313 = vmatprep.subr.bf16.mxu0 %v10194
    %11314 = vmatpush2.bf16.msra.mxu0 %v10193
    %11315 = vmatprep.subr.bf16.mxu0 %v10186
    %11316 = vmatpush2.bf16.msra.mxu0 %v10185
    %11317 = vmatprep.subr.bf16.mxu0 %v10178
    %11318 = vmatpush2.bf16.msra.mxu0 %v10177
    %11319 = vmatprep.mubr.bf16.mxu0 %v7760
    %11320 = vmatmul.mubr.bf16.gmra.mxu0 %v7759
    %v11321 = vpop.f32.mrf.mxu0
    %v11322 = vadd.f32 %v11281, %v11321
    %v11323 = vpop.f32.mrf.mxu0
    %v11324 = vadd.f32 %v11283, %v11323
    %v11325 = vpop.f32.mrf.mxu0
    %v11326 = vpop.f32.mrf.mxu0
    %11327 = vdwg.mxu0
    %11328 = vmatprep.subr.bf16.mxu0 %v10298
    %11329 = vmatpush1.bf16.msra.mxu0 %v10297
    %11330 = vmatprep.subr.bf16.mxu0 %v10290
    %11331 = vmatpush1.bf16.msra.mxu0 %v10289
    %11332 = vmatprep.subr.bf16.mxu0 %v10282
    %11333 = vmatpush1.bf16.msra.mxu0 %v10281
    %11334 = vmatprep.subr.bf16.mxu0 %v10274
    %11335 = vmatpush1.bf16.msra.mxu0 %v10273
    %11336 = vmatprep.subr.bf16.mxu0 %v10266
    %11337 = vmatpush1.bf16.msra.mxu0 %v10265
    %11338 = vmatprep.subr.bf16.mxu0 %v10258
    %11339 = vmatpush1.bf16.msra.mxu0 %v10257
    %11340 = vmatprep.subr.bf16.mxu0 %v10250
    %11341 = vmatpush1.bf16.msra.mxu0 %v10249
    %11342 = vmatprep.subr.bf16.mxu0 %v10242
    %11343 = vmatpush1.bf16.msra.mxu0 %v10241
    %11344 = vmatprep.subr.bf16.mxu0 %v10362
    %11345 = vmatpush2.bf16.msra.mxu0 %v10361
    %11346 = vmatprep.subr.bf16.mxu0 %v10354
    %11347 = vmatpush2.bf16.msra.mxu0 %v10353
    %11348 = vmatprep.subr.bf16.mxu0 %v10346
    %11349 = vmatpush2.bf16.msra.mxu0 %v10345
    %11350 = vmatprep.subr.bf16.mxu0 %v10338
    %11351 = vmatpush2.bf16.msra.mxu0 %v10337
    %11352 = vmatprep.subr.bf16.mxu0 %v10330
    %11353 = vmatpush2.bf16.msra.mxu0 %v10329
    %11354 = vmatprep.subr.bf16.mxu0 %v10322
    %11355 = vmatpush2.bf16.msra.mxu0 %v10321
    %11356 = vmatprep.subr.bf16.mxu0 %v10314
    %11357 = vmatpush2.bf16.msra.mxu0 %v10313
    %11358 = vmatprep.subr.bf16.mxu0 %v10306
    %11359 = vmatpush2.bf16.msra.mxu0 %v10305
    %11360 = vmatprep.mubr.bf16.mxu0 %v7762
    %11361 = vmatmul.mubr.bf16.gmra.mxu0 %v7761
    %v11362 = vpop.f32.mrf.mxu0
    %v11363 = vadd.f32 %v11322, %v11362
    %v11364 = vpop.f32.mrf.mxu0
    %v11365 = vadd.f32 %v11324, %v11364
    %v11366 = vpop.f32.mrf.mxu0
    %v11367 = vpop.f32.mrf.mxu0
    %11368 = vdwg.mxu0
    %11369 = vmatprep.subr.bf16.mxu0 %v9916
    %11370 = vmatpush1.bf16.msra.mxu0 %v9915
    %11371 = vmatprep.subr.bf16.mxu0 %v9908
    %11372 = vmatpush1.bf16.msra.mxu0 %v9907
    %11373 = vmatprep.subr.bf16.mxu0 %v9900
    %11374 = vmatpush1.bf16.msra.mxu0 %v9899
    %11375 = vmatprep.subr.bf16.mxu0 %v9892
    %11376 = vmatpush1.bf16.msra.mxu0 %v9891
    %11377 = vmatprep.subr.bf16.mxu0 %v9884
    %11378 = vmatpush1.bf16.msra.mxu0 %v9883
    %11379 = vmatprep.subr.bf16.mxu0 %v9876
    %11380 = vmatpush1.bf16.msra.mxu0 %v9875
    %11381 = vmatprep.subr.bf16.mxu0 %v9868
    %11382 = vmatpush1.bf16.msra.mxu0 %v9867
    %11383 = vmatprep.subr.bf16.mxu0 %v9860
    %11384 = vmatpush1.bf16.msra.mxu0 %v9859
    %11385 = vmatprep.subr.bf16.mxu0 %v9980
    %11386 = vmatpush2.bf16.msra.mxu0 %v9979
    %11387 = vmatprep.subr.bf16.mxu0 %v9972
    %11388 = vmatpush2.bf16.msra.mxu0 %v9971
    %11389 = vmatprep.subr.bf16.mxu0 %v9964
    %11390 = vmatpush2.bf16.msra.mxu0 %v9963
    %11391 = vmatprep.subr.bf16.mxu0 %v9956
    %11392 = vmatpush2.bf16.msra.mxu0 %v9955
    %11393 = vmatprep.subr.bf16.mxu0 %v9948
    %11394 = vmatpush2.bf16.msra.mxu0 %v9947
    %11395 = vmatprep.subr.bf16.mxu0 %v9940
    %11396 = vmatpush2.bf16.msra.mxu0 %v9939
    %11397 = vmatprep.subr.bf16.mxu0 %v9932
    %11398 = vmatpush2.bf16.msra.mxu0 %v9931
    %11399 = vmatprep.subr.bf16.mxu0 %v9924
    %11400 = vmatpush2.bf16.msra.mxu0 %v9923
    %11401 = vmatprep.mubr.bf16.mxu0 %v7756
    %11402 = vmatmul.mubr.bf16.gmra.mxu0 %v7755
    %v11403 = vpop.f32.mrf.mxu0
    %v11404 = vadd.f32 %v8304, %v11403
    %v11405 = vpop.f32.mrf.mxu0
    %v11406 = vadd.f32 %v8308, %v11405
    %v11407 = vpop.f32.mrf.mxu0
    %v11408 = vpop.f32.mrf.mxu0
    %11409 = vdwg.mxu0
    %11410 = vmatprep.subr.bf16.mxu0 %v10044
    %11411 = vmatpush1.bf16.msra.mxu0 %v10043
    %11412 = vmatprep.subr.bf16.mxu0 %v10036
    %11413 = vmatpush1.bf16.msra.mxu0 %v10035
    %11414 = vmatprep.subr.bf16.mxu0 %v10028
    %11415 = vmatpush1.bf16.msra.mxu0 %v10027
    %11416 = vmatprep.subr.bf16.mxu0 %v10020
    %11417 = vmatpush1.bf16.msra.mxu0 %v10019
    %11418 = vmatprep.subr.bf16.mxu0 %v10012
    %11419 = vmatpush1.bf16.msra.mxu0 %v10011
    %11420 = vmatprep.subr.bf16.mxu0 %v10004
    %11421 = vmatpush1.bf16.msra.mxu0 %v10003
    %11422 = vmatprep.subr.bf16.mxu0 %v9996
    %11423 = vmatpush1.bf16.msra.mxu0 %v9995
    %11424 = vmatprep.subr.bf16.mxu0 %v9988
    %11425 = vmatpush1.bf16.msra.mxu0 %v9987
    %11426 = vmatprep.subr.bf16.mxu0 %v10108
    %11427 = vmatpush2.bf16.msra.mxu0 %v10107
    %11428 = vmatprep.subr.bf16.mxu0 %v10100
    %11429 = vmatpush2.bf16.msra.mxu0 %v10099
    %11430 = vmatprep.subr.bf16.mxu0 %v10092
    %11431 = vmatpush2.bf16.msra.mxu0 %v10091
    %11432 = vmatprep.subr.bf16.mxu0 %v10084
    %11433 = vmatpush2.bf16.msra.mxu0 %v10083
    %11434 = vmatprep.subr.bf16.mxu0 %v10076
    %11435 = vmatpush2.bf16.msra.mxu0 %v10075
    %11436 = vmatprep.subr.bf16.mxu0 %v10068
    %11437 = vmatpush2.bf16.msra.mxu0 %v10067
    %11438 = vmatprep.subr.bf16.mxu0 %v10060
    %11439 = vmatpush2.bf16.msra.mxu0 %v10059
    %11440 = vmatprep.subr.bf16.mxu0 %v10052
    %11441 = vmatpush2.bf16.msra.mxu0 %v10051
    %11442 = vmatprep.mubr.bf16.mxu0 %v7758
    %11443 = vmatmul.mubr.bf16.gmra.mxu0 %v7757
    %v11444 = vpop.f32.mrf.mxu0
    %v11445 = vadd.f32 %v11404, %v11444
    %v11446 = vpop.f32.mrf.mxu0
    %v11447 = vadd.f32 %v11406, %v11446
    %v11448 = vpop.f32.mrf.mxu0
    %v11449 = vpop.f32.mrf.mxu0
    %11450 = vdwg.mxu0
    %11451 = vmatprep.subr.bf16.mxu0 %v10172
    %11452 = vmatpush1.bf16.msra.mxu0 %v10171
    %11453 = vmatprep.subr.bf16.mxu0 %v10164
    %11454 = vmatpush1.bf16.msra.mxu0 %v10163
    %11455 = vmatprep.subr.bf16.mxu0 %v10156
    %11456 = vmatpush1.bf16.msra.mxu0 %v10155
    %11457 = vmatprep.subr.bf16.mxu0 %v10148
    %11458 = vmatpush1.bf16.msra.mxu0 %v10147
    %11459 = vmatprep.subr.bf16.mxu0 %v10140
    %11460 = vmatpush1.bf16.msra.mxu0 %v10139
    %11461 = vmatprep.subr.bf16.mxu0 %v10132
    %11462 = vmatpush1.bf16.msra.mxu0 %v10131
    %11463 = vmatprep.subr.bf16.mxu0 %v10124
    %11464 = vmatpush1.bf16.msra.mxu0 %v10123
    %11465 = vmatprep.subr.bf16.mxu0 %v10116
    %11466 = vmatpush1.bf16.msra.mxu0 %v10115
    %11467 = vmatprep.subr.bf16.mxu0 %v10236
    %11468 = vmatpush2.bf16.msra.mxu0 %v10235
    %11469 = vmatprep.subr.bf16.mxu0 %v10228
    %11470 = vmatpush2.bf16.msra.mxu0 %v10227
    %11471 = vmatprep.subr.bf16.mxu0 %v10220
    %11472 = vmatpush2.bf16.msra.mxu0 %v10219
    %11473 = vmatprep.subr.bf16.mxu0 %v10212
    %11474 = vmatpush2.bf16.msra.mxu0 %v10211
    %11475 = vmatprep.subr.bf16.mxu0 %v10204
    %11476 = vmatpush2.bf16.msra.mxu0 %v10203
    %11477 = vmatprep.subr.bf16.mxu0 %v10196
    %11478 = vmatpush2.bf16.msra.mxu0 %v10195
    %11479 = vmatprep.subr.bf16.mxu0 %v10188
    %11480 = vmatpush2.bf16.msra.mxu0 %v10187
    %11481 = vmatprep.subr.bf16.mxu0 %v10180
    %11482 = vmatpush2.bf16.msra.mxu0 %v10179
    %11483 = vmatprep.mubr.bf16.mxu0 %v7760
    %11484 = vmatmul.mubr.bf16.gmra.mxu0 %v7759
    %v11485 = vpop.f32.mrf.mxu0
    %v11486 = vadd.f32 %v11445, %v11485
    %v11487 = vpop.f32.mrf.mxu0
    %v11488 = vadd.f32 %v11447, %v11487
    %v11489 = vpop.f32.mrf.mxu0
    %v11490 = vpop.f32.mrf.mxu0
    %11491 = vdwg.mxu0
    %11492 = vmatprep.subr.bf16.mxu0 %v10300
    %11493 = vmatpush1.bf16.msra.mxu0 %v10299
    %11494 = vmatprep.subr.bf16.mxu0 %v10292
    %11495 = vmatpush1.bf16.msra.mxu0 %v10291
    %11496 = vmatprep.subr.bf16.mxu0 %v10284
    %11497 = vmatpush1.bf16.msra.mxu0 %v10283
    %11498 = vmatprep.subr.bf16.mxu0 %v10276
    %11499 = vmatpush1.bf16.msra.mxu0 %v10275
    %11500 = vmatprep.subr.bf16.mxu0 %v10268
    %11501 = vmatpush1.bf16.msra.mxu0 %v10267
    %11502 = vmatprep.subr.bf16.mxu0 %v10260
    %11503 = vmatpush1.bf16.msra.mxu0 %v10259
    %11504 = vmatprep.subr.bf16.mxu0 %v10252
    %11505 = vmatpush1.bf16.msra.mxu0 %v10251
    %11506 = vmatprep.subr.bf16.mxu0 %v10244
    %11507 = vmatpush1.bf16.msra.mxu0 %v10243
    %11508 = vmatprep.subr.bf16.mxu0 %v10364
    %11509 = vmatpush2.bf16.msra.mxu0 %v10363
    %11510 = vmatprep.subr.bf16.mxu0 %v10356
    %11511 = vmatpush2.bf16.msra.mxu0 %v10355
    %11512 = vmatprep.subr.bf16.mxu0 %v10348
    %11513 = vmatpush2.bf16.msra.mxu0 %v10347
    %11514 = vmatprep.subr.bf16.mxu0 %v10340
    %11515 = vmatpush2.bf16.msra.mxu0 %v10339
    %11516 = vmatprep.subr.bf16.mxu0 %v10332
    %11517 = vmatpush2.bf16.msra.mxu0 %v10331
    %11518 = vmatprep.subr.bf16.mxu0 %v10324
    %11519 = vmatpush2.bf16.msra.mxu0 %v10323
    %11520 = vmatprep.subr.bf16.mxu0 %v10316
    %11521 = vmatpush2.bf16.msra.mxu0 %v10315
    %11522 = vmatprep.subr.bf16.mxu0 %v10308
    %11523 = vmatpush2.bf16.msra.mxu0 %v10307
    %11524 = vmatprep.mubr.bf16.mxu0 %v7762
    %11525 = vmatmul.mubr.bf16.gmra.mxu0 %v7761
    %v11526 = vpop.f32.mrf.mxu0
    %v11527 = vadd.f32 %v11486, %v11526
    %v11528 = vpop.f32.mrf.mxu0
    %v11529 = vadd.f32 %v11488, %v11528
    %v11530 = vpop.f32.mrf.mxu0
    %v11531 = vpop.f32.mrf.mxu0
    %11532 = vdwg.mxu0
    %v11533 = vadd.f32 %v11035, %v6939
    %v11534 = vadd.f32 %v11037, %v6941
    %v11535 = vadd.f32 %v11199, %v7185
    %v11536 = vadd.f32 %v11201, %v7187
    %v11537 = vadd.f32 %v11363, %v7431
    %v11538 = vadd.f32 %v11365, %v7433
    %v11539 = vadd.f32 %v11527, %v7677
    %v11540 = vadd.f32 %v11529, %v7679
    %vm11541 = vcmask 1041408
    %v11542 = vsel %vm11541, %v11533, 0.0
    %v11543 = vsel %vm11541, %v11534, 0.0
    %v11544 = vadd.f32 %v11542, %v11543
    %v11545 = vsel %vm11541, %v11535, 0.0
    %v11546 = vadd.f32 %v11544, %v11545
    %v11547 = vsel %vm11541, %v11536, 0.0
    %v11548 = vadd.f32 %v11546, %v11547
    %v11549 = vsel %vm11541, %v11537, 0.0
    %v11550 = vadd.f32 %v11548, %v11549
    %v11551 = vsel %vm11541, %v11538, 0.0
    %v11552 = vadd.f32 %v11550, %v11551
    %v11553 = vsel %vm11541, %v11539, 0.0
    %v11554 = vadd.f32 %v11552, %v11553
    %v11555 = vsel %vm11541, %v11540, 0.0
    %v11556 = vadd.f32 %v11554, %v11555
    %11557 = vadd.xlane.f32.xlu0 %v11556
    %v11558 = vpop.xlane.xlu0 %11557
    %v11559 = vrcp.pop 1024.0
    %v11560 = vmul.f32 %v11558, %v11559
    %v11561 = vmul.f32 %v11533, %v11533
    %v11562 = vmul.f32 %v11534, %v11534
    %v11563 = vmul.f32 %v11535, %v11535
    %v11564 = vmul.f32 %v11536, %v11536
    %v11565 = vmul.f32 %v11537, %v11537
    %v11566 = vmul.f32 %v11538, %v11538
    %v11567 = vmul.f32 %v11539, %v11539
    %v11568 = vmul.f32 %v11540, %v11540
    %v11569 = vsel %vm11541, %v11561, 0.0
    %v11570 = vsel %vm11541, %v11562, 0.0
    %v11571 = vadd.f32 %v11569, %v11570
    %v11572 = vsel %vm11541, %v11563, 0.0
    %v11573 = vadd.f32 %v11571, %v11572
    %v11574 = vsel %vm11541, %v11564, 0.0
    %v11575 = vadd.f32 %v11573, %v11574
    %v11576 = vsel %vm11541, %v11565, 0.0
    %v11577 = vadd.f32 %v11575, %v11576
    %v11578 = vsel %vm11541, %v11566, 0.0
    %v11579 = vadd.f32 %v11577, %v11578
    %v11580 = vsel %vm11541, %v11567, 0.0
    %v11581 = vadd.f32 %v11579, %v11580
    %v11582 = vsel %vm11541, %v11568, 0.0
    %v11583 = vadd.f32 %v11581, %v11582
    %11584 = vadd.xlane.f32.xlu0 %v11583
    %v11585 = vpop.xlane.xlu0 %11584
    %v11586 = vmul.f32 %v11585, %v11559
    %v11587 = vmul.f32 %v11560, %v11560
    %v11588 = vsub.f32 %v11586, %v11587
    %v11589 = vsub.f32 %v11533, %v11560
    %v11590 = vsub.f32 %v11534, %v11560
    %v11591 = vsub.f32 %v11535, %v11560
    %v11592 = vsub.f32 %v11536, %v11560
    %v11593 = vsub.f32 %v11537, %v11560
    %v11594 = vsub.f32 %v11538, %v11560
    %v11595 = vsub.f32 %v11539, %v11560
    %v11596 = vsub.f32 %v11540, %v11560
    %v11597 = vadd.f32 %v11588, 1e-05
    %v11598 = vrsqrt.pop %v11597
    %v11599 = vmul.f32 %v11589, %v11598
    %v11600 = vmul.f32 %v11590, %v11598
    %v11601 = vmul.f32 %v11591, %v11598
    %v11602 = vmul.f32 %v11592, %v11598
    %v11603 = vmul.f32 %v11593, %v11598
    %v11604 = vmul.f32 %v11594, %v11598
    %v11605 = vmul.f32 %v11595, %v11598
    %v11606 = vmul.f32 %v11596, %v11598
    %v11607 = vld [vmem:[%s12] sm:$0xff]
    %v11609 = vlaneseq
    %v11610 = vshrl.u32 %v11609, 7
    %v11611 = vsub.s32 0, %v11610
    %v11612 = vrot.slane %v11607, %v11611
    %v11613 = vlaneseq
    %v11614 = vshrl.u32 %v11613, 7
    %v11615 = vsub.s32 1, %v11614
    %v11616 = vrot.slane %v11607, %v11615
    %v11617 = vlaneseq
    %v11618 = vshrl.u32 %v11617, 7
    %v11619 = vsub.s32 2, %v11618
    %v11620 = vrot.slane %v11607, %v11619
    %v11621 = vlaneseq
    %v11622 = vshrl.u32 %v11621, 7
    %v11623 = vsub.s32 3, %v11622
    %v11624 = vrot.slane %v11607, %v11623
    %v11625 = vlaneseq
    %v11626 = vshrl.u32 %v11625, 7
    %v11627 = vsub.s32 4, %v11626
    %v11628 = vrot.slane %v11607, %v11627
    %v11629 = vlaneseq
    %v11630 = vshrl.u32 %v11629, 7
    %v11631 = vsub.s32 5, %v11630
    %v11632 = vrot.slane %v11607, %v11631
    %v11633 = vlaneseq
    %v11634 = vshrl.u32 %v11633, 7
    %v11635 = vsub.s32 6, %v11634
    %v11636 = vrot.slane %v11607, %v11635
    %v11637 = vlaneseq
    %v11638 = vshrl.u32 %v11637, 7
    %v11639 = vsub.s32 7, %v11638
    %v11640 = vrot.slane %v11607, %v11639
    %v11649 = vmul.f32 %v11599, %v11612
    %v11650 = vmul.f32 %v11600, %v11616
    %v11651 = vmul.f32 %v11601, %v11620
    %v11652 = vmul.f32 %v11602, %v11624
    %v11653 = vmul.f32 %v11603, %v11628
    %v11654 = vmul.f32 %v11604, %v11632
    %v11655 = vmul.f32 %v11605, %v11636
    %v11656 = vmul.f32 %v11606, %v11640
    %v11657 = vld [vmem:[%s13] sm:$0xff]
    %v11659 = vlaneseq
    %v11660 = vshrl.u32 %v11659, 7
    %v11661 = vsub.s32 0, %v11660
    %v11662 = vrot.slane %v11657, %v11661
    %v11663 = vlaneseq
    %v11664 = vshrl.u32 %v11663, 7
    %v11665 = vsub.s32 1, %v11664
    %v11666 = vrot.slane %v11657, %v11665
    %v11667 = vlaneseq
    %v11668 = vshrl.u32 %v11667, 7
    %v11669 = vsub.s32 2, %v11668
    %v11670 = vrot.slane %v11657, %v11669
    %v11671 = vlaneseq
    %v11672 = vshrl.u32 %v11671, 7
    %v11673 = vsub.s32 3, %v11672
    %v11674 = vrot.slane %v11657, %v11673
    %v11675 = vlaneseq
    %v11676 = vshrl.u32 %v11675, 7
    %v11677 = vsub.s32 4, %v11676
    %v11678 = vrot.slane %v11657, %v11677
    %v11679 = vlaneseq
    %v11680 = vshrl.u32 %v11679, 7
    %v11681 = vsub.s32 5, %v11680
    %v11682 = vrot.slane %v11657, %v11681
    %v11683 = vlaneseq
    %v11684 = vshrl.u32 %v11683, 7
    %v11685 = vsub.s32 6, %v11684
    %v11686 = vrot.slane %v11657, %v11685
    %v11687 = vlaneseq
    %v11688 = vshrl.u32 %v11687, 7
    %v11689 = vsub.s32 7, %v11688
    %v11690 = vrot.slane %v11657, %v11689
    %v11699 = vadd.f32 %v11649, %v11662
    %v11700 = vadd.f32 %v11650, %v11666
    %v11701 = vadd.f32 %v11651, %v11670
    %v11702 = vadd.f32 %v11652, %v11674
    %v11703 = vadd.f32 %v11653, %v11678
    %v11704 = vadd.f32 %v11654, %v11682
    %v11705 = vadd.f32 %v11655, %v11686
    %v11706 = vadd.f32 %v11656, %v11690
    %v11715 = vcombine.low %v11699, %v11700
    %v11716 = vcombine.low %v11701, %v11702
    %v11718 = vunpack.c.l.s4 1983009808
    %v11719 = vunpack.c.0.s8 %v11718
    %v11720 = vlaneseq
    %v11721 = vshrl.u32 %v11720, 7
    %v11722 = vsub.s32 %v11719, %v11721
    %v11723 = vrot.slane %v11715, %v11722
    %v11725 = vunpack.c.l.s4 1983009808
    %v11726 = vunpack.c.0.s8 %v11725
    %v11727 = vlaneseq
    %v11728 = vshrl.u32 %v11727, 7
    %v11729 = vsub.s32 %v11726, %v11728
    %v11730 = vrot.slane %v11716, %v11729
    %v11731 = vcombine.low %v11723, %v11730
    %v11732 = vcombine.low %v11703, %v11704
    %v11733 = vcombine.low %v11705, %v11706
    %v11735 = vunpack.c.l.s4 1983009808
    %v11736 = vunpack.c.0.s8 %v11735
    %v11737 = vlaneseq
    %v11738 = vshrl.u32 %v11737, 7
    %v11739 = vsub.s32 %v11736, %v11738
    %v11740 = vrot.slane %v11732, %v11739
    %v11742 = vunpack.c.l.s4 1983009808
    %v11743 = vunpack.c.0.s8 %v11742
    %v11744 = vlaneseq
    %v11745 = vshrl.u32 %v11744, 7
    %v11746 = vsub.s32 %v11743, %v11745
    %v11747 = vrot.slane %v11733, %v11746
    %v11748 = vcombine.low %v11740, %v11747
    %11751 = vst [vmem:[#allocation3] sm:$0xff] %v11731
    %11752 = vst [vmem:[#allocation3 + $0x8] sm:$0xff] %v11748
    // Predicated region
    $region65: #{muse_eeg_forward.1} parent=1 // pred_check
      _
    $region66: #{muse_eeg_forward.1} parent=1 // pred_check_branch
      %11754 = sbr.rel (0) target = $region68
    $region67: #{muse_eeg_forward.1} parent=1 // pred_region
      %s11756 = ssub.s32 256, 256
      %11757 = vsyncadd [#allocation4], %s11756
      %s11759 = sshll.u32 [#allocation3], 4
      %s11760 = int_to_ptr.vmem [resolvable:$true] %s11759
      %11762 = dma.vmem_to_hbm [thread:$0]  %s11760, 256, %s14, [#allocation4]
    $region68: #{muse_eeg_forward.1} parent=1 // pred_fallthru
      _
    // Predicated region
    $region69: #{muse_eeg_forward.1} parent=1 // pred_check
      _
    $region70: #{muse_eeg_forward.1} parent=1 // pred_check_branch
      %11764 = sbr.rel (0) target = $region72
    $region71: #{muse_eeg_forward.1} parent=1 // pred_region
      %11765 = dma.done [#allocation4], 256
    $region72: #{muse_eeg_forward.1} parent=1 // pred_fallthru
      _
    %11766 = vsyncpa [#allocation4], 1

</llo_original>
